<compile_context>
chip_gen: v7x
topology: tpu7x:2x2x1
jax: 0.10.0
libtpu: 0.0.40
codegen_flags: <defaults>
</compile_context>

<pallas_src>
import functools

import jax
import jax.numpy as jnp
from jax import lax
from jax.experimental import pallas as pl
from jax.experimental.pallas import tpu as pltpu

BN_EPS = 1e-5
MATMUL_DTYPE = jnp.bfloat16   # MXU operand / intermediate dtype; accum stays f32.
LANE = 128


def _round_up(x, m):
    return (x + m - 1) // m * m


# ----------------------------------------------------------------------------
# Optional single-buffering of grid-invariant operands (weights, scale/bias).
# ----------------------------------------------------------------------------
def _probe_kernel(x_ref, o_ref):
    o_ref[...] = x_ref[...] + 1.0


def _detect_single_buffer_mode():
    """Return pl.Buffered(1) if this Pallas supports single-buffered invariant
    operands (saves one weight-sized VMEM buffer per grid step); else None."""
    try:
        mode = pl.Buffered(buffer_count=1)
        fn = pl.pallas_call(
            _probe_kernel,
            out_shape=jax.ShapeDtypeStruct((8, LANE), jnp.float32),
            grid=(2,),
            in_specs=[pl.BlockSpec((8, LANE), lambda i: (0, 0),
                                   pipeline_mode=mode)],
            out_specs=pl.BlockSpec((8, LANE), lambda i: (0, 0)),
        )
        x = jnp.arange(8 * LANE, dtype=jnp.float32).reshape(8, LANE)
        y = jax.block_until_ready(fn(x))
        if bool(jnp.allclose(y, x + 1.0)):
            return mode
    except Exception:   # capability probe: fall back to default buffering
        pass
    return None


_SINGLE_BUFFER_MODE = _detect_single_buffer_mode()


def _invariant_spec(block_shape, index_map):
    """BlockSpec for an operand whose block never changes across the grid."""
    if _SINGLE_BUFFER_MODE is not None:
        return pl.BlockSpec(block_shape, index_map,
                            pipeline_mode=_SINGLE_BUFFER_MODE)
    return pl.BlockSpec(block_shape, index_map)


# ----------------------------------------------------------------------------
# Generation-aware compiler params.
# ----------------------------------------------------------------------------
def _vmem_limit_bytes():
    try:
        kind = jax.devices()[0].device_kind.lower()
    except Exception:
        return None
    if "v7" in kind:
        return 48 * 1024 * 1024          # v7x: 64 MiB physical VMEM per core
    if any(v in kind for v in ("v4", "v5", "v6")):
        return 100 * 1024 * 1024         # 128 MiB physical VMEM
    return None


def _compiler_params():
    kwargs = dict(dimension_semantics=("parallel",))
    lim = _vmem_limit_bytes()
    if lim is not None:
        kwargs["vmem_limit_bytes"] = lim
    return pltpu.CompilerParams(**kwargs)


# ----------------------------------------------------------------------------
# Pass A: in-kernel shifted-window conv (9 accumulated matmuls) + BN partials.
# ----------------------------------------------------------------------------
def _make_conv_stats_kernel(taps, cin_eff, hout, wph, wout):
    lout = hout * wph

    def kernel(xph_ref, w_ref, conv_ref, psum_ref, psumsq_ref):
        acc = None
        for t, (phase, off) in enumerate(taps):
            xs = xph_ref[phase, off:off + lout, :]            # (lout, cin_eff)
            wk = w_ref[t * cin_eff:(t + 1) * cin_eff, :]      # (cin_eff, coutP)
            d = jnp.dot(xs, wk, preferred_element_type=jnp.float32)
            acc = d if acc is None else acc + d
        # Zero the wrap-around columns (stored col >= wout of each row) so they
        # contribute nothing to BN stats and stay 0 in the bf16 intermediate.
        col = lax.broadcasted_iota(jnp.int32, (lout, 1), 0) % wph
        acc = jnp.where(col < wout, acc, 0.0)
        conv_ref[...] = acc.astype(conv_ref.dtype)            # bf16 intermediate
        psum_ref[...] = jnp.sum(acc, axis=0, keepdims=True)
        psumsq_ref[...] = jnp.sum(acc * acc, axis=0, keepdims=True)

    return kernel


def conv_stats_pallas(xph, w2d, taps, hout, wph, wout, conv_dtype=MATMUL_DTYPE):
    """xph: (P, N, Lin, Cin) bf16 flattened/phased activation.
    w2d: (len(taps)*Cin, CoutP) bf16.  Returns conv (N, Hout*wph, CoutP) bf16,
    psum/psumsq (N, 1, CoutP) f32 (per-image partial BN statistics)."""
    nph, n, lin, cin_eff = xph.shape
    kc, cout_p = w2d.shape
    assert kc == len(taps) * cin_eff
    lout = hout * wph

    flops = 2 * n * lout * kc * cout_p
    bytes_accessed = (xph.size * xph.dtype.itemsize
                      + w2d.size * w2d.dtype.itemsize
                      + n * lout * cout_p * jnp.dtype(conv_dtype).itemsize
                      + 2 * n * cout_p * 4)

    return pl.pallas_call(
        _make_conv_stats_kernel(tuple(taps), cin_eff, hout, wph, wout),
        out_shape=(jax.ShapeDtypeStruct((n, lout, cout_p), conv_dtype),
                   jax.ShapeDtypeStruct((n, 1, cout_p), jnp.float32),
                   jax.ShapeDtypeStruct((n, 1, cout_p), jnp.float32)),
        grid=(n,),
        in_specs=[pl.BlockSpec((nph, None, lin, cin_eff),
                               lambda i: (0, i, 0, 0)),
                  _invariant_spec((kc, cout_p), lambda i: (0, 0))],
        out_specs=(pl.BlockSpec((None, lout, cout_p), lambda i: (i, 0, 0)),
                   pl.BlockSpec((None, 1, cout_p), lambda i: (i, 0, 0)),
                   pl.BlockSpec((None, 1, cout_p), lambda i: (i, 0, 0))),
        compiler_params=_compiler_params(),
        cost_estimate=pl.CostEstimate(flops=flops, transcendentals=0,
                                      bytes_accessed=bytes_accessed),
    )(xph, w2d)


# ----------------------------------------------------------------------------
# Pass B: y = conv*scale + bias (+ residual) (-> swish), per image.
# ----------------------------------------------------------------------------
def _make_bn_act_kernel(add_residual, apply_swish):
    def kernel(*refs):
        if add_residual:
            conv_ref, scale_ref, bias_ref, res_ref, out_ref = refs
        else:
            conv_ref, scale_ref, bias_ref, out_ref = refs
            res_ref = None
        y = conv_ref[...].astype(jnp.float32) * scale_ref[...] + bias_ref[...]
        if add_residual:
            y = y + res_ref[...].astype(jnp.float32)
        if apply_swish:
            y = y * jax.nn.sigmoid(y)
        out_ref[...] = y.astype(out_ref.dtype)
    return kernel


def bn_act_pallas(conv, scale, bias, *, res=None, apply_swish=False,
                  out_dtype=jnp.float32):
    n, lout, cout_p = conv.shape
    inputs = [conv,
              scale.reshape(1, cout_p).astype(jnp.float32),
              bias.reshape(1, cout_p).astype(jnp.float32)]
    in_specs = [pl.BlockSpec((None, lout, cout_p), lambda i: (i, 0, 0)),
                _invariant_spec((1, cout_p), lambda i: (0, 0)),
                _invariant_spec((1, cout_p), lambda i: (0, 0))]
    if res is not None:
        inputs.append(res)
        in_specs.append(pl.BlockSpec((None, lout, cout_p), lambda i: (i, 0, 0)))

    bytes_accessed = (sum(a.size * a.dtype.itemsize for a in inputs)
                      + n * lout * cout_p * jnp.dtype(out_dtype).itemsize)
    return pl.pallas_call(
        _make_bn_act_kernel(res is not None, apply_swish),
        out_shape=jax.ShapeDtypeStruct((n, lout, cout_p), out_dtype),
        grid=(n,),
        in_specs=in_specs,
        out_specs=pl.BlockSpec((None, lout, cout_p), lambda i: (i, 0, 0)),
        compiler_params=_compiler_params(),
        cost_estimate=pl.CostEstimate(
            flops=6 * n * lout * cout_p,
            transcendentals=n * lout * cout_p if apply_swish else 0,
            bytes_accessed=bytes_accessed),
    )(*inputs)


# ----------------------------------------------------------------------------
# conv + BN(train) + optional residual + optional swish (two Pallas passes).
# ----------------------------------------------------------------------------
def conv_bn_act(xph, w2d, gamma, beta, taps, hout, wph, wout, *, res=None,
                apply_swish=False, out_dtype=jnp.float32, eps=BN_EPS):
    """Returns (N, Hout*wph, CoutP) in out_dtype (wrap columns are junk)."""
    n = xph.shape[1]
    m = n * hout * wout                              # true BN element count

    conv, psum, psumsq = conv_stats_pallas(xph, w2d, taps, hout, wph, wout)

    s = jnp.sum(psum, axis=(0, 1))
    sq = jnp.sum(psumsq, axis=(0, 1))
    mean = s / m
    # TODO(synk): E[x^2]-E[x]^2 in f32 can cancel for |mean|>>std; use a shifted
    # / two-pass variance if tighter tolerances are ever required.
    var = jnp.maximum(sq / m - mean * mean, 0.0)
    scale = gamma.astype(jnp.float32) * lax.rsqrt(var + eps)
    bias = beta.astype(jnp.float32) - mean * scale

    return bn_act_pallas(conv, scale, bias, res=res, apply_swish=apply_swish,
                         out_dtype=out_dtype)


# ----------------------------------------------------------------------------
# JAX glue: polyphase / flattened window prep and weight layout.
# ----------------------------------------------------------------------------
def _phase_windows(x_nhwc, stride, hout, wout):
    """Prepare a 3x3 / padding=1 conv for in-kernel shifted-window reads.

    Returns
      xph : (P, N, Lin, C) — the P = stride**2 polyphase components of the
            zero-padded input, each flattened row-major over (Hph, Wph) with one
            extra trailing zero row (keeps every tap's window slice in bounds).
      taps: 9 (phase, row_offset) pairs in (kh, kw)-major order; tap t reads
            xph[phase, n, off : off + Hout*Wph, :]  (static, unstrided slice).
      wph : padded row width (== the conv output storage width).
    """
    n, h, w, c = x_nhwc.shape
    s = stride
    xpad = jnp.pad(x_nhwc, ((0, 0), (1, 1), (1, 1), (0, 0)))
    hph = 2 // s + hout + 1
    wph = 2 // s + wout
    phases = []
    for ph in range(s):
        for pw in range(s):
            p = xpad[:, ph::s, pw::s, :][:, :hph, :wph, :]
            pad_h = hph - p.shape[1]
            pad_w = wph - p.shape[2]
            if pad_h or pad_w:
                p = jnp.pad(p, ((0, 0), (0, pad_h), (0, pad_w), (0, 0)))
            phases.append(p.reshape(n, hph * wph, c))
    xph = jnp.stack(phases, axis=0)
    taps = []
    for kh in range(3):
        for kw in range(3):
            pidx = (kh % s) * s + (kw % s)
            taps.append((pidx, (kh // s) * wph + (kw // s)))
    return xph, taps, wph


def _flatten_width(x_nhwc, width):
    """Zero-pad W to `width` and flatten to (N, H*width, C)."""
    n, h, w, c = x_nhwc.shape
    x = jnp.pad(x_nhwc, ((0, 0), (0, 0), (0, width - w), (0, 0)))
    return x.reshape(n, h * width, c)


def _w3x3_to_2d(w, cin_eff, cout_pad):
    """(Cout, Cin, 3, 3) -> (9*cin_eff, cout_pad) bf16; zero rows/cols for the
    channel padding.  Row order (kh, kw, ci) matches the kernel's tap order."""
    cout, cin, kh, kw = w.shape
    w2 = jnp.transpose(w, (2, 3, 1, 0))                       # (kh, kw, cin, cout)
    w2 = jnp.pad(w2, ((0, 0), (0, 0), (0, cin_eff - cin), (0, cout_pad - cout)))
    return w2.reshape(kh * kw * cin_eff, cout_pad).astype(MATMUL_DTYPE)


def _w1x1_to_2d(w, cout_pad):
    cout, cin, _, _ = w.shape
    w2 = jnp.transpose(w, (2, 3, 1, 0)).reshape(cin, cout)
    return jnp.pad(w2, ((0, 0), (0, cout_pad - cout))).astype(MATMUL_DTYPE)


def _pad_gb(g, b, cout_pad):
    pad = (0, cout_pad - g.shape[0])
    return (jnp.pad(g.astype(jnp.float32), pad),
            jnp.pad(b.astype(jnp.float32), pad))


# ----------------------------------------------------------------------------
# BasicBlock forward.
# ----------------------------------------------------------------------------
def basic_block_pallas(x_nchw, params, stride, out_layout="NCHW"):
    n, cin, h, w = x_nchw.shape
    cout = params["w1"].shape[0]
    cout_pad = _round_up(cout, LANE)
    hout = (h - 1) // stride + 1
    wout = (w - 1) // stride + 1
    wph2 = wout + 2                      # storage width of the block-output grid

    x_nhwc = jnp.transpose(x_nchw, (0, 2, 3, 1)).astype(MATMUL_DTYPE)

    # --- residual branch: conv1 (3x3, stride) + BN1 + swish -> bf16 ---
    xph1, taps1, wph1 = _phase_windows(x_nhwc, stride, hout, wout)
    h1 = conv_bn_act(
        xph1, _w3x3_to_2d(params["w1"], cin, cout_pad),
        *_pad_gb(params["g1"], params["b1"], cout_pad),
        taps1, hout, wph1, wout,
        apply_swish=True, out_dtype=MATMUL_DTYPE)

    # --- shortcut branch (stored on the same (hout, wph2) grid as conv2) ---
    if stride != 1 or cin != cout:
        xs = x_nhwc[:, ::stride, ::stride, :][:, :hout, :wout, :]
        res = conv_bn_act(
            _flatten_width(xs, wph2)[None],
            _w1x1_to_2d(params["wsc"], cout_pad),
            *_pad_gb(params["gsc"], params["bsc"], cout_pad),
            ((0, 0),), hout, wph2, wout,
            apply_swish=False, out_dtype=MATMUL_DTYPE)
    else:
        # Identity shortcut: bf16, channel-padded, on the output storage grid.
        xr = jnp.pad(x_nhwc,
                     ((0, 0), (0, 0), (0, wph2 - w), (0, cout_pad - cout)))
        res = xr.reshape(n, hout * wph2, cout_pad)

    # --- residual branch: conv2 (3x3, stride 1) + BN2 + add + final swish ---
    # TODO(synk): fold this slice + re-pad of h1 into conv1's pass-B output
    # (write h1 directly on conv2's padded grid) to save one h1 HBM round trip.
    h1_valid = h1.reshape(n, hout, wph1, cout_pad)[:, :, :wout, :]
    xph2, taps2, wph2b = _phase_windows(h1_valid, 1, hout, wout)
    assert wph2b == wph2
    out = conv_bn_act(
        xph2, _w3x3_to_2d(params["w2"], cout_pad, cout_pad),
        *_pad_gb(params["g2"], params["b2"], cout_pad),
        taps2, hout, wph2, wout,
        res=res, apply_swish=True, out_dtype=jnp.float32)

    out = out.reshape(n, hout, wph2, cout_pad)[:, :, :wout, :cout]
    if out_layout == "NHWC":
        # Review: keep the chain NHWC when the consumer is another BasicBlock
        # to drop the final transpose round trip.
        return out
    return jnp.transpose(out, (0, 3, 1, 2))


# ----------------------------------------------------------------------------
# Pure-JAX reference (correctness check).
# ----------------------------------------------------------------------------
def _ref_conv(x, w, stride, pad):
    return lax.conv_general_dilated(
        x, w, (stride, stride), [(pad, pad), (pad, pad)],
        dimension_numbers=("NCHW", "OIHW", "NCHW"))


def _ref_bn(x, g, b, eps=BN_EPS):
    mean = x.mean(axis=(0, 2, 3), keepdims=True)
    var = ((x - mean) ** 2).mean(axis=(0, 2, 3), keepdims=True)
    return (x - mean) * lax.rsqrt(var + eps) * g.reshape(1, -1, 1, 1) \
        + b.reshape(1, -1, 1, 1)


def _swish(x):
    return x * jax.nn.sigmoid(x)


def basic_block_ref(x, params, stride):
    cin, cout = x.shape[1], params["w1"].shape[0]
    h1 = _swish(_ref_bn(_ref_conv(x, params["w1"], stride, 1),
                        params["g1"], params["b1"]))
    h2 = _ref_bn(_ref_conv(h1, params["w2"], 1, 1), params["g2"], params["b2"])
    if stride != 1 or cin != cout:
        sc = _ref_bn(_ref_conv(x, params["wsc"], stride, 0),
                     params["gsc"], params["bsc"])
    else:
        sc = x
    return _swish(h2 + sc)


# ----------------------------------------------------------------------------
if __name__ == "__main__":
    def make_params(key, cin, cout, with_shortcut):
        ks = jax.random.split(key, 9)
        p = {
            "w1": 0.2 * jax.random.normal(ks[0], (cout, cin, 3, 3), jnp.float32),
            "g1": 1.0 + 0.1 * jax.random.normal(ks[1], (cout,), jnp.float32),
            "b1": 0.1 * jax.random.normal(ks[2], (cout,), jnp.float32),
            "w2": 0.2 * jax.random.normal(ks[3], (cout, cout, 3, 3), jnp.float32),
            "g2": 1.0 + 0.1 * jax.random.normal(ks[4], (cout,), jnp.float32),
            "b2": 0.1 * jax.random.normal(ks[5], (cout,), jnp.float32),
        }
        if with_shortcut:
            p["wsc"] = 0.2 * jax.random.normal(ks[6], (cout, cin, 1, 1),
                                               jnp.float32)
            p["gsc"] = 1.0 + 0.1 * jax.random.normal(ks[7], (cout,), jnp.float32)
            p["bsc"] = 0.1 * jax.random.normal(ks[8], (cout,), jnp.float32)
        return p

    key = jax.random.PRNGKey(0)
    k1, k2, k3, k4 = jax.random.split(key, 4)

    # Case 1: downsampling block (stride=2, Cin != Cout) -> conv shortcut.
    N, CIN, COUT, H, W, STRIDE = 2, 4, 8, 16, 16, 2
    params1 = make_params(k1, CIN, COUT, with_shortcut=True)
    x1 = jax.random.normal(k2, (N, CIN, H, W), jnp.float32)
    fwd1 = jax.jit(functools.partial(basic_block_pallas, stride=STRIDE))
    out1 = jax.block_until_ready(fwd1(x1, params1))
    ref1 = basic_block_ref(x1, params1, STRIDE)
    assert out1.shape == ref1.shape == (N, COUT, H // STRIDE, W // STRIDE)
    err1 = float(jnp.max(jnp.abs(out1 - ref1)))
    assert jnp.allclose(out1, ref1, rtol=3e-2, atol=3e-2), err1

    # Case 2: identity-shortcut block (stride=1, Cin == Cout).
    N2, C2, H2, W2 = 2, 8, 8, 8
    params2 = make_params(k3, C2, C2, with_shortcut=False)
    x2 = jax.random.normal(k4, (N2, C2, H2, W2), jnp.float32)
    fwd2 = jax.jit(functools.partial(basic_block_pallas, stride=1))
    out2 = jax.block_until_ready(fwd2(x2, params2))
    ref2 = basic_block_ref(x2, params2, 1)
    assert out2.shape == ref2.shape == (N2, C2, H2, W2)
    err2 = float(jnp.max(jnp.abs(out2 - ref2)))
    assert jnp.allclose(out2, ref2, rtol=3e-2, atol=3e-2), err2

    print("KERNEL_OK")
</pallas_src>

<mosaic_0001>
module attributes {stable_mosaic.version = 11 : i64} {
  func.func @_probe_kernel(%arg0: i32, %arg1: memref<8x128xf32, #tpu.memory_space<vmem>>, %arg2: memref<8x128xf32, #tpu.memory_space<vmem>>) attributes {dimension_semantics = [#tpu.dimension_semantics<arbitrary>], iteration_bounds = array<i64: 2>, scalar_prefetch = 0 : i64, scratch_operands = 0 : i64, tpu.core_type = #tpu.core_type<tc>, window_params = [{pipeline_mode = #tpu.pipeline_mode<synchronous>, transform_indices = @transform_0, window_bounds = array<i64: 8, 128>}, {pipeline_mode = #tpu.pipeline_mode<synchronous>, transform_indices = @transform_1, window_bounds = array<i64: 8, 128>}]} {
    %c0 = arith.constant 0 : index
    %c0_0 = arith.constant 0 : index
    %0 = vector.load %arg1[%c0, %c0_0] : memref<8x128xf32, #tpu.memory_space<vmem>>, vector<8x128xf32>
    %cst = arith.constant 1.000000e+00 : f32
    %1 = vector.broadcast %cst : f32 to vector<8x128xf32>
    %2 = arith.addf %0, %1 : vector<8x128xf32>
    %c0_1 = arith.constant 0 : index
    %c0_2 = arith.constant 0 : index
    %3 = vector.load %arg2[%c0_1, %c0_2] : memref<8x128xf32, #tpu.memory_space<vmem>>, vector<8x128xf32>
    tpu.vector_store %arg2[%c0_1, %c0_2], %2 {strides = array<i32>} : memref<8x128xf32, #tpu.memory_space<vmem>>, vector<8x128xf32>,
    return
  }
  func.func @transform_0(%arg0: i32) -> (i32, i32) {
    %c0_i32 = arith.constant 0 : i32
    %c0_i32_0 = arith.constant 0 : i32
    %c0_i32_1 = arith.constant 0 : i32
    return %c0_i32, %c0_i32_0 : i32, i32
  }
  func.func @transform_1(%arg0: i32) -> (i32, i32) {
    %c0_i32 = arith.constant 0 : i32
    %c0_i32_0 = arith.constant 0 : i32
    %c0_i32_1 = arith.constant 0 : i32
    return %c0_i32, %c0_i32_0 : i32, i32
  }
}

module attributes {stable_mosaic.version = 11 : i64} {
  func.func @kernel(%arg0: i32, %arg1: memref<1x72x128xbf16, #tpu.memory_space<vmem>>, %arg2: memref<1x128xf32, #tpu.memory_space<vmem>>, %arg3: memref<1x128xf32, #tpu.memory_space<vmem>>, %arg4: memref<1x72x128xbf16, #tpu.memory_space<vmem>>) attributes {dimension_semantics = [#tpu.dimension_semantics<parallel>], iteration_bounds = array<i64: 2>, scalar_prefetch = 0 : i64, scratch_operands = 0 : i64, tpu.core_type = #tpu.core_type<tc>, window_params = [{transform_indices = @transform_0, window_bounds = array<i64: 1, 72, 128>}, {pipeline_mode = #tpu.pipeline_mode<synchronous>, transform_indices = @transform_1, window_bounds = array<i64: 1, 128>}, {pipeline_mode = #tpu.pipeline_mode<synchronous>, transform_indices = @transform_2, window_bounds = array<i64: 1, 128>}, {transform_indices = @transform_3, window_bounds = array<i64: 1, 72, 128>}]} {
    %c0 = arith.constant 0 : index
    %c0_0 = arith.constant 0 : index
    %c0_1 = arith.constant 0 : index
    %0 = vector.load %arg1[%c0, %c0_0, %c0_1] : memref<1x72x128xbf16, #tpu.memory_space<vmem>>, vector<1x72x128xbf16>
    %1 = vector.shape_cast %0 : vector<1x72x128xbf16> to vector<72x128xbf16>
    %2 = arith.extf %1 : vector<72x128xbf16> to vector<72x128xf32>
    %c0_2 = arith.constant 0 : index
    %c0_3 = arith.constant 0 : index
    %3 = vector.load %arg2[%c0_2, %c0_3] : memref<1x128xf32, #tpu.memory_space<vmem>>, vector<1x128xf32>
    %4 = vector.broadcast %3 : vector<1x128xf32> to vector<72x128xf32>
    %5 = arith.mulf %2, %4 : vector<72x128xf32>
    %c0_4 = arith.constant 0 : index
    %c0_5 = arith.constant 0 : index
    %6 = vector.load %arg3[%c0_4, %c0_5] : memref<1x128xf32, #tpu.memory_space<vmem>>, vector<1x128xf32>
    %7 = vector.broadcast %6 : vector<1x128xf32> to vector<72x128xf32>
    %8 = arith.addf %5, %7 : vector<72x128xf32>
    %9 = arith.negf %8 : vector<72x128xf32>
    %10 = math.exp %9 : vector<72x128xf32>
    %cst = arith.constant 1.000000e+00 : f32
    %11 = vector.broadcast %cst : f32 to vector<72x128xf32>
    %12 = arith.addf %11, %10 : vector<72x128xf32>
    %13 = arith.divf %11, %12 : vector<72x128xf32>
    %14 = arith.mulf %8, %13 : vector<72x128xf32>
    %15 = arith.truncf %14 : vector<72x128xf32> to vector<72x128xbf16>
    %c0_6 = arith.constant 0 : index
    %c0_7 = arith.constant 0 : index
    %c0_8 = arith.constant 0 : index
    %16 = vector.load %arg4[%c0_6, %c0_7, %c0_8] : memref<1x72x128xbf16, #tpu.memory_space<vmem>>, vector<1x72x128xbf16>
    %17 = vector.shape_cast %16 : vector<1x72x128xbf16> to vector<72x128xbf16>
    %18 = vector.shape_cast %15 : vector<72x128xbf16> to vector<1x72x128xbf16>
    tpu.vector_store %arg4[%c0_6, %c0_7, %c0_8], %18 {strides = array<i32>} : memref<1x72x128xbf16, #tpu.memory_space<vmem>>, vector<1x72x128xbf16>,
    return
  }
  func.func @transform_0(%arg0: i32) -> (i32, i32, i32) {
    %c0_i32 = arith.constant 0 : i32
    %c0_i32_0 = arith.constant 0 : i32
    %c0_i32_1 = arith.constant 0 : i32
    return %arg0, %c0_i32, %c0_i32_0 : i32, i32, i32
  }
  func.func @transform_1(%arg0: i32) -> (i32, i32) {
    %c0_i32 = arith.constant 0 : i32
    %c0_i32_0 = arith.constant 0 : i32
    %c0_i32_1 = arith.constant 0 : i32
    return %c0_i32, %c0_i32_0 : i32, i32
  }
  func.func @transform_2(%arg0: i32) -> (i32, i32) {
    %c0_i32 = arith.constant 0 : i32
    %c0_i32_0 = arith.constant 0 : i32
    %c0_i32_1 = arith.constant 0 : i32
    return %c0_i32, %c0_i32_0 : i32, i32
  }
  func.func @transform_3(%arg0: i32) -> (i32, i32, i32) {
    %c0_i32 = arith.constant 0 : i32
    %c0_i32_0 = arith.constant 0 : i32
    %c0_i32_1 = arith.constant 0 : i32
    return %arg0, %c0_i32, %c0_i32_0 : i32, i32, i32
  }
}

module attributes {stable_mosaic.version = 11 : i64} {
  func.func @kernel(%arg0: i32, %arg1: memref<4x1x90x4xbf16, #tpu.memory_space<vmem>>, %arg2: memref<36x128xbf16, #tpu.memory_space<vmem>>, %arg3: memref<1x72x128xbf16, #tpu.memory_space<vmem>>, %arg4: memref<1x1x128xf32, #tpu.memory_space<vmem>>, %arg5: memref<1x1x128xf32, #tpu.memory_space<vmem>>) attributes {dimension_semantics = [#tpu.dimension_semantics<parallel>], iteration_bounds = array<i64: 2>, scalar_prefetch = 0 : i64, scratch_operands = 0 : i64, tpu.core_type = #tpu.core_type<tc>, window_params = [{transform_indices = @transform_0, window_bounds = array<i64: 4, 1, 90, 4>}, {pipeline_mode = #tpu.pipeline_mode<synchronous>, transform_indices = @transform_1, window_bounds = array<i64: 36, 128>}, {transform_indices = @transform_2, window_bounds = array<i64: 1, 72, 128>}, {transform_indices = @transform_3, window_bounds = array<i64: 1, 1, 128>}, {transform_indices = @transform_4, window_bounds = array<i64: 1, 1, 128>}]} {
    %c0 = arith.constant 0 : index
    %c0_0 = arith.constant 0 : index
    %c0_1 = arith.constant 0 : index
    %c0_2 = arith.constant 0 : index
    %0 = vector.load %arg1[%c0, %c0_0, %c0_1, %c0_2] : memref<4x1x90x4xbf16, #tpu.memory_space<vmem>>, vector<1x1x72x4xbf16>
    %1 = vector.shape_cast %0 : vector<1x1x72x4xbf16> to vector<72x4xbf16>
    %c0_3 = arith.constant 0 : index
    %c0_4 = arith.constant 0 : index
    %2 = vector.load %arg2[%c0_3, %c0_4] : memref<36x128xbf16, #tpu.memory_space<vmem>>, vector<4x128xbf16>
    %cst = arith.constant dense<0.000000e+00> : vector<72x128xf32>
    %3 = tpu.matmul %1, %2, %cst {dimension_numbers = #tpu.dot_dimension_numbers<[1], [0], [0], [1], [0, 0, 1, 1], [], []>} : vector<72x4xbf16>, vector<4x128xbf16>, vector<72x128xf32> -> vector<72x128xf32>
    %c1 = arith.constant 1 : index
    %c0_5 = arith.constant 0 : index
    %c0_6 = arith.constant 0 : index
    %c0_7 = arith.constant 0 : index
    %4 = vector.load %arg1[%c1, %c0_5, %c0_6, %c0_7] : memref<4x1x90x4xbf16, #tpu.memory_space<vmem>>, vector<1x1x72x4xbf16>
    %5 = vector.shape_cast %4 : vector<1x1x72x4xbf16> to vector<72x4xbf16>
    %c4 = arith.constant 4 : index
    %c0_8 = arith.constant 0 : index
    %6 = vector.load %arg2[%c4, %c0_8] : memref<36x128xbf16, #tpu.memory_space<vmem>>, vector<4x128xbf16>
    %cst_9 = arith.constant dense<0.000000e+00> : vector<72x128xf32>
    %7 = tpu.matmul %5, %6, %cst_9 {dimension_numbers = #tpu.dot_dimension_numbers<[1], [0], [0], [1], [0, 0, 1, 1], [], []>} : vector<72x4xbf16>, vector<4x128xbf16>, vector<72x128xf32> -> vector<72x128xf32>
    %8 = arith.addf %3, %7 : vector<72x128xf32>
    %c0_10 = arith.constant 0 : index
    %c0_11 = arith.constant 0 : index
    %c1_12 = arith.constant 1 : index
    %c0_13 = arith.constant 0 : index
    %9 = vector.load %arg1[%c0_10, %c0_11, %c1_12, %c0_13] : memref<4x1x90x4xbf16, #tpu.memory_space<vmem>>, vector<1x1x72x4xbf16>
    %10 = vector.shape_cast %9 : vector<1x1x72x4xbf16> to vector<72x4xbf16>
    %c8 = arith.constant 8 : index
    %c0_14 = arith.constant 0 : index
    %11 = vector.load %arg2[%c8, %c0_14] : memref<36x128xbf16, #tpu.memory_space<vmem>>, vector<4x128xbf16>
    %cst_15 = arith.constant dense<0.000000e+00> : vector<72x128xf32>
    %12 = tpu.matmul %10, %11, %cst_15 {dimension_numbers = #tpu.dot_dimension_numbers<[1], [0], [0], [1], [0, 0, 1, 1], [], []>} : vector<72x4xbf16>, vector<4x128xbf16>, vector<72x128xf32> -> vector<72x128xf32>
    %13 = arith.addf %8, %12 : vector<72x128xf32>
    %c2 = arith.constant 2 : index
    %c0_16 = arith.constant 0 : index
    %c0_17 = arith.constant 0 : index
    %c0_18 = arith.constant 0 : index
    %14 = vector.load %arg1[%c2, %c0_16, %c0_17, %c0_18] : memref<4x1x90x4xbf16, #tpu.memory_space<vmem>>, vector<1x1x72x4xbf16>
    %15 = vector.shape_cast %14 : vector<1x1x72x4xbf16> to vector<72x4xbf16>
    %c12 = arith.constant 12 : index
    %c0_19 = arith.constant 0 : index
    %16 = vector.load %arg2[%c12, %c0_19] : memref<36x128xbf16, #tpu.memory_space<vmem>>, vector<4x128xbf16>
    %cst_20 = arith.constant dense<0.000000e+00> : vector<72x128xf32>
    %17 = tpu.matmul %15, %16, %cst_20 {dimension_numbers = #tpu.dot_dimension_numbers<[1], [0], [0], [1], [0, 0, 1, 1], [], []>} : vector<72x4xbf16>, vector<4x128xbf16>, vector<72x128xf32> -> vector<72x128xf32>
    %18 = arith.addf %13, %17 : vector<72x128xf32>
    %c3 = arith.constant 3 : index
    %c0_21 = arith.constant 0 : index
    %c0_22 = arith.constant 0 : index
    %c0_23 = arith.constant 0 : index
    %19 = vector.load %arg1[%c3, %c0_21, %c0_22, %c0_23] : memref<4x1x90x4xbf16, #tpu.memory_space<vmem>>, vector<1x1x72x4xbf16>
    %20 = vector.shape_cast %19 : vector<1x1x72x4xbf16> to vector<72x4xbf16>
    %c16 = arith.constant 16 : index
    %c0_24 = arith.constant 0 : index
    %21 = vector.load %arg2[%c16, %c0_24] : memref<36x128xbf16, #tpu.memory_space<vmem>>, vector<4x128xbf16>
    %cst_25 = arith.constant dense<0.000000e+00> : vector<72x128xf32>
    %22 = tpu.matmul %20, %21, %cst_25 {dimension_numbers = #tpu.dot_dimension_numbers<[1], [0], [0], [1], [0, 0, 1, 1], [], []>} : vector<72x4xbf16>, vector<4x128xbf16>, vector<72x128xf32> -> vector<72x128xf32>
    %23 = arith.addf %18, %22 : vector<72x128xf32>
    %c2_26 = arith.constant 2 : index
    %c0_27 = arith.constant 0 : index
    %c1_28 = arith.constant 1 : index
    %c0_29 = arith.constant 0 : index
    %24 = vector.load %arg1[%c2_26, %c0_27, %c1_28, %c0_29] : memref<4x1x90x4xbf16, #tpu.memory_space<vmem>>, vector<1x1x72x4xbf16>
    %25 = vector.shape_cast %24 : vector<1x1x72x4xbf16> to vector<72x4xbf16>
    %c20 = arith.constant 20 : index
    %c0_30 = arith.constant 0 : index
    %26 = vector.load %arg2[%c20, %c0_30] : memref<36x128xbf16, #tpu.memory_space<vmem>>, vector<4x128xbf16>
    %cst_31 = arith.constant dense<0.000000e+00> : vector<72x128xf32>
    %27 = tpu.matmul %25, %26, %cst_31 {dimension_numbers = #tpu.dot_dimension_numbers<[1], [0], [0], [1], [0, 0, 1, 1], [], []>} : vector<72x4xbf16>, vector<4x128xbf16>, vector<72x128xf32> -> vector<72x128xf32>
    %28 = arith.addf %23, %27 : vector<72x128xf32>
    %c0_32 = arith.constant 0 : index
    %c0_33 = arith.constant 0 : index
    %c9 = arith.constant 9 : index
    %c0_34 = arith.constant 0 : index
    %29 = vector.load %arg1[%c0_32, %c0_33, %c9, %c0_34] : memref<4x1x90x4xbf16, #tpu.memory_space<vmem>>, vector<1x1x72x4xbf16>
    %30 = vector.shape_cast %29 : vector<1x1x72x4xbf16> to vector<72x4xbf16>
    %c24 = arith.constant 24 : index
    %c0_35 = arith.constant 0 : index
    %31 = vector.load %arg2[%c24, %c0_35] : memref<36x128xbf16, #tpu.memory_space<vmem>>, vector<4x128xbf16>
    %cst_36 = arith.constant dense<0.000000e+00> : vector<72x128xf32>
    %32 = tpu.matmul %30, %31, %cst_36 {dimension_numbers = #tpu.dot_dimension_numbers<[1], [0], [0], [1], [0, 0, 1, 1], [], []>} : vector<72x4xbf16>, vector<4x128xbf16>, vector<72x128xf32> -> vector<72x128xf32>
    %33 = arith.addf %28, %32 : vector<72x128xf32>
    %c1_37 = arith.constant 1 : index
    %c0_38 = arith.constant 0 : index
    %c9_39 = arith.constant 9 : index
    %c0_40 = arith.constant 0 : index
    %34 = vector.load %arg1[%c1_37, %c0_38, %c9_39, %c0_40] : memref<4x1x90x4xbf16, #tpu.memory_space<vmem>>, vector<1x1x72x4xbf16>
    %35 = vector.shape_cast %34 : vector<1x1x72x4xbf16> to vector<72x4xbf16>
    %c28 = arith.constant 28 : index
    %c0_41 = arith.constant 0 : index
    %36 = vector.load %arg2[%c28, %c0_41] : memref<36x128xbf16, #tpu.memory_space<vmem>>, vector<4x128xbf16>
    %cst_42 = arith.constant dense<0.000000e+00> : vector<72x128xf32>
    %37 = tpu.matmul %35, %36, %cst_42 {dimension_numbers = #tpu.dot_dimension_numbers<[1], [0], [0], [1], [0, 0, 1, 1], [], []>} : vector<72x4xbf16>, vector<4x128xbf16>, vector<72x128xf32> -> vector<72x128xf32>
    %38 = arith.addf %33, %37 : vector<72x128xf32>
    %c0_43 = arith.constant 0 : index
    %c0_44 = arith.constant 0 : index
    %c10 = arith.constant 10 : index
    %c0_45 = arith.constant 0 : index
    %39 = vector.load %arg1[%c0_43, %c0_44, %c10, %c0_45] : memref<4x1x90x4xbf16, #tpu.memory_space<vmem>>, vector<1x1x72x4xbf16>
    %40 = vector.shape_cast %39 : vector<1x1x72x4xbf16> to vector<72x4xbf16>
    %c32 = arith.constant 32 : index
    %c0_46 = arith.constant 0 : index
    %41 = vector.load %arg2[%c32, %c0_46] : memref<36x128xbf16, #tpu.memory_space<vmem>>, vector<4x128xbf16>
    %cst_47 = arith.constant dense<0.000000e+00> : vector<72x128xf32>
    %42 = tpu.matmul %40, %41, %cst_47 {dimension_numbers = #tpu.dot_dimension_numbers<[1], [0], [0], [1], [0, 0, 1, 1], [], []>} : vector<72x4xbf16>, vector<4x128xbf16>, vector<72x128xf32> -> vector<72x128xf32>
    %43 = arith.addf %38, %42 : vector<72x128xf32>
    %44 = tpu.iota {dimensions = array<i32: 0>} : vector<72x1xi32>
    %c9_i32 = arith.constant 9 : i32
    %c0_i32 = arith.constant 0 : i32
    %45 = arith.cmpi eq, %c9_i32, %c0_i32 : i32
    %c1_i32 = arith.constant 1 : i32
    %46 = arith.select %45, %c1_i32, %c9_i32 : i32
    %47 = vector.broadcast %46 : i32 to vector<72x1xi32>
    %48 = arith.remsi %44, %47 : vector<72x1xi32>
    %c0_i32_48 = arith.constant 0 : i32
    %49 = vector.broadcast %c0_i32_48 : i32 to vector<72x1xi32>
    %50 = arith.cmpi ne, %48, %49 : vector<72x1xi32>
    %c0_i32_49 = arith.constant 0 : i32
    %51 = vector.broadcast %c0_i32_49 : i32 to vector<72x1xi32>
    %52 = arith.cmpi slt, %48, %51 : vector<72x1xi32>
    %c0_i32_50 = arith.constant 0 : i32
    %53 = arith.cmpi slt, %46, %c0_i32_50 : i32
    %54 = vector.broadcast %53 : i1 to vector<72x1xi1>
    %55 = vector.broadcast %54 : vector<72x1xi1> to vector<72x1xi1>
    %56 = arith.xori %52, %55 : vector<72x1xi1>
    %57 = arith.andi %56, %50 : vector<72x1xi1>
    %58 = vector.broadcast %46 : i32 to vector<72x1xi32>
    %59 = arith.addi %48, %58 : vector<72x1xi32>
    %60 = arith.select %57, %59, %48 : vector<72x1xi1>, vector<72x1xi32>
    %c8_i32 = arith.constant 8 : i32
    %61 = vector.broadcast %c8_i32 : i32 to vector<72x1xi32>
    %62 = arith.cmpi slt, %60, %61 : vector<72x1xi32>
    %cst_51 = arith.constant 0.000000e+00 : f32
    %63 = vector.shape_cast %62 : vector<72x1xi1> to vector<72x1xi1>
    %64 = vector.broadcast %63 : vector<72x1xi1> to vector<72x128xi1>
    %65 = vector.broadcast %cst_51 : f32 to vector<72x128xf32>
    %66 = arith.select %64, %43, %65 : vector<72x128xi1>, vector<72x128xf32>
    %67 = arith.truncf %66 : vector<72x128xf32> to vector<72x128xbf16>
    %c0_52 = arith.constant 0 : index
    %c0_53 = arith.constant 0 : index
    %c0_54 = arith.constant 0 : index
    %68 = vector.load %arg3[%c0_52, %c0_53, %c0_54] : memref<1x72x128xbf16, #tpu.memory_space<vmem>>, vector<1x72x128xbf16>
    %69 = vector.shape_cast %68 : vector<1x72x128xbf16> to vector<72x128xbf16>
    %70 = vector.shape_cast %67 : vector<72x128xbf16> to vector<1x72x128xbf16>
    tpu.vector_store %arg3[%c0_52, %c0_53, %c0_54], %70 {strides = array<i32>} : memref<1x72x128xbf16, #tpu.memory_space<vmem>>, vector<1x72x128xbf16>,
    %cst_55 = arith.constant dense<0.000000e+00> : vector<128xf32>
    %71 = vector.multi_reduction <add>, %66, %cst_55 [0] : vector<72x128xf32> to vector<128xf32>
    %72 = vector.shape_cast %71 : vector<128xf32> to vector<1x128xf32>
    %c0_56 = arith.constant 0 : index
    %c0_57 = arith.constant 0 : index
    %c0_58 = arith.constant 0 : index
    %73 = vector.load %arg4[%c0_56, %c0_57, %c0_58] : memref<1x1x128xf32, #tpu.memory_space<vmem>>, vector<1x1x128xf32>
    %74 = vector.shape_cast %73 : vector<1x1x128xf32> to vector<1x128xf32>
    %75 = vector.shape_cast %72 : vector<1x128xf32> to vector<1x1x128xf32>
    tpu.vector_store %arg4[%c0_56, %c0_57, %c0_58], %75 {strides = array<i32>} : memref<1x1x128xf32, #tpu.memory_space<vmem>>, vector<1x1x128xf32>,
    %76 = arith.mulf %66, %66 : vector<72x128xf32>
    %cst_59 = arith.constant dense<0.000000e+00> : vector<128xf32>
    %77 = vector.multi_reduction <add>, %76, %cst_59 [0] : vector<72x128xf32> to vector<128xf32>
    %78 = vector.shape_cast %77 : vector<128xf32> to vector<1x128xf32>
    %c0_60 = arith.constant 0 : index
    %c0_61 = arith.constant 0 : index
    %c0_62 = arith.constant 0 : index
    %79 = vector.load %arg5[%c0_60, %c0_61, %c0_62] : memref<1x1x128xf32, #tpu.memory_space<vmem>>, vector<1x1x128xf32>
    %80 = vector.shape_cast %79 : vector<1x1x128xf32> to vector<1x128xf32>
    %81 = vector.shape_cast %78 : vector<1x128xf32> to vector<1x1x128xf32>
    tpu.vector_store %arg5[%c0_60, %c0_61, %c0_62], %81 {strides = array<i32>} : memref<1x1x128xf32, #tpu.memory_space<vmem>>, vector<1x1x128xf32>,
    return
  }
  func.func @transform_0(%arg0: i32) -> (i32, i32, i32, i32) {
    %c0_i32 = arith.constant 0 : i32
    %c0_i32_0 = arith.constant 0 : i32
    %c0_i32_1 = arith.constant 0 : i32
    %c0_i32_2 = arith.constant 0 : i32
    return %c0_i32, %arg0, %c0_i32_0, %c0_i32_1 : i32, i32, i32, i32
  }
  func.func @transform_1(%arg0: i32) -> (i32, i32) {
    %c0_i32 = arith.constant 0 : i32
    %c0_i32_0 = arith.constant 0 : i32
    %c0_i32_1 = arith.constant 0 : i32
    return %c0_i32, %c0_i32_0 : i32, i32
  }
  func.func @transform_2(%arg0: i32) -> (i32, i32, i32) {
    %c0_i32 = arith.constant 0 : i32
    %c0_i32_0 = arith.constant 0 : i32
    %c0_i32_1 = arith.constant 0 : i32
    return %arg0, %c0_i32, %c0_i32_0 : i32, i32, i32
  }
  func.func @transform_3(%arg0: i32) -> (i32, i32, i32) {
    %c0_i32 = arith.constant 0 : i32
    %c0_i32_0 = arith.constant 0 : i32
    %c0_i32_1 = arith.constant 0 : i32
    return %arg0, %c0_i32, %c0_i32_0 : i32, i32, i32
  }
  func.func @transform_4(%arg0: i32) -> (i32, i32, i32) {
    %c0_i32 = arith.constant 0 : i32
    %c0_i32_0 = arith.constant 0 : i32
    %c0_i32_1 = arith.constant 0 : i32
    return %arg0, %c0_i32, %c0_i32_0 : i32, i32, i32
  }
}

module attributes {stable_mosaic.version = 11 : i64} {
  func.func @kernel(%arg0: i32, %arg1: memref<1x1x110x128xbf16, #tpu.memory_space<vmem>>, %arg2: memref<1152x128xbf16, #tpu.memory_space<vmem>>, %arg3: memref<1x80x128xbf16, #tpu.memory_space<vmem>>, %arg4: memref<1x1x128xf32, #tpu.memory_space<vmem>>, %arg5: memref<1x1x128xf32, #tpu.memory_space<vmem>>) attributes {dimension_semantics = [#tpu.dimension_semantics<parallel>], iteration_bounds = array<i64: 2>, scalar_prefetch = 0 : i64, scratch_operands = 0 : i64, tpu.core_type = #tpu.core_type<tc>, window_params = [{transform_indices = @transform_0, window_bounds = array<i64: 1, 1, 110, 128>}, {pipeline_mode = #tpu.pipeline_mode<synchronous>, transform_indices = @transform_1, window_bounds = array<i64: 1152, 128>}, {transform_indices = @transform_2, window_bounds = array<i64: 1, 80, 128>}, {transform_indices = @transform_3, window_bounds = array<i64: 1, 1, 128>}, {transform_indices = @transform_4, window_bounds = array<i64: 1, 1, 128>}]} {
    %c0 = arith.constant 0 : index
    %c0_0 = arith.constant 0 : index
    %c0_1 = arith.constant 0 : index
    %c0_2 = arith.constant 0 : index
    %0 = vector.load %arg1[%c0, %c0_0, %c0_1, %c0_2] : memref<1x1x110x128xbf16, #tpu.memory_space<vmem>>, vector<1x1x80x128xbf16>
    %1 = vector.shape_cast %0 : vector<1x1x80x128xbf16> to vector<80x128xbf16>
    %c0_3 = arith.constant 0 : index
    %c0_4 = arith.constant 0 : index
    %2 = vector.load %arg2[%c0_3, %c0_4] : memref<1152x128xbf16, #tpu.memory_space<vmem>>, vector<128x128xbf16>
    %cst = arith.constant dense<0.000000e+00> : vector<80x128xf32>
    %3 = tpu.matmul %1, %2, %cst {dimension_numbers = #tpu.dot_dimension_numbers<[1], [0], [0], [1], [0, 0, 1, 1], [], []>} : vector<80x128xbf16>, vector<128x128xbf16>, vector<80x128xf32> -> vector<80x128xf32>
    %c0_5 = arith.constant 0 : index
    %c0_6 = arith.constant 0 : index
    %c1 = arith.constant 1 : index
    %c0_7 = arith.constant 0 : index
    %4 = vector.load %arg1[%c0_5, %c0_6, %c1, %c0_7] : memref<1x1x110x128xbf16, #tpu.memory_space<vmem>>, vector<1x1x80x128xbf16>
    %5 = vector.shape_cast %4 : vector<1x1x80x128xbf16> to vector<80x128xbf16>
    %c128 = arith.constant 128 : index
    %c0_8 = arith.constant 0 : index
    %6 = vector.load %arg2[%c128, %c0_8] : memref<1152x128xbf16, #tpu.memory_space<vmem>>, vector<128x128xbf16>
    %cst_9 = arith.constant dense<0.000000e+00> : vector<80x128xf32>
    %7 = tpu.matmul %5, %6, %cst_9 {dimension_numbers = #tpu.dot_dimension_numbers<[1], [0], [0], [1], [0, 0, 1, 1], [], []>} : vector<80x128xbf16>, vector<128x128xbf16>, vector<80x128xf32> -> vector<80x128xf32>
    %8 = arith.addf %3, %7 : vector<80x128xf32>
    %c0_10 = arith.constant 0 : index
    %c0_11 = arith.constant 0 : index
    %c2 = arith.constant 2 : index
    %c0_12 = arith.constant 0 : index
    %9 = vector.load %arg1[%c0_10, %c0_11, %c2, %c0_12] : memref<1x1x110x128xbf16, #tpu.memory_space<vmem>>, vector<1x1x80x128xbf16>
    %10 = vector.shape_cast %9 : vector<1x1x80x128xbf16> to vector<80x128xbf16>
    %c256 = arith.constant 256 : index
    %c0_13 = arith.constant 0 : index
    %11 = vector.load %arg2[%c256, %c0_13] : memref<1152x128xbf16, #tpu.memory_space<vmem>>, vector<128x128xbf16>
    %cst_14 = arith.constant dense<0.000000e+00> : vector<80x128xf32>
    %12 = tpu.matmul %10, %11, %cst_14 {dimension_numbers = #tpu.dot_dimension_numbers<[1], [0], [0], [1], [0, 0, 1, 1], [], []>} : vector<80x128xbf16>, vector<128x128xbf16>, vector<80x128xf32> -> vector<80x128xf32>
    %13 = arith.addf %8, %12 : vector<80x128xf32>
    %c0_15 = arith.constant 0 : index
    %c0_16 = arith.constant 0 : index
    %c10 = arith.constant 10 : index
    %c0_17 = arith.constant 0 : index
    %14 = vector.load %arg1[%c0_15, %c0_16, %c10, %c0_17] : memref<1x1x110x128xbf16, #tpu.memory_space<vmem>>, vector<1x1x80x128xbf16>
    %15 = vector.shape_cast %14 : vector<1x1x80x128xbf16> to vector<80x128xbf16>
    %c384 = arith.constant 384 : index
    %c0_18 = arith.constant 0 : index
    %16 = vector.load %arg2[%c384, %c0_18] : memref<1152x128xbf16, #tpu.memory_space<vmem>>, vector<128x128xbf16>
    %cst_19 = arith.constant dense<0.000000e+00> : vector<80x128xf32>
    %17 = tpu.matmul %15, %16, %cst_19 {dimension_numbers = #tpu.dot_dimension_numbers<[1], [0], [0], [1], [0, 0, 1, 1], [], []>} : vector<80x128xbf16>, vector<128x128xbf16>, vector<80x128xf32> -> vector<80x128xf32>
    %18 = arith.addf %13, %17 : vector<80x128xf32>
    %c0_20 = arith.constant 0 : index
    %c0_21 = arith.constant 0 : index
    %c11 = arith.constant 11 : index
    %c0_22 = arith.constant 0 : index
    %19 = vector.load %arg1[%c0_20, %c0_21, %c11, %c0_22] : memref<1x1x110x128xbf16, #tpu.memory_space<vmem>>, vector<1x1x80x128xbf16>
    %20 = vector.shape_cast %19 : vector<1x1x80x128xbf16> to vector<80x128xbf16>
    %c512 = arith.constant 512 : index
    %c0_23 = arith.constant 0 : index
    %21 = vector.load %arg2[%c512, %c0_23] : memref<1152x128xbf16, #tpu.memory_space<vmem>>, vector<128x128xbf16>
    %cst_24 = arith.constant dense<0.000000e+00> : vector<80x128xf32>
    %22 = tpu.matmul %20, %21, %cst_24 {dimension_numbers = #tpu.dot_dimension_numbers<[1], [0], [0], [1], [0, 0, 1, 1], [], []>} : vector<80x128xbf16>, vector<128x128xbf16>, vector<80x128xf32> -> vector<80x128xf32>
    %23 = arith.addf %18, %22 : vector<80x128xf32>
    %c0_25 = arith.constant 0 : index
    %c0_26 = arith.constant 0 : index
    %c12 = arith.constant 12 : index
    %c0_27 = arith.constant 0 : index
    %24 = vector.load %arg1[%c0_25, %c0_26, %c12, %c0_27] : memref<1x1x110x128xbf16, #tpu.memory_space<vmem>>, vector<1x1x80x128xbf16>
    %25 = vector.shape_cast %24 : vector<1x1x80x128xbf16> to vector<80x128xbf16>
    %c640 = arith.constant 640 : index
    %c0_28 = arith.constant 0 : index
    %26 = vector.load %arg2[%c640, %c0_28] : memref<1152x128xbf16, #tpu.memory_space<vmem>>, vector<128x128xbf16>
    %cst_29 = arith.constant dense<0.000000e+00> : vector<80x128xf32>
    %27 = tpu.matmul %25, %26, %cst_29 {dimension_numbers = #tpu.dot_dimension_numbers<[1], [0], [0], [1], [0, 0, 1, 1], [], []>} : vector<80x128xbf16>, vector<128x128xbf16>, vector<80x128xf32> -> vector<80x128xf32>
    %28 = arith.addf %23, %27 : vector<80x128xf32>
    %c0_30 = arith.constant 0 : index
    %c0_31 = arith.constant 0 : index
    %c20 = arith.constant 20 : index
    %c0_32 = arith.constant 0 : index
    %29 = vector.load %arg1[%c0_30, %c0_31, %c20, %c0_32] : memref<1x1x110x128xbf16, #tpu.memory_space<vmem>>, vector<1x1x80x128xbf16>
    %30 = vector.shape_cast %29 : vector<1x1x80x128xbf16> to vector<80x128xbf16>
    %c768 = arith.constant 768 : index
    %c0_33 = arith.constant 0 : index
    %31 = vector.load %arg2[%c768, %c0_33] : memref<1152x128xbf16, #tpu.memory_space<vmem>>, vector<128x128xbf16>
    %cst_34 = arith.constant dense<0.000000e+00> : vector<80x128xf32>
    %32 = tpu.matmul %30, %31, %cst_34 {dimension_numbers = #tpu.dot_dimension_numbers<[1], [0], [0], [1], [0, 0, 1, 1], [], []>} : vector<80x128xbf16>, vector<128x128xbf16>, vector<80x128xf32> -> vector<80x128xf32>
    %33 = arith.addf %28, %32 : vector<80x128xf32>
    %c0_35 = arith.constant 0 : index
    %c0_36 = arith.constant 0 : index
    %c21 = arith.constant 21 : index
    %c0_37 = arith.constant 0 : index
    %34 = vector.load %arg1[%c0_35, %c0_36, %c21, %c0_37] : memref<1x1x110x128xbf16, #tpu.memory_space<vmem>>, vector<1x1x80x128xbf16>
    %35 = vector.shape_cast %34 : vector<1x1x80x128xbf16> to vector<80x128xbf16>
    %c896 = arith.constant 896 : index
    %c0_38 = arith.constant 0 : index
    %36 = vector.load %arg2[%c896, %c0_38] : memref<1152x128xbf16, #tpu.memory_space<vmem>>, vector<128x128xbf16>
    %cst_39 = arith.constant dense<0.000000e+00> : vector<80x128xf32>
    %37 = tpu.matmul %35, %36, %cst_39 {dimension_numbers = #tpu.dot_dimension_numbers<[1], [0], [0], [1], [0, 0, 1, 1], [], []>} : vector<80x128xbf16>, vector<128x128xbf16>, vector<80x128xf32> -> vector<80x128xf32>
    %38 = arith.addf %33, %37 : vector<80x128xf32>
    %c0_40 = arith.constant 0 : index
    %c0_41 = arith.constant 0 : index
    %c22 = arith.constant 22 : index
    %c0_42 = arith.constant 0 : index
    %39 = vector.load %arg1[%c0_40, %c0_41, %c22, %c0_42] : memref<1x1x110x128xbf16, #tpu.memory_space<vmem>>, vector<1x1x80x128xbf16>
    %40 = vector.shape_cast %39 : vector<1x1x80x128xbf16> to vector<80x128xbf16>
    %c1024 = arith.constant 1024 : index
    %c0_43 = arith.constant 0 : index
    %41 = vector.load %arg2[%c1024, %c0_43] : memref<1152x128xbf16, #tpu.memory_space<vmem>>, vector<128x128xbf16>
    %cst_44 = arith.constant dense<0.000000e+00> : vector<80x128xf32>
    %42 = tpu.matmul %40, %41, %cst_44 {dimension_numbers = #tpu.dot_dimension_numbers<[1], [0], [0], [1], [0, 0, 1, 1], [], []>} : vector<80x128xbf16>, vector<128x128xbf16>, vector<80x128xf32> -> vector<80x128xf32>
    %43 = arith.addf %38, %42 : vector<80x128xf32>
    %44 = tpu.iota {dimensions = array<i32: 0>} : vector<80x1xi32>
    %c10_i32 = arith.constant 10 : i32
    %c0_i32 = arith.constant 0 : i32
    %45 = arith.cmpi eq, %c10_i32, %c0_i32 : i32
    %c1_i32 = arith.constant 1 : i32
    %46 = arith.select %45, %c1_i32, %c10_i32 : i32
    %47 = vector.broadcast %46 : i32 to vector<80x1xi32>
    %48 = arith.remsi %44, %47 : vector<80x1xi32>
    %c0_i32_45 = arith.constant 0 : i32
    %49 = vector.broadcast %c0_i32_45 : i32 to vector<80x1xi32>
    %50 = arith.cmpi ne, %48, %49 : vector<80x1xi32>
    %c0_i32_46 = arith.constant 0 : i32
    %51 = vector.broadcast %c0_i32_46 : i32 to vector<80x1xi32>
    %52 = arith.cmpi slt, %48, %51 : vector<80x1xi32>
    %c0_i32_47 = arith.constant 0 : i32
    %53 = arith.cmpi slt, %46, %c0_i32_47 : i32
    %54 = vector.broadcast %53 : i1 to vector<80x1xi1>
    %55 = vector.broadcast %54 : vector<80x1xi1> to vector<80x1xi1>
    %56 = arith.xori %52, %55 : vector<80x1xi1>
    %57 = arith.andi %56, %50 : vector<80x1xi1>
    %58 = vector.broadcast %46 : i32 to vector<80x1xi32>
    %59 = arith.addi %48, %58 : vector<80x1xi32>
    %60 = arith.select %57, %59, %48 : vector<80x1xi1>, vector<80x1xi32>
    %c8_i32 = arith.constant 8 : i32
    %61 = vector.broadcast %c8_i32 : i32 to vector<80x1xi32>
    %62 = arith.cmpi slt, %60, %61 : vector<80x1xi32>
    %cst_48 = arith.constant 0.000000e+00 : f32
    %63 = vector.shape_cast %62 : vector<80x1xi1> to vector<80x1xi1>
    %64 = vector.broadcast %63 : vector<80x1xi1> to vector<80x128xi1>
    %65 = vector.broadcast %cst_48 : f32 to vector<80x128xf32>
    %66 = arith.select %64, %43, %65 : vector<80x128xi1>, vector<80x128xf32>
    %67 = arith.truncf %66 : vector<80x128xf32> to vector<80x128xbf16>
    %c0_49 = arith.constant 0 : index
    %c0_50 = arith.constant 0 : index
    %c0_51 = arith.constant 0 : index
    %68 = vector.load %arg3[%c0_49, %c0_50, %c0_51] : memref<1x80x128xbf16, #tpu.memory_space<vmem>>, vector<1x80x128xbf16>
    %69 = vector.shape_cast %68 : vector<1x80x128xbf16> to vector<80x128xbf16>
    %70 = vector.shape_cast %67 : vector<80x128xbf16> to vector<1x80x128xbf16>
    tpu.vector_store %arg3[%c0_49, %c0_50, %c0_51], %70 {strides = array<i32>} : memref<1x80x128xbf16, #tpu.memory_space<vmem>>, vector<1x80x128xbf16>,
    %cst_52 = arith.constant dense<0.000000e+00> : vector<128xf32>
    %71 = vector.multi_reduction <add>, %66, %cst_52 [0] : vector<80x128xf32> to vector<128xf32>
    %72 = vector.shape_cast %71 : vector<128xf32> to vector<1x128xf32>
    %c0_53 = arith.constant 0 : index
    %c0_54 = arith.constant 0 : index
    %c0_55 = arith.constant 0 : index
    %73 = vector.load %arg4[%c0_53, %c0_54, %c0_55] : memref<1x1x128xf32, #tpu.memory_space<vmem>>, vector<1x1x128xf32>
    %74 = vector.shape_cast %73 : vector<1x1x128xf32> to vector<1x128xf32>
    %75 = vector.shape_cast %72 : vector<1x128xf32> to vector<1x1x128xf32>
    tpu.vector_store %arg4[%c0_53, %c0_54, %c0_55], %75 {strides = array<i32>} : memref<1x1x128xf32, #tpu.memory_space<vmem>>, vector<1x1x128xf32>,
    %76 = arith.mulf %66, %66 : vector<80x128xf32>
    %cst_56 = arith.constant dense<0.000000e+00> : vector<128xf32>
    %77 = vector.multi_reduction <add>, %76, %cst_56 [0] : vector<80x128xf32> to vector<128xf32>
    %78 = vector.shape_cast %77 : vector<128xf32> to vector<1x128xf32>
    %c0_57 = arith.constant 0 : index
    %c0_58 = arith.constant 0 : index
    %c0_59 = arith.constant 0 : index
    %79 = vector.load %arg5[%c0_57, %c0_58, %c0_59] : memref<1x1x128xf32, #tpu.memory_space<vmem>>, vector<1x1x128xf32>
    %80 = vector.shape_cast %79 : vector<1x1x128xf32> to vector<1x128xf32>
    %81 = vector.shape_cast %78 : vector<1x128xf32> to vector<1x1x128xf32>
    tpu.vector_store %arg5[%c0_57, %c0_58, %c0_59], %81 {strides = array<i32>} : memref<1x1x128xf32, #tpu.memory_space<vmem>>, vector<1x1x128xf32>,
    return
  }
  func.func @transform_0(%arg0: i32) -> (i32, i32, i32, i32) {
    %c0_i32 = arith.constant 0 : i32
    %c0_i32_0 = arith.constant 0 : i32
    %c0_i32_1 = arith.constant 0 : i32
    %c0_i32_2 = arith.constant 0 : i32
    return %c0_i32, %arg0, %c0_i32_0, %c0_i32_1 : i32, i32, i32, i32
  }
  func.func @transform_1(%arg0: i32) -> (i32, i32) {
    %c0_i32 = arith.constant 0 : i32
    %c0_i32_0 = arith.constant 0 : i32
    %c0_i32_1 = arith.constant 0 : i32
    return %c0_i32, %c0_i32_0 : i32, i32
  }
  func.func @transform_2(%arg0: i32) -> (i32, i32, i32) {
    %c0_i32 = arith.constant 0 : i32
    %c0_i32_0 = arith.constant 0 : i32
    %c0_i32_1 = arith.constant 0 : i32
    return %arg0, %c0_i32, %c0_i32_0 : i32, i32, i32
  }
  func.func @transform_3(%arg0: i32) -> (i32, i32, i32) {
    %c0_i32 = arith.constant 0 : i32
    %c0_i32_0 = arith.constant 0 : i32
    %c0_i32_1 = arith.constant 0 : i32
    return %arg0, %c0_i32, %c0_i32_0 : i32, i32, i32
  }
  func.func @transform_4(%arg0: i32) -> (i32, i32, i32) {
    %c0_i32 = arith.constant 0 : i32
    %c0_i32_0 = arith.constant 0 : i32
    %c0_i32_1 = arith.constant 0 : i32
    return %arg0, %c0_i32, %c0_i32_0 : i32, i32, i32
  }
}

module attributes {stable_mosaic.version = 11 : i64} {
  func.func @kernel(%arg0: i32, %arg1: memref<1x80x128xbf16, #tpu.memory_space<vmem>>, %arg2: memref<1x128xf32, #tpu.memory_space<vmem>>, %arg3: memref<1x128xf32, #tpu.memory_space<vmem>>, %arg4: memref<1x80x128xbf16, #tpu.memory_space<vmem>>) attributes {dimension_semantics = [#tpu.dimension_semantics<parallel>], iteration_bounds = array<i64: 2>, scalar_prefetch = 0 : i64, scratch_operands = 0 : i64, tpu.core_type = #tpu.core_type<tc>, window_params = [{transform_indices = @transform_0, window_bounds = array<i64: 1, 80, 128>}, {pipeline_mode = #tpu.pipeline_mode<synchronous>, transform_indices = @transform_1, window_bounds = array<i64: 1, 128>}, {pipeline_mode = #tpu.pipeline_mode<synchronous>, transform_indices = @transform_2, window_bounds = array<i64: 1, 128>}, {transform_indices = @transform_3, window_bounds = array<i64: 1, 80, 128>}]} {
    %c0 = arith.constant 0 : index
    %c0_0 = arith.constant 0 : index
    %c0_1 = arith.constant 0 : index
    %0 = vector.load %arg1[%c0, %c0_0, %c0_1] : memref<1x80x128xbf16, #tpu.memory_space<vmem>>, vector<1x80x128xbf16>
    %1 = vector.shape_cast %0 : vector<1x80x128xbf16> to vector<80x128xbf16>
    %2 = arith.extf %1 : vector<80x128xbf16> to vector<80x128xf32>
    %c0_2 = arith.constant 0 : index
    %c0_3 = arith.constant 0 : index
    %3 = vector.load %arg2[%c0_2, %c0_3] : memref<1x128xf32, #tpu.memory_space<vmem>>, vector<1x128xf32>
    %4 = vector.broadcast %3 : vector<1x128xf32> to vector<80x128xf32>
    %5 = arith.mulf %2, %4 : vector<80x128xf32>
    %c0_4 = arith.constant 0 : index
    %c0_5 = arith.constant 0 : index
    %6 = vector.load %arg3[%c0_4, %c0_5] : memref<1x128xf32, #tpu.memory_space<vmem>>, vector<1x128xf32>
    %7 = vector.broadcast %6 : vector<1x128xf32> to vector<80x128xf32>
    %8 = arith.addf %5, %7 : vector<80x128xf32>
    %9 = arith.truncf %8 : vector<80x128xf32> to vector<80x128xbf16>
    %c0_6 = arith.constant 0 : index
    %c0_7 = arith.constant 0 : index
    %c0_8 = arith.constant 0 : index
    %10 = vector.load %arg4[%c0_6, %c0_7, %c0_8] : memref<1x80x128xbf16, #tpu.memory_space<vmem>>, vector<1x80x128xbf16>
    %11 = vector.shape_cast %10 : vector<1x80x128xbf16> to vector<80x128xbf16>
    %12 = vector.shape_cast %9 : vector<80x128xbf16> to vector<1x80x128xbf16>
    tpu.vector_store %arg4[%c0_6, %c0_7, %c0_8], %12 {strides = array<i32>} : memref<1x80x128xbf16, #tpu.memory_space<vmem>>, vector<1x80x128xbf16>,
    return
  }
  func.func @transform_0(%arg0: i32) -> (i32, i32, i32) {
    %c0_i32 = arith.constant 0 : i32
    %c0_i32_0 = arith.constant 0 : i32
    %c0_i32_1 = arith.constant 0 : i32
    return %arg0, %c0_i32, %c0_i32_0 : i32, i32, i32
  }
  func.func @transform_1(%arg0: i32) -> (i32, i32) {
    %c0_i32 = arith.constant 0 : i32
    %c0_i32_0 = arith.constant 0 : i32
    %c0_i32_1 = arith.constant 0 : i32
    return %c0_i32, %c0_i32_0 : i32, i32
  }
  func.func @transform_2(%arg0: i32) -> (i32, i32) {
    %c0_i32 = arith.constant 0 : i32
    %c0_i32_0 = arith.constant 0 : i32
    %c0_i32_1 = arith.constant 0 : i32
    return %c0_i32, %c0_i32_0 : i32, i32
  }
  func.func @transform_3(%arg0: i32) -> (i32, i32, i32) {
    %c0_i32 = arith.constant 0 : i32
    %c0_i32_0 = arith.constant 0 : i32
    %c0_i32_1 = arith.constant 0 : i32
    return %arg0, %c0_i32, %c0_i32_0 : i32, i32, i32
  }
}

module attributes {stable_mosaic.version = 11 : i64} {
  func.func @kernel(%arg0: i32, %arg1: memref<1x1x80x4xbf16, #tpu.memory_space<vmem>>, %arg2: memref<4x128xbf16, #tpu.memory_space<vmem>>, %arg3: memref<1x80x128xbf16, #tpu.memory_space<vmem>>, %arg4: memref<1x1x128xf32, #tpu.memory_space<vmem>>, %arg5: memref<1x1x128xf32, #tpu.memory_space<vmem>>) attributes {dimension_semantics = [#tpu.dimension_semantics<parallel>], iteration_bounds = array<i64: 2>, scalar_prefetch = 0 : i64, scratch_operands = 0 : i64, tpu.core_type = #tpu.core_type<tc>, window_params = [{transform_indices = @transform_0, window_bounds = array<i64: 1, 1, 80, 4>}, {pipeline_mode = #tpu.pipeline_mode<synchronous>, transform_indices = @transform_1, window_bounds = array<i64: 4, 128>}, {transform_indices = @transform_2, window_bounds = array<i64: 1, 80, 128>}, {transform_indices = @transform_3, window_bounds = array<i64: 1, 1, 128>}, {transform_indices = @transform_4, window_bounds = array<i64: 1, 1, 128>}]} {
    %c0 = arith.constant 0 : index
    %c0_0 = arith.constant 0 : index
    %c0_1 = arith.constant 0 : index
    %c0_2 = arith.constant 0 : index
    %0 = vector.load %arg1[%c0, %c0_0, %c0_1, %c0_2] : memref<1x1x80x4xbf16, #tpu.memory_space<vmem>>, vector<1x1x80x4xbf16>
    %1 = vector.shape_cast %0 : vector<1x1x80x4xbf16> to vector<80x4xbf16>
    %c0_3 = arith.constant 0 : index
    %c0_4 = arith.constant 0 : index
    %2 = vector.load %arg2[%c0_3, %c0_4] : memref<4x128xbf16, #tpu.memory_space<vmem>>, vector<4x128xbf16>
    %cst = arith.constant dense<0.000000e+00> : vector<80x128xf32>
    %3 = tpu.matmul %1, %2, %cst {dimension_numbers = #tpu.dot_dimension_numbers<[1], [0], [0], [1], [0, 0, 1, 1], [], []>} : vector<80x4xbf16>, vector<4x128xbf16>, vector<80x128xf32> -> vector<80x128xf32>
    %4 = tpu.iota {dimensions = array<i32: 0>} : vector<80x1xi32>
    %c10_i32 = arith.constant 10 : i32
    %c0_i32 = arith.constant 0 : i32
    %5 = arith.cmpi eq, %c10_i32, %c0_i32 : i32
    %c1_i32 = arith.constant 1 : i32
    %6 = arith.select %5, %c1_i32, %c10_i32 : i32
    %7 = vector.broadcast %6 : i32 to vector<80x1xi32>
    %8 = arith.remsi %4, %7 : vector<80x1xi32>
    %c0_i32_5 = arith.constant 0 : i32
    %9 = vector.broadcast %c0_i32_5 : i32 to vector<80x1xi32>
    %10 = arith.cmpi ne, %8, %9 : vector<80x1xi32>
    %c0_i32_6 = arith.constant 0 : i32
    %11 = vector.broadcast %c0_i32_6 : i32 to vector<80x1xi32>
    %12 = arith.cmpi slt, %8, %11 : vector<80x1xi32>
    %c0_i32_7 = arith.constant 0 : i32
    %13 = arith.cmpi slt, %6, %c0_i32_7 : i32
    %14 = vector.broadcast %13 : i1 to vector<80x1xi1>
    %15 = vector.broadcast %14 : vector<80x1xi1> to vector<80x1xi1>
    %16 = arith.xori %12, %15 : vector<80x1xi1>
    %17 = arith.andi %16, %10 : vector<80x1xi1>
    %18 = vector.broadcast %6 : i32 to vector<80x1xi32>
    %19 = arith.addi %8, %18 : vector<80x1xi32>
    %20 = arith.select %17, %19, %8 : vector<80x1xi1>, vector<80x1xi32>
    %c8_i32 = arith.constant 8 : i32
    %21 = vector.broadcast %c8_i32 : i32 to vector<80x1xi32>
    %22 = arith.cmpi slt, %20, %21 : vector<80x1xi32>
    %cst_8 = arith.constant 0.000000e+00 : f32
    %23 = vector.shape_cast %22 : vector<80x1xi1> to vector<80x1xi1>
    %24 = vector.broadcast %23 : vector<80x1xi1> to vector<80x128xi1>
    %25 = vector.broadcast %cst_8 : f32 to vector<80x128xf32>
    %26 = arith.select %24, %3, %25 : vector<80x128xi1>, vector<80x128xf32>
    %27 = arith.truncf %26 : vector<80x128xf32> to vector<80x128xbf16>
    %c0_9 = arith.constant 0 : index
    %c0_10 = arith.constant 0 : index
    %c0_11 = arith.constant 0 : index
    %28 = vector.load %arg3[%c0_9, %c0_10, %c0_11] : memref<1x80x128xbf16, #tpu.memory_space<vmem>>, vector<1x80x128xbf16>
    %29 = vector.shape_cast %28 : vector<1x80x128xbf16> to vector<80x128xbf16>
    %30 = vector.shape_cast %27 : vector<80x128xbf16> to vector<1x80x128xbf16>
    tpu.vector_store %arg3[%c0_9, %c0_10, %c0_11], %30 {strides = array<i32>} : memref<1x80x128xbf16, #tpu.memory_space<vmem>>, vector<1x80x128xbf16>,
    %cst_12 = arith.constant dense<0.000000e+00> : vector<128xf32>
    %31 = vector.multi_reduction <add>, %26, %cst_12 [0] : vector<80x128xf32> to vector<128xf32>
    %32 = vector.shape_cast %31 : vector<128xf32> to vector<1x128xf32>
    %c0_13 = arith.constant 0 : index
    %c0_14 = arith.constant 0 : index
    %c0_15 = arith.constant 0 : index
    %33 = vector.load %arg4[%c0_13, %c0_14, %c0_15] : memref<1x1x128xf32, #tpu.memory_space<vmem>>, vector<1x1x128xf32>
    %34 = vector.shape_cast %33 : vector<1x1x128xf32> to vector<1x128xf32>
    %35 = vector.shape_cast %32 : vector<1x128xf32> to vector<1x1x128xf32>
    tpu.vector_store %arg4[%c0_13, %c0_14, %c0_15], %35 {strides = array<i32>} : memref<1x1x128xf32, #tpu.memory_space<vmem>>, vector<1x1x128xf32>,
    %36 = arith.mulf %26, %26 : vector<80x128xf32>
    %cst_16 = arith.constant dense<0.000000e+00> : vector<128xf32>
    %37 = vector.multi_reduction <add>, %36, %cst_16 [0] : vector<80x128xf32> to vector<128xf32>
    %38 = vector.shape_cast %37 : vector<128xf32> to vector<1x128xf32>
    %c0_17 = arith.constant 0 : index
    %c0_18 = arith.constant 0 : index
    %c0_19 = arith.constant 0 : index
    %39 = vector.load %arg5[%c0_17, %c0_18, %c0_19] : memref<1x1x128xf32, #tpu.memory_space<vmem>>, vector<1x1x128xf32>
    %40 = vector.shape_cast %39 : vector<1x1x128xf32> to vector<1x128xf32>
    %41 = vector.shape_cast %38 : vector<1x128xf32> to vector<1x1x128xf32>
    tpu.vector_store %arg5[%c0_17, %c0_18, %c0_19], %41 {strides = array<i32>} : memref<1x1x128xf32, #tpu.memory_space<vmem>>, vector<1x1x128xf32>,
    return
  }
  func.func @transform_0(%arg0: i32) -> (i32, i32, i32, i32) {
    %c0_i32 = arith.constant 0 : i32
    %c0_i32_0 = arith.constant 0 : i32
    %c0_i32_1 = arith.constant 0 : i32
    %c0_i32_2 = arith.constant 0 : i32
    return %c0_i32, %arg0, %c0_i32_0, %c0_i32_1 : i32, i32, i32, i32
  }
  func.func @transform_1(%arg0: i32) -> (i32, i32) {
    %c0_i32 = arith.constant 0 : i32
    %c0_i32_0 = arith.constant 0 : i32
    %c0_i32_1 = arith.constant 0 : i32
    return %c0_i32, %c0_i32_0 : i32, i32
  }
  func.func @transform_2(%arg0: i32) -> (i32, i32, i32) {
    %c0_i32 = arith.constant 0 : i32
    %c0_i32_0 = arith.constant 0 : i32
    %c0_i32_1 = arith.constant 0 : i32
    return %arg0, %c0_i32, %c0_i32_0 : i32, i32, i32
  }
  func.func @transform_3(%arg0: i32) -> (i32, i32, i32) {
    %c0_i32 = arith.constant 0 : i32
    %c0_i32_0 = arith.constant 0 : i32
    %c0_i32_1 = arith.constant 0 : i32
    return %arg0, %c0_i32, %c0_i32_0 : i32, i32, i32
  }
  func.func @transform_4(%arg0: i32) -> (i32, i32, i32) {
    %c0_i32 = arith.constant 0 : i32
    %c0_i32_0 = arith.constant 0 : i32
    %c0_i32_1 = arith.constant 0 : i32
    return %arg0, %c0_i32, %c0_i32_0 : i32, i32, i32
  }
}

module attributes {stable_mosaic.version = 11 : i64} {
  func.func @kernel(%arg0: i32, %arg1: memref<1x80x128xbf16, #tpu.memory_space<vmem>>, %arg2: memref<1x128xf32, #tpu.memory_space<vmem>>, %arg3: memref<1x128xf32, #tpu.memory_space<vmem>>, %arg4: memref<1x80x128xbf16, #tpu.memory_space<vmem>>, %arg5: memref<1x80x128xf32, #tpu.memory_space<vmem>>) attributes {dimension_semantics = [#tpu.dimension_semantics<parallel>], iteration_bounds = array<i64: 2>, scalar_prefetch = 0 : i64, scratch_operands = 0 : i64, tpu.core_type = #tpu.core_type<tc>, window_params = [{transform_indices = @transform_0, window_bounds = array<i64: 1, 80, 128>}, {pipeline_mode = #tpu.pipeline_mode<synchronous>, transform_indices = @transform_1, window_bounds = array<i64: 1, 128>}, {pipeline_mode = #tpu.pipeline_mode<synchronous>, transform_indices = @transform_2, window_bounds = array<i64: 1, 128>}, {transform_indices = @transform_3, window_bounds = array<i64: 1, 80, 128>}, {transform_indices = @transform_4, window_bounds = array<i64: 1, 80, 128>}]} {
    %c0 = arith.constant 0 : index
    %c0_0 = arith.constant 0 : index
    %c0_1 = arith.constant 0 : index
    %0 = vector.load %arg1[%c0, %c0_0, %c0_1] : memref<1x80x128xbf16, #tpu.memory_space<vmem>>, vector<1x80x128xbf16>
    %1 = vector.shape_cast %0 : vector<1x80x128xbf16> to vector<80x128xbf16>
    %2 = arith.extf %1 : vector<80x128xbf16> to vector<80x128xf32>
    %c0_2 = arith.constant 0 : index
    %c0_3 = arith.constant 0 : index
    %3 = vector.load %arg2[%c0_2, %c0_3] : memref<1x128xf32, #tpu.memory_space<vmem>>, vector<1x128xf32>
    %4 = vector.broadcast %3 : vector<1x128xf32> to vector<80x128xf32>
    %5 = arith.mulf %2, %4 : vector<80x128xf32>
    %c0_4 = arith.constant 0 : index
    %c0_5 = arith.constant 0 : index
    %6 = vector.load %arg3[%c0_4, %c0_5] : memref<1x128xf32, #tpu.memory_space<vmem>>, vector<1x128xf32>
    %7 = vector.broadcast %6 : vector<1x128xf32> to vector<80x128xf32>
    %8 = arith.addf %5, %7 : vector<80x128xf32>
    %c0_6 = arith.constant 0 : index
    %c0_7 = arith.constant 0 : index
    %c0_8 = arith.constant 0 : index
    %9 = vector.load %arg4[%c0_6, %c0_7, %c0_8] : memref<1x80x128xbf16, #tpu.memory_space<vmem>>, vector<1x80x128xbf16>
    %10 = vector.shape_cast %9 : vector<1x80x128xbf16> to vector<80x128xbf16>
    %11 = arith.extf %10 : vector<80x128xbf16> to vector<80x128xf32>
    %12 = arith.addf %8, %11 : vector<80x128xf32>
    %13 = arith.negf %12 : vector<80x128xf32>
    %14 = math.exp %13 : vector<80x128xf32>
    %cst = arith.constant 1.000000e+00 : f32
    %15 = vector.broadcast %cst : f32 to vector<80x128xf32>
    %16 = arith.addf %15, %14 : vector<80x128xf32>
    %17 = arith.divf %15, %16 : vector<80x128xf32>
    %18 = arith.mulf %12, %17 : vector<80x128xf32>
    %c0_9 = arith.constant 0 : index
    %c0_10 = arith.constant 0 : index
    %c0_11 = arith.constant 0 : index
    %19 = vector.load %arg5[%c0_9, %c0_10, %c0_11] : memref<1x80x128xf32, #tpu.memory_space<vmem>>, vector<1x80x128xf32>
    %20 = vector.shape_cast %19 : vector<1x80x128xf32> to vector<80x128xf32>
    %21 = vector.shape_cast %18 : vector<80x128xf32> to vector<1x80x128xf32>
    tpu.vector_store %arg5[%c0_9, %c0_10, %c0_11], %21 {strides = array<i32>} : memref<1x80x128xf32, #tpu.memory_space<vmem>>, vector<1x80x128xf32>,
    return
  }
  func.func @transform_0(%arg0: i32) -> (i32, i32, i32) {
    %c0_i32 = arith.constant 0 : i32
    %c0_i32_0 = arith.constant 0 : i32
    %c0_i32_1 = arith.constant 0 : i32
    return %arg0, %c0_i32, %c0_i32_0 : i32, i32, i32
  }
  func.func @transform_1(%arg0: i32) -> (i32, i32) {
    %c0_i32 = arith.constant 0 : i32
    %c0_i32_0 = arith.constant 0 : i32
    %c0_i32_1 = arith.constant 0 : i32
    return %c0_i32, %c0_i32_0 : i32, i32
  }
  func.func @transform_2(%arg0: i32) -> (i32, i32) {
    %c0_i32 = arith.constant 0 : i32
    %c0_i32_0 = arith.constant 0 : i32
    %c0_i32_1 = arith.constant 0 : i32
    return %c0_i32, %c0_i32_0 : i32, i32
  }
  func.func @transform_3(%arg0: i32) -> (i32, i32, i32) {
    %c0_i32 = arith.constant 0 : i32
    %c0_i32_0 = arith.constant 0 : i32
    %c0_i32_1 = arith.constant 0 : i32
    return %arg0, %c0_i32, %c0_i32_0 : i32, i32, i32
  }
  func.func @transform_4(%arg0: i32) -> (i32, i32, i32) {
    %c0_i32 = arith.constant 0 : i32
    %c0_i32_0 = arith.constant 0 : i32
    %c0_i32_1 = arith.constant 0 : i32
    return %arg0, %c0_i32, %c0_i32_0 : i32, i32, i32
  }
}

</mosaic_0001>

<llo_original>
// kernel: tpu_custom_call.1
$region0: #{tpu_custom_call.1}
  #allocation0 [shape = 'u32[]', space=smem, size = 0x4, offset = 0x4, fixed_abs, tag = 'smem constant byte address 0x4 - core index']
  #allocation1 [shape = 'u32[144,128]{1,0:T(1,128)}', space=vmem, size = 0x12000, scoped, tag = 'internal scratch']
  %s0 = inlined_call_operand.hbm [shape: f32[8,128], index: 0, kind: input, shape index: {}]
  %s1 = inlined_call_operand.hbm [shape: f32[8,128], index: 1, kind: output, shape index: {}]
  %s2 = sld [smem:[#allocation0]]
  $region41: #{tpu_custom_call.1} parent=0
    _
  %s4 = ssub.s32 1, %s2
  %s5 = scalar_select 0, %s4, %s2
  $region1: #{tpu_custom_call.1} parent=0
    #allocation2 [shape = 'u8[4096]{0}', space=vmem, size = 0x1000, scoped, tag = 'input window, operand 0, single buffered']
    #allocation3 [shape = 's32[2]{0}', space=sflag, size = 0x8, scoped, tag = 'scoped memory for tpu_custom_call.1']
    #allocation4 [shape = 's32[2]{0}', space=sflag, size = 0x8, scoped, tag = 'scoped memory for tpu_custom_call.1']
    #allocation5 [shape = 'u8[4096]{0}', space=vmem, size = 0x1000, scoped, tag = 'output window, operand 0, single buffered']
    %6 = vsyncpa [#allocation3], 0
    %7 = vsyncpa [#allocation4], 0
    loop: start=0, step=1, limit=4
    $region2: #{tpu_custom_call.1} parent=1 // loop_pre_header
      _
    $region3: #{tpu_custom_call.1} parent=1 // loop_header
      %s9 = sphi 0, %s13
      %p10 = scmp.ge.s32.totalorder %s9, 4
      %s17 = sphi 0, %s17
      %s19 = sphi 0, %s17
      %s20 = sphi 0, %s19
      %s34 = sphi 0, %s20
      %s38 = sphi 0, %s38
      %s40 = sphi 0, %s38
      %s41 = sphi 0, %s40
      %s55 = sphi 0, %s41
    $region4: #{tpu_custom_call.1} parent=1 // loop_header_branch
      %12 = sbr.rel (%p10) target = $region8
    $region5: #{tpu_custom_call.1} parent=1 // loop_body
      %s14 = ssub.s32 %s9, 1
      %s15 = ssub.s32 %s9, 2
      %s16 = sadd.s32 %s9, 1
      %s18 = sadd.s32 %s17, 1
      %p21 = scmp.eq.s32.totalorder %s9, 1
      %p22 = scmp.ne.s32.totalorder %s17, %s19
      %p23 = scmp.eq.s32.totalorder %s9, 0
      %p24 = por %p22, %p23
      %p25 = scmp.ne.s32.totalorder %s17, %s19
      %p26 = scmp.eq.s32.totalorder %s14, 1
      %p27 = por %p25, %p26
      %p28 = scmp.ne.s32.totalorder %s19, %s20
      %p29 = scmp.eq.s32.totalorder %s14, 0
      %p30 = por %p28, %p29
      %p31 = scmp.ne.s32.totalorder %s19, %s20
      %p32 = scmp.eq.s32.totalorder %s15, 1
      %p33 = por %p31, %p32
      %p35 = scmp.ne.s32.totalorder %s20, %s34
      %p36 = scmp.eq.s32.totalorder %s15, 0
      %p37 = por %p35, %p36
      %s39 = sadd.s32 %s38, 1
      %p42 = scmp.eq.s32.totalorder %s9, 1
      %p43 = scmp.ne.s32.totalorder %s38, %s40
      %p44 = scmp.eq.s32.totalorder %s9, 0
      %p45 = por %p43, %p44
      %p46 = scmp.ne.s32.totalorder %s38, %s40
      %p47 = scmp.eq.s32.totalorder %s14, 1
      %p48 = por %p46, %p47
      %p49 = scmp.ne.s32.totalorder %s40, %s41
      %p50 = scmp.eq.s32.totalorder %s14, 0
      %p51 = por %p49, %p50
      %p52 = scmp.ne.s32.totalorder %s40, %s41
      %p53 = scmp.eq.s32.totalorder %s15, 1
      %p54 = por %p52, %p53
      %p56 = scmp.ne.s32.totalorder %s41, %s55
      %p57 = scmp.eq.s32.totalorder %s15, 0
      %p58 = por %p56, %p57
      %p59 = scmp.le.s32.totalorder 1, %s9
      %p60 = scmp.lt.s32.totalorder %s9, 3
      %p61 = pnand %p59, %p60
      %p62 = pneg %p61
      // Predicated region
      $region9: #{tpu_custom_call.1} parent=5 // pred_check
        _
      $region10: #{tpu_custom_call.1} parent=5 // pred_check_branch
        %64 = sbr.rel (%p61) target = $region12
      $region11: #{tpu_custom_call.1} parent=5 // pred_region
        %s65 = ssub.s32 %s9, 1
        // Predicated region
        $region13: #{tpu_custom_call.1} parent=11 // pred_check
          %p66 = pneg %p30
        $region14: #{tpu_custom_call.1} parent=11 // pred_check_branch
          %68 = sbr.rel (%p66) target = $region16
        $region15: #{tpu_custom_call.1} parent=11 // pred_region
          %s70 = ssub.s32 128, 128
          %71 = vsyncadd [#allocation3], %s70
          %s73 = sshll.u32 [#allocation2], 4
          %s74 = int_to_ptr.vmem [resolvable:$true] %s73
          %76 = dma.hbm_to_vmem [thread:$0]  %s0, 128, %s74, [#allocation3]
        $region16: #{tpu_custom_call.1} parent=11 // pred_fallthru
          _
      $region12: #{tpu_custom_call.1} parent=5 // pred_fallthru
        _
      %p77 = scmp.lt.s32.totalorder %s9, 2
      // Predicated region
      $region17: #{tpu_custom_call.1} parent=5 // pred_check
        %p78 = pneg %p77
      $region18: #{tpu_custom_call.1} parent=5 // pred_check_branch
        %80 = sbr.rel (%p78) target = $region20
      $region19: #{tpu_custom_call.1} parent=5 // pred_region
        _
      $region20: #{tpu_custom_call.1} parent=5 // pred_fallthru
        _
      %p81 = scmp.le.s32.totalorder 1, %s9
      %p82 = scmp.lt.s32.totalorder %s9, 3
      %p83 = pnand %p81, %p82
      %p84 = pneg %p83
      // Predicated region
      $region21: #{tpu_custom_call.1} parent=5 // pred_check
        _
      $region22: #{tpu_custom_call.1} parent=5 // pred_check_branch
        %86 = sbr.rel (%p83) target = $region24
      $region23: #{tpu_custom_call.1} parent=5 // pred_region
        %s87 = ssub.s32 %s9, 1
        // Predicated region
        $region25: #{tpu_custom_call.1} parent=23 // pred_check
          %p88 = pneg %p30
        $region26: #{tpu_custom_call.1} parent=23 // pred_check_branch
          %90 = sbr.rel (%p88) target = $region28
        $region27: #{tpu_custom_call.1} parent=23 // pred_region
          %91 = dma.done [#allocation3], 128
        $region28: #{tpu_custom_call.1} parent=23 // pred_fallthru
          _
        %p92 = pneg %p30
        %p93 = pneg %p27
        %p94 = pneg %p51
        %p95 = pneg %p48
        %v96 = vld [vmem:[#allocation2] sm:$0xff]
        %v97 = vadd.f32 %v96, 1.0
        %98 = vst [vmem:[#allocation5] sm:$0xff] %v97
        // Predicated region
        $region29: #{tpu_custom_call.1} parent=23 // pred_check
          %p99 = pneg %p48
        $region30: #{tpu_custom_call.1} parent=23 // pred_check_branch
          %101 = sbr.rel (%p99) target = $region32
        $region31: #{tpu_custom_call.1} parent=23 // pred_region
          %s103 = ssub.s32 128, 128
          %104 = vsyncadd [#allocation4], %s103
          %s106 = sshll.u32 [#allocation5], 4
          %s107 = int_to_ptr.vmem [resolvable:$true] %s106
          %109 = dma.vmem_to_hbm [thread:$0]  %s107, 128, %s1, [#allocation4]
        $region32: #{tpu_custom_call.1} parent=23 // pred_fallthru
          _
        // Predicated region
        $region33: #{tpu_custom_call.1} parent=23 // pred_check
          %p110 = pneg %p48
        $region34: #{tpu_custom_call.1} parent=23 // pred_check_branch
          %112 = sbr.rel (%p110) target = $region36
        $region35: #{tpu_custom_call.1} parent=23 // pred_region
          %113 = dma.done [#allocation4], 128
        $region36: #{tpu_custom_call.1} parent=23 // pred_fallthru
          _
      $region24: #{tpu_custom_call.1} parent=5 // pred_fallthru
        _
      %p114 = scmp.le.s32.totalorder 2, %s9
      // Predicated region
      $region37: #{tpu_custom_call.1} parent=5 // pred_check
        %p115 = pneg %p114
      $region38: #{tpu_custom_call.1} parent=5 // pred_check_branch
        %117 = sbr.rel (%p115) target = $region40
      $region39: #{tpu_custom_call.1} parent=5 // pred_region
        %s118 = ssub.s32 %s9, 2
      $region40: #{tpu_custom_call.1} parent=5 // pred_fallthru
        _
    $region6: #{tpu_custom_call.1} parent=1 // loop_footer
      %s13 = sadd.s32 1, %s9
    $region7: #{tpu_custom_call.1} parent=1 // loop_footer_branch
      %8 = sbr.rel target = $region3
    $region8: #{tpu_custom_call.1} parent=1 // loop_exit
      _
    %119 = vsyncpa [#allocation3], 1
    %s120 = scalar_lea.sflag [#allocation3], 1
    %121 = vsyncpa %s120, 1
    %122 = vsyncpa [#allocation4], 1
    %s123 = scalar_lea.sflag [#allocation4], 1
    %124 = vsyncpa %s123, 1

// kernel: basic_block_pallas.7
$region0: #{basic_block_pallas.7}
  #allocation0 [shape = 'u32[]', space=smem, size = 0x4, offset = 0x4, fixed_abs, tag = 'smem constant byte address 0x4 - core index']
  #allocation1 [shape = 'u32[144,128]{1,0:T(1,128)}', space=vmem, size = 0x12000, scoped, tag = 'internal scratch']
  %s0 = inlined_call_operand.vmem [shape: bf16[2,72,128], index: 0, kind: input, shape index: {}]
  %s1 = inlined_call_operand.vmem [shape: f32[1,128], index: 1, kind: input, shape index: {}]
  %s2 = inlined_call_operand.vmem [shape: f32[1,128], index: 2, kind: input, shape index: {}]
  %s3 = inlined_call_operand.vmem [shape: bf16[2,72,128], index: 3, kind: output, shape index: {}]
  %s4 = sld [smem:[#allocation0]]
  $region45: #{basic_block_pallas.7} parent=0
    _
  %s6 = ssub.s32 1, %s4
  %s7 = scalar_select 0, %s6, %s4
  loop: start=0, step=1, limit=4
  $region2: #{basic_block_pallas.7} parent=0 // loop_pre_header
    _
  $region3: #{basic_block_pallas.7} parent=0 // loop_header
    %s9 = sphi 0, %s13
    %p10 = scmp.ge.s32.totalorder %s9, 4
    %s19 = sphi 0, %s21
    %s22 = sphi 0, %s19
    %s23 = sphi 0, %s22
    %s39 = sphi 0, %s23
    %s43 = sphi 0, %s43
    %s45 = sphi 0, %s43
    %s46 = sphi 0, %s45
    %s60 = sphi 0, %s46
    %s64 = sphi 0, %s64
    %s66 = sphi 0, %s64
    %s67 = sphi 0, %s66
    %s81 = sphi 0, %s67
    %s87 = sphi 0, %s89
    %s90 = sphi 0, %s87
    %s91 = sphi 0, %s90
    %s107 = sphi 0, %s91
  $region4: #{basic_block_pallas.7} parent=0 // loop_header_branch
    %12 = sbr.rel (%p10) target = $region8
  $region5: #{basic_block_pallas.7} parent=0 // loop_body
    %s14 = ssub.s32 %s9, 1
    %s15 = ssub.s32 %s9, 2
    %s16 = sadd.s32 %s9, 1
    %s17 = ssub.s32 %s9, %s16
    %p18 = scmp.eq.s32.totalorder %s17, 0
    %s20 = sadd.s32 %s19, 1
    %s21 = scalar_select %p18, %s19, %s20
    %p24 = pneg %p18
    %p25 = scmp.eq.s32.totalorder %s9, 1
    %p26 = por %p24, %p25
    %p27 = scmp.ne.s32.totalorder %s19, %s22
    %p28 = scmp.eq.s32.totalorder %s9, 0
    %p29 = por %p27, %p28
    %p30 = scmp.ne.s32.totalorder %s19, %s22
    %p31 = scmp.eq.s32.totalorder %s14, 1
    %p32 = por %p30, %p31
    %p33 = scmp.ne.s32.totalorder %s22, %s23
    %p34 = scmp.eq.s32.totalorder %s14, 0
    %p35 = por %p33, %p34
    %p36 = scmp.ne.s32.totalorder %s22, %s23
    %p37 = scmp.eq.s32.totalorder %s15, 1
    %p38 = por %p36, %p37
    %p40 = scmp.ne.s32.totalorder %s23, %s39
    %p41 = scmp.eq.s32.totalorder %s15, 0
    %p42 = por %p40, %p41
    %s44 = sadd.s32 %s43, 1
    %p47 = scmp.eq.s32.totalorder %s9, 1
    %p48 = scmp.ne.s32.totalorder %s43, %s45
    %p49 = scmp.eq.s32.totalorder %s9, 0
    %p50 = por %p48, %p49
    %p51 = scmp.ne.s32.totalorder %s43, %s45
    %p52 = scmp.eq.s32.totalorder %s14, 1
    %p53 = por %p51, %p52
    %p54 = scmp.ne.s32.totalorder %s45, %s46
    %p55 = scmp.eq.s32.totalorder %s14, 0
    %p56 = por %p54, %p55
    %p57 = scmp.ne.s32.totalorder %s45, %s46
    %p58 = scmp.eq.s32.totalorder %s15, 1
    %p59 = por %p57, %p58
    %p61 = scmp.ne.s32.totalorder %s46, %s60
    %p62 = scmp.eq.s32.totalorder %s15, 0
    %p63 = por %p61, %p62
    %s65 = sadd.s32 %s64, 1
    %p68 = scmp.eq.s32.totalorder %s9, 1
    %p69 = scmp.ne.s32.totalorder %s64, %s66
    %p70 = scmp.eq.s32.totalorder %s9, 0
    %p71 = por %p69, %p70
    %p72 = scmp.ne.s32.totalorder %s64, %s66
    %p73 = scmp.eq.s32.totalorder %s14, 1
    %p74 = por %p72, %p73
    %p75 = scmp.ne.s32.totalorder %s66, %s67
    %p76 = scmp.eq.s32.totalorder %s14, 0
    %p77 = por %p75, %p76
    %p78 = scmp.ne.s32.totalorder %s66, %s67
    %p79 = scmp.eq.s32.totalorder %s15, 1
    %p80 = por %p78, %p79
    %p82 = scmp.ne.s32.totalorder %s67, %s81
    %p83 = scmp.eq.s32.totalorder %s15, 0
    %p84 = por %p82, %p83
    %s85 = ssub.s32 %s9, %s16
    %p86 = scmp.eq.s32.totalorder %s85, 0
    %s88 = sadd.s32 %s87, 1
    %s89 = scalar_select %p86, %s87, %s88
    %p92 = pneg %p86
    %p93 = scmp.eq.s32.totalorder %s9, 1
    %p94 = por %p92, %p93
    %p95 = scmp.ne.s32.totalorder %s87, %s90
    %p96 = scmp.eq.s32.totalorder %s9, 0
    %p97 = por %p95, %p96
    %p98 = scmp.ne.s32.totalorder %s87, %s90
    %p99 = scmp.eq.s32.totalorder %s14, 1
    %p100 = por %p98, %p99
    %p101 = scmp.ne.s32.totalorder %s90, %s91
    %p102 = scmp.eq.s32.totalorder %s14, 0
    %p103 = por %p101, %p102
    %p104 = scmp.ne.s32.totalorder %s90, %s91
    %p105 = scmp.eq.s32.totalorder %s15, 1
    %p106 = por %p104, %p105
    %p108 = scmp.ne.s32.totalorder %s91, %s107
    %p109 = scmp.eq.s32.totalorder %s15, 0
    %p110 = por %p108, %p109
    %p111 = scmp.le.s32.totalorder 1, %s9
    %p112 = scmp.lt.s32.totalorder %s9, 3
    %p113 = pnand %p111, %p112
    %p114 = pneg %p113
    // Predicated region
    $region9: #{basic_block_pallas.7} parent=5 // pred_check
      _
    $region10: #{basic_block_pallas.7} parent=5 // pred_check_branch
      %116 = sbr.rel (%p113) target = $region12
    $region11: #{basic_block_pallas.7} parent=5 // pred_region
      %s117 = ssub.s32 %s9, 1
      // Predicated region
      $region13: #{basic_block_pallas.7} parent=11 // pred_check
        %p118 = pneg %p56
      $region14: #{basic_block_pallas.7} parent=11 // pred_check_branch
        %120 = sbr.rel (%p118) target = $region16
      $region15: #{basic_block_pallas.7} parent=11 // pred_region
        _
      $region16: #{basic_block_pallas.7} parent=11 // pred_fallthru
        _
      // Predicated region
      $region17: #{basic_block_pallas.7} parent=11 // pred_check
        %p121 = pneg %p77
      $region18: #{basic_block_pallas.7} parent=11 // pred_check_branch
        %123 = sbr.rel (%p121) target = $region20
      $region19: #{basic_block_pallas.7} parent=11 // pred_region
        _
      $region20: #{basic_block_pallas.7} parent=11 // pred_fallthru
        _
    $region12: #{basic_block_pallas.7} parent=5 // pred_fallthru
      _
    %p124 = scmp.lt.s32.totalorder %s9, 2
    // Predicated region
    $region21: #{basic_block_pallas.7} parent=5 // pred_check
      %p125 = pneg %p124
    $region22: #{basic_block_pallas.7} parent=5 // pred_check_branch
      %127 = sbr.rel (%p125) target = $region24
    $region23: #{basic_block_pallas.7} parent=5 // pred_region
      // Predicated region
      $region25: #{basic_block_pallas.7} parent=23 // pred_check
        %p128 = pneg %p29
      $region26: #{basic_block_pallas.7} parent=23 // pred_check_branch
        %130 = sbr.rel (%p128) target = $region28
      $region27: #{basic_block_pallas.7} parent=23 // pred_region
        %p131 = scmp.lt.s32.totalorder %s9, 1
        %s132 = scalar_select %p131, %s9, 1
        %s133 = smul.addr %s132, 9
        %s134 = smul.addr %s133, 4
        %s135 = scalar_lea.vmem %s0, %s134
      $region28: #{basic_block_pallas.7} parent=23 // pred_fallthru
        _
    $region24: #{basic_block_pallas.7} parent=5 // pred_fallthru
      _
    %p136 = scmp.le.s32.totalorder 1, %s9
    %p137 = scmp.lt.s32.totalorder %s9, 3
    %p138 = pnand %p136, %p137
    %p139 = pneg %p138
    // Predicated region
    $region29: #{basic_block_pallas.7} parent=5 // pred_check
      _
    $region30: #{basic_block_pallas.7} parent=5 // pred_check_branch
      %141 = sbr.rel (%p138) target = $region32
    $region31: #{basic_block_pallas.7} parent=5 // pred_region
      %s142 = ssub.s32 %s9, 1
      %p143 = scmp.lt.s32.totalorder %s14, 1
      %s144 = scalar_select %p143, %s14, 1
      %s145 = smul.addr %s144, 9
      %s146 = smul.addr %s145, 4
      %s147 = scalar_lea.vmem %s0, %s146
      %p148 = pneg %p35
      %p149 = pneg %p32
      %p150 = pneg %p56
      %p151 = pneg %p53
      %p152 = pneg %p77
      %p153 = pneg %p74
      %p154 = pneg %p103
      %p155 = pneg %p100
      %p156 = scmp.lt.s32.totalorder %s14, 1
      %s157 = scalar_select %p156, %s14, 1
      %s158 = smul.addr %s157, 9
      %s159 = smul.addr %s158, 4
      %s160 = scalar_lea.vmem %s3, %s159
      %p161 = scmp.lt.s32.totalorder %s14, 1
      %s162 = scalar_select %p161, %s14, 1
      %s163 = smul.addr %s162, 9
      %s164 = smul.addr %s163, 4
      %s165 = scalar_lea.vmem %s0, %s164
      %p166 = scmp.lt.s32.totalorder %s14, 1
      %s167 = scalar_select %p166, %s14, 1
      %s168 = smul.addr %s167, 9
      %s169 = smul.addr %s168, 4
      %s170 = scalar_lea.vmem %s3, %s169
      %v171 = vld [vmem:[%s165] sm:$0xf]
      %v172 = vld [vmem:[%s165 + $0x4] sm:$0xf]
      %v173 = vld [vmem:[%s165 + $0x8] sm:$0xf]
      %v174 = vld [vmem:[%s165 + $0xc] sm:$0xf]
      %v175 = vld [vmem:[%s165 + $0x10] sm:$0xf]
      %v176 = vld [vmem:[%s165 + $0x14] sm:$0xf]
      %v177 = vld [vmem:[%s165 + $0x18] sm:$0xf]
      %v178 = vld [vmem:[%s165 + $0x1c] sm:$0xf]
      %v179 = vld [vmem:[%s165 + $0x20] sm:$0xf]
      %v180 = vunpack.c.l.bf16 %v171
      %v181 = vunpack.c.l.bf16 %v172
      %v182 = vunpack.c.l.bf16 %v173
      %v183 = vunpack.c.l.bf16 %v174
      %v184 = vunpack.c.l.bf16 %v175
      %v185 = vunpack.c.l.bf16 %v176
      %v186 = vunpack.c.l.bf16 %v177
      %v187 = vunpack.c.l.bf16 %v178
      %v188 = vunpack.c.l.bf16 %v179
      %v189 = vld [vmem:[%s1] sm:$0x1]
      %v191 = vlaneseq
      %v192 = vshrl.u32 %v191, 7
      %v193 = vsub.s32 0, %v192
      %v194 = vrot.slane %v189, %v193
      %v196 = vmul.f32 %v180, %v194
      %v197 = vmul.f32 %v181, %v194
      %v198 = vmul.f32 %v182, %v194
      %v199 = vmul.f32 %v183, %v194
      %v200 = vmul.f32 %v184, %v194
      %v201 = vmul.f32 %v185, %v194
      %v202 = vmul.f32 %v186, %v194
      %v203 = vmul.f32 %v187, %v194
      %v204 = vmul.f32 %v188, %v194
      %v205 = vld [vmem:[%s2] sm:$0x1]
      %v207 = vlaneseq
      %v208 = vshrl.u32 %v207, 7
      %v209 = vsub.s32 0, %v208
      %v210 = vrot.slane %v205, %v209
      %v212 = vadd.f32 %v196, %v210
      %v213 = vadd.f32 %v197, %v210
      %v214 = vadd.f32 %v198, %v210
      %v215 = vadd.f32 %v199, %v210
      %v216 = vadd.f32 %v200, %v210
      %v217 = vadd.f32 %v201, %v210
      %v218 = vadd.f32 %v202, %v210
      %v219 = vadd.f32 %v203, %v210
      %v220 = vadd.f32 %v204, %v210
      %v221 = vxor.u32 %v212, 2147483648
      %v222 = vxor.u32 %v213, 2147483648
      %v223 = vxor.u32 %v214, 2147483648
      %v224 = vxor.u32 %v215, 2147483648
      %v225 = vxor.u32 %v216, 2147483648
      %v226 = vxor.u32 %v217, 2147483648
      %v227 = vxor.u32 %v218, 2147483648
      %v228 = vxor.u32 %v219, 2147483648
      %v229 = vxor.u32 %v220, 2147483648
      %v230 = vmul.f32 %v221, 1.442695
      %v231 = vpow.pop %v230
      %v232 = vmul.f32 %v222, 1.442695
      %v233 = vpow.pop %v232
      %v234 = vmul.f32 %v223, 1.442695
      %v235 = vpow.pop %v234
      %v236 = vmul.f32 %v224, 1.442695
      %v237 = vpow.pop %v236
      %v238 = vmul.f32 %v225, 1.442695
      %v239 = vpow.pop %v238
      %v240 = vmul.f32 %v226, 1.442695
      %v241 = vpow.pop %v240
      %v242 = vmul.f32 %v227, 1.442695
      %v243 = vpow.pop %v242
      %v244 = vmul.f32 %v228, 1.442695
      %v245 = vpow.pop %v244
      %v246 = vmul.f32 %v229, 1.442695
      %v247 = vpow.pop %v246
      %v248 = vadd.f32 %v231, 1.0
      %v249 = vadd.f32 %v233, 1.0
      %v250 = vadd.f32 %v235, 1.0
      %v251 = vadd.f32 %v237, 1.0
      %v252 = vadd.f32 %v239, 1.0
      %v253 = vadd.f32 %v241, 1.0
      %v254 = vadd.f32 %v243, 1.0
      %v255 = vadd.f32 %v245, 1.0
      %v256 = vadd.f32 %v247, 1.0
      %v257 = vrcp.pop %v248
      %v258 = vmul.f32 1.0, %v257
      %v259 = vrcp.pop %v249
      %v260 = vmul.f32 1.0, %v259
      %v261 = vrcp.pop %v250
      %v262 = vmul.f32 1.0, %v261
      %v263 = vrcp.pop %v251
      %v264 = vmul.f32 1.0, %v263
      %v265 = vrcp.pop %v252
      %v266 = vmul.f32 1.0, %v265
      %v267 = vrcp.pop %v253
      %v268 = vmul.f32 1.0, %v267
      %v269 = vrcp.pop %v254
      %v270 = vmul.f32 1.0, %v269
      %v271 = vrcp.pop %v255
      %v272 = vmul.f32 1.0, %v271
      %v273 = vrcp.pop %v256
      %v274 = vmul.f32 1.0, %v273
      %v275 = vmul.f32 %v212, %v258
      %v276 = vmul.f32 %v213, %v260
      %v277 = vmul.f32 %v214, %v262
      %v278 = vmul.f32 %v215, %v264
      %v279 = vmul.f32 %v216, %v266
      %v280 = vmul.f32 %v217, %v268
      %v281 = vmul.f32 %v218, %v270
      %v282 = vmul.f32 %v219, %v272
      %v283 = vmul.f32 %v220, %v274
      %v284 = vpack.c.bf16 %v276, %v275
      %v285 = vpack.c.bf16 %v278, %v277
      %v286 = vpack.c.bf16 %v280, %v279
      %v287 = vpack.c.bf16 %v282, %v281
      %v288 = vpack.c.bf16 %v283, %v283
      %v294 = vunpack.c.l.b16 %v284
      %v295 = vunpack.c.h.b16 %v284
      %v296 = vunpack.c.l.b16 %v285
      %v297 = vunpack.c.h.b16 %v285
      %v298 = vunpack.c.l.b16 %v286
      %v299 = vunpack.c.h.b16 %v286
      %v300 = vunpack.c.l.b16 %v287
      %v301 = vunpack.c.h.b16 %v287
      %v302 = vunpack.c.l.b16 %v288
      %v303 = vpack.c.b16 %v294, %v294
      %v304 = vpack.c.b16 %v295, %v295
      %v305 = vpack.c.b16 %v296, %v296
      %v306 = vpack.c.b16 %v297, %v297
      %v307 = vpack.c.b16 %v298, %v298
      %v308 = vpack.c.b16 %v299, %v299
      %v309 = vpack.c.b16 %v300, %v300
      %v310 = vpack.c.b16 %v301, %v301
      %v311 = vpack.c.b16 %v302, %v302
      %321 = vst [vmem:[%s170] sm:$0xf] %v303
      %322 = vst [vmem:[%s170 + $0x4] sm:$0xf] %v304
      %323 = vst [vmem:[%s170 + $0x8] sm:$0xf] %v305
      %324 = vst [vmem:[%s170 + $0xc] sm:$0xf] %v306
      %325 = vst [vmem:[%s170 + $0x10] sm:$0xf] %v307
      %326 = vst [vmem:[%s170 + $0x14] sm:$0xf] %v308
      %327 = vst [vmem:[%s170 + $0x18] sm:$0xf] %v309
      %328 = vst [vmem:[%s170 + $0x1c] sm:$0xf] %v310
      %329 = vst [vmem:[%s170 + $0x20] sm:$0xf] %v311
      %p330 = scmp.lt.s32.totalorder %s14, 1
      %s331 = scalar_select %p330, %s14, 1
      %s332 = smul.addr %s331, 9
      %s333 = smul.addr %s332, 4
      %s334 = scalar_lea.vmem %s3, %s333
      // Predicated region
      $region33: #{basic_block_pallas.7} parent=31 // pred_check
        %p335 = pneg %p100
      $region34: #{basic_block_pallas.7} parent=31 // pred_check_branch
        %337 = sbr.rel (%p335) target = $region36
      $region35: #{basic_block_pallas.7} parent=31 // pred_region
        _
      $region36: #{basic_block_pallas.7} parent=31 // pred_fallthru
        _
    $region32: #{basic_block_pallas.7} parent=5 // pred_fallthru
      _
    %p338 = scmp.le.s32.totalorder 2, %s9
    // Predicated region
    $region37: #{basic_block_pallas.7} parent=5 // pred_check
      %p339 = pneg %p338
    $region38: #{basic_block_pallas.7} parent=5 // pred_check_branch
      %341 = sbr.rel (%p339) target = $region40
    $region39: #{basic_block_pallas.7} parent=5 // pred_region
      %s342 = ssub.s32 %s9, 2
      // Predicated region
      $region41: #{basic_block_pallas.7} parent=39 // pred_check
        %p343 = pneg %p106
      $region42: #{basic_block_pallas.7} parent=39 // pred_check_branch
        %345 = sbr.rel (%p343) target = $region44
      $region43: #{basic_block_pallas.7} parent=39 // pred_region
        %p346 = scmp.lt.s32.totalorder %s15, 1
        %s347 = scalar_select %p346, %s15, 1
        %s348 = smul.addr %s347, 9
        %s349 = smul.addr %s348, 4
        %s350 = scalar_lea.vmem %s3, %s349
      $region44: #{basic_block_pallas.7} parent=39 // pred_fallthru
        _
    $region40: #{basic_block_pallas.7} parent=5 // pred_fallthru
      _
  $region6: #{basic_block_pallas.7} parent=0 // loop_footer
    %s13 = sadd.s32 1, %s9
  $region7: #{basic_block_pallas.7} parent=0 // loop_footer_branch
    %8 = sbr.rel target = $region3
  $region8: #{basic_block_pallas.7} parent=0 // loop_exit
    _

// kernel: basic_block_pallas.6
$region0: #{basic_block_pallas.6}
  #allocation0 [shape = 'u32[]', space=smem, size = 0x4, offset = 0x4, fixed_abs, tag = 'smem constant byte address 0x4 - core index']
  #allocation1 [shape = 'u32[144,128]{1,0:T(1,128)}', space=vmem, size = 0x12000, scoped, tag = 'internal scratch']
  %s0 = inlined_call_operand.vmem [shape: bf16[4,2,90,4], index: 0, kind: input, shape index: {}]
  %s1 = inlined_call_operand.vmem [shape: bf16[36,128], index: 1, kind: input, shape index: {}]
  %s2 = inlined_call_operand.vmem [shape: bf16[2,72,128], index: 2, kind: output, shape index: {0}]
  %s3 = inlined_call_operand.vmem [shape: f32[2,1,128], index: 3, kind: output, shape index: {1}]
  %s4 = inlined_call_operand.vmem [shape: f32[2,1,128], index: 4, kind: output, shape index: {2}]
  %5 = xla_tuple %s2, %s3, %s4
  %s6 = sld [smem:[#allocation0]]
  $region98: #{basic_block_pallas.6} parent=0
    _
  %s8 = ssub.s32 1, %s6
  %s9 = scalar_select 0, %s8, %s6
  $region1: #{basic_block_pallas.6} parent=0
    #allocation2 [shape = 'u8[196608]{0}', space=vmem, size = 0x30000, scoped, tag = 'input window, operand 0']
    loop: start=0, step=1, limit=4
    $region2: #{basic_block_pallas.6} parent=1 // loop_pre_header
      _
    $region3: #{basic_block_pallas.6} parent=1 // loop_header
      %s11 = sphi 0, %s15
      %p12 = scmp.ge.s32.totalorder %s11, 4
      %s21 = sphi 0, %s23
      %s24 = sphi 0, %s21
      %s25 = sphi 0, %s24
      %s41 = sphi 0, %s25
      %s45 = sphi 0, %s45
      %s47 = sphi 0, %s45
      %s48 = sphi 0, %s47
      %s62 = sphi 0, %s48
      %s68 = sphi 0, %s70
      %s71 = sphi 0, %s68
      %s72 = sphi 0, %s71
      %s88 = sphi 0, %s72
      %s94 = sphi 0, %s96
      %s97 = sphi 0, %s94
      %s98 = sphi 0, %s97
      %s114 = sphi 0, %s98
      %s120 = sphi 0, %s122
      %s123 = sphi 0, %s120
      %s124 = sphi 0, %s123
      %s140 = sphi 0, %s124
    $region4: #{basic_block_pallas.6} parent=1 // loop_header_branch
      %14 = sbr.rel (%p12) target = $region8
    $region5: #{basic_block_pallas.6} parent=1 // loop_body
      %s16 = ssub.s32 %s11, 1
      %s17 = ssub.s32 %s11, 2
      %s18 = sadd.s32 %s11, 1
      %s19 = ssub.s32 %s11, %s18
      %p20 = scmp.eq.s32.totalorder %s19, 0
      %s22 = sadd.s32 %s21, 1
      %s23 = scalar_select %p20, %s21, %s22
      %p26 = pneg %p20
      %p27 = scmp.eq.s32.totalorder %s11, 1
      %p28 = por %p26, %p27
      %p29 = scmp.ne.s32.totalorder %s21, %s24
      %p30 = scmp.eq.s32.totalorder %s11, 0
      %p31 = por %p29, %p30
      %p32 = scmp.ne.s32.totalorder %s21, %s24
      %p33 = scmp.eq.s32.totalorder %s16, 1
      %p34 = por %p32, %p33
      %p35 = scmp.ne.s32.totalorder %s24, %s25
      %p36 = scmp.eq.s32.totalorder %s16, 0
      %p37 = por %p35, %p36
      %p38 = scmp.ne.s32.totalorder %s24, %s25
      %p39 = scmp.eq.s32.totalorder %s17, 1
      %p40 = por %p38, %p39
      %p42 = scmp.ne.s32.totalorder %s25, %s41
      %p43 = scmp.eq.s32.totalorder %s17, 0
      %p44 = por %p42, %p43
      %s46 = sadd.s32 %s45, 1
      %p49 = scmp.eq.s32.totalorder %s11, 1
      %p50 = scmp.ne.s32.totalorder %s45, %s47
      %p51 = scmp.eq.s32.totalorder %s11, 0
      %p52 = por %p50, %p51
      %p53 = scmp.ne.s32.totalorder %s45, %s47
      %p54 = scmp.eq.s32.totalorder %s16, 1
      %p55 = por %p53, %p54
      %p56 = scmp.ne.s32.totalorder %s47, %s48
      %p57 = scmp.eq.s32.totalorder %s16, 0
      %p58 = por %p56, %p57
      %p59 = scmp.ne.s32.totalorder %s47, %s48
      %p60 = scmp.eq.s32.totalorder %s17, 1
      %p61 = por %p59, %p60
      %p63 = scmp.ne.s32.totalorder %s48, %s62
      %p64 = scmp.eq.s32.totalorder %s17, 0
      %p65 = por %p63, %p64
      %s66 = ssub.s32 %s11, %s18
      %p67 = scmp.eq.s32.totalorder %s66, 0
      %s69 = sadd.s32 %s68, 1
      %s70 = scalar_select %p67, %s68, %s69
      %p73 = pneg %p67
      %p74 = scmp.eq.s32.totalorder %s11, 1
      %p75 = por %p73, %p74
      %p76 = scmp.ne.s32.totalorder %s68, %s71
      %p77 = scmp.eq.s32.totalorder %s11, 0
      %p78 = por %p76, %p77
      %p79 = scmp.ne.s32.totalorder %s68, %s71
      %p80 = scmp.eq.s32.totalorder %s16, 1
      %p81 = por %p79, %p80
      %p82 = scmp.ne.s32.totalorder %s71, %s72
      %p83 = scmp.eq.s32.totalorder %s16, 0
      %p84 = por %p82, %p83
      %p85 = scmp.ne.s32.totalorder %s71, %s72
      %p86 = scmp.eq.s32.totalorder %s17, 1
      %p87 = por %p85, %p86
      %p89 = scmp.ne.s32.totalorder %s72, %s88
      %p90 = scmp.eq.s32.totalorder %s17, 0
      %p91 = por %p89, %p90
      %s92 = ssub.s32 %s11, %s18
      %p93 = scmp.eq.s32.totalorder %s92, 0
      %s95 = sadd.s32 %s94, 1
      %s96 = scalar_select %p93, %s94, %s95
      %p99 = pneg %p93
      %p100 = scmp.eq.s32.totalorder %s11, 1
      %p101 = por %p99, %p100
      %p102 = scmp.ne.s32.totalorder %s94, %s97
      %p103 = scmp.eq.s32.totalorder %s11, 0
      %p104 = por %p102, %p103
      %p105 = scmp.ne.s32.totalorder %s94, %s97
      %p106 = scmp.eq.s32.totalorder %s16, 1
      %p107 = por %p105, %p106
      %p108 = scmp.ne.s32.totalorder %s97, %s98
      %p109 = scmp.eq.s32.totalorder %s16, 0
      %p110 = por %p108, %p109
      %p111 = scmp.ne.s32.totalorder %s97, %s98
      %p112 = scmp.eq.s32.totalorder %s17, 1
      %p113 = por %p111, %p112
      %p115 = scmp.ne.s32.totalorder %s98, %s114
      %p116 = scmp.eq.s32.totalorder %s17, 0
      %p117 = por %p115, %p116
      %s118 = ssub.s32 %s11, %s18
      %p119 = scmp.eq.s32.totalorder %s118, 0
      %s121 = sadd.s32 %s120, 1
      %s122 = scalar_select %p119, %s120, %s121
      %p125 = pneg %p119
      %p126 = scmp.eq.s32.totalorder %s11, 1
      %p127 = por %p125, %p126
      %p128 = scmp.ne.s32.totalorder %s120, %s123
      %p129 = scmp.eq.s32.totalorder %s11, 0
      %p130 = por %p128, %p129
      %p131 = scmp.ne.s32.totalorder %s120, %s123
      %p132 = scmp.eq.s32.totalorder %s16, 1
      %p133 = por %p131, %p132
      %p134 = scmp.ne.s32.totalorder %s123, %s124
      %p135 = scmp.eq.s32.totalorder %s16, 0
      %p136 = por %p134, %p135
      %p137 = scmp.ne.s32.totalorder %s123, %s124
      %p138 = scmp.eq.s32.totalorder %s17, 1
      %p139 = por %p137, %p138
      %p141 = scmp.ne.s32.totalorder %s124, %s140
      %p142 = scmp.eq.s32.totalorder %s17, 0
      %p143 = por %p141, %p142
      %p144 = scmp.le.s32.totalorder 1, %s11
      %p145 = scmp.lt.s32.totalorder %s11, 3
      %p146 = pnand %p144, %p145
      %p147 = pneg %p146
      // Predicated region
      $region9: #{basic_block_pallas.6} parent=5 // pred_check
        _
      $region10: #{basic_block_pallas.6} parent=5 // pred_check_branch
        %149 = sbr.rel (%p146) target = $region12
      $region11: #{basic_block_pallas.6} parent=5 // pred_region
        %s150 = ssub.s32 %s11, 1
        // Predicated region
        $region13: #{basic_block_pallas.6} parent=11 // pred_check
          %p151 = pneg %p58
        $region14: #{basic_block_pallas.6} parent=11 // pred_check_branch
          %153 = sbr.rel (%p151) target = $region16
        $region15: #{basic_block_pallas.6} parent=11 // pred_region
          _
        $region16: #{basic_block_pallas.6} parent=11 // pred_fallthru
          _
      $region12: #{basic_block_pallas.6} parent=5 // pred_fallthru
        _
      %p154 = scmp.lt.s32.totalorder %s11, 2
      // Predicated region
      $region17: #{basic_block_pallas.6} parent=5 // pred_check
        %p155 = pneg %p154
      $region18: #{basic_block_pallas.6} parent=5 // pred_check_branch
        %157 = sbr.rel (%p155) target = $region20
      $region19: #{basic_block_pallas.6} parent=5 // pred_region
        // Predicated region
        $region21: #{basic_block_pallas.6} parent=19 // pred_check
          %p158 = pneg %p31
        $region22: #{basic_block_pallas.6} parent=19 // pred_check_branch
          %160 = sbr.rel (%p158) target = $region24
        $region23: #{basic_block_pallas.6} parent=19 // pred_region
          %s161 = sand.u32 %s21, 1
          %s162 = sand.u32 %s21, 1
          %s163 = smul.addr %s162, 192
          %s164 = scalar_lea.vmem [#allocation2], %s163
          %s165 = smul.addr %s11, 12
          %s166 = smul.addr %s165, 4
          %s167 = scalar_lea.vmem %s0, %s166
          // Predicated region
          $region25: #{basic_block_pallas.6} parent=23 // pred_check
            _
          $region26: #{basic_block_pallas.6} parent=23 // pred_check_branch
            %169 = sbr.rel (0) target = $region28
          $region27: #{basic_block_pallas.6} parent=23 // pred_region
            // Predicated region
            $region29: #{basic_block_pallas.6} parent=27 // pred_check
              _
            $region30: #{basic_block_pallas.6} parent=27 // pred_check_branch
              %171 = sbr.rel target = $region32
            $region31: #{basic_block_pallas.6} parent=27 // pred_region
              // Predicated region
              $region44: #{basic_block_pallas.6} parent=31 // pred_check
                _
              $region45: #{basic_block_pallas.6} parent=31 // pred_check_branch
                %280 = sbr.rel (0) target = $region47
              $region46: #{basic_block_pallas.6} parent=31 // pred_region
                loop: start=0, step=1, limit=1
                $region48: #{basic_block_pallas.6} parent=46 // loop_pre_header
                  _
                $region49: #{basic_block_pallas.6} parent=46 // loop_header
                  %s282 = sphi 0, %s286
                  %p283 = scmp.ge.s32.totalorder %s282, 1
                  %s287 = sphi %s167, %s167
                  %s288 = sphi %s164, %s164
                $region50: #{basic_block_pallas.6} parent=46 // loop_header_branch
                  %285 = sbr.rel (%p283) target = $region54
                $region51: #{basic_block_pallas.6} parent=46 // loop_body
                  _
                $region52: #{basic_block_pallas.6} parent=46 // loop_footer
                  %s286 = sadd.s32 1, %s282
                $region53: #{basic_block_pallas.6} parent=46 // loop_footer_branch
                  %281 = sbr.rel target = $region49
                $region54: #{basic_block_pallas.6} parent=46 // loop_exit
                  _
                loop: start=0, step=1, limit=1
                $region55: #{basic_block_pallas.6} parent=46 // loop_pre_header
                  _
                $region56: #{basic_block_pallas.6} parent=46 // loop_header
                  %s291 = sphi 0, %s295
                  %p292 = scmp.ge.s32.totalorder %s291, 1
                  %s296 = sphi %s167, %s167
                  %s297 = sphi %s164, %s164
                $region57: #{basic_block_pallas.6} parent=46 // loop_header_branch
                  %294 = sbr.rel (%p292) target = $region61
                $region58: #{basic_block_pallas.6} parent=46 // loop_body
                  %v298 = vld [vmem:[%s296] sm:$0xf]
                  %299 = vst [vmem:[%s297] sm:$0xf] %v298
                  %v300 = vld [vmem:[%s296 + $0x4] sm:$0xf]
                  %301 = vst [vmem:[%s297 + $0x4] sm:$0xf] %v300
                  %v302 = vld [vmem:[%s296 + $0x8] sm:$0xf]
                  %303 = vst [vmem:[%s297 + $0x8] sm:$0xf] %v302
                  %v304 = vld [vmem:[%s296 + $0xc] sm:$0xf]
                  %305 = vst [vmem:[%s297 + $0xc] sm:$0xf] %v304
                  %v306 = vld [vmem:[%s296 + $0x10] sm:$0xf]
                  %307 = vst [vmem:[%s297 + $0x10] sm:$0xf] %v306
                  %v308 = vld [vmem:[%s296 + $0x14] sm:$0xf]
                  %309 = vst [vmem:[%s297 + $0x14] sm:$0xf] %v308
                  %v310 = vld [vmem:[%s296 + $0x18] sm:$0xf]
                  %311 = vst [vmem:[%s297 + $0x18] sm:$0xf] %v310
                  %v312 = vld [vmem:[%s296 + $0x1c] sm:$0xf]
                  %313 = vst [vmem:[%s297 + $0x1c] sm:$0xf] %v312
                  %v314 = vld [vmem:[%s296 + $0x20] sm:$0xf]
                  %315 = vst [vmem:[%s297 + $0x20] sm:$0xf] %v314
                  %v316 = vld [vmem:[%s296 + $0x24] sm:$0xf]
                  %317 = vst [vmem:[%s297 + $0x24] sm:$0xf] %v316
                  %v318 = vld [vmem:[%s296 + $0x28] sm:$0xf]
                  %319 = vst [vmem:[%s297 + $0x28] sm:$0xf] %v318
                  %v320 = vld [vmem:[%s296 + $0x2c] sm:$0xf]
                  %321 = vst [vmem:[%s297 + $0x2c] sm:$0xf] %v320
                  %v322 = vld [vmem:[%s296 + $0x60] sm:$0xf]
                  %323 = vst [vmem:[%s297 + $0x30] sm:$0xf] %v322
                  %v324 = vld [vmem:[%s296 + $0x64] sm:$0xf]
                  %325 = vst [vmem:[%s297 + $0x34] sm:$0xf] %v324
                  %v326 = vld [vmem:[%s296 + $0x68] sm:$0xf]
                  %327 = vst [vmem:[%s297 + $0x38] sm:$0xf] %v326
                  %v328 = vld [vmem:[%s296 + $0x6c] sm:$0xf]
                  %329 = vst [vmem:[%s297 + $0x3c] sm:$0xf] %v328
                  %v330 = vld [vmem:[%s296 + $0x70] sm:$0xf]
                  %331 = vst [vmem:[%s297 + $0x40] sm:$0xf] %v330
                  %v332 = vld [vmem:[%s296 + $0x74] sm:$0xf]
                  %333 = vst [vmem:[%s297 + $0x44] sm:$0xf] %v332
                  %v334 = vld [vmem:[%s296 + $0x78] sm:$0xf]
                  %335 = vst [vmem:[%s297 + $0x48] sm:$0xf] %v334
                  %v336 = vld [vmem:[%s296 + $0x7c] sm:$0xf]
                  %337 = vst [vmem:[%s297 + $0x4c] sm:$0xf] %v336
                  %v338 = vld [vmem:[%s296 + $0x80] sm:$0xf]
                  %339 = vst [vmem:[%s297 + $0x50] sm:$0xf] %v338
                  %v340 = vld [vmem:[%s296 + $0x84] sm:$0xf]
                  %341 = vst [vmem:[%s297 + $0x54] sm:$0xf] %v340
                  %v342 = vld [vmem:[%s296 + $0x88] sm:$0xf]
                  %343 = vst [vmem:[%s297 + $0x58] sm:$0xf] %v342
                  %v344 = vld [vmem:[%s296 + $0x8c] sm:$0xf]
                  %345 = vst [vmem:[%s297 + $0x5c] sm:$0xf] %v344
                  %v346 = vld [vmem:[%s296 + $0xc0] sm:$0xf]
                  %347 = vst [vmem:[%s297 + $0x60] sm:$0xf] %v346
                  %v348 = vld [vmem:[%s296 + $0xc4] sm:$0xf]
                  %349 = vst [vmem:[%s297 + $0x64] sm:$0xf] %v348
                  %v350 = vld [vmem:[%s296 + $0xc8] sm:$0xf]
                  %351 = vst [vmem:[%s297 + $0x68] sm:$0xf] %v350
                  %v352 = vld [vmem:[%s296 + $0xcc] sm:$0xf]
                  %353 = vst [vmem:[%s297 + $0x6c] sm:$0xf] %v352
                  %v354 = vld [vmem:[%s296 + $0xd0] sm:$0xf]
                  %355 = vst [vmem:[%s297 + $0x70] sm:$0xf] %v354
                  %v356 = vld [vmem:[%s296 + $0xd4] sm:$0xf]
                  %357 = vst [vmem:[%s297 + $0x74] sm:$0xf] %v356
                  %v358 = vld [vmem:[%s296 + $0xd8] sm:$0xf]
                  %359 = vst [vmem:[%s297 + $0x78] sm:$0xf] %v358
                  %v360 = vld [vmem:[%s296 + $0xdc] sm:$0xf]
                  %361 = vst [vmem:[%s297 + $0x7c] sm:$0xf] %v360
                  %v362 = vld [vmem:[%s296 + $0xe0] sm:$0xf]
                  %363 = vst [vmem:[%s297 + $0x80] sm:$0xf] %v362
                  %v364 = vld [vmem:[%s296 + $0xe4] sm:$0xf]
                  %365 = vst [vmem:[%s297 + $0x84] sm:$0xf] %v364
                  %v366 = vld [vmem:[%s296 + $0xe8] sm:$0xf]
                  %367 = vst [vmem:[%s297 + $0x88] sm:$0xf] %v366
                  %v368 = vld [vmem:[%s296 + $0xec] sm:$0xf]
                  %369 = vst [vmem:[%s297 + $0x8c] sm:$0xf] %v368
                  %v370 = vld [vmem:[%s296 + $0x120] sm:$0xf]
                  %371 = vst [vmem:[%s297 + $0x90] sm:$0xf] %v370
                  %v372 = vld [vmem:[%s296 + $0x124] sm:$0xf]
                  %373 = vst [vmem:[%s297 + $0x94] sm:$0xf] %v372
                  %v374 = vld [vmem:[%s296 + $0x128] sm:$0xf]
                  %375 = vst [vmem:[%s297 + $0x98] sm:$0xf] %v374
                  %v376 = vld [vmem:[%s296 + $0x12c] sm:$0xf]
                  %377 = vst [vmem:[%s297 + $0x9c] sm:$0xf] %v376
                  %v378 = vld [vmem:[%s296 + $0x130] sm:$0xf]
                  %379 = vst [vmem:[%s297 + $0xa0] sm:$0xf] %v378
                  %v380 = vld [vmem:[%s296 + $0x134] sm:$0xf]
                  %381 = vst [vmem:[%s297 + $0xa4] sm:$0xf] %v380
                  %v382 = vld [vmem:[%s296 + $0x138] sm:$0xf]
                  %383 = vst [vmem:[%s297 + $0xa8] sm:$0xf] %v382
                  %v384 = vld [vmem:[%s296 + $0x13c] sm:$0xf]
                  %385 = vst [vmem:[%s297 + $0xac] sm:$0xf] %v384
                  %v386 = vld [vmem:[%s296 + $0x140] sm:$0xf]
                  %387 = vst [vmem:[%s297 + $0xb0] sm:$0xf] %v386
                  %v388 = vld [vmem:[%s296 + $0x144] sm:$0xf]
                  %389 = vst [vmem:[%s297 + $0xb4] sm:$0xf] %v388
                  %v390 = vld [vmem:[%s296 + $0x148] sm:$0xf]
                  %391 = vst [vmem:[%s297 + $0xb8] sm:$0xf] %v390
                  %v392 = vld [vmem:[%s296 + $0x14c] sm:$0xf]
                  %393 = vst [vmem:[%s297 + $0xbc] sm:$0xf] %v392
                $region59: #{basic_block_pallas.6} parent=46 // loop_footer
                  %s295 = sadd.s32 1, %s291
                $region60: #{basic_block_pallas.6} parent=46 // loop_footer_branch
                  %290 = sbr.rel target = $region56
                $region61: #{basic_block_pallas.6} parent=46 // loop_exit
                  _
              $region47: #{basic_block_pallas.6} parent=31 // pred_fallthru
                _
            $region32: #{basic_block_pallas.6} parent=27 // pred_fallthru
              _
            // Predicated region
            $region33: #{basic_block_pallas.6} parent=27 // pred_check
              _
            $region34: #{basic_block_pallas.6} parent=27 // pred_check_branch
              %173 = sbr.rel (0) target = $region36
            $region35: #{basic_block_pallas.6} parent=27 // pred_region
              loop: start=0, step=1, limit=1
              $region37: #{basic_block_pallas.6} parent=35 // loop_pre_header
                _
              $region38: #{basic_block_pallas.6} parent=35 // loop_header
                %s176 = sphi 0, %s180
                %p177 = scmp.ge.s32.totalorder %s176, 1
                %s181 = sphi %s167, %s167
                %s182 = sphi %s164, %s164
              $region39: #{basic_block_pallas.6} parent=35 // loop_header_branch
                %179 = sbr.rel (%p177) target = $region43
              $region40: #{basic_block_pallas.6} parent=35 // loop_body
                %v183 = vld [vmem:[%s181] sm:$0xf]
                %184 = vst [vmem:[%s182] sm:$0xf] %v183
                %v185 = vld [vmem:[%s181 + $0x4] sm:$0xf]
                %186 = vst [vmem:[%s182 + $0x4] sm:$0xf] %v185
                %v187 = vld [vmem:[%s181 + $0x8] sm:$0xf]
                %188 = vst [vmem:[%s182 + $0x8] sm:$0xf] %v187
                %v189 = vld [vmem:[%s181 + $0xc] sm:$0xf]
                %190 = vst [vmem:[%s182 + $0xc] sm:$0xf] %v189
                %v191 = vld [vmem:[%s181 + $0x10] sm:$0xf]
                %192 = vst [vmem:[%s182 + $0x10] sm:$0xf] %v191
                %v193 = vld [vmem:[%s181 + $0x14] sm:$0xf]
                %194 = vst [vmem:[%s182 + $0x14] sm:$0xf] %v193
                %v195 = vld [vmem:[%s181 + $0x18] sm:$0xf]
                %196 = vst [vmem:[%s182 + $0x18] sm:$0xf] %v195
                %v197 = vld [vmem:[%s181 + $0x1c] sm:$0xf]
                %198 = vst [vmem:[%s182 + $0x1c] sm:$0xf] %v197
                %v199 = vld [vmem:[%s181 + $0x20] sm:$0xf]
                %200 = vst [vmem:[%s182 + $0x20] sm:$0xf] %v199
                %v201 = vld [vmem:[%s181 + $0x24] sm:$0xf]
                %202 = vst [vmem:[%s182 + $0x24] sm:$0xf] %v201
                %v203 = vld [vmem:[%s181 + $0x28] sm:$0xf]
                %204 = vst [vmem:[%s182 + $0x28] sm:$0xf] %v203
                %v205 = vld [vmem:[%s181 + $0x2c] sm:$0xf]
                %206 = vst [vmem:[%s182 + $0x2c] sm:$0xf] %v205
                %v207 = vld [vmem:[%s181 + $0x60] sm:$0xf]
                %208 = vst [vmem:[%s182 + $0x30] sm:$0xf] %v207
                %v209 = vld [vmem:[%s181 + $0x64] sm:$0xf]
                %210 = vst [vmem:[%s182 + $0x34] sm:$0xf] %v209
                %v211 = vld [vmem:[%s181 + $0x68] sm:$0xf]
                %212 = vst [vmem:[%s182 + $0x38] sm:$0xf] %v211
                %v213 = vld [vmem:[%s181 + $0x6c] sm:$0xf]
                %214 = vst [vmem:[%s182 + $0x3c] sm:$0xf] %v213
                %v215 = vld [vmem:[%s181 + $0x70] sm:$0xf]
                %216 = vst [vmem:[%s182 + $0x40] sm:$0xf] %v215
                %v217 = vld [vmem:[%s181 + $0x74] sm:$0xf]
                %218 = vst [vmem:[%s182 + $0x44] sm:$0xf] %v217
                %v219 = vld [vmem:[%s181 + $0x78] sm:$0xf]
                %220 = vst [vmem:[%s182 + $0x48] sm:$0xf] %v219
                %v221 = vld [vmem:[%s181 + $0x7c] sm:$0xf]
                %222 = vst [vmem:[%s182 + $0x4c] sm:$0xf] %v221
                %v223 = vld [vmem:[%s181 + $0x80] sm:$0xf]
                %224 = vst [vmem:[%s182 + $0x50] sm:$0xf] %v223
                %v225 = vld [vmem:[%s181 + $0x84] sm:$0xf]
                %226 = vst [vmem:[%s182 + $0x54] sm:$0xf] %v225
                %v227 = vld [vmem:[%s181 + $0x88] sm:$0xf]
                %228 = vst [vmem:[%s182 + $0x58] sm:$0xf] %v227
                %v229 = vld [vmem:[%s181 + $0x8c] sm:$0xf]
                %230 = vst [vmem:[%s182 + $0x5c] sm:$0xf] %v229
                %v231 = vld [vmem:[%s181 + $0xc0] sm:$0xf]
                %232 = vst [vmem:[%s182 + $0x60] sm:$0xf] %v231
                %v233 = vld [vmem:[%s181 + $0xc4] sm:$0xf]
                %234 = vst [vmem:[%s182 + $0x64] sm:$0xf] %v233
                %v235 = vld [vmem:[%s181 + $0xc8] sm:$0xf]
                %236 = vst [vmem:[%s182 + $0x68] sm:$0xf] %v235
                %v237 = vld [vmem:[%s181 + $0xcc] sm:$0xf]
                %238 = vst [vmem:[%s182 + $0x6c] sm:$0xf] %v237
                %v239 = vld [vmem:[%s181 + $0xd0] sm:$0xf]
                %240 = vst [vmem:[%s182 + $0x70] sm:$0xf] %v239
                %v241 = vld [vmem:[%s181 + $0xd4] sm:$0xf]
                %242 = vst [vmem:[%s182 + $0x74] sm:$0xf] %v241
                %v243 = vld [vmem:[%s181 + $0xd8] sm:$0xf]
                %244 = vst [vmem:[%s182 + $0x78] sm:$0xf] %v243
                %v245 = vld [vmem:[%s181 + $0xdc] sm:$0xf]
                %246 = vst [vmem:[%s182 + $0x7c] sm:$0xf] %v245
                %v247 = vld [vmem:[%s181 + $0xe0] sm:$0xf]
                %248 = vst [vmem:[%s182 + $0x80] sm:$0xf] %v247
                %v249 = vld [vmem:[%s181 + $0xe4] sm:$0xf]
                %250 = vst [vmem:[%s182 + $0x84] sm:$0xf] %v249
                %v251 = vld [vmem:[%s181 + $0xe8] sm:$0xf]
                %252 = vst [vmem:[%s182 + $0x88] sm:$0xf] %v251
                %v253 = vld [vmem:[%s181 + $0xec] sm:$0xf]
                %254 = vst [vmem:[%s182 + $0x8c] sm:$0xf] %v253
                %v255 = vld [vmem:[%s181 + $0x120] sm:$0xf]
                %256 = vst [vmem:[%s182 + $0x90] sm:$0xf] %v255
                %v257 = vld [vmem:[%s181 + $0x124] sm:$0xf]
                %258 = vst [vmem:[%s182 + $0x94] sm:$0xf] %v257
                %v259 = vld [vmem:[%s181 + $0x128] sm:$0xf]
                %260 = vst [vmem:[%s182 + $0x98] sm:$0xf] %v259
                %v261 = vld [vmem:[%s181 + $0x12c] sm:$0xf]
                %262 = vst [vmem:[%s182 + $0x9c] sm:$0xf] %v261
                %v263 = vld [vmem:[%s181 + $0x130] sm:$0xf]
                %264 = vst [vmem:[%s182 + $0xa0] sm:$0xf] %v263
                %v265 = vld [vmem:[%s181 + $0x134] sm:$0xf]
                %266 = vst [vmem:[%s182 + $0xa4] sm:$0xf] %v265
                %v267 = vld [vmem:[%s181 + $0x138] sm:$0xf]
                %268 = vst [vmem:[%s182 + $0xa8] sm:$0xf] %v267
                %v269 = vld [vmem:[%s181 + $0x13c] sm:$0xf]
                %270 = vst [vmem:[%s182 + $0xac] sm:$0xf] %v269
                %v271 = vld [vmem:[%s181 + $0x140] sm:$0xf]
                %272 = vst [vmem:[%s182 + $0xb0] sm:$0xf] %v271
                %v273 = vld [vmem:[%s181 + $0x144] sm:$0xf]
                %274 = vst [vmem:[%s182 + $0xb4] sm:$0xf] %v273
                %v275 = vld [vmem:[%s181 + $0x148] sm:$0xf]
                %276 = vst [vmem:[%s182 + $0xb8] sm:$0xf] %v275
                %v277 = vld [vmem:[%s181 + $0x14c] sm:$0xf]
                %278 = vst [vmem:[%s182 + $0xbc] sm:$0xf] %v277
              $region41: #{basic_block_pallas.6} parent=35 // loop_footer
                %s180 = sadd.s32 1, %s176
              $region42: #{basic_block_pallas.6} parent=35 // loop_footer_branch
                %175 = sbr.rel target = $region38
              $region43: #{basic_block_pallas.6} parent=35 // loop_exit
                _
            $region36: #{basic_block_pallas.6} parent=27 // pred_fallthru
              _
          $region28: #{basic_block_pallas.6} parent=23 // pred_fallthru
            _
          %394 = vnop
        $region24: #{basic_block_pallas.6} parent=19 // pred_fallthru
          _
      $region20: #{basic_block_pallas.6} parent=5 // pred_fallthru
        _
      %p395 = scmp.le.s32.totalorder 1, %s11
      %p396 = scmp.lt.s32.totalorder %s11, 3
      %p397 = pnand %p395, %p396
      %p398 = pneg %p397
      // Predicated region
      $region62: #{basic_block_pallas.6} parent=5 // pred_check
        _
      $region63: #{basic_block_pallas.6} parent=5 // pred_check_branch
        %400 = sbr.rel (%p397) target = $region65
      $region64: #{basic_block_pallas.6} parent=5 // pred_region
        %s401 = ssub.s32 %s11, 1
        %s402 = sand.u32 %s24, 1
        %s403 = sand.u32 %s24, 1
        %s404 = smul.addr %s403, 192
        %s405 = scalar_lea.vmem [#allocation2], %s404
        // Predicated region
        $region66: #{basic_block_pallas.6} parent=64 // pred_check
          %p406 = pneg %p37
        $region67: #{basic_block_pallas.6} parent=64 // pred_check_branch
          %408 = sbr.rel (%p406) target = $region69
        $region68: #{basic_block_pallas.6} parent=64 // pred_region
          _
        $region69: #{basic_block_pallas.6} parent=64 // pred_fallthru
          _
        %s409 = sand.u32 %s24, 1
        %s410 = sand.u32 %s24, 1
        %s411 = smul.addr %s410, 192
        %s412 = scalar_lea.vmem [#allocation2], %s411
        %p413 = pneg %p37
        %p414 = pneg %p34
        %p415 = pneg %p58
        %p416 = pneg %p55
        %p417 = pneg %p84
        %p418 = pneg %p81
        %p419 = scmp.lt.s32.totalorder %s16, 1
        %s420 = scalar_select %p419, %s16, 1
        %s421 = smul.addr %s420, 9
        %s422 = smul.addr %s421, 4
        %s423 = scalar_lea.vmem %s2, %s422
        %p424 = pneg %p110
        %p425 = pneg %p107
        %p426 = scmp.lt.s32.totalorder %s16, 1
        %s427 = scalar_select %p426, %s16, 1
        %s428 = scalar_lea.vmem %s3, %s427
        %p429 = pneg %p136
        %p430 = pneg %p133
        %p431 = scmp.lt.s32.totalorder %s16, 1
        %s432 = scalar_select %p431, %s16, 1
        %s433 = scalar_lea.vmem %s4, %s432
        %p434 = scmp.lt.s32.totalorder %s16, 1
        %s435 = scalar_select %p434, %s16, 1
        %s436 = smul.addr %s435, 9
        %s437 = smul.addr %s436, 4
        %s438 = scalar_lea.vmem %s2, %s437
        %p439 = scmp.lt.s32.totalorder %s16, 1
        %s440 = scalar_select %p439, %s16, 1
        %s441 = scalar_lea.vmem %s3, %s440
        %p442 = scmp.lt.s32.totalorder %s16, 1
        %s443 = scalar_select %p442, %s16, 1
        %s444 = scalar_lea.vmem %s4, %s443
        %v446 = vld [vmem:[%s405] sm:$0xf]
        %v447 = vld [vmem:[%s405 + $0x4] sm:$0xf]
        %v448 = vld [vmem:[%s405 + $0x8] sm:$0xf]
        %v449 = vld [vmem:[%s405 + $0xc] sm:$0xf]
        %v450 = vld [vmem:[%s405 + $0x10] sm:$0xf]
        %v451 = vld [vmem:[%s405 + $0x14] sm:$0xf]
        %v452 = vld [vmem:[%s405 + $0x18] sm:$0xf]
        %v453 = vld [vmem:[%s405 + $0x1c] sm:$0xf]
        %v454 = vld [vmem:[%s405 + $0x20] sm:$0xf]
        %v455 = vld [vmem:[%s1] sm:$0x3]
        %s456 = scalar_lea.vmem %s405, 48 [#allocation2]
        %v457 = vld [vmem:[%s456] sm:$0xf]
        %v458 = vld [vmem:[%s456 + $0x4] sm:$0xf]
        %v459 = vld [vmem:[%s456 + $0x8] sm:$0xf]
        %v460 = vld [vmem:[%s456 + $0xc] sm:$0xf]
        %v461 = vld [vmem:[%s456 + $0x10] sm:$0xf]
        %v462 = vld [vmem:[%s456 + $0x14] sm:$0xf]
        %v463 = vld [vmem:[%s456 + $0x18] sm:$0xf]
        %v464 = vld [vmem:[%s456 + $0x1c] sm:$0xf]
        %v465 = vld [vmem:[%s456 + $0x20] sm:$0xf]
        %v466 = vld [vmem:[%s1] sm:$0xc]
        %v476 = vunpack.c.l.b16 %v457
        %v477 = vunpack.c.l.b16 %v458
        %v478 = vunpack.c.l.b16 %v459
        %v479 = vunpack.c.l.b16 %v460
        %v480 = vunpack.c.l.b16 %v461
        %v481 = vunpack.c.l.b16 %v462
        %v482 = vunpack.c.l.b16 %v463
        %v483 = vunpack.c.l.b16 %v464
        %v484 = vunpack.c.l.b16 %v465
        %v485 = vpack.c.b16 %v477, %v476
        %v486 = vpack.c.b16 %v479, %v478
        %v487 = vpack.c.b16 %v481, %v480
        %v488 = vpack.c.b16 %v483, %v482
        %v489 = vpack.c.b16 %v484, %v484
        %v491 = vunpack.c.l.b16 %v466
        %v492 = vpack.c.b16 %v491, %v491
        %v493 = vrot.slane %v492, 2
        %vm494 = vcmask 31744
        %v496 = vsel %vm494, %v485, 0
        %v499 = vsel %vm494, %v486, 0
        %v502 = vsel %vm494, %v487, 0
        %v505 = vsel %vm494, %v488, 0
        %v508 = vsel %vm494, %v489, 0
        %vm510 = vcmask 1041408
        %v512 = vsel %vm510, %v493, 0
        %514 = vmatprep.subr.bf16.mxu0 0
        %515 = vmatpush1.bf16.msra.mxu0 %v512
        %516 = vmatprep.subr.bf16.mxu0 0
        %517 = vmatpush1.bf16.msra.mxu0 0
        %518 = vmatprep.subr.bf16.mxu0 0
        %519 = vmatpush1.bf16.msra.mxu0 0
        %520 = vmatprep.subr.bf16.mxu0 0
        %521 = vmatpush1.bf16.msra.mxu0 0
        %522 = vmatprep.subr.bf16.mxu0 0
        %523 = vmatpush1.bf16.msra.mxu0 0
        %524 = vmatprep.subr.bf16.mxu0 0
        %525 = vmatpush1.bf16.msra.mxu0 0
        %526 = vmatprep.subr.bf16.mxu0 0
        %527 = vmatpush1.bf16.msra.mxu0 0
        %528 = vmatprep.subr.bf16.mxu0 0
        %529 = vmatpush1.bf16.msra.mxu0 0
        %530 = vmatprep.subr.bf16.mxu0 0
        %531 = vmatpush1.bf16.msra.mxu0 0
        %532 = vmatprep.subr.bf16.mxu0 0
        %533 = vmatpush1.bf16.msra.mxu0 0
        %534 = vmatprep.subr.bf16.mxu0 0
        %535 = vmatpush1.bf16.msra.mxu0 0
        %536 = vmatprep.subr.bf16.mxu0 0
        %537 = vmatpush1.bf16.msra.mxu0 0
        %538 = vmatprep.subr.bf16.mxu0 0
        %539 = vmatpush1.bf16.msra.mxu0 0
        %540 = vmatprep.subr.bf16.mxu0 0
        %541 = vmatpush1.bf16.msra.mxu0 0
        %542 = vmatprep.subr.bf16.mxu0 0
        %543 = vmatpush1.bf16.msra.mxu0 0
        %544 = vmatprep.subr.bf16.mxu0 0
        %545 = vmatpush1.bf16.msra.mxu0 0
        %546 = vmatprep.mubr.bf16.mxu0 0
        %547 = vmatmul.mubr.bf16.gmra.mrb[0].mxu0 %v496
        %v548 = vpop.f32.mrb[0].mxu0
        %v549 = vadd.f32 0.0, %v548
        %v550 = vpop.f32.mrb[0].mxu0
        %v551 = vpop.f32.mrb[0].mxu0
        %v552 = vadd.f32 0.0, %v551
        %v553 = vpop.f32.mrb[0].mxu0
        %554 = vmatprep.mubr.bf16.mxu0 0
        %555 = vmatmul.mubr.bf16.gmra.mrb[0].mxu0 %v499
        %v556 = vpop.f32.mrb[0].mxu0
        %v557 = vadd.f32 0.0, %v556
        %v558 = vpop.f32.mrb[0].mxu0
        %v559 = vpop.f32.mrb[0].mxu0
        %v560 = vadd.f32 0.0, %v559
        %v561 = vpop.f32.mrb[0].mxu0
        %562 = vmatprep.mubr.bf16.mxu0 0
        %563 = vmatmul.mubr.bf16.gmra.mrb[0].mxu0 %v502
        %v564 = vpop.f32.mrb[0].mxu0
        %v565 = vadd.f32 0.0, %v564
        %v566 = vpop.f32.mrb[0].mxu0
        %v567 = vpop.f32.mrb[0].mxu0
        %v568 = vadd.f32 0.0, %v567
        %v569 = vpop.f32.mrb[0].mxu0
        %570 = vmatprep.mubr.bf16.mxu0 0
        %571 = vmatmul.mubr.bf16.gmra.mrb[0].mxu0 %v505
        %v572 = vpop.f32.mrb[0].mxu0
        %v573 = vadd.f32 0.0, %v572
        %v574 = vpop.f32.mrb[0].mxu0
        %v575 = vpop.f32.mrb[0].mxu0
        %v576 = vadd.f32 0.0, %v575
        %v577 = vpop.f32.mrb[0].mxu0
        %578 = vmatprep.mubr.bf16.mxu0 0
        %579 = vmatmul.mubr.bf16.gmra.mrb[0].mxu0 %v508
        %v580 = vpop.f32.mrb[0].mxu0
        %v581 = vadd.f32 0.0, %v580
        %v582 = vpop.f32.mrb[0].mxu0
        %v583 = vpop.f32.mrb[0].mxu0
        %v584 = vpop.f32.mrb[0].mxu0
        %585 = vdwg.mxu0
        %v595 = vunpack.c.l.b16 %v446
        %v596 = vunpack.c.l.b16 %v447
        %v597 = vunpack.c.l.b16 %v448
        %v598 = vunpack.c.l.b16 %v449
        %v599 = vunpack.c.l.b16 %v450
        %v600 = vunpack.c.l.b16 %v451
        %v601 = vunpack.c.l.b16 %v452
        %v602 = vunpack.c.l.b16 %v453
        %v603 = vunpack.c.l.b16 %v454
        %v604 = vpack.c.b16 %v596, %v595
        %v605 = vpack.c.b16 %v598, %v597
        %v606 = vpack.c.b16 %v600, %v599
        %v607 = vpack.c.b16 %v602, %v601
        %v608 = vpack.c.b16 %v603, %v603
        %v610 = vsel %vm494, %v604, 0
        %v613 = vsel %vm494, %v605, 0
        %v616 = vsel %vm494, %v606, 0
        %v619 = vsel %vm494, %v607, 0
        %v622 = vsel %vm494, %v608, 0
        %v625 = vsel %vm510, %v455, 0
        %627 = vmatprep.subr.bf16.mxu0 0
        %628 = vmatpush1.bf16.msra.mxu0 %v625
        %629 = vmatprep.subr.bf16.mxu0 0
        %630 = vmatpush1.bf16.msra.mxu0 0
        %631 = vmatprep.subr.bf16.mxu0 0
        %632 = vmatpush1.bf16.msra.mxu0 0
        %633 = vmatprep.subr.bf16.mxu0 0
        %634 = vmatpush1.bf16.msra.mxu0 0
        %635 = vmatprep.subr.bf16.mxu0 0
        %636 = vmatpush1.bf16.msra.mxu0 0
        %637 = vmatprep.subr.bf16.mxu0 0
        %638 = vmatpush1.bf16.msra.mxu0 0
        %639 = vmatprep.subr.bf16.mxu0 0
        %640 = vmatpush1.bf16.msra.mxu0 0
        %641 = vmatprep.subr.bf16.mxu0 0
        %642 = vmatpush1.bf16.msra.mxu0 0
        %643 = vmatprep.subr.bf16.mxu0 0
        %644 = vmatpush1.bf16.msra.mxu0 0
        %645 = vmatprep.subr.bf16.mxu0 0
        %646 = vmatpush1.bf16.msra.mxu0 0
        %647 = vmatprep.subr.bf16.mxu0 0
        %648 = vmatpush1.bf16.msra.mxu0 0
        %649 = vmatprep.subr.bf16.mxu0 0
        %650 = vmatpush1.bf16.msra.mxu0 0
        %651 = vmatprep.subr.bf16.mxu0 0
        %652 = vmatpush1.bf16.msra.mxu0 0
        %653 = vmatprep.subr.bf16.mxu0 0
        %654 = vmatpush1.bf16.msra.mxu0 0
        %655 = vmatprep.subr.bf16.mxu0 0
        %656 = vmatpush1.bf16.msra.mxu0 0
        %657 = vmatprep.subr.bf16.mxu0 0
        %658 = vmatpush1.bf16.msra.mxu0 0
        %659 = vmatprep.mubr.bf16.mxu0 0
        %660 = vmatmul.mubr.bf16.gmra.mrb[0].mxu0 %v610
        %v661 = vpop.f32.mrb[0].mxu0
        %v662 = vadd.f32 %v549, %v661
        %v663 = vpop.f32.mrb[0].mxu0
        %v664 = vpop.f32.mrb[0].mxu0
        %v665 = vadd.f32 %v552, %v664
        %v666 = vpop.f32.mrb[0].mxu0
        %667 = vmatprep.mubr.bf16.mxu0 0
        %668 = vmatmul.mubr.bf16.gmra.mrb[0].mxu0 %v613
        %v669 = vpop.f32.mrb[0].mxu0
        %v670 = vadd.f32 %v557, %v669
        %v671 = vpop.f32.mrb[0].mxu0
        %v672 = vpop.f32.mrb[0].mxu0
        %v673 = vadd.f32 %v560, %v672
        %v674 = vpop.f32.mrb[0].mxu0
        %675 = vmatprep.mubr.bf16.mxu0 0
        %676 = vmatmul.mubr.bf16.gmra.mrb[0].mxu0 %v616
        %v677 = vpop.f32.mrb[0].mxu0
        %v678 = vadd.f32 %v565, %v677
        %v679 = vpop.f32.mrb[0].mxu0
        %v680 = vpop.f32.mrb[0].mxu0
        %v681 = vadd.f32 %v568, %v680
        %v682 = vpop.f32.mrb[0].mxu0
        %683 = vmatprep.mubr.bf16.mxu0 0
        %684 = vmatmul.mubr.bf16.gmra.mrb[0].mxu0 %v619
        %v685 = vpop.f32.mrb[0].mxu0
        %v686 = vadd.f32 %v573, %v685
        %v687 = vpop.f32.mrb[0].mxu0
        %v688 = vpop.f32.mrb[0].mxu0
        %v689 = vadd.f32 %v576, %v688
        %v690 = vpop.f32.mrb[0].mxu0
        %691 = vmatprep.mubr.bf16.mxu0 0
        %692 = vmatmul.mubr.bf16.gmra.mrb[0].mxu0 %v622
        %v693 = vpop.f32.mrb[0].mxu0
        %v694 = vadd.f32 %v581, %v693
        %v695 = vpop.f32.mrb[0].mxu0
        %v696 = vpop.f32.mrb[0].mxu0
        %v697 = vpop.f32.mrb[0].mxu0
        %698 = vdwg.mxu0
        %v699 = vld [vmem:[%s405] sm:$0xf]
        %v700 = vld [vmem:[%s405 + $0x4] sm:$0xf]
        %v701 = vld [vmem:[%s405 + $0x8] sm:$0xf]
        %v702 = vld [vmem:[%s405 + $0xc] sm:$0xf]
        %v703 = vld [vmem:[%s405 + $0x10] sm:$0xf]
        %v704 = vld [vmem:[%s405 + $0x14] sm:$0xf]
        %v705 = vld [vmem:[%s405 + $0x18] sm:$0xf]
        %v706 = vld [vmem:[%s405 + $0x1c] sm:$0xf]
        %v707 = vld [vmem:[%s405 + $0x20] sm:$0xf]
        %v708 = vld [vmem:[%s405 + $0x24] sm:$0x1]
        %v709 = vld [vmem:[%s1 + $0x4] sm:$0x3]
        %v720 = vunpack.c.l.b16 %v699
        %v721 = vunpack.c.l.b16 %v700
        %v722 = vunpack.c.l.b16 %v701
        %v723 = vunpack.c.l.b16 %v702
        %v724 = vunpack.c.l.b16 %v703
        %v725 = vunpack.c.l.b16 %v704
        %v726 = vunpack.c.l.b16 %v705
        %v727 = vunpack.c.l.b16 %v706
        %v728 = vunpack.c.l.b16 %v707
        %v729 = vunpack.c.l.b16 %v708
        %v730 = vpack.c.b16 %v721, %v720
        %v731 = vpack.c.b16 %v723, %v722
        %v732 = vpack.c.b16 %v725, %v724
        %v733 = vpack.c.b16 %v727, %v726
        %v734 = vpack.c.b16 %v729, %v728
        %vm735 = vsmask.f32 7424
        %v737 = vshrl.u32 %v730, 16
        %v739 = vshll.u32 %v730, 16
        %v741 = vrot.slane %v739, 1
        %v742 = vor.u32 %v737, %v741
        %v744 = vshll.u32 %v731, 16
        %v746 = vrot.slane %v744, 1
        %v747 = vsel %vm735, %v742, %v746
        %v748 = vshrl.u32 %v731, 16
        %v750 = vor.u32 %v748, %v746
        %v752 = vshll.u32 %v732, 16
        %v754 = vrot.slane %v752, 1
        %v755 = vsel %vm735, %v750, %v754
        %v756 = vshrl.u32 %v732, 16
        %v758 = vor.u32 %v756, %v754
        %v760 = vshll.u32 %v733, 16
        %v762 = vrot.slane %v760, 1
        %v763 = vsel %vm735, %v758, %v762
        %v764 = vshrl.u32 %v733, 16
        %v766 = vor.u32 %v764, %v762
        %v768 = vshll.u32 %v734, 16
        %v770 = vrot.slane %v768, 1
        %v771 = vsel %vm735, %v766, %v770
        %v772 = vshrl.u32 %v734, 16
        %v774 = vor.u32 %v772, %v770
        %v776 = vsel %vm494, %v747, 0
        %v779 = vsel %vm494, %v755, 0
        %v782 = vsel %vm494, %v763, 0
        %v785 = vsel %vm494, %v771, 0
        %v788 = vsel %vm494, %v774, 0
        %v791 = vsel %vm510, %v709, 0
        %793 = vmatprep.subr.bf16.mxu0 0
        %794 = vmatpush1.bf16.msra.mxu0 %v791
        %795 = vmatprep.subr.bf16.mxu0 0
        %796 = vmatpush1.bf16.msra.mxu0 0
        %797 = vmatprep.subr.bf16.mxu0 0
        %798 = vmatpush1.bf16.msra.mxu0 0
        %799 = vmatprep.subr.bf16.mxu0 0
        %800 = vmatpush1.bf16.msra.mxu0 0
        %801 = vmatprep.subr.bf16.mxu0 0
        %802 = vmatpush1.bf16.msra.mxu0 0
        %803 = vmatprep.subr.bf16.mxu0 0
        %804 = vmatpush1.bf16.msra.mxu0 0
        %805 = vmatprep.subr.bf16.mxu0 0
        %806 = vmatpush1.bf16.msra.mxu0 0
        %807 = vmatprep.subr.bf16.mxu0 0
        %808 = vmatpush1.bf16.msra.mxu0 0
        %809 = vmatprep.subr.bf16.mxu0 0
        %810 = vmatpush1.bf16.msra.mxu0 0
        %811 = vmatprep.subr.bf16.mxu0 0
        %812 = vmatpush1.bf16.msra.mxu0 0
        %813 = vmatprep.subr.bf16.mxu0 0
        %814 = vmatpush1.bf16.msra.mxu0 0
        %815 = vmatprep.subr.bf16.mxu0 0
        %816 = vmatpush1.bf16.msra.mxu0 0
        %817 = vmatprep.subr.bf16.mxu0 0
        %818 = vmatpush1.bf16.msra.mxu0 0
        %819 = vmatprep.subr.bf16.mxu0 0
        %820 = vmatpush1.bf16.msra.mxu0 0
        %821 = vmatprep.subr.bf16.mxu0 0
        %822 = vmatpush1.bf16.msra.mxu0 0
        %823 = vmatprep.subr.bf16.mxu0 0
        %824 = vmatpush1.bf16.msra.mxu0 0
        %825 = vmatprep.mubr.bf16.mxu0 0
        %826 = vmatmul.mubr.bf16.gmra.mrb[0].mxu0 %v776
        %v827 = vpop.f32.mrb[0].mxu0
        %v828 = vadd.f32 0.0, %v827
        %v829 = vpop.f32.mrb[0].mxu0
        %v830 = vpop.f32.mrb[0].mxu0
        %v831 = vadd.f32 0.0, %v830
        %v832 = vpop.f32.mrb[0].mxu0
        %833 = vmatprep.mubr.bf16.mxu0 0
        %834 = vmatmul.mubr.bf16.gmra.mrb[0].mxu0 %v779
        %v835 = vpop.f32.mrb[0].mxu0
        %v836 = vadd.f32 0.0, %v835
        %v837 = vpop.f32.mrb[0].mxu0
        %v838 = vpop.f32.mrb[0].mxu0
        %v839 = vadd.f32 0.0, %v838
        %v840 = vpop.f32.mrb[0].mxu0
        %841 = vmatprep.mubr.bf16.mxu0 0
        %842 = vmatmul.mubr.bf16.gmra.mrb[0].mxu0 %v782
        %v843 = vpop.f32.mrb[0].mxu0
        %v844 = vadd.f32 0.0, %v843
        %v845 = vpop.f32.mrb[0].mxu0
        %v846 = vpop.f32.mrb[0].mxu0
        %v847 = vadd.f32 0.0, %v846
        %v848 = vpop.f32.mrb[0].mxu0
        %849 = vmatprep.mubr.bf16.mxu0 0
        %850 = vmatmul.mubr.bf16.gmra.mrb[0].mxu0 %v785
        %v851 = vpop.f32.mrb[0].mxu0
        %v852 = vadd.f32 0.0, %v851
        %v853 = vpop.f32.mrb[0].mxu0
        %v854 = vpop.f32.mrb[0].mxu0
        %v855 = vadd.f32 0.0, %v854
        %v856 = vpop.f32.mrb[0].mxu0
        %857 = vmatprep.mubr.bf16.mxu0 0
        %858 = vmatmul.mubr.bf16.gmra.mrb[0].mxu0 %v788
        %v859 = vpop.f32.mrb[0].mxu0
        %v860 = vadd.f32 0.0, %v859
        %v861 = vpop.f32.mrb[0].mxu0
        %v862 = vpop.f32.mrb[0].mxu0
        %v863 = vpop.f32.mrb[0].mxu0
        %864 = vdwg.mxu0
        %v865 = vadd.f32 %v662, %v828
        %v866 = vadd.f32 %v665, %v831
        %v867 = vadd.f32 %v670, %v836
        %v868 = vadd.f32 %v673, %v839
        %v869 = vadd.f32 %v678, %v844
        %v870 = vadd.f32 %v681, %v847
        %v871 = vadd.f32 %v686, %v852
        %v872 = vadd.f32 %v689, %v855
        %v873 = vadd.f32 %v694, %v860
        %s874 = scalar_lea.vmem %s405, 96 [#allocation2]
        %v875 = vld [vmem:[%s874] sm:$0xf]
        %v876 = vld [vmem:[%s874 + $0x4] sm:$0xf]
        %v877 = vld [vmem:[%s874 + $0x8] sm:$0xf]
        %v878 = vld [vmem:[%s874 + $0xc] sm:$0xf]
        %v879 = vld [vmem:[%s874 + $0x10] sm:$0xf]
        %v880 = vld [vmem:[%s874 + $0x14] sm:$0xf]
        %v881 = vld [vmem:[%s874 + $0x18] sm:$0xf]
        %v882 = vld [vmem:[%s874 + $0x1c] sm:$0xf]
        %v883 = vld [vmem:[%s874 + $0x20] sm:$0xf]
        %v884 = vld [vmem:[%s1 + $0x4] sm:$0xc]
        %v894 = vunpack.c.l.b16 %v875
        %v895 = vunpack.c.l.b16 %v876
        %v896 = vunpack.c.l.b16 %v877
        %v897 = vunpack.c.l.b16 %v878
        %v898 = vunpack.c.l.b16 %v879
        %v899 = vunpack.c.l.b16 %v880
        %v900 = vunpack.c.l.b16 %v881
        %v901 = vunpack.c.l.b16 %v882
        %v902 = vunpack.c.l.b16 %v883
        %v903 = vpack.c.b16 %v895, %v894
        %v904 = vpack.c.b16 %v897, %v896
        %v905 = vpack.c.b16 %v899, %v898
        %v906 = vpack.c.b16 %v901, %v900
        %v907 = vpack.c.b16 %v902, %v902
        %v909 = vunpack.c.l.b16 %v884
        %v910 = vpack.c.b16 %v909, %v909
        %v911 = vrot.slane %v910, 2
        %v913 = vsel %vm494, %v903, 0
        %v916 = vsel %vm494, %v904, 0
        %v919 = vsel %vm494, %v905, 0
        %v922 = vsel %vm494, %v906, 0
        %v925 = vsel %vm494, %v907, 0
        %v928 = vsel %vm510, %v911, 0
        %930 = vmatprep.subr.bf16.mxu0 0
        %931 = vmatpush1.bf16.msra.mxu0 %v928
        %932 = vmatprep.subr.bf16.mxu0 0
        %933 = vmatpush1.bf16.msra.mxu0 0
        %934 = vmatprep.subr.bf16.mxu0 0
        %935 = vmatpush1.bf16.msra.mxu0 0
        %936 = vmatprep.subr.bf16.mxu0 0
        %937 = vmatpush1.bf16.msra.mxu0 0
        %938 = vmatprep.subr.bf16.mxu0 0
        %939 = vmatpush1.bf16.msra.mxu0 0
        %940 = vmatprep.subr.bf16.mxu0 0
        %941 = vmatpush1.bf16.msra.mxu0 0
        %942 = vmatprep.subr.bf16.mxu0 0
        %943 = vmatpush1.bf16.msra.mxu0 0
        %944 = vmatprep.subr.bf16.mxu0 0
        %945 = vmatpush1.bf16.msra.mxu0 0
        %946 = vmatprep.subr.bf16.mxu0 0
        %947 = vmatpush1.bf16.msra.mxu0 0
        %948 = vmatprep.subr.bf16.mxu0 0
        %949 = vmatpush1.bf16.msra.mxu0 0
        %950 = vmatprep.subr.bf16.mxu0 0
        %951 = vmatpush1.bf16.msra.mxu0 0
        %952 = vmatprep.subr.bf16.mxu0 0
        %953 = vmatpush1.bf16.msra.mxu0 0
        %954 = vmatprep.subr.bf16.mxu0 0
        %955 = vmatpush1.bf16.msra.mxu0 0
        %956 = vmatprep.subr.bf16.mxu0 0
        %957 = vmatpush1.bf16.msra.mxu0 0
        %958 = vmatprep.subr.bf16.mxu0 0
        %959 = vmatpush1.bf16.msra.mxu0 0
        %960 = vmatprep.subr.bf16.mxu0 0
        %961 = vmatpush1.bf16.msra.mxu0 0
        %962 = vmatprep.mubr.bf16.mxu0 0
        %963 = vmatmul.mubr.bf16.gmra.mrb[0].mxu0 %v913
        %v964 = vpop.f32.mrb[0].mxu0
        %v965 = vadd.f32 0.0, %v964
        %v966 = vpop.f32.mrb[0].mxu0
        %v967 = vpop.f32.mrb[0].mxu0
        %v968 = vadd.f32 0.0, %v967
        %v969 = vpop.f32.mrb[0].mxu0
        %970 = vmatprep.mubr.bf16.mxu0 0
        %971 = vmatmul.mubr.bf16.gmra.mrb[0].mxu0 %v916
        %v972 = vpop.f32.mrb[0].mxu0
        %v973 = vadd.f32 0.0, %v972
        %v974 = vpop.f32.mrb[0].mxu0
        %v975 = vpop.f32.mrb[0].mxu0
        %v976 = vadd.f32 0.0, %v975
        %v977 = vpop.f32.mrb[0].mxu0
        %978 = vmatprep.mubr.bf16.mxu0 0
        %979 = vmatmul.mubr.bf16.gmra.mrb[0].mxu0 %v919
        %v980 = vpop.f32.mrb[0].mxu0
        %v981 = vadd.f32 0.0, %v980
        %v982 = vpop.f32.mrb[0].mxu0
        %v983 = vpop.f32.mrb[0].mxu0
        %v984 = vadd.f32 0.0, %v983
        %v985 = vpop.f32.mrb[0].mxu0
        %986 = vmatprep.mubr.bf16.mxu0 0
        %987 = vmatmul.mubr.bf16.gmra.mrb[0].mxu0 %v922
        %v988 = vpop.f32.mrb[0].mxu0
        %v989 = vadd.f32 0.0, %v988
        %v990 = vpop.f32.mrb[0].mxu0
        %v991 = vpop.f32.mrb[0].mxu0
        %v992 = vadd.f32 0.0, %v991
        %v993 = vpop.f32.mrb[0].mxu0
        %994 = vmatprep.mubr.bf16.mxu0 0
        %995 = vmatmul.mubr.bf16.gmra.mrb[0].mxu0 %v925
        %v996 = vpop.f32.mrb[0].mxu0
        %v997 = vadd.f32 0.0, %v996
        %v998 = vpop.f32.mrb[0].mxu0
        %v999 = vpop.f32.mrb[0].mxu0
        %v1000 = vpop.f32.mrb[0].mxu0
        %1001 = vdwg.mxu0
        %v1002 = vadd.f32 %v865, %v965
        %v1003 = vadd.f32 %v866, %v968
        %v1004 = vadd.f32 %v867, %v973
        %v1005 = vadd.f32 %v868, %v976
        %v1006 = vadd.f32 %v869, %v981
        %v1007 = vadd.f32 %v870, %v984
        %v1008 = vadd.f32 %v871, %v989
        %v1009 = vadd.f32 %v872, %v992
        %v1010 = vadd.f32 %v873, %v997
        %s1011 = scalar_lea.vmem %s405, 144 [#allocation2]
        %v1012 = vld [vmem:[%s1011] sm:$0xf]
        %v1013 = vld [vmem:[%s1011 + $0x4] sm:$0xf]
        %v1014 = vld [vmem:[%s1011 + $0x8] sm:$0xf]
        %v1015 = vld [vmem:[%s1011 + $0xc] sm:$0xf]
        %v1016 = vld [vmem:[%s1011 + $0x10] sm:$0xf]
        %v1017 = vld [vmem:[%s1011 + $0x14] sm:$0xf]
        %v1018 = vld [vmem:[%s1011 + $0x18] sm:$0xf]
        %v1019 = vld [vmem:[%s1011 + $0x1c] sm:$0xf]
        %v1020 = vld [vmem:[%s1011 + $0x20] sm:$0xf]
        %v1021 = vld [vmem:[%s1 + $0x8] sm:$0x3]
        %v1031 = vunpack.c.l.b16 %v1012
        %v1032 = vunpack.c.l.b16 %v1013
        %v1033 = vunpack.c.l.b16 %v1014
        %v1034 = vunpack.c.l.b16 %v1015
        %v1035 = vunpack.c.l.b16 %v1016
        %v1036 = vunpack.c.l.b16 %v1017
        %v1037 = vunpack.c.l.b16 %v1018
        %v1038 = vunpack.c.l.b16 %v1019
        %v1039 = vunpack.c.l.b16 %v1020
        %v1040 = vpack.c.b16 %v1032, %v1031
        %v1041 = vpack.c.b16 %v1034, %v1033
        %v1042 = vpack.c.b16 %v1036, %v1035
        %v1043 = vpack.c.b16 %v1038, %v1037
        %v1044 = vpack.c.b16 %v1039, %v1039
        %v1046 = vsel %vm494, %v1040, 0
        %v1049 = vsel %vm494, %v1041, 0
        %v1052 = vsel %vm494, %v1042, 0
        %v1055 = vsel %vm494, %v1043, 0
        %v1058 = vsel %vm494, %v1044, 0
        %v1061 = vsel %vm510, %v1021, 0
        %1063 = vmatprep.subr.bf16.mxu0 0
        %1064 = vmatpush1.bf16.msra.mxu0 %v1061
        %1065 = vmatprep.subr.bf16.mxu0 0
        %1066 = vmatpush1.bf16.msra.mxu0 0
        %1067 = vmatprep.subr.bf16.mxu0 0
        %1068 = vmatpush1.bf16.msra.mxu0 0
        %1069 = vmatprep.subr.bf16.mxu0 0
        %1070 = vmatpush1.bf16.msra.mxu0 0
        %1071 = vmatprep.subr.bf16.mxu0 0
        %1072 = vmatpush1.bf16.msra.mxu0 0
        %1073 = vmatprep.subr.bf16.mxu0 0
        %1074 = vmatpush1.bf16.msra.mxu0 0
        %1075 = vmatprep.subr.bf16.mxu0 0
        %1076 = vmatpush1.bf16.msra.mxu0 0
        %1077 = vmatprep.subr.bf16.mxu0 0
        %1078 = vmatpush1.bf16.msra.mxu0 0
        %1079 = vmatprep.subr.bf16.mxu0 0
        %1080 = vmatpush1.bf16.msra.mxu0 0
        %1081 = vmatprep.subr.bf16.mxu0 0
        %1082 = vmatpush1.bf16.msra.mxu0 0
        %1083 = vmatprep.subr.bf16.mxu0 0
        %1084 = vmatpush1.bf16.msra.mxu0 0
        %1085 = vmatprep.subr.bf16.mxu0 0
        %1086 = vmatpush1.bf16.msra.mxu0 0
        %1087 = vmatprep.subr.bf16.mxu0 0
        %1088 = vmatpush1.bf16.msra.mxu0 0
        %1089 = vmatprep.subr.bf16.mxu0 0
        %1090 = vmatpush1.bf16.msra.mxu0 0
        %1091 = vmatprep.subr.bf16.mxu0 0
        %1092 = vmatpush1.bf16.msra.mxu0 0
        %1093 = vmatprep.subr.bf16.mxu0 0
        %1094 = vmatpush1.bf16.msra.mxu0 0
        %1095 = vmatprep.mubr.bf16.mxu0 0
        %1096 = vmatmul.mubr.bf16.gmra.mrb[0].mxu0 %v1046
        %v1097 = vpop.f32.mrb[0].mxu0
        %v1098 = vadd.f32 0.0, %v1097
        %v1099 = vpop.f32.mrb[0].mxu0
        %v1100 = vpop.f32.mrb[0].mxu0
        %v1101 = vadd.f32 0.0, %v1100
        %v1102 = vpop.f32.mrb[0].mxu0
        %1103 = vmatprep.mubr.bf16.mxu0 0
        %1104 = vmatmul.mubr.bf16.gmra.mrb[0].mxu0 %v1049
        %v1105 = vpop.f32.mrb[0].mxu0
        %v1106 = vadd.f32 0.0, %v1105
        %v1107 = vpop.f32.mrb[0].mxu0
        %v1108 = vpop.f32.mrb[0].mxu0
        %v1109 = vadd.f32 0.0, %v1108
        %v1110 = vpop.f32.mrb[0].mxu0
        %1111 = vmatprep.mubr.bf16.mxu0 0
        %1112 = vmatmul.mubr.bf16.gmra.mrb[0].mxu0 %v1052
        %v1113 = vpop.f32.mrb[0].mxu0
        %v1114 = vadd.f32 0.0, %v1113
        %v1115 = vpop.f32.mrb[0].mxu0
        %v1116 = vpop.f32.mrb[0].mxu0
        %v1117 = vadd.f32 0.0, %v1116
        %v1118 = vpop.f32.mrb[0].mxu0
        %1119 = vmatprep.mubr.bf16.mxu0 0
        %1120 = vmatmul.mubr.bf16.gmra.mrb[0].mxu0 %v1055
        %v1121 = vpop.f32.mrb[0].mxu0
        %v1122 = vadd.f32 0.0, %v1121
        %v1123 = vpop.f32.mrb[0].mxu0
        %v1124 = vpop.f32.mrb[0].mxu0
        %v1125 = vadd.f32 0.0, %v1124
        %v1126 = vpop.f32.mrb[0].mxu0
        %1127 = vmatprep.mubr.bf16.mxu0 0
        %1128 = vmatmul.mubr.bf16.gmra.mrb[0].mxu0 %v1058
        %v1129 = vpop.f32.mrb[0].mxu0
        %v1130 = vadd.f32 0.0, %v1129
        %v1131 = vpop.f32.mrb[0].mxu0
        %v1132 = vpop.f32.mrb[0].mxu0
        %v1133 = vpop.f32.mrb[0].mxu0
        %1134 = vdwg.mxu0
        %v1135 = vadd.f32 %v1002, %v1098
        %v1136 = vadd.f32 %v1003, %v1101
        %v1137 = vadd.f32 %v1004, %v1106
        %v1138 = vadd.f32 %v1005, %v1109
        %v1139 = vadd.f32 %v1006, %v1114
        %v1140 = vadd.f32 %v1007, %v1117
        %v1141 = vadd.f32 %v1008, %v1122
        %v1142 = vadd.f32 %v1009, %v1125
        %v1143 = vadd.f32 %v1010, %v1130
        %v1144 = vld [vmem:[%s874] sm:$0xf]
        %v1145 = vld [vmem:[%s874 + $0x4] sm:$0xf]
        %v1146 = vld [vmem:[%s874 + $0x8] sm:$0xf]
        %v1147 = vld [vmem:[%s874 + $0xc] sm:$0xf]
        %v1148 = vld [vmem:[%s874 + $0x10] sm:$0xf]
        %v1149 = vld [vmem:[%s874 + $0x14] sm:$0xf]
        %v1150 = vld [vmem:[%s874 + $0x18] sm:$0xf]
        %v1151 = vld [vmem:[%s874 + $0x1c] sm:$0xf]
        %v1152 = vld [vmem:[%s874 + $0x20] sm:$0xf]
        %v1153 = vld [vmem:[%s874 + $0x24] sm:$0x1]
        %v1154 = vld [vmem:[%s1 + $0x8] sm:$0xc]
        %v1165 = vunpack.c.l.b16 %v1144
        %v1166 = vunpack.c.l.b16 %v1145
        %v1167 = vunpack.c.l.b16 %v1146
        %v1168 = vunpack.c.l.b16 %v1147
        %v1169 = vunpack.c.l.b16 %v1148
        %v1170 = vunpack.c.l.b16 %v1149
        %v1171 = vunpack.c.l.b16 %v1150
        %v1172 = vunpack.c.l.b16 %v1151
        %v1173 = vunpack.c.l.b16 %v1152
        %v1174 = vunpack.c.l.b16 %v1153
        %v1175 = vpack.c.b16 %v1166, %v1165
        %v1176 = vpack.c.b16 %v1168, %v1167
        %v1177 = vpack.c.b16 %v1170, %v1169
        %v1178 = vpack.c.b16 %v1172, %v1171
        %v1179 = vpack.c.b16 %v1174, %v1173
        %v1181 = vshrl.u32 %v1175, 16
        %v1183 = vshll.u32 %v1175, 16
        %v1185 = vrot.slane %v1183, 1
        %v1186 = vor.u32 %v1181, %v1185
        %v1188 = vshll.u32 %v1176, 16
        %v1190 = vrot.slane %v1188, 1
        %v1191 = vsel %vm735, %v1186, %v1190
        %v1192 = vshrl.u32 %v1176, 16
        %v1194 = vor.u32 %v1192, %v1190
        %v1196 = vshll.u32 %v1177, 16
        %v1198 = vrot.slane %v1196, 1
        %v1199 = vsel %vm735, %v1194, %v1198
        %v1200 = vshrl.u32 %v1177, 16
        %v1202 = vor.u32 %v1200, %v1198
        %v1204 = vshll.u32 %v1178, 16
        %v1206 = vrot.slane %v1204, 1
        %v1207 = vsel %vm735, %v1202, %v1206
        %v1208 = vshrl.u32 %v1178, 16
        %v1210 = vor.u32 %v1208, %v1206
        %v1212 = vshll.u32 %v1179, 16
        %v1214 = vrot.slane %v1212, 1
        %v1215 = vsel %vm735, %v1210, %v1214
        %v1216 = vshrl.u32 %v1179, 16
        %v1218 = vor.u32 %v1216, %v1214
        %v1220 = vunpack.c.l.b16 %v1154
        %v1221 = vpack.c.b16 %v1220, %v1220
        %v1222 = vrot.slane %v1221, 2
        %v1224 = vsel %vm494, %v1191, 0
        %v1227 = vsel %vm494, %v1199, 0
        %v1230 = vsel %vm494, %v1207, 0
        %v1233 = vsel %vm494, %v1215, 0
        %v1236 = vsel %vm494, %v1218, 0
        %v1239 = vsel %vm510, %v1222, 0
        %1241 = vmatprep.subr.bf16.mxu0 0
        %1242 = vmatpush1.bf16.msra.mxu0 %v1239
        %1243 = vmatprep.subr.bf16.mxu0 0
        %1244 = vmatpush1.bf16.msra.mxu0 0
        %1245 = vmatprep.subr.bf16.mxu0 0
        %1246 = vmatpush1.bf16.msra.mxu0 0
        %1247 = vmatprep.subr.bf16.mxu0 0
        %1248 = vmatpush1.bf16.msra.mxu0 0
        %1249 = vmatprep.subr.bf16.mxu0 0
        %1250 = vmatpush1.bf16.msra.mxu0 0
        %1251 = vmatprep.subr.bf16.mxu0 0
        %1252 = vmatpush1.bf16.msra.mxu0 0
        %1253 = vmatprep.subr.bf16.mxu0 0
        %1254 = vmatpush1.bf16.msra.mxu0 0
        %1255 = vmatprep.subr.bf16.mxu0 0
        %1256 = vmatpush1.bf16.msra.mxu0 0
        %1257 = vmatprep.subr.bf16.mxu0 0
        %1258 = vmatpush1.bf16.msra.mxu0 0
        %1259 = vmatprep.subr.bf16.mxu0 0
        %1260 = vmatpush1.bf16.msra.mxu0 0
        %1261 = vmatprep.subr.bf16.mxu0 0
        %1262 = vmatpush1.bf16.msra.mxu0 0
        %1263 = vmatprep.subr.bf16.mxu0 0
        %1264 = vmatpush1.bf16.msra.mxu0 0
        %1265 = vmatprep.subr.bf16.mxu0 0
        %1266 = vmatpush1.bf16.msra.mxu0 0
        %1267 = vmatprep.subr.bf16.mxu0 0
        %1268 = vmatpush1.bf16.msra.mxu0 0
        %1269 = vmatprep.subr.bf16.mxu0 0
        %1270 = vmatpush1.bf16.msra.mxu0 0
        %1271 = vmatprep.subr.bf16.mxu0 0
        %1272 = vmatpush1.bf16.msra.mxu0 0
        %1273 = vmatprep.mubr.bf16.mxu0 0
        %1274 = vmatmul.mubr.bf16.gmra.mrb[0].mxu0 %v1224
        %v1275 = vpop.f32.mrb[0].mxu0
        %v1276 = vadd.f32 0.0, %v1275
        %v1277 = vpop.f32.mrb[0].mxu0
        %v1278 = vpop.f32.mrb[0].mxu0
        %v1279 = vadd.f32 0.0, %v1278
        %v1280 = vpop.f32.mrb[0].mxu0
        %1281 = vmatprep.mubr.bf16.mxu0 0
        %1282 = vmatmul.mubr.bf16.gmra.mrb[0].mxu0 %v1227
        %v1283 = vpop.f32.mrb[0].mxu0
        %v1284 = vadd.f32 0.0, %v1283
        %v1285 = vpop.f32.mrb[0].mxu0
        %v1286 = vpop.f32.mrb[0].mxu0
        %v1287 = vadd.f32 0.0, %v1286
        %v1288 = vpop.f32.mrb[0].mxu0
        %1289 = vmatprep.mubr.bf16.mxu0 0
        %1290 = vmatmul.mubr.bf16.gmra.mrb[0].mxu0 %v1230
        %v1291 = vpop.f32.mrb[0].mxu0
        %v1292 = vadd.f32 0.0, %v1291
        %v1293 = vpop.f32.mrb[0].mxu0
        %v1294 = vpop.f32.mrb[0].mxu0
        %v1295 = vadd.f32 0.0, %v1294
        %v1296 = vpop.f32.mrb[0].mxu0
        %1297 = vmatprep.mubr.bf16.mxu0 0
        %1298 = vmatmul.mubr.bf16.gmra.mrb[0].mxu0 %v1233
        %v1299 = vpop.f32.mrb[0].mxu0
        %v1300 = vadd.f32 0.0, %v1299
        %v1301 = vpop.f32.mrb[0].mxu0
        %v1302 = vpop.f32.mrb[0].mxu0
        %v1303 = vadd.f32 0.0, %v1302
        %v1304 = vpop.f32.mrb[0].mxu0
        %1305 = vmatprep.mubr.bf16.mxu0 0
        %1306 = vmatmul.mubr.bf16.gmra.mrb[0].mxu0 %v1236
        %v1307 = vpop.f32.mrb[0].mxu0
        %v1308 = vadd.f32 0.0, %v1307
        %v1309 = vpop.f32.mrb[0].mxu0
        %v1310 = vpop.f32.mrb[0].mxu0
        %v1311 = vpop.f32.mrb[0].mxu0
        %1312 = vdwg.mxu0
        %v1313 = vadd.f32 %v1135, %v1276
        %v1314 = vadd.f32 %v1136, %v1279
        %v1315 = vadd.f32 %v1137, %v1284
        %v1316 = vadd.f32 %v1138, %v1287
        %v1317 = vadd.f32 %v1139, %v1292
        %v1318 = vadd.f32 %v1140, %v1295
        %v1319 = vadd.f32 %v1141, %v1300
        %v1320 = vadd.f32 %v1142, %v1303
        %v1321 = vadd.f32 %v1143, %v1308
        %v1322 = vld [vmem:[%s405 + $0x4] sm:$0xf]
        %v1323 = vld [vmem:[%s405 + $0x8] sm:$0xf]
        %v1324 = vld [vmem:[%s405 + $0xc] sm:$0xf]
        %v1325 = vld [vmem:[%s405 + $0x10] sm:$0xf]
        %v1326 = vld [vmem:[%s405 + $0x14] sm:$0xf]
        %v1327 = vld [vmem:[%s405 + $0x18] sm:$0xf]
        %v1328 = vld [vmem:[%s405 + $0x1c] sm:$0xf]
        %v1329 = vld [vmem:[%s405 + $0x20] sm:$0xf]
        %v1330 = vld [vmem:[%s405 + $0x24] sm:$0xf]
        %v1331 = vld [vmem:[%s405 + $0x28] sm:$0x1]
        %v1332 = vld [vmem:[%s1 + $0xc] sm:$0x3]
        %v1343 = vunpack.c.l.b16 %v1322
        %v1344 = vunpack.c.l.b16 %v1323
        %v1345 = vunpack.c.l.b16 %v1324
        %v1346 = vunpack.c.l.b16 %v1325
        %v1347 = vunpack.c.l.b16 %v1326
        %v1348 = vunpack.c.l.b16 %v1327
        %v1349 = vunpack.c.l.b16 %v1328
        %v1350 = vunpack.c.l.b16 %v1329
        %v1351 = vunpack.c.l.b16 %v1330
        %v1352 = vunpack.c.l.b16 %v1331
        %v1353 = vpack.c.b16 %v1344, %v1343
        %v1354 = vpack.c.b16 %v1346, %v1345
        %v1355 = vpack.c.b16 %v1348, %v1347
        %v1356 = vpack.c.b16 %v1350, %v1349
        %v1357 = vpack.c.b16 %v1352, %v1351
        %v1359 = vshrl.u32 %v1353, 16
        %v1361 = vshll.u32 %v1353, 16
        %v1363 = vrot.slane %v1361, 1
        %v1364 = vor.u32 %v1359, %v1363
        %v1366 = vshll.u32 %v1354, 16
        %v1368 = vrot.slane %v1366, 1
        %v1369 = vsel %vm735, %v1364, %v1368
        %v1370 = vshrl.u32 %v1354, 16
        %v1372 = vor.u32 %v1370, %v1368
        %v1374 = vshll.u32 %v1355, 16
        %v1376 = vrot.slane %v1374, 1
        %v1377 = vsel %vm735, %v1372, %v1376
        %v1378 = vshrl.u32 %v1355, 16
        %v1380 = vor.u32 %v1378, %v1376
        %v1382 = vshll.u32 %v1356, 16
        %v1384 = vrot.slane %v1382, 1
        %v1385 = vsel %vm735, %v1380, %v1384
        %v1386 = vshrl.u32 %v1356, 16
        %v1388 = vor.u32 %v1386, %v1384
        %v1390 = vshll.u32 %v1357, 16
        %v1392 = vrot.slane %v1390, 1
        %v1393 = vsel %vm735, %v1388, %v1392
        %v1394 = vshrl.u32 %v1357, 16
        %v1396 = vor.u32 %v1394, %v1392
        %v1398 = vsel %vm494, %v1369, 0
        %v1401 = vsel %vm494, %v1377, 0
        %v1404 = vsel %vm494, %v1385, 0
        %v1407 = vsel %vm494, %v1393, 0
        %v1410 = vsel %vm494, %v1396, 0
        %v1413 = vsel %vm510, %v1332, 0
        %1415 = vmatprep.subr.bf16.mxu0 0
        %1416 = vmatpush1.bf16.msra.mxu0 %v1413
        %1417 = vmatprep.subr.bf16.mxu0 0
        %1418 = vmatpush1.bf16.msra.mxu0 0
        %1419 = vmatprep.subr.bf16.mxu0 0
        %1420 = vmatpush1.bf16.msra.mxu0 0
        %1421 = vmatprep.subr.bf16.mxu0 0
        %1422 = vmatpush1.bf16.msra.mxu0 0
        %1423 = vmatprep.subr.bf16.mxu0 0
        %1424 = vmatpush1.bf16.msra.mxu0 0
        %1425 = vmatprep.subr.bf16.mxu0 0
        %1426 = vmatpush1.bf16.msra.mxu0 0
        %1427 = vmatprep.subr.bf16.mxu0 0
        %1428 = vmatpush1.bf16.msra.mxu0 0
        %1429 = vmatprep.subr.bf16.mxu0 0
        %1430 = vmatpush1.bf16.msra.mxu0 0
        %1431 = vmatprep.subr.bf16.mxu0 0
        %1432 = vmatpush1.bf16.msra.mxu0 0
        %1433 = vmatprep.subr.bf16.mxu0 0
        %1434 = vmatpush1.bf16.msra.mxu0 0
        %1435 = vmatprep.subr.bf16.mxu0 0
        %1436 = vmatpush1.bf16.msra.mxu0 0
        %1437 = vmatprep.subr.bf16.mxu0 0
        %1438 = vmatpush1.bf16.msra.mxu0 0
        %1439 = vmatprep.subr.bf16.mxu0 0
        %1440 = vmatpush1.bf16.msra.mxu0 0
        %1441 = vmatprep.subr.bf16.mxu0 0
        %1442 = vmatpush1.bf16.msra.mxu0 0
        %1443 = vmatprep.subr.bf16.mxu0 0
        %1444 = vmatpush1.bf16.msra.mxu0 0
        %1445 = vmatprep.subr.bf16.mxu0 0
        %1446 = vmatpush1.bf16.msra.mxu0 0
        %1447 = vmatprep.mubr.bf16.mxu0 0
        %1448 = vmatmul.mubr.bf16.gmra.mrb[0].mxu0 %v1398
        %v1449 = vpop.f32.mrb[0].mxu0
        %v1450 = vadd.f32 0.0, %v1449
        %v1451 = vpop.f32.mrb[0].mxu0
        %v1452 = vpop.f32.mrb[0].mxu0
        %v1453 = vadd.f32 0.0, %v1452
        %v1454 = vpop.f32.mrb[0].mxu0
        %1455 = vmatprep.mubr.bf16.mxu0 0
        %1456 = vmatmul.mubr.bf16.gmra.mrb[0].mxu0 %v1401
        %v1457 = vpop.f32.mrb[0].mxu0
        %v1458 = vadd.f32 0.0, %v1457
        %v1459 = vpop.f32.mrb[0].mxu0
        %v1460 = vpop.f32.mrb[0].mxu0
        %v1461 = vadd.f32 0.0, %v1460
        %v1462 = vpop.f32.mrb[0].mxu0
        %1463 = vmatprep.mubr.bf16.mxu0 0
        %1464 = vmatmul.mubr.bf16.gmra.mrb[0].mxu0 %v1404
        %v1465 = vpop.f32.mrb[0].mxu0
        %v1466 = vadd.f32 0.0, %v1465
        %v1467 = vpop.f32.mrb[0].mxu0
        %v1468 = vpop.f32.mrb[0].mxu0
        %v1469 = vadd.f32 0.0, %v1468
        %v1470 = vpop.f32.mrb[0].mxu0
        %1471 = vmatprep.mubr.bf16.mxu0 0
        %1472 = vmatmul.mubr.bf16.gmra.mrb[0].mxu0 %v1407
        %v1473 = vpop.f32.mrb[0].mxu0
        %v1474 = vadd.f32 0.0, %v1473
        %v1475 = vpop.f32.mrb[0].mxu0
        %v1476 = vpop.f32.mrb[0].mxu0
        %v1477 = vadd.f32 0.0, %v1476
        %v1478 = vpop.f32.mrb[0].mxu0
        %1479 = vmatprep.mubr.bf16.mxu0 0
        %1480 = vmatmul.mubr.bf16.gmra.mrb[0].mxu0 %v1410
        %v1481 = vpop.f32.mrb[0].mxu0
        %v1482 = vadd.f32 0.0, %v1481
        %v1483 = vpop.f32.mrb[0].mxu0
        %v1484 = vpop.f32.mrb[0].mxu0
        %v1485 = vpop.f32.mrb[0].mxu0
        %1486 = vdwg.mxu0
        %v1487 = vadd.f32 %v1313, %v1450
        %v1488 = vadd.f32 %v1314, %v1453
        %v1489 = vadd.f32 %v1315, %v1458
        %v1490 = vadd.f32 %v1316, %v1461
        %v1491 = vadd.f32 %v1317, %v1466
        %v1492 = vadd.f32 %v1318, %v1469
        %v1493 = vadd.f32 %v1319, %v1474
        %v1494 = vadd.f32 %v1320, %v1477
        %v1495 = vadd.f32 %v1321, %v1482
        %v1496 = vld [vmem:[%s456 + $0x4] sm:$0xf]
        %v1497 = vld [vmem:[%s456 + $0x8] sm:$0xf]
        %v1498 = vld [vmem:[%s456 + $0xc] sm:$0xf]
        %v1499 = vld [vmem:[%s456 + $0x10] sm:$0xf]
        %v1500 = vld [vmem:[%s456 + $0x14] sm:$0xf]
        %v1501 = vld [vmem:[%s456 + $0x18] sm:$0xf]
        %v1502 = vld [vmem:[%s456 + $0x1c] sm:$0xf]
        %v1503 = vld [vmem:[%s456 + $0x20] sm:$0xf]
        %v1504 = vld [vmem:[%s456 + $0x24] sm:$0xf]
        %v1505 = vld [vmem:[%s456 + $0x28] sm:$0x1]
        %v1506 = vld [vmem:[%s1 + $0xc] sm:$0xc]
        %v1517 = vunpack.c.l.b16 %v1496
        %v1518 = vunpack.c.l.b16 %v1497
        %v1519 = vunpack.c.l.b16 %v1498
        %v1520 = vunpack.c.l.b16 %v1499
        %v1521 = vunpack.c.l.b16 %v1500
        %v1522 = vunpack.c.l.b16 %v1501
        %v1523 = vunpack.c.l.b16 %v1502
        %v1524 = vunpack.c.l.b16 %v1503
        %v1525 = vunpack.c.l.b16 %v1504
        %v1526 = vunpack.c.l.b16 %v1505
        %v1527 = vpack.c.b16 %v1518, %v1517
        %v1528 = vpack.c.b16 %v1520, %v1519
        %v1529 = vpack.c.b16 %v1522, %v1521
        %v1530 = vpack.c.b16 %v1524, %v1523
        %v1531 = vpack.c.b16 %v1526, %v1525
        %v1533 = vshrl.u32 %v1527, 16
        %v1535 = vshll.u32 %v1527, 16
        %v1537 = vrot.slane %v1535, 1
        %v1538 = vor.u32 %v1533, %v1537
        %v1540 = vshll.u32 %v1528, 16
        %v1542 = vrot.slane %v1540, 1
        %v1543 = vsel %vm735, %v1538, %v1542
        %v1544 = vshrl.u32 %v1528, 16
        %v1546 = vor.u32 %v1544, %v1542
        %v1548 = vshll.u32 %v1529, 16
        %v1550 = vrot.slane %v1548, 1
        %v1551 = vsel %vm735, %v1546, %v1550
        %v1552 = vshrl.u32 %v1529, 16
        %v1554 = vor.u32 %v1552, %v1550
        %v1556 = vshll.u32 %v1530, 16
        %v1558 = vrot.slane %v1556, 1
        %v1559 = vsel %vm735, %v1554, %v1558
        %v1560 = vshrl.u32 %v1530, 16
        %v1562 = vor.u32 %v1560, %v1558
        %v1564 = vshll.u32 %v1531, 16
        %v1566 = vrot.slane %v1564, 1
        %v1567 = vsel %vm735, %v1562, %v1566
        %v1568 = vshrl.u32 %v1531, 16
        %v1570 = vor.u32 %v1568, %v1566
        %v1572 = vunpack.c.l.b16 %v1506
        %v1573 = vpack.c.b16 %v1572, %v1572
        %v1574 = vrot.slane %v1573, 2
        %v1576 = vsel %vm494, %v1543, 0
        %v1579 = vsel %vm494, %v1551, 0
        %v1582 = vsel %vm494, %v1559, 0
        %v1585 = vsel %vm494, %v1567, 0
        %v1588 = vsel %vm494, %v1570, 0
        %v1591 = vsel %vm510, %v1574, 0
        %1593 = vmatprep.subr.bf16.mxu0 0
        %1594 = vmatpush1.bf16.msra.mxu0 %v1591
        %1595 = vmatprep.subr.bf16.mxu0 0
        %1596 = vmatpush1.bf16.msra.mxu0 0
        %1597 = vmatprep.subr.bf16.mxu0 0
        %1598 = vmatpush1.bf16.msra.mxu0 0
        %1599 = vmatprep.subr.bf16.mxu0 0
        %1600 = vmatpush1.bf16.msra.mxu0 0
        %1601 = vmatprep.subr.bf16.mxu0 0
        %1602 = vmatpush1.bf16.msra.mxu0 0
        %1603 = vmatprep.subr.bf16.mxu0 0
        %1604 = vmatpush1.bf16.msra.mxu0 0
        %1605 = vmatprep.subr.bf16.mxu0 0
        %1606 = vmatpush1.bf16.msra.mxu0 0
        %1607 = vmatprep.subr.bf16.mxu0 0
        %1608 = vmatpush1.bf16.msra.mxu0 0
        %1609 = vmatprep.subr.bf16.mxu0 0
        %1610 = vmatpush1.bf16.msra.mxu0 0
        %1611 = vmatprep.subr.bf16.mxu0 0
        %1612 = vmatpush1.bf16.msra.mxu0 0
        %1613 = vmatprep.subr.bf16.mxu0 0
        %1614 = vmatpush1.bf16.msra.mxu0 0
        %1615 = vmatprep.subr.bf16.mxu0 0
        %1616 = vmatpush1.bf16.msra.mxu0 0
        %1617 = vmatprep.subr.bf16.mxu0 0
        %1618 = vmatpush1.bf16.msra.mxu0 0
        %1619 = vmatprep.subr.bf16.mxu0 0
        %1620 = vmatpush1.bf16.msra.mxu0 0
        %1621 = vmatprep.subr.bf16.mxu0 0
        %1622 = vmatpush1.bf16.msra.mxu0 0
        %1623 = vmatprep.subr.bf16.mxu0 0
        %1624 = vmatpush1.bf16.msra.mxu0 0
        %1625 = vmatprep.mubr.bf16.mxu0 0
        %1626 = vmatmul.mubr.bf16.gmra.mrb[0].mxu0 %v1576
        %v1627 = vpop.f32.mrb[0].mxu0
        %v1628 = vadd.f32 0.0, %v1627
        %v1629 = vpop.f32.mrb[0].mxu0
        %v1630 = vpop.f32.mrb[0].mxu0
        %v1631 = vadd.f32 0.0, %v1630
        %v1632 = vpop.f32.mrb[0].mxu0
        %1633 = vmatprep.mubr.bf16.mxu0 0
        %1634 = vmatmul.mubr.bf16.gmra.mrb[0].mxu0 %v1579
        %v1635 = vpop.f32.mrb[0].mxu0
        %v1636 = vadd.f32 0.0, %v1635
        %v1637 = vpop.f32.mrb[0].mxu0
        %v1638 = vpop.f32.mrb[0].mxu0
        %v1639 = vadd.f32 0.0, %v1638
        %v1640 = vpop.f32.mrb[0].mxu0
        %1641 = vmatprep.mubr.bf16.mxu0 0
        %1642 = vmatmul.mubr.bf16.gmra.mrb[0].mxu0 %v1582
        %v1643 = vpop.f32.mrb[0].mxu0
        %v1644 = vadd.f32 0.0, %v1643
        %v1645 = vpop.f32.mrb[0].mxu0
        %v1646 = vpop.f32.mrb[0].mxu0
        %v1647 = vadd.f32 0.0, %v1646
        %v1648 = vpop.f32.mrb[0].mxu0
        %1649 = vmatprep.mubr.bf16.mxu0 0
        %1650 = vmatmul.mubr.bf16.gmra.mrb[0].mxu0 %v1585
        %v1651 = vpop.f32.mrb[0].mxu0
        %v1652 = vadd.f32 0.0, %v1651
        %v1653 = vpop.f32.mrb[0].mxu0
        %v1654 = vpop.f32.mrb[0].mxu0
        %v1655 = vadd.f32 0.0, %v1654
        %v1656 = vpop.f32.mrb[0].mxu0
        %1657 = vmatprep.mubr.bf16.mxu0 0
        %1658 = vmatmul.mubr.bf16.gmra.mrb[0].mxu0 %v1588
        %v1659 = vpop.f32.mrb[0].mxu0
        %v1660 = vadd.f32 0.0, %v1659
        %v1661 = vpop.f32.mrb[0].mxu0
        %v1662 = vpop.f32.mrb[0].mxu0
        %v1663 = vpop.f32.mrb[0].mxu0
        %1664 = vdwg.mxu0
        %v1665 = vadd.f32 %v1487, %v1628
        %v1666 = vadd.f32 %v1488, %v1631
        %v1667 = vadd.f32 %v1489, %v1636
        %v1668 = vadd.f32 %v1490, %v1639
        %v1669 = vadd.f32 %v1491, %v1644
        %v1670 = vadd.f32 %v1492, %v1647
        %v1671 = vadd.f32 %v1493, %v1652
        %v1672 = vadd.f32 %v1494, %v1655
        %v1673 = vadd.f32 %v1495, %v1660
        %v1674 = vld [vmem:[%s405 + $0x4] sm:$0xe]
        %v1675 = vld [vmem:[%s1 + $0x10] sm:$0x3]
        %v1677 = vunpack.c.l.b16 %v1674
        %v1678 = vpack.c.b16 %v1344, %v1677
        %vm1679 = vcmask 1046528
        %v1680 = vrot.slane %v1678, 1
        %v1681 = vrot.slane %v1354, 1
        %v1682 = vsel %vm1679, %v1680, %v1681
        %v1683 = vrot.slane %v1355, 1
        %v1684 = vsel %vm1679, %v1681, %v1683
        %v1685 = vrot.slane %v1356, 1
        %v1686 = vsel %vm1679, %v1683, %v1685
        %v1687 = vrot.slane %v1357, 1
        %v1688 = vsel %vm1679, %v1685, %v1687
        %v1690 = vsel %vm494, %v1682, 0
        %v1693 = vsel %vm494, %v1684, 0
        %v1696 = vsel %vm494, %v1686, 0
        %v1699 = vsel %vm494, %v1688, 0
        %v1702 = vsel %vm494, %v1687, 0
        %v1705 = vsel %vm510, %v1675, 0
        %1707 = vmatprep.subr.bf16.mxu0 0
        %1708 = vmatpush1.bf16.msra.mxu0 %v1705
        %1709 = vmatprep.subr.bf16.mxu0 0
        %1710 = vmatpush1.bf16.msra.mxu0 0
        %1711 = vmatprep.subr.bf16.mxu0 0
        %1712 = vmatpush1.bf16.msra.mxu0 0
        %1713 = vmatprep.subr.bf16.mxu0 0
        %1714 = vmatpush1.bf16.msra.mxu0 0
        %1715 = vmatprep.subr.bf16.mxu0 0
        %1716 = vmatpush1.bf16.msra.mxu0 0
        %1717 = vmatprep.subr.bf16.mxu0 0
        %1718 = vmatpush1.bf16.msra.mxu0 0
        %1719 = vmatprep.subr.bf16.mxu0 0
        %1720 = vmatpush1.bf16.msra.mxu0 0
        %1721 = vmatprep.subr.bf16.mxu0 0
        %1722 = vmatpush1.bf16.msra.mxu0 0
        %1723 = vmatprep.subr.bf16.mxu0 0
        %1724 = vmatpush1.bf16.msra.mxu0 0
        %1725 = vmatprep.subr.bf16.mxu0 0
        %1726 = vmatpush1.bf16.msra.mxu0 0
        %1727 = vmatprep.subr.bf16.mxu0 0
        %1728 = vmatpush1.bf16.msra.mxu0 0
        %1729 = vmatprep.subr.bf16.mxu0 0
        %1730 = vmatpush1.bf16.msra.mxu0 0
        %1731 = vmatprep.subr.bf16.mxu0 0
        %1732 = vmatpush1.bf16.msra.mxu0 0
        %1733 = vmatprep.subr.bf16.mxu0 0
        %1734 = vmatpush1.bf16.msra.mxu0 0
        %1735 = vmatprep.subr.bf16.mxu0 0
        %1736 = vmatpush1.bf16.msra.mxu0 0
        %1737 = vmatprep.subr.bf16.mxu0 0
        %1738 = vmatpush1.bf16.msra.mxu0 0
        %1739 = vmatprep.mubr.bf16.mxu0 0
        %1740 = vmatmul.mubr.bf16.gmra.mrb[0].mxu0 %v1690
        %v1741 = vpop.f32.mrb[0].mxu0
        %v1742 = vadd.f32 0.0, %v1741
        %v1743 = vpop.f32.mrb[0].mxu0
        %v1744 = vpop.f32.mrb[0].mxu0
        %v1745 = vadd.f32 0.0, %v1744
        %v1746 = vpop.f32.mrb[0].mxu0
        %1747 = vmatprep.mubr.bf16.mxu0 0
        %1748 = vmatmul.mubr.bf16.gmra.mrb[0].mxu0 %v1693
        %v1749 = vpop.f32.mrb[0].mxu0
        %v1750 = vadd.f32 0.0, %v1749
        %v1751 = vpop.f32.mrb[0].mxu0
        %v1752 = vpop.f32.mrb[0].mxu0
        %v1753 = vadd.f32 0.0, %v1752
        %v1754 = vpop.f32.mrb[0].mxu0
        %1755 = vmatprep.mubr.bf16.mxu0 0
        %1756 = vmatmul.mubr.bf16.gmra.mrb[0].mxu0 %v1696
        %v1757 = vpop.f32.mrb[0].mxu0
        %v1758 = vadd.f32 0.0, %v1757
        %v1759 = vpop.f32.mrb[0].mxu0
        %v1760 = vpop.f32.mrb[0].mxu0
        %v1761 = vadd.f32 0.0, %v1760
        %v1762 = vpop.f32.mrb[0].mxu0
        %1763 = vmatprep.mubr.bf16.mxu0 0
        %1764 = vmatmul.mubr.bf16.gmra.mrb[0].mxu0 %v1699
        %v1765 = vpop.f32.mrb[0].mxu0
        %v1766 = vadd.f32 0.0, %v1765
        %v1767 = vpop.f32.mrb[0].mxu0
        %v1768 = vpop.f32.mrb[0].mxu0
        %v1769 = vadd.f32 0.0, %v1768
        %v1770 = vpop.f32.mrb[0].mxu0
        %1771 = vmatprep.mubr.bf16.mxu0 0
        %1772 = vmatmul.mubr.bf16.gmra.mrb[0].mxu0 %v1702
        %v1773 = vpop.f32.mrb[0].mxu0
        %v1774 = vadd.f32 0.0, %v1773
        %v1775 = vpop.f32.mrb[0].mxu0
        %v1776 = vpop.f32.mrb[0].mxu0
        %v1777 = vpop.f32.mrb[0].mxu0
        %1778 = vdwg.mxu0
        %v1779 = vadd.f32 %v1665, %v1742
        %v1780 = vadd.f32 %v1666, %v1745
        %v1781 = vadd.f32 %v1667, %v1750
        %v1782 = vadd.f32 %v1668, %v1753
        %v1783 = vadd.f32 %v1669, %v1758
        %v1784 = vadd.f32 %v1670, %v1761
        %v1785 = vadd.f32 %v1671, %v1766
        %v1786 = vadd.f32 %v1672, %v1769
        %v1787 = vadd.f32 %v1673, %v1774
        %v1788 = vlaneseq
        %v1789 = vshrl.u32 %v1788, 7
        %v1790 = vadd.s32 %v1789, 8
        %v1791 = vadd.s32 %v1789, 16
        %v1792 = vadd.s32 %v1789, 24
        %v1793 = vadd.s32 %v1789, 32
        %v1794 = vadd.s32 %v1789, 40
        %v1795 = vadd.s32 %v1789, 48
        %v1796 = vadd.s32 %v1789, 56
        %v1797 = vadd.s32 %v1789, 64
        %vm1798 = vcmp.lt.s32.totalorder %v1789, 0
        %v1799 = vsub.s32 0, %v1789
        %v1800 = vsel %vm1798, %v1799, %v1789
        %v1801 = vmul.u32.u64.compose %v1800, 3817748708
        %v1802 = vextract.low.u32 %v1801
        %v1803 = vextract.high.u32 %v1801
        %v1804 = vshrl.u32 %v1803, 3
        %v1805 = vmul.u32 %v1804, 9
        %v1806 = vsub.s32 %v1800, %v1805
        %v1807 = vsub.s32 0, %v1806
        %v1808 = vsel %vm1798, %v1807, %v1806
        %vm1809 = vcmp.lt.s32.totalorder %v1790, 0
        %v1810 = vsub.s32 0, %v1790
        %v1811 = vsel %vm1809, %v1810, %v1790
        %v1812 = vmul.u32.u64.compose %v1811, 3817748708
        %v1813 = vextract.low.u32 %v1812
        %v1814 = vextract.high.u32 %v1812
        %v1815 = vshrl.u32 %v1814, 3
        %v1816 = vmul.u32 %v1815, 9
        %v1817 = vsub.s32 %v1811, %v1816
        %v1818 = vsub.s32 0, %v1817
        %v1819 = vsel %vm1809, %v1818, %v1817
        %vm1820 = vcmp.lt.s32.totalorder %v1791, 0
        %v1821 = vsub.s32 0, %v1791
        %v1822 = vsel %vm1820, %v1821, %v1791
        %v1823 = vmul.u32.u64.compose %v1822, 3817748708
        %v1824 = vextract.low.u32 %v1823
        %v1825 = vextract.high.u32 %v1823
        %v1826 = vshrl.u32 %v1825, 3
        %v1827 = vmul.u32 %v1826, 9
        %v1828 = vsub.s32 %v1822, %v1827
        %v1829 = vsub.s32 0, %v1828
        %v1830 = vsel %vm1820, %v1829, %v1828
        %vm1831 = vcmp.lt.s32.totalorder %v1792, 0
        %v1832 = vsub.s32 0, %v1792
        %v1833 = vsel %vm1831, %v1832, %v1792
        %v1834 = vmul.u32.u64.compose %v1833, 3817748708
        %v1835 = vextract.low.u32 %v1834
        %v1836 = vextract.high.u32 %v1834
        %v1837 = vshrl.u32 %v1836, 3
        %v1838 = vmul.u32 %v1837, 9
        %v1839 = vsub.s32 %v1833, %v1838
        %v1840 = vsub.s32 0, %v1839
        %v1841 = vsel %vm1831, %v1840, %v1839
        %vm1842 = vcmp.lt.s32.totalorder %v1793, 0
        %v1843 = vsub.s32 0, %v1793
        %v1844 = vsel %vm1842, %v1843, %v1793
        %v1845 = vmul.u32.u64.compose %v1844, 3817748708
        %v1846 = vextract.low.u32 %v1845
        %v1847 = vextract.high.u32 %v1845
        %v1848 = vshrl.u32 %v1847, 3
        %v1849 = vmul.u32 %v1848, 9
        %v1850 = vsub.s32 %v1844, %v1849
        %v1851 = vsub.s32 0, %v1850
        %v1852 = vsel %vm1842, %v1851, %v1850
        %vm1853 = vcmp.lt.s32.totalorder %v1794, 0
        %v1854 = vsub.s32 0, %v1794
        %v1855 = vsel %vm1853, %v1854, %v1794
        %v1856 = vmul.u32.u64.compose %v1855, 3817748708
        %v1857 = vextract.low.u32 %v1856
        %v1858 = vextract.high.u32 %v1856
        %v1859 = vshrl.u32 %v1858, 3
        %v1860 = vmul.u32 %v1859, 9
        %v1861 = vsub.s32 %v1855, %v1860
        %v1862 = vsub.s32 0, %v1861
        %v1863 = vsel %vm1853, %v1862, %v1861
        %vm1864 = vcmp.lt.s32.totalorder %v1795, 0
        %v1865 = vsub.s32 0, %v1795
        %v1866 = vsel %vm1864, %v1865, %v1795
        %v1867 = vmul.u32.u64.compose %v1866, 3817748708
        %v1868 = vextract.low.u32 %v1867
        %v1869 = vextract.high.u32 %v1867
        %v1870 = vshrl.u32 %v1869, 3
        %v1871 = vmul.u32 %v1870, 9
        %v1872 = vsub.s32 %v1866, %v1871
        %v1873 = vsub.s32 0, %v1872
        %v1874 = vsel %vm1864, %v1873, %v1872
        %vm1875 = vcmp.lt.s32.totalorder %v1796, 0
        %v1876 = vsub.s32 0, %v1796
        %v1877 = vsel %vm1875, %v1876, %v1796
        %v1878 = vmul.u32.u64.compose %v1877, 3817748708
        %v1879 = vextract.low.u32 %v1878
        %v1880 = vextract.high.u32 %v1878
        %v1881 = vshrl.u32 %v1880, 3
        %v1882 = vmul.u32 %v1881, 9
        %v1883 = vsub.s32 %v1877, %v1882
        %v1884 = vsub.s32 0, %v1883
        %v1885 = vsel %vm1875, %v1884, %v1883
        %vm1886 = vcmp.lt.s32.totalorder %v1797, 0
        %v1887 = vsub.s32 0, %v1797
        %v1888 = vsel %vm1886, %v1887, %v1797
        %v1889 = vmul.u32.u64.compose %v1888, 3817748708
        %v1890 = vextract.low.u32 %v1889
        %v1891 = vextract.high.u32 %v1889
        %v1892 = vshrl.u32 %v1891, 3
        %v1893 = vmul.u32 %v1892, 9
        %v1894 = vsub.s32 %v1888, %v1893
        %v1895 = vsub.s32 0, %v1894
        %v1896 = vsel %vm1886, %v1895, %v1894
        %vm1897 = vcmp.ne.s32.totalorder %v1808, 0
        %vm1898 = vcmp.ne.s32.totalorder %v1819, 0
        %vm1899 = vcmp.ne.s32.totalorder %v1830, 0
        %vm1900 = vcmp.ne.s32.totalorder %v1841, 0
        %vm1901 = vcmp.ne.s32.totalorder %v1852, 0
        %vm1902 = vcmp.ne.s32.totalorder %v1863, 0
        %vm1903 = vcmp.ne.s32.totalorder %v1874, 0
        %vm1904 = vcmp.ne.s32.totalorder %v1885, 0
        %vm1905 = vcmp.ne.s32.totalorder %v1896, 0
        %vm1906 = vcmp.lt.s32.totalorder %v1808, 0
        %vm1907 = vcmp.lt.s32.totalorder %v1819, 0
        %vm1908 = vcmp.lt.s32.totalorder %v1830, 0
        %vm1909 = vcmp.lt.s32.totalorder %v1841, 0
        %vm1910 = vcmp.lt.s32.totalorder %v1852, 0
        %vm1911 = vcmp.lt.s32.totalorder %v1863, 0
        %vm1912 = vcmp.lt.s32.totalorder %v1874, 0
        %vm1913 = vcmp.lt.s32.totalorder %v1885, 0
        %vm1914 = vcmp.lt.s32.totalorder %v1896, 0
        %vm1915 = vmand %vm1906, %vm1897
        %vm1916 = vmand %vm1907, %vm1898
        %vm1917 = vmand %vm1908, %vm1899
        %vm1918 = vmand %vm1909, %vm1900
        %vm1919 = vmand %vm1910, %vm1901
        %vm1920 = vmand %vm1911, %vm1902
        %vm1921 = vmand %vm1912, %vm1903
        %vm1922 = vmand %vm1913, %vm1904
        %vm1923 = vmand %vm1914, %vm1905
        %v1924 = vadd.s32 %v1808, 9
        %v1925 = vadd.s32 %v1819, 9
        %v1926 = vadd.s32 %v1830, 9
        %v1927 = vadd.s32 %v1841, 9
        %v1928 = vadd.s32 %v1852, 9
        %v1929 = vadd.s32 %v1863, 9
        %v1930 = vadd.s32 %v1874, 9
        %v1931 = vadd.s32 %v1885, 9
        %v1932 = vadd.s32 %v1896, 9
        %v1933 = vsel %vm1915, %v1924, %v1808
        %v1934 = vsel %vm1916, %v1925, %v1819
        %v1935 = vsel %vm1917, %v1926, %v1830
        %v1936 = vsel %vm1918, %v1927, %v1841
        %v1937 = vsel %vm1919, %v1928, %v1852
        %v1938 = vsel %vm1920, %v1929, %v1863
        %v1939 = vsel %vm1921, %v1930, %v1874
        %v1940 = vsel %vm1922, %v1931, %v1885
        %v1941 = vsel %vm1923, %v1932, %v1896
        %vm1942 = vcmp.lt.s32.totalorder %v1933, 8
        %vm1943 = vcmp.lt.s32.totalorder %v1934, 8
        %vm1944 = vcmp.lt.s32.totalorder %v1935, 8
        %vm1945 = vcmp.lt.s32.totalorder %v1936, 8
        %vm1946 = vcmp.lt.s32.totalorder %v1937, 8
        %vm1947 = vcmp.lt.s32.totalorder %v1938, 8
        %vm1948 = vcmp.lt.s32.totalorder %v1939, 8
        %vm1949 = vcmp.lt.s32.totalorder %v1940, 8
        %vm1950 = vcmp.lt.s32.totalorder %v1941, 8
        %v1951 = vsel %vm1942, 1, 0
        %v1952 = vsel %vm1943, 1, 0
        %v1953 = vsel %vm1944, 1, 0
        %v1954 = vsel %vm1945, 1, 0
        %v1955 = vsel %vm1946, 1, 0
        %v1956 = vsel %vm1947, 1, 0
        %v1957 = vsel %vm1948, 1, 0
        %v1958 = vsel %vm1949, 1, 0
        %v1959 = vsel %vm1950, 1, 0
        %vm1960 = vcmp.eq.s32.totalorder %v1951, 1
        %vm1961 = vcmp.eq.s32.totalorder %v1952, 1
        %vm1962 = vcmp.eq.s32.totalorder %v1953, 1
        %vm1963 = vcmp.eq.s32.totalorder %v1954, 1
        %vm1964 = vcmp.eq.s32.totalorder %v1955, 1
        %vm1965 = vcmp.eq.s32.totalorder %v1956, 1
        %vm1966 = vcmp.eq.s32.totalorder %v1957, 1
        %vm1967 = vcmp.eq.s32.totalorder %v1958, 1
        %vm1968 = vcmp.eq.s32.totalorder %v1959, 1
        %v1969 = vsel %vm1960, %v1779, 0.0
        %v1970 = vsel %vm1961, %v1780, 0.0
        %v1971 = vsel %vm1962, %v1781, 0.0
        %v1972 = vsel %vm1963, %v1782, 0.0
        %v1973 = vsel %vm1964, %v1783, 0.0
        %v1974 = vsel %vm1965, %v1784, 0.0
        %v1975 = vsel %vm1966, %v1785, 0.0
        %v1976 = vsel %vm1967, %v1786, 0.0
        %v1977 = vsel %vm1968, %v1787, 0.0
        %v1978 = vpack.c.bf16 %v1970, %v1969
        %v1979 = vpack.c.bf16 %v1972, %v1971
        %v1980 = vpack.c.bf16 %v1974, %v1973
        %v1981 = vpack.c.bf16 %v1976, %v1975
        %v1982 = vpack.c.bf16 %v1977, %v1977
        %v1988 = vunpack.c.l.b16 %v1978
        %v1989 = vunpack.c.h.b16 %v1978
        %v1990 = vunpack.c.l.b16 %v1979
        %v1991 = vunpack.c.h.b16 %v1979
        %v1992 = vunpack.c.l.b16 %v1980
        %v1993 = vunpack.c.h.b16 %v1980
        %v1994 = vunpack.c.l.b16 %v1981
        %v1995 = vunpack.c.h.b16 %v1981
        %v1996 = vunpack.c.l.b16 %v1982
        %v1997 = vpack.c.b16 %v1988, %v1988
        %v1998 = vpack.c.b16 %v1989, %v1989
        %v1999 = vpack.c.b16 %v1990, %v1990
        %v2000 = vpack.c.b16 %v1991, %v1991
        %v2001 = vpack.c.b16 %v1992, %v1992
        %v2002 = vpack.c.b16 %v1993, %v1993
        %v2003 = vpack.c.b16 %v1994, %v1994
        %v2004 = vpack.c.b16 %v1995, %v1995
        %v2005 = vpack.c.b16 %v1996, %v1996
        %2015 = vst [vmem:[%s438] sm:$0xf] %v1997
        %2016 = vst [vmem:[%s438 + $0x4] sm:$0xf] %v1998
        %2017 = vst [vmem:[%s438 + $0x8] sm:$0xf] %v1999
        %2018 = vst [vmem:[%s438 + $0xc] sm:$0xf] %v2000
        %2019 = vst [vmem:[%s438 + $0x10] sm:$0xf] %v2001
        %2020 = vst [vmem:[%s438 + $0x14] sm:$0xf] %v2002
        %2021 = vst [vmem:[%s438 + $0x18] sm:$0xf] %v2003
        %2022 = vst [vmem:[%s438 + $0x1c] sm:$0xf] %v2004
        %2023 = vst [vmem:[%s438 + $0x20] sm:$0xf] %v2005
        %v2024 = vadd.f32 %v1969, %v1970
        %v2025 = vadd.f32 %v2024, %v1971
        %v2026 = vadd.f32 %v2025, %v1972
        %v2027 = vadd.f32 %v2026, %v1973
        %v2028 = vadd.f32 %v2027, %v1974
        %v2029 = vadd.f32 %v2028, %v1975
        %v2030 = vadd.f32 %v2029, %v1976
        %v2031 = vadd.f32 %v2030, %v1977
        %v2032 = vrot.slane %v2031, 4
        %v2033 = vadd.f32 %v2031, %v2032
        %v2034 = vrot.slane %v2033, 2
        %v2035 = vadd.f32 %v2033, %v2034
        %v2036 = vrot.slane %v2035, 1
        %v2037 = vadd.f32 %v2035, %v2036
        %2038 = vst [vmem:[%s441] sm:$0x1] %v2037
        %v2039 = vmul.f32 %v1969, %v1969
        %v2040 = vmul.f32 %v1970, %v1970
        %v2041 = vmul.f32 %v1971, %v1971
        %v2042 = vmul.f32 %v1972, %v1972
        %v2043 = vmul.f32 %v1973, %v1973
        %v2044 = vmul.f32 %v1974, %v1974
        %v2045 = vmul.f32 %v1975, %v1975
        %v2046 = vmul.f32 %v1976, %v1976
        %v2047 = vmul.f32 %v1977, %v1977
        %v2048 = vadd.f32 %v2039, %v2040
        %v2049 = vadd.f32 %v2048, %v2041
        %v2050 = vadd.f32 %v2049, %v2042
        %v2051 = vadd.f32 %v2050, %v2043
        %v2052 = vadd.f32 %v2051, %v2044
        %v2053 = vadd.f32 %v2052, %v2045
        %v2054 = vadd.f32 %v2053, %v2046
        %v2055 = vadd.f32 %v2054, %v2047
        %v2056 = vrot.slane %v2055, 4
        %v2057 = vadd.f32 %v2055, %v2056
        %v2058 = vrot.slane %v2057, 2
        %v2059 = vadd.f32 %v2057, %v2058
        %v2060 = vrot.slane %v2059, 1
        %v2061 = vadd.f32 %v2059, %v2060
        %2062 = vst [vmem:[%s444] sm:$0x1] %v2061
        %p2063 = scmp.lt.s32.totalorder %s16, 1
        %s2064 = scalar_select %p2063, %s16, 1
        %s2065 = smul.addr %s2064, 9
        %s2066 = smul.addr %s2065, 4
        %s2067 = scalar_lea.vmem %s2, %s2066
        %p2068 = scmp.lt.s32.totalorder %s16, 1
        %s2069 = scalar_select %p2068, %s16, 1
        %s2070 = scalar_lea.vmem %s3, %s2069
        %p2071 = scmp.lt.s32.totalorder %s16, 1
        %s2072 = scalar_select %p2071, %s16, 1
        %s2073 = scalar_lea.vmem %s4, %s2072
        // Predicated region
        $region70: #{basic_block_pallas.6} parent=64 // pred_check
          %p2074 = pneg %p81
        $region71: #{basic_block_pallas.6} parent=64 // pred_check_branch
          %2076 = sbr.rel (%p2074) target = $region73
        $region72: #{basic_block_pallas.6} parent=64 // pred_region
          _
        $region73: #{basic_block_pallas.6} parent=64 // pred_fallthru
          _
        // Predicated region
        $region74: #{basic_block_pallas.6} parent=64 // pred_check
          %p2077 = pneg %p107
        $region75: #{basic_block_pallas.6} parent=64 // pred_check_branch
          %2079 = sbr.rel (%p2077) target = $region77
        $region76: #{basic_block_pallas.6} parent=64 // pred_region
          _
        $region77: #{basic_block_pallas.6} parent=64 // pred_fallthru
          _
        // Predicated region
        $region78: #{basic_block_pallas.6} parent=64 // pred_check
          %p2080 = pneg %p133
        $region79: #{basic_block_pallas.6} parent=64 // pred_check_branch
          %2082 = sbr.rel (%p2080) target = $region81
        $region80: #{basic_block_pallas.6} parent=64 // pred_region
          _
        $region81: #{basic_block_pallas.6} parent=64 // pred_fallthru
          _
      $region65: #{basic_block_pallas.6} parent=5 // pred_fallthru
        _
      %p2083 = scmp.le.s32.totalorder 2, %s11
      // Predicated region
      $region82: #{basic_block_pallas.6} parent=5 // pred_check
        %p2084 = pneg %p2083
      $region83: #{basic_block_pallas.6} parent=5 // pred_check_branch
        %2086 = sbr.rel (%p2084) target = $region85
      $region84: #{basic_block_pallas.6} parent=5 // pred_region
        %s2087 = ssub.s32 %s11, 2
        // Predicated region
        $region86: #{basic_block_pallas.6} parent=84 // pred_check
          %p2088 = pneg %p87
        $region87: #{basic_block_pallas.6} parent=84 // pred_check_branch
          %2090 = sbr.rel (%p2088) target = $region89
        $region88: #{basic_block_pallas.6} parent=84 // pred_region
          %p2091 = scmp.lt.s32.totalorder %s17, 1
          %s2092 = scalar_select %p2091, %s17, 1
          %s2093 = smul.addr %s2092, 9
          %s2094 = smul.addr %s2093, 4
          %s2095 = scalar_lea.vmem %s2, %s2094
        $region89: #{basic_block_pallas.6} parent=84 // pred_fallthru
          _
        // Predicated region
        $region90: #{basic_block_pallas.6} parent=84 // pred_check
          %p2096 = pneg %p113
        $region91: #{basic_block_pallas.6} parent=84 // pred_check_branch
          %2098 = sbr.rel (%p2096) target = $region93
        $region92: #{basic_block_pallas.6} parent=84 // pred_region
          %p2099 = scmp.lt.s32.totalorder %s17, 1
          %s2100 = scalar_select %p2099, %s17, 1
          %s2101 = scalar_lea.vmem %s3, %s2100
        $region93: #{basic_block_pallas.6} parent=84 // pred_fallthru
          _
        // Predicated region
        $region94: #{basic_block_pallas.6} parent=84 // pred_check
          %p2102 = pneg %p139
        $region95: #{basic_block_pallas.6} parent=84 // pred_check_branch
          %2104 = sbr.rel (%p2102) target = $region97
        $region96: #{basic_block_pallas.6} parent=84 // pred_region
          %p2105 = scmp.lt.s32.totalorder %s17, 1
          %s2106 = scalar_select %p2105, %s17, 1
          %s2107 = scalar_lea.vmem %s4, %s2106
        $region97: #{basic_block_pallas.6} parent=84 // pred_fallthru
          _
      $region85: #{basic_block_pallas.6} parent=5 // pred_fallthru
        _
    $region6: #{basic_block_pallas.6} parent=1 // loop_footer
      %s15 = sadd.s32 1, %s11
    $region7: #{basic_block_pallas.6} parent=1 // loop_footer_branch
      %10 = sbr.rel target = $region3
    $region8: #{basic_block_pallas.6} parent=1 // loop_exit
      _

// kernel: basic_block_pallas.9
$region0: #{basic_block_pallas.9}
  #allocation0 [shape = 'u32[]', space=smem, size = 0x4, offset = 0x4, fixed_abs, tag = 'smem constant byte address 0x4 - core index']
  #allocation1 [shape = 'u32[144,128]{1,0:T(1,128)}', space=vmem, size = 0x12000, scoped, tag = 'internal scratch']
  %s0 = inlined_call_operand.vmem [shape: bf16[2,80,128], index: 0, kind: input, shape index: {}]
  %s1 = inlined_call_operand.vmem [shape: f32[1,128], index: 1, kind: input, shape index: {}]
  %s2 = inlined_call_operand.vmem [shape: f32[1,128], index: 2, kind: input, shape index: {}]
  %s3 = inlined_call_operand.vmem [shape: bf16[2,80,128], index: 3, kind: output, shape index: {}]
  %s4 = sld [smem:[#allocation0]]
  $region45: #{basic_block_pallas.9} parent=0
    _
  %s6 = ssub.s32 1, %s4
  %s7 = scalar_select 0, %s6, %s4
  loop: start=0, step=1, limit=4
  $region2: #{basic_block_pallas.9} parent=0 // loop_pre_header
    _
  $region3: #{basic_block_pallas.9} parent=0 // loop_header
    %s9 = sphi 0, %s13
    %p10 = scmp.ge.s32.totalorder %s9, 4
    %s19 = sphi 0, %s21
    %s22 = sphi 0, %s19
    %s23 = sphi 0, %s22
    %s39 = sphi 0, %s23
    %s43 = sphi 0, %s43
    %s45 = sphi 0, %s43
    %s46 = sphi 0, %s45
    %s60 = sphi 0, %s46
    %s64 = sphi 0, %s64
    %s66 = sphi 0, %s64
    %s67 = sphi 0, %s66
    %s81 = sphi 0, %s67
    %s87 = sphi 0, %s89
    %s90 = sphi 0, %s87
    %s91 = sphi 0, %s90
    %s107 = sphi 0, %s91
  $region4: #{basic_block_pallas.9} parent=0 // loop_header_branch
    %12 = sbr.rel (%p10) target = $region8
  $region5: #{basic_block_pallas.9} parent=0 // loop_body
    %s14 = ssub.s32 %s9, 1
    %s15 = ssub.s32 %s9, 2
    %s16 = sadd.s32 %s9, 1
    %s17 = ssub.s32 %s9, %s16
    %p18 = scmp.eq.s32.totalorder %s17, 0
    %s20 = sadd.s32 %s19, 1
    %s21 = scalar_select %p18, %s19, %s20
    %p24 = pneg %p18
    %p25 = scmp.eq.s32.totalorder %s9, 1
    %p26 = por %p24, %p25
    %p27 = scmp.ne.s32.totalorder %s19, %s22
    %p28 = scmp.eq.s32.totalorder %s9, 0
    %p29 = por %p27, %p28
    %p30 = scmp.ne.s32.totalorder %s19, %s22
    %p31 = scmp.eq.s32.totalorder %s14, 1
    %p32 = por %p30, %p31
    %p33 = scmp.ne.s32.totalorder %s22, %s23
    %p34 = scmp.eq.s32.totalorder %s14, 0
    %p35 = por %p33, %p34
    %p36 = scmp.ne.s32.totalorder %s22, %s23
    %p37 = scmp.eq.s32.totalorder %s15, 1
    %p38 = por %p36, %p37
    %p40 = scmp.ne.s32.totalorder %s23, %s39
    %p41 = scmp.eq.s32.totalorder %s15, 0
    %p42 = por %p40, %p41
    %s44 = sadd.s32 %s43, 1
    %p47 = scmp.eq.s32.totalorder %s9, 1
    %p48 = scmp.ne.s32.totalorder %s43, %s45
    %p49 = scmp.eq.s32.totalorder %s9, 0
    %p50 = por %p48, %p49
    %p51 = scmp.ne.s32.totalorder %s43, %s45
    %p52 = scmp.eq.s32.totalorder %s14, 1
    %p53 = por %p51, %p52
    %p54 = scmp.ne.s32.totalorder %s45, %s46
    %p55 = scmp.eq.s32.totalorder %s14, 0
    %p56 = por %p54, %p55
    %p57 = scmp.ne.s32.totalorder %s45, %s46
    %p58 = scmp.eq.s32.totalorder %s15, 1
    %p59 = por %p57, %p58
    %p61 = scmp.ne.s32.totalorder %s46, %s60
    %p62 = scmp.eq.s32.totalorder %s15, 0
    %p63 = por %p61, %p62
    %s65 = sadd.s32 %s64, 1
    %p68 = scmp.eq.s32.totalorder %s9, 1
    %p69 = scmp.ne.s32.totalorder %s64, %s66
    %p70 = scmp.eq.s32.totalorder %s9, 0
    %p71 = por %p69, %p70
    %p72 = scmp.ne.s32.totalorder %s64, %s66
    %p73 = scmp.eq.s32.totalorder %s14, 1
    %p74 = por %p72, %p73
    %p75 = scmp.ne.s32.totalorder %s66, %s67
    %p76 = scmp.eq.s32.totalorder %s14, 0
    %p77 = por %p75, %p76
    %p78 = scmp.ne.s32.totalorder %s66, %s67
    %p79 = scmp.eq.s32.totalorder %s15, 1
    %p80 = por %p78, %p79
    %p82 = scmp.ne.s32.totalorder %s67, %s81
    %p83 = scmp.eq.s32.totalorder %s15, 0
    %p84 = por %p82, %p83
    %s85 = ssub.s32 %s9, %s16
    %p86 = scmp.eq.s32.totalorder %s85, 0
    %s88 = sadd.s32 %s87, 1
    %s89 = scalar_select %p86, %s87, %s88
    %p92 = pneg %p86
    %p93 = scmp.eq.s32.totalorder %s9, 1
    %p94 = por %p92, %p93
    %p95 = scmp.ne.s32.totalorder %s87, %s90
    %p96 = scmp.eq.s32.totalorder %s9, 0
    %p97 = por %p95, %p96
    %p98 = scmp.ne.s32.totalorder %s87, %s90
    %p99 = scmp.eq.s32.totalorder %s14, 1
    %p100 = por %p98, %p99
    %p101 = scmp.ne.s32.totalorder %s90, %s91
    %p102 = scmp.eq.s32.totalorder %s14, 0
    %p103 = por %p101, %p102
    %p104 = scmp.ne.s32.totalorder %s90, %s91
    %p105 = scmp.eq.s32.totalorder %s15, 1
    %p106 = por %p104, %p105
    %p108 = scmp.ne.s32.totalorder %s91, %s107
    %p109 = scmp.eq.s32.totalorder %s15, 0
    %p110 = por %p108, %p109
    %p111 = scmp.le.s32.totalorder 1, %s9
    %p112 = scmp.lt.s32.totalorder %s9, 3
    %p113 = pnand %p111, %p112
    %p114 = pneg %p113
    // Predicated region
    $region9: #{basic_block_pallas.9} parent=5 // pred_check
      _
    $region10: #{basic_block_pallas.9} parent=5 // pred_check_branch
      %116 = sbr.rel (%p113) target = $region12
    $region11: #{basic_block_pallas.9} parent=5 // pred_region
      %s117 = ssub.s32 %s9, 1
      // Predicated region
      $region13: #{basic_block_pallas.9} parent=11 // pred_check
        %p118 = pneg %p56
      $region14: #{basic_block_pallas.9} parent=11 // pred_check_branch
        %120 = sbr.rel (%p118) target = $region16
      $region15: #{basic_block_pallas.9} parent=11 // pred_region
        _
      $region16: #{basic_block_pallas.9} parent=11 // pred_fallthru
        _
      // Predicated region
      $region17: #{basic_block_pallas.9} parent=11 // pred_check
        %p121 = pneg %p77
      $region18: #{basic_block_pallas.9} parent=11 // pred_check_branch
        %123 = sbr.rel (%p121) target = $region20
      $region19: #{basic_block_pallas.9} parent=11 // pred_region
        _
      $region20: #{basic_block_pallas.9} parent=11 // pred_fallthru
        _
    $region12: #{basic_block_pallas.9} parent=5 // pred_fallthru
      _
    %p124 = scmp.lt.s32.totalorder %s9, 2
    // Predicated region
    $region21: #{basic_block_pallas.9} parent=5 // pred_check
      %p125 = pneg %p124
    $region22: #{basic_block_pallas.9} parent=5 // pred_check_branch
      %127 = sbr.rel (%p125) target = $region24
    $region23: #{basic_block_pallas.9} parent=5 // pred_region
      // Predicated region
      $region25: #{basic_block_pallas.9} parent=23 // pred_check
        %p128 = pneg %p29
      $region26: #{basic_block_pallas.9} parent=23 // pred_check_branch
        %130 = sbr.rel (%p128) target = $region28
      $region27: #{basic_block_pallas.9} parent=23 // pred_region
        %p131 = scmp.lt.s32.totalorder %s9, 1
        %s132 = scalar_select %p131, %s9, 1
        %s133 = smul.addr %s132, 10
        %s134 = smul.addr %s133, 4
        %s135 = scalar_lea.vmem %s0, %s134
      $region28: #{basic_block_pallas.9} parent=23 // pred_fallthru
        _
    $region24: #{basic_block_pallas.9} parent=5 // pred_fallthru
      _
    %p136 = scmp.le.s32.totalorder 1, %s9
    %p137 = scmp.lt.s32.totalorder %s9, 3
    %p138 = pnand %p136, %p137
    %p139 = pneg %p138
    // Predicated region
    $region29: #{basic_block_pallas.9} parent=5 // pred_check
      _
    $region30: #{basic_block_pallas.9} parent=5 // pred_check_branch
      %141 = sbr.rel (%p138) target = $region32
    $region31: #{basic_block_pallas.9} parent=5 // pred_region
      %s142 = ssub.s32 %s9, 1
      %p143 = scmp.lt.s32.totalorder %s14, 1
      %s144 = scalar_select %p143, %s14, 1
      %s145 = smul.addr %s144, 10
      %s146 = smul.addr %s145, 4
      %s147 = scalar_lea.vmem %s0, %s146
      %p148 = pneg %p35
      %p149 = pneg %p32
      %p150 = pneg %p56
      %p151 = pneg %p53
      %p152 = pneg %p77
      %p153 = pneg %p74
      %p154 = pneg %p103
      %p155 = pneg %p100
      %p156 = scmp.lt.s32.totalorder %s14, 1
      %s157 = scalar_select %p156, %s14, 1
      %s158 = smul.addr %s157, 10
      %s159 = smul.addr %s158, 4
      %s160 = scalar_lea.vmem %s3, %s159
      %p161 = scmp.lt.s32.totalorder %s14, 1
      %s162 = scalar_select %p161, %s14, 1
      %s163 = smul.addr %s162, 10
      %s164 = smul.addr %s163, 4
      %s165 = scalar_lea.vmem %s0, %s164
      %p166 = scmp.lt.s32.totalorder %s14, 1
      %s167 = scalar_select %p166, %s14, 1
      %s168 = smul.addr %s167, 10
      %s169 = smul.addr %s168, 4
      %s170 = scalar_lea.vmem %s3, %s169
      %v171 = vld [vmem:[%s165] sm:$0xf]
      %v172 = vld [vmem:[%s165 + $0x4] sm:$0xf]
      %v173 = vld [vmem:[%s165 + $0x8] sm:$0xf]
      %v174 = vld [vmem:[%s165 + $0xc] sm:$0xf]
      %v175 = vld [vmem:[%s165 + $0x10] sm:$0xf]
      %v176 = vld [vmem:[%s165 + $0x14] sm:$0xf]
      %v177 = vld [vmem:[%s165 + $0x18] sm:$0xf]
      %v178 = vld [vmem:[%s165 + $0x1c] sm:$0xf]
      %v179 = vld [vmem:[%s165 + $0x20] sm:$0xf]
      %v180 = vld [vmem:[%s165 + $0x24] sm:$0xf]
      %v181 = vunpack.c.l.bf16 %v171
      %v182 = vunpack.c.l.bf16 %v172
      %v183 = vunpack.c.l.bf16 %v173
      %v184 = vunpack.c.l.bf16 %v174
      %v185 = vunpack.c.l.bf16 %v175
      %v186 = vunpack.c.l.bf16 %v176
      %v187 = vunpack.c.l.bf16 %v177
      %v188 = vunpack.c.l.bf16 %v178
      %v189 = vunpack.c.l.bf16 %v179
      %v190 = vunpack.c.l.bf16 %v180
      %v191 = vld [vmem:[%s1] sm:$0x1]
      %v193 = vlaneseq
      %v194 = vshrl.u32 %v193, 7
      %v195 = vsub.s32 0, %v194
      %v196 = vrot.slane %v191, %v195
      %v198 = vmul.f32 %v181, %v196
      %v199 = vmul.f32 %v182, %v196
      %v200 = vmul.f32 %v183, %v196
      %v201 = vmul.f32 %v184, %v196
      %v202 = vmul.f32 %v185, %v196
      %v203 = vmul.f32 %v186, %v196
      %v204 = vmul.f32 %v187, %v196
      %v205 = vmul.f32 %v188, %v196
      %v206 = vmul.f32 %v189, %v196
      %v207 = vmul.f32 %v190, %v196
      %v208 = vld [vmem:[%s2] sm:$0x1]
      %v210 = vlaneseq
      %v211 = vshrl.u32 %v210, 7
      %v212 = vsub.s32 0, %v211
      %v213 = vrot.slane %v208, %v212
      %v215 = vadd.f32 %v198, %v213
      %v216 = vadd.f32 %v199, %v213
      %v217 = vadd.f32 %v200, %v213
      %v218 = vadd.f32 %v201, %v213
      %v219 = vadd.f32 %v202, %v213
      %v220 = vadd.f32 %v203, %v213
      %v221 = vadd.f32 %v204, %v213
      %v222 = vadd.f32 %v205, %v213
      %v223 = vadd.f32 %v206, %v213
      %v224 = vadd.f32 %v207, %v213
      %v225 = vpack.c.bf16 %v216, %v215
      %v226 = vpack.c.bf16 %v218, %v217
      %v227 = vpack.c.bf16 %v220, %v219
      %v228 = vpack.c.bf16 %v222, %v221
      %v229 = vpack.c.bf16 %v224, %v223
      %v235 = vunpack.c.l.b16 %v225
      %v236 = vunpack.c.h.b16 %v225
      %v237 = vunpack.c.l.b16 %v226
      %v238 = vunpack.c.h.b16 %v226
      %v239 = vunpack.c.l.b16 %v227
      %v240 = vunpack.c.h.b16 %v227
      %v241 = vunpack.c.l.b16 %v228
      %v242 = vunpack.c.h.b16 %v228
      %v243 = vunpack.c.l.b16 %v229
      %v244 = vunpack.c.h.b16 %v229
      %v245 = vpack.c.b16 %v235, %v235
      %v246 = vpack.c.b16 %v236, %v236
      %v247 = vpack.c.b16 %v237, %v237
      %v248 = vpack.c.b16 %v238, %v238
      %v249 = vpack.c.b16 %v239, %v239
      %v250 = vpack.c.b16 %v240, %v240
      %v251 = vpack.c.b16 %v241, %v241
      %v252 = vpack.c.b16 %v242, %v242
      %v253 = vpack.c.b16 %v243, %v243
      %v254 = vpack.c.b16 %v244, %v244
      %265 = vst [vmem:[%s170] sm:$0xf] %v245
      %266 = vst [vmem:[%s170 + $0x4] sm:$0xf] %v246
      %267 = vst [vmem:[%s170 + $0x8] sm:$0xf] %v247
      %268 = vst [vmem:[%s170 + $0xc] sm:$0xf] %v248
      %269 = vst [vmem:[%s170 + $0x10] sm:$0xf] %v249
      %270 = vst [vmem:[%s170 + $0x14] sm:$0xf] %v250
      %271 = vst [vmem:[%s170 + $0x18] sm:$0xf] %v251
      %272 = vst [vmem:[%s170 + $0x1c] sm:$0xf] %v252
      %273 = vst [vmem:[%s170 + $0x20] sm:$0xf] %v253
      %274 = vst [vmem:[%s170 + $0x24] sm:$0xf] %v254
      %p275 = scmp.lt.s32.totalorder %s14, 1
      %s276 = scalar_select %p275, %s14, 1
      %s277 = smul.addr %s276, 10
      %s278 = smul.addr %s277, 4
      %s279 = scalar_lea.vmem %s3, %s278
      // Predicated region
      $region33: #{basic_block_pallas.9} parent=31 // pred_check
        %p280 = pneg %p100
      $region34: #{basic_block_pallas.9} parent=31 // pred_check_branch
        %282 = sbr.rel (%p280) target = $region36
      $region35: #{basic_block_pallas.9} parent=31 // pred_region
        _
      $region36: #{basic_block_pallas.9} parent=31 // pred_fallthru
        _
    $region32: #{basic_block_pallas.9} parent=5 // pred_fallthru
      _
    %p283 = scmp.le.s32.totalorder 2, %s9
    // Predicated region
    $region37: #{basic_block_pallas.9} parent=5 // pred_check
      %p284 = pneg %p283
    $region38: #{basic_block_pallas.9} parent=5 // pred_check_branch
      %286 = sbr.rel (%p284) target = $region40
    $region39: #{basic_block_pallas.9} parent=5 // pred_region
      %s287 = ssub.s32 %s9, 2
      // Predicated region
      $region41: #{basic_block_pallas.9} parent=39 // pred_check
        %p288 = pneg %p106
      $region42: #{basic_block_pallas.9} parent=39 // pred_check_branch
        %290 = sbr.rel (%p288) target = $region44
      $region43: #{basic_block_pallas.9} parent=39 // pred_region
        %p291 = scmp.lt.s32.totalorder %s15, 1
        %s292 = scalar_select %p291, %s15, 1
        %s293 = smul.addr %s292, 10
        %s294 = smul.addr %s293, 4
        %s295 = scalar_lea.vmem %s3, %s294
      $region44: #{basic_block_pallas.9} parent=39 // pred_fallthru
        _
    $region40: #{basic_block_pallas.9} parent=5 // pred_fallthru
      _
  $region6: #{basic_block_pallas.9} parent=0 // loop_footer
    %s13 = sadd.s32 1, %s9
  $region7: #{basic_block_pallas.9} parent=0 // loop_footer_branch
    %8 = sbr.rel target = $region3
  $region8: #{basic_block_pallas.9} parent=0 // loop_exit
    _

// kernel: basic_block_pallas.8
$region0: #{basic_block_pallas.8}
  #allocation0 [shape = 'u32[]', space=smem, size = 0x4, offset = 0x4, fixed_abs, tag = 'smem constant byte address 0x4 - core index']
  #allocation1 [shape = 'u32[144,128]{1,0:T(1,128)}', space=vmem, size = 0x12000, scoped, tag = 'internal scratch']
  %s0 = inlined_call_operand.vmem [shape: bf16[1,2,80,4], index: 0, kind: input, shape index: {}]
  %s1 = inlined_call_operand.vmem [shape: bf16[4,128], index: 1, kind: input, shape index: {}]
  %s2 = inlined_call_operand.vmem [shape: bf16[2,80,128], index: 2, kind: output, shape index: {0}]
  %s3 = inlined_call_operand.vmem [shape: f32[2,1,128], index: 3, kind: output, shape index: {1}]
  %s4 = inlined_call_operand.vmem [shape: f32[2,1,128], index: 4, kind: output, shape index: {2}]
  %5 = xla_tuple %s2, %s3, %s4
  %s6 = sld [smem:[#allocation0]]
  $region57: #{basic_block_pallas.8} parent=0
    _
  %s8 = ssub.s32 1, %s6
  %s9 = scalar_select 0, %s8, %s6
  loop: start=0, step=1, limit=4
  $region2: #{basic_block_pallas.8} parent=0 // loop_pre_header
    _
  $region3: #{basic_block_pallas.8} parent=0 // loop_header
    %s11 = sphi 0, %s15
    %p12 = scmp.ge.s32.totalorder %s11, 4
    %s21 = sphi 0, %s23
    %s24 = sphi 0, %s21
    %s25 = sphi 0, %s24
    %s41 = sphi 0, %s25
    %s45 = sphi 0, %s45
    %s47 = sphi 0, %s45
    %s48 = sphi 0, %s47
    %s62 = sphi 0, %s48
    %s68 = sphi 0, %s70
    %s71 = sphi 0, %s68
    %s72 = sphi 0, %s71
    %s88 = sphi 0, %s72
    %s94 = sphi 0, %s96
    %s97 = sphi 0, %s94
    %s98 = sphi 0, %s97
    %s114 = sphi 0, %s98
    %s120 = sphi 0, %s122
    %s123 = sphi 0, %s120
    %s124 = sphi 0, %s123
    %s140 = sphi 0, %s124
  $region4: #{basic_block_pallas.8} parent=0 // loop_header_branch
    %14 = sbr.rel (%p12) target = $region8
  $region5: #{basic_block_pallas.8} parent=0 // loop_body
    %s16 = ssub.s32 %s11, 1
    %s17 = ssub.s32 %s11, 2
    %s18 = sadd.s32 %s11, 1
    %s19 = ssub.s32 %s11, %s18
    %p20 = scmp.eq.s32.totalorder %s19, 0
    %s22 = sadd.s32 %s21, 1
    %s23 = scalar_select %p20, %s21, %s22
    %p26 = pneg %p20
    %p27 = scmp.eq.s32.totalorder %s11, 1
    %p28 = por %p26, %p27
    %p29 = scmp.ne.s32.totalorder %s21, %s24
    %p30 = scmp.eq.s32.totalorder %s11, 0
    %p31 = por %p29, %p30
    %p32 = scmp.ne.s32.totalorder %s21, %s24
    %p33 = scmp.eq.s32.totalorder %s16, 1
    %p34 = por %p32, %p33
    %p35 = scmp.ne.s32.totalorder %s24, %s25
    %p36 = scmp.eq.s32.totalorder %s16, 0
    %p37 = por %p35, %p36
    %p38 = scmp.ne.s32.totalorder %s24, %s25
    %p39 = scmp.eq.s32.totalorder %s17, 1
    %p40 = por %p38, %p39
    %p42 = scmp.ne.s32.totalorder %s25, %s41
    %p43 = scmp.eq.s32.totalorder %s17, 0
    %p44 = por %p42, %p43
    %s46 = sadd.s32 %s45, 1
    %p49 = scmp.eq.s32.totalorder %s11, 1
    %p50 = scmp.ne.s32.totalorder %s45, %s47
    %p51 = scmp.eq.s32.totalorder %s11, 0
    %p52 = por %p50, %p51
    %p53 = scmp.ne.s32.totalorder %s45, %s47
    %p54 = scmp.eq.s32.totalorder %s16, 1
    %p55 = por %p53, %p54
    %p56 = scmp.ne.s32.totalorder %s47, %s48
    %p57 = scmp.eq.s32.totalorder %s16, 0
    %p58 = por %p56, %p57
    %p59 = scmp.ne.s32.totalorder %s47, %s48
    %p60 = scmp.eq.s32.totalorder %s17, 1
    %p61 = por %p59, %p60
    %p63 = scmp.ne.s32.totalorder %s48, %s62
    %p64 = scmp.eq.s32.totalorder %s17, 0
    %p65 = por %p63, %p64
    %s66 = ssub.s32 %s11, %s18
    %p67 = scmp.eq.s32.totalorder %s66, 0
    %s69 = sadd.s32 %s68, 1
    %s70 = scalar_select %p67, %s68, %s69
    %p73 = pneg %p67
    %p74 = scmp.eq.s32.totalorder %s11, 1
    %p75 = por %p73, %p74
    %p76 = scmp.ne.s32.totalorder %s68, %s71
    %p77 = scmp.eq.s32.totalorder %s11, 0
    %p78 = por %p76, %p77
    %p79 = scmp.ne.s32.totalorder %s68, %s71
    %p80 = scmp.eq.s32.totalorder %s16, 1
    %p81 = por %p79, %p80
    %p82 = scmp.ne.s32.totalorder %s71, %s72
    %p83 = scmp.eq.s32.totalorder %s16, 0
    %p84 = por %p82, %p83
    %p85 = scmp.ne.s32.totalorder %s71, %s72
    %p86 = scmp.eq.s32.totalorder %s17, 1
    %p87 = por %p85, %p86
    %p89 = scmp.ne.s32.totalorder %s72, %s88
    %p90 = scmp.eq.s32.totalorder %s17, 0
    %p91 = por %p89, %p90
    %s92 = ssub.s32 %s11, %s18
    %p93 = scmp.eq.s32.totalorder %s92, 0
    %s95 = sadd.s32 %s94, 1
    %s96 = scalar_select %p93, %s94, %s95
    %p99 = pneg %p93
    %p100 = scmp.eq.s32.totalorder %s11, 1
    %p101 = por %p99, %p100
    %p102 = scmp.ne.s32.totalorder %s94, %s97
    %p103 = scmp.eq.s32.totalorder %s11, 0
    %p104 = por %p102, %p103
    %p105 = scmp.ne.s32.totalorder %s94, %s97
    %p106 = scmp.eq.s32.totalorder %s16, 1
    %p107 = por %p105, %p106
    %p108 = scmp.ne.s32.totalorder %s97, %s98
    %p109 = scmp.eq.s32.totalorder %s16, 0
    %p110 = por %p108, %p109
    %p111 = scmp.ne.s32.totalorder %s97, %s98
    %p112 = scmp.eq.s32.totalorder %s17, 1
    %p113 = por %p111, %p112
    %p115 = scmp.ne.s32.totalorder %s98, %s114
    %p116 = scmp.eq.s32.totalorder %s17, 0
    %p117 = por %p115, %p116
    %s118 = ssub.s32 %s11, %s18
    %p119 = scmp.eq.s32.totalorder %s118, 0
    %s121 = sadd.s32 %s120, 1
    %s122 = scalar_select %p119, %s120, %s121
    %p125 = pneg %p119
    %p126 = scmp.eq.s32.totalorder %s11, 1
    %p127 = por %p125, %p126
    %p128 = scmp.ne.s32.totalorder %s120, %s123
    %p129 = scmp.eq.s32.totalorder %s11, 0
    %p130 = por %p128, %p129
    %p131 = scmp.ne.s32.totalorder %s120, %s123
    %p132 = scmp.eq.s32.totalorder %s16, 1
    %p133 = por %p131, %p132
    %p134 = scmp.ne.s32.totalorder %s123, %s124
    %p135 = scmp.eq.s32.totalorder %s16, 0
    %p136 = por %p134, %p135
    %p137 = scmp.ne.s32.totalorder %s123, %s124
    %p138 = scmp.eq.s32.totalorder %s17, 1
    %p139 = por %p137, %p138
    %p141 = scmp.ne.s32.totalorder %s124, %s140
    %p142 = scmp.eq.s32.totalorder %s17, 0
    %p143 = por %p141, %p142
    %p144 = scmp.le.s32.totalorder 1, %s11
    %p145 = scmp.lt.s32.totalorder %s11, 3
    %p146 = pnand %p144, %p145
    %p147 = pneg %p146
    // Predicated region
    $region9: #{basic_block_pallas.8} parent=5 // pred_check
      _
    $region10: #{basic_block_pallas.8} parent=5 // pred_check_branch
      %149 = sbr.rel (%p146) target = $region12
    $region11: #{basic_block_pallas.8} parent=5 // pred_region
      %s150 = ssub.s32 %s11, 1
      // Predicated region
      $region13: #{basic_block_pallas.8} parent=11 // pred_check
        %p151 = pneg %p58
      $region14: #{basic_block_pallas.8} parent=11 // pred_check_branch
        %153 = sbr.rel (%p151) target = $region16
      $region15: #{basic_block_pallas.8} parent=11 // pred_region
        _
      $region16: #{basic_block_pallas.8} parent=11 // pred_fallthru
        _
    $region12: #{basic_block_pallas.8} parent=5 // pred_fallthru
      _
    %p154 = scmp.lt.s32.totalorder %s11, 2
    // Predicated region
    $region17: #{basic_block_pallas.8} parent=5 // pred_check
      %p155 = pneg %p154
    $region18: #{basic_block_pallas.8} parent=5 // pred_check_branch
      %157 = sbr.rel (%p155) target = $region20
    $region19: #{basic_block_pallas.8} parent=5 // pred_region
      // Predicated region
      $region21: #{basic_block_pallas.8} parent=19 // pred_check
        %p158 = pneg %p31
      $region22: #{basic_block_pallas.8} parent=19 // pred_check_branch
        %160 = sbr.rel (%p158) target = $region24
      $region23: #{basic_block_pallas.8} parent=19 // pred_region
        %p161 = scmp.lt.s32.totalorder %s11, 1
        %s162 = scalar_select %p161, %s11, 1
        %s163 = smul.addr %s162, 10
        %s164 = smul.addr %s163, 4
        %s165 = scalar_lea.vmem %s0, %s164
      $region24: #{basic_block_pallas.8} parent=19 // pred_fallthru
        _
    $region20: #{basic_block_pallas.8} parent=5 // pred_fallthru
      _
    %p166 = scmp.le.s32.totalorder 1, %s11
    %p167 = scmp.lt.s32.totalorder %s11, 3
    %p168 = pnand %p166, %p167
    %p169 = pneg %p168
    // Predicated region
    $region25: #{basic_block_pallas.8} parent=5 // pred_check
      _
    $region26: #{basic_block_pallas.8} parent=5 // pred_check_branch
      %171 = sbr.rel (%p168) target = $region28
    $region27: #{basic_block_pallas.8} parent=5 // pred_region
      %s172 = ssub.s32 %s11, 1
      %p173 = scmp.lt.s32.totalorder %s16, 1
      %s174 = scalar_select %p173, %s16, 1
      %s175 = smul.addr %s174, 10
      %s176 = smul.addr %s175, 4
      %s177 = scalar_lea.vmem %s0, %s176
      %p178 = pneg %p37
      %p179 = pneg %p34
      %p180 = pneg %p58
      %p181 = pneg %p55
      %p182 = pneg %p84
      %p183 = pneg %p81
      %p184 = scmp.lt.s32.totalorder %s16, 1
      %s185 = scalar_select %p184, %s16, 1
      %s186 = smul.addr %s185, 10
      %s187 = smul.addr %s186, 4
      %s188 = scalar_lea.vmem %s2, %s187
      %p189 = pneg %p110
      %p190 = pneg %p107
      %p191 = scmp.lt.s32.totalorder %s16, 1
      %s192 = scalar_select %p191, %s16, 1
      %s193 = scalar_lea.vmem %s3, %s192
      %p194 = pneg %p136
      %p195 = pneg %p133
      %p196 = scmp.lt.s32.totalorder %s16, 1
      %s197 = scalar_select %p196, %s16, 1
      %s198 = scalar_lea.vmem %s4, %s197
      %p199 = scmp.lt.s32.totalorder %s16, 1
      %s200 = scalar_select %p199, %s16, 1
      %s201 = smul.addr %s200, 10
      %s202 = smul.addr %s201, 4
      %s203 = scalar_lea.vmem %s0, %s202
      %p204 = scmp.lt.s32.totalorder %s16, 1
      %s205 = scalar_select %p204, %s16, 1
      %s206 = smul.addr %s205, 10
      %s207 = smul.addr %s206, 4
      %s208 = scalar_lea.vmem %s2, %s207
      %p209 = scmp.lt.s32.totalorder %s16, 1
      %s210 = scalar_select %p209, %s16, 1
      %s211 = scalar_lea.vmem %s3, %s210
      %p212 = scmp.lt.s32.totalorder %s16, 1
      %s213 = scalar_select %p212, %s16, 1
      %s214 = scalar_lea.vmem %s4, %s213
      %v216 = vld [vmem:[%s203] sm:$0xf]
      %v217 = vld [vmem:[%s203 + $0x4] sm:$0xf]
      %v218 = vld [vmem:[%s203 + $0x8] sm:$0xf]
      %v219 = vld [vmem:[%s203 + $0xc] sm:$0xf]
      %v220 = vld [vmem:[%s203 + $0x10] sm:$0xf]
      %v221 = vld [vmem:[%s203 + $0x14] sm:$0xf]
      %v222 = vld [vmem:[%s203 + $0x18] sm:$0xf]
      %v223 = vld [vmem:[%s203 + $0x1c] sm:$0xf]
      %v224 = vld [vmem:[%s203 + $0x20] sm:$0xf]
      %v225 = vld [vmem:[%s203 + $0x24] sm:$0xf]
      %v226 = vld [vmem:[%s1] sm:$0x3]
      %v237 = vunpack.c.l.b16 %v216
      %v238 = vunpack.c.l.b16 %v217
      %v239 = vunpack.c.l.b16 %v218
      %v240 = vunpack.c.l.b16 %v219
      %v241 = vunpack.c.l.b16 %v220
      %v242 = vunpack.c.l.b16 %v221
      %v243 = vunpack.c.l.b16 %v222
      %v244 = vunpack.c.l.b16 %v223
      %v245 = vunpack.c.l.b16 %v224
      %v246 = vunpack.c.l.b16 %v225
      %v247 = vpack.c.b16 %v238, %v237
      %v248 = vpack.c.b16 %v240, %v239
      %v249 = vpack.c.b16 %v242, %v241
      %v250 = vpack.c.b16 %v244, %v243
      %v251 = vpack.c.b16 %v246, %v245
      %vm252 = vcmask 31744
      %v254 = vsel %vm252, %v247, 0
      %v257 = vsel %vm252, %v248, 0
      %v260 = vsel %vm252, %v249, 0
      %v263 = vsel %vm252, %v250, 0
      %v266 = vsel %vm252, %v251, 0
      %vm268 = vcmask 1041408
      %v270 = vsel %vm268, %v226, 0
      %272 = vmatprep.subr.bf16.mxu0 0
      %273 = vmatpush1.bf16.msra.mxu0 %v270
      %274 = vmatprep.subr.bf16.mxu0 0
      %275 = vmatpush1.bf16.msra.mxu0 0
      %276 = vmatprep.subr.bf16.mxu0 0
      %277 = vmatpush1.bf16.msra.mxu0 0
      %278 = vmatprep.subr.bf16.mxu0 0
      %279 = vmatpush1.bf16.msra.mxu0 0
      %280 = vmatprep.subr.bf16.mxu0 0
      %281 = vmatpush1.bf16.msra.mxu0 0
      %282 = vmatprep.subr.bf16.mxu0 0
      %283 = vmatpush1.bf16.msra.mxu0 0
      %284 = vmatprep.subr.bf16.mxu0 0
      %285 = vmatpush1.bf16.msra.mxu0 0
      %286 = vmatprep.subr.bf16.mxu0 0
      %287 = vmatpush1.bf16.msra.mxu0 0
      %288 = vmatprep.subr.bf16.mxu0 0
      %289 = vmatpush1.bf16.msra.mxu0 0
      %290 = vmatprep.subr.bf16.mxu0 0
      %291 = vmatpush1.bf16.msra.mxu0 0
      %292 = vmatprep.subr.bf16.mxu0 0
      %293 = vmatpush1.bf16.msra.mxu0 0
      %294 = vmatprep.subr.bf16.mxu0 0
      %295 = vmatpush1.bf16.msra.mxu0 0
      %296 = vmatprep.subr.bf16.mxu0 0
      %297 = vmatpush1.bf16.msra.mxu0 0
      %298 = vmatprep.subr.bf16.mxu0 0
      %299 = vmatpush1.bf16.msra.mxu0 0
      %300 = vmatprep.subr.bf16.mxu0 0
      %301 = vmatpush1.bf16.msra.mxu0 0
      %302 = vmatprep.subr.bf16.mxu0 0
      %303 = vmatpush1.bf16.msra.mxu0 0
      %304 = vmatprep.mubr.bf16.mxu0 0
      %305 = vmatmul.mubr.bf16.gmra.mrb[0].mxu0 %v254
      %v306 = vpop.f32.mrb[0].mxu0
      %v307 = vadd.f32 0.0, %v306
      %v308 = vpop.f32.mrb[0].mxu0
      %v309 = vpop.f32.mrb[0].mxu0
      %v310 = vadd.f32 0.0, %v309
      %v311 = vpop.f32.mrb[0].mxu0
      %312 = vmatprep.mubr.bf16.mxu0 0
      %313 = vmatmul.mubr.bf16.gmra.mrb[0].mxu0 %v257
      %v314 = vpop.f32.mrb[0].mxu0
      %v315 = vadd.f32 0.0, %v314
      %v316 = vpop.f32.mrb[0].mxu0
      %v317 = vpop.f32.mrb[0].mxu0
      %v318 = vadd.f32 0.0, %v317
      %v319 = vpop.f32.mrb[0].mxu0
      %320 = vmatprep.mubr.bf16.mxu0 0
      %321 = vmatmul.mubr.bf16.gmra.mrb[0].mxu0 %v260
      %v322 = vpop.f32.mrb[0].mxu0
      %v323 = vadd.f32 0.0, %v322
      %v324 = vpop.f32.mrb[0].mxu0
      %v325 = vpop.f32.mrb[0].mxu0
      %v326 = vadd.f32 0.0, %v325
      %v327 = vpop.f32.mrb[0].mxu0
      %328 = vmatprep.mubr.bf16.mxu0 0
      %329 = vmatmul.mubr.bf16.gmra.mrb[0].mxu0 %v263
      %v330 = vpop.f32.mrb[0].mxu0
      %v331 = vadd.f32 0.0, %v330
      %v332 = vpop.f32.mrb[0].mxu0
      %v333 = vpop.f32.mrb[0].mxu0
      %v334 = vadd.f32 0.0, %v333
      %v335 = vpop.f32.mrb[0].mxu0
      %336 = vmatprep.mubr.bf16.mxu0 0
      %337 = vmatmul.mubr.bf16.gmra.mrb[0].mxu0 %v266
      %v338 = vpop.f32.mrb[0].mxu0
      %v339 = vadd.f32 0.0, %v338
      %v340 = vpop.f32.mrb[0].mxu0
      %v341 = vpop.f32.mrb[0].mxu0
      %v342 = vadd.f32 0.0, %v341
      %v343 = vpop.f32.mrb[0].mxu0
      %344 = vdwg.mxu0
      %v345 = vlaneseq
      %v346 = vshrl.u32 %v345, 7
      %v347 = vadd.s32 %v346, 8
      %v348 = vadd.s32 %v346, 16
      %v349 = vadd.s32 %v346, 24
      %v350 = vadd.s32 %v346, 32
      %v351 = vadd.s32 %v346, 40
      %v352 = vadd.s32 %v346, 48
      %v353 = vadd.s32 %v346, 56
      %v354 = vadd.s32 %v346, 64
      %v355 = vadd.s32 %v346, 72
      %vm356 = vcmp.lt.s32.totalorder %v346, 0
      %v357 = vsub.s32 0, %v346
      %v358 = vsel %vm356, %v357, %v346
      %v359 = vmul.u32.u64.compose %v358, 3435973837
      %v360 = vextract.low.u32 %v359
      %v361 = vextract.high.u32 %v359
      %v362 = vshrl.u32 %v361, 3
      %v363 = vmul.u32 %v362, 10
      %v364 = vsub.s32 %v358, %v363
      %v365 = vsub.s32 0, %v364
      %v366 = vsel %vm356, %v365, %v364
      %vm367 = vcmp.lt.s32.totalorder %v347, 0
      %v368 = vsub.s32 0, %v347
      %v369 = vsel %vm367, %v368, %v347
      %v370 = vmul.u32.u64.compose %v369, 3435973837
      %v371 = vextract.low.u32 %v370
      %v372 = vextract.high.u32 %v370
      %v373 = vshrl.u32 %v372, 3
      %v374 = vmul.u32 %v373, 10
      %v375 = vsub.s32 %v369, %v374
      %v376 = vsub.s32 0, %v375
      %v377 = vsel %vm367, %v376, %v375
      %vm378 = vcmp.lt.s32.totalorder %v348, 0
      %v379 = vsub.s32 0, %v348
      %v380 = vsel %vm378, %v379, %v348
      %v381 = vmul.u32.u64.compose %v380, 3435973837
      %v382 = vextract.low.u32 %v381
      %v383 = vextract.high.u32 %v381
      %v384 = vshrl.u32 %v383, 3
      %v385 = vmul.u32 %v384, 10
      %v386 = vsub.s32 %v380, %v385
      %v387 = vsub.s32 0, %v386
      %v388 = vsel %vm378, %v387, %v386
      %vm389 = vcmp.lt.s32.totalorder %v349, 0
      %v390 = vsub.s32 0, %v349
      %v391 = vsel %vm389, %v390, %v349
      %v392 = vmul.u32.u64.compose %v391, 3435973837
      %v393 = vextract.low.u32 %v392
      %v394 = vextract.high.u32 %v392
      %v395 = vshrl.u32 %v394, 3
      %v396 = vmul.u32 %v395, 10
      %v397 = vsub.s32 %v391, %v396
      %v398 = vsub.s32 0, %v397
      %v399 = vsel %vm389, %v398, %v397
      %vm400 = vcmp.lt.s32.totalorder %v350, 0
      %v401 = vsub.s32 0, %v350
      %v402 = vsel %vm400, %v401, %v350
      %v403 = vmul.u32.u64.compose %v402, 3435973837
      %v404 = vextract.low.u32 %v403
      %v405 = vextract.high.u32 %v403
      %v406 = vshrl.u32 %v405, 3
      %v407 = vmul.u32 %v406, 10
      %v408 = vsub.s32 %v402, %v407
      %v409 = vsub.s32 0, %v408
      %v410 = vsel %vm400, %v409, %v408
      %vm411 = vcmp.lt.s32.totalorder %v351, 0
      %v412 = vsub.s32 0, %v351
      %v413 = vsel %vm411, %v412, %v351
      %v414 = vmul.u32.u64.compose %v413, 3435973837
      %v415 = vextract.low.u32 %v414
      %v416 = vextract.high.u32 %v414
      %v417 = vshrl.u32 %v416, 3
      %v418 = vmul.u32 %v417, 10
      %v419 = vsub.s32 %v413, %v418
      %v420 = vsub.s32 0, %v419
      %v421 = vsel %vm411, %v420, %v419
      %vm422 = vcmp.lt.s32.totalorder %v352, 0
      %v423 = vsub.s32 0, %v352
      %v424 = vsel %vm422, %v423, %v352
      %v425 = vmul.u32.u64.compose %v424, 3435973837
      %v426 = vextract.low.u32 %v425
      %v427 = vextract.high.u32 %v425
      %v428 = vshrl.u32 %v427, 3
      %v429 = vmul.u32 %v428, 10
      %v430 = vsub.s32 %v424, %v429
      %v431 = vsub.s32 0, %v430
      %v432 = vsel %vm422, %v431, %v430
      %vm433 = vcmp.lt.s32.totalorder %v353, 0
      %v434 = vsub.s32 0, %v353
      %v435 = vsel %vm433, %v434, %v353
      %v436 = vmul.u32.u64.compose %v435, 3435973837
      %v437 = vextract.low.u32 %v436
      %v438 = vextract.high.u32 %v436
      %v439 = vshrl.u32 %v438, 3
      %v440 = vmul.u32 %v439, 10
      %v441 = vsub.s32 %v435, %v440
      %v442 = vsub.s32 0, %v441
      %v443 = vsel %vm433, %v442, %v441
      %vm444 = vcmp.lt.s32.totalorder %v354, 0
      %v445 = vsub.s32 0, %v354
      %v446 = vsel %vm444, %v445, %v354
      %v447 = vmul.u32.u64.compose %v446, 3435973837
      %v448 = vextract.low.u32 %v447
      %v449 = vextract.high.u32 %v447
      %v450 = vshrl.u32 %v449, 3
      %v451 = vmul.u32 %v450, 10
      %v452 = vsub.s32 %v446, %v451
      %v453 = vsub.s32 0, %v452
      %v454 = vsel %vm444, %v453, %v452
      %vm455 = vcmp.lt.s32.totalorder %v355, 0
      %v456 = vsub.s32 0, %v355
      %v457 = vsel %vm455, %v456, %v355
      %v458 = vmul.u32.u64.compose %v457, 3435973837
      %v459 = vextract.low.u32 %v458
      %v460 = vextract.high.u32 %v458
      %v461 = vshrl.u32 %v460, 3
      %v462 = vmul.u32 %v461, 10
      %v463 = vsub.s32 %v457, %v462
      %v464 = vsub.s32 0, %v463
      %v465 = vsel %vm455, %v464, %v463
      %vm466 = vcmp.ne.s32.totalorder %v366, 0
      %vm467 = vcmp.ne.s32.totalorder %v377, 0
      %vm468 = vcmp.ne.s32.totalorder %v388, 0
      %vm469 = vcmp.ne.s32.totalorder %v399, 0
      %vm470 = vcmp.ne.s32.totalorder %v410, 0
      %vm471 = vcmp.ne.s32.totalorder %v421, 0
      %vm472 = vcmp.ne.s32.totalorder %v432, 0
      %vm473 = vcmp.ne.s32.totalorder %v443, 0
      %vm474 = vcmp.ne.s32.totalorder %v454, 0
      %vm475 = vcmp.ne.s32.totalorder %v465, 0
      %vm476 = vcmp.lt.s32.totalorder %v366, 0
      %vm477 = vcmp.lt.s32.totalorder %v377, 0
      %vm478 = vcmp.lt.s32.totalorder %v388, 0
      %vm479 = vcmp.lt.s32.totalorder %v399, 0
      %vm480 = vcmp.lt.s32.totalorder %v410, 0
      %vm481 = vcmp.lt.s32.totalorder %v421, 0
      %vm482 = vcmp.lt.s32.totalorder %v432, 0
      %vm483 = vcmp.lt.s32.totalorder %v443, 0
      %vm484 = vcmp.lt.s32.totalorder %v454, 0
      %vm485 = vcmp.lt.s32.totalorder %v465, 0
      %vm486 = vmand %vm476, %vm466
      %vm487 = vmand %vm477, %vm467
      %vm488 = vmand %vm478, %vm468
      %vm489 = vmand %vm479, %vm469
      %vm490 = vmand %vm480, %vm470
      %vm491 = vmand %vm481, %vm471
      %vm492 = vmand %vm482, %vm472
      %vm493 = vmand %vm483, %vm473
      %vm494 = vmand %vm484, %vm474
      %vm495 = vmand %vm485, %vm475
      %v496 = vadd.s32 %v366, 10
      %v497 = vadd.s32 %v377, 10
      %v498 = vadd.s32 %v388, 10
      %v499 = vadd.s32 %v399, 10
      %v500 = vadd.s32 %v410, 10
      %v501 = vadd.s32 %v421, 10
      %v502 = vadd.s32 %v432, 10
      %v503 = vadd.s32 %v443, 10
      %v504 = vadd.s32 %v454, 10
      %v505 = vadd.s32 %v465, 10
      %v506 = vsel %vm486, %v496, %v366
      %v507 = vsel %vm487, %v497, %v377
      %v508 = vsel %vm488, %v498, %v388
      %v509 = vsel %vm489, %v499, %v399
      %v510 = vsel %vm490, %v500, %v410
      %v511 = vsel %vm491, %v501, %v421
      %v512 = vsel %vm492, %v502, %v432
      %v513 = vsel %vm493, %v503, %v443
      %v514 = vsel %vm494, %v504, %v454
      %v515 = vsel %vm495, %v505, %v465
      %vm516 = vcmp.lt.s32.totalorder %v506, 8
      %vm517 = vcmp.lt.s32.totalorder %v507, 8
      %vm518 = vcmp.lt.s32.totalorder %v508, 8
      %vm519 = vcmp.lt.s32.totalorder %v509, 8
      %vm520 = vcmp.lt.s32.totalorder %v510, 8
      %vm521 = vcmp.lt.s32.totalorder %v511, 8
      %vm522 = vcmp.lt.s32.totalorder %v512, 8
      %vm523 = vcmp.lt.s32.totalorder %v513, 8
      %vm524 = vcmp.lt.s32.totalorder %v514, 8
      %vm525 = vcmp.lt.s32.totalorder %v515, 8
      %v526 = vsel %vm516, 1, 0
      %v527 = vsel %vm517, 1, 0
      %v528 = vsel %vm518, 1, 0
      %v529 = vsel %vm519, 1, 0
      %v530 = vsel %vm520, 1, 0
      %v531 = vsel %vm521, 1, 0
      %v532 = vsel %vm522, 1, 0
      %v533 = vsel %vm523, 1, 0
      %v534 = vsel %vm524, 1, 0
      %v535 = vsel %vm525, 1, 0
      %vm536 = vcmp.eq.s32.totalorder %v526, 1
      %vm537 = vcmp.eq.s32.totalorder %v527, 1
      %vm538 = vcmp.eq.s32.totalorder %v528, 1
      %vm539 = vcmp.eq.s32.totalorder %v529, 1
      %vm540 = vcmp.eq.s32.totalorder %v530, 1
      %vm541 = vcmp.eq.s32.totalorder %v531, 1
      %vm542 = vcmp.eq.s32.totalorder %v532, 1
      %vm543 = vcmp.eq.s32.totalorder %v533, 1
      %vm544 = vcmp.eq.s32.totalorder %v534, 1
      %vm545 = vcmp.eq.s32.totalorder %v535, 1
      %v546 = vsel %vm536, %v307, 0.0
      %v547 = vsel %vm537, %v310, 0.0
      %v548 = vsel %vm538, %v315, 0.0
      %v549 = vsel %vm539, %v318, 0.0
      %v550 = vsel %vm540, %v323, 0.0
      %v551 = vsel %vm541, %v326, 0.0
      %v552 = vsel %vm542, %v331, 0.0
      %v553 = vsel %vm543, %v334, 0.0
      %v554 = vsel %vm544, %v339, 0.0
      %v555 = vsel %vm545, %v342, 0.0
      %v556 = vpack.c.bf16 %v547, %v546
      %v557 = vpack.c.bf16 %v549, %v548
      %v558 = vpack.c.bf16 %v551, %v550
      %v559 = vpack.c.bf16 %v553, %v552
      %v560 = vpack.c.bf16 %v555, %v554
      %v566 = vunpack.c.l.b16 %v556
      %v567 = vunpack.c.h.b16 %v556
      %v568 = vunpack.c.l.b16 %v557
      %v569 = vunpack.c.h.b16 %v557
      %v570 = vunpack.c.l.b16 %v558
      %v571 = vunpack.c.h.b16 %v558
      %v572 = vunpack.c.l.b16 %v559
      %v573 = vunpack.c.h.b16 %v559
      %v574 = vunpack.c.l.b16 %v560
      %v575 = vunpack.c.h.b16 %v560
      %v576 = vpack.c.b16 %v566, %v566
      %v577 = vpack.c.b16 %v567, %v567
      %v578 = vpack.c.b16 %v568, %v568
      %v579 = vpack.c.b16 %v569, %v569
      %v580 = vpack.c.b16 %v570, %v570
      %v581 = vpack.c.b16 %v571, %v571
      %v582 = vpack.c.b16 %v572, %v572
      %v583 = vpack.c.b16 %v573, %v573
      %v584 = vpack.c.b16 %v574, %v574
      %v585 = vpack.c.b16 %v575, %v575
      %596 = vst [vmem:[%s208] sm:$0xf] %v576
      %597 = vst [vmem:[%s208 + $0x4] sm:$0xf] %v577
      %598 = vst [vmem:[%s208 + $0x8] sm:$0xf] %v578
      %599 = vst [vmem:[%s208 + $0xc] sm:$0xf] %v579
      %600 = vst [vmem:[%s208 + $0x10] sm:$0xf] %v580
      %601 = vst [vmem:[%s208 + $0x14] sm:$0xf] %v581
      %602 = vst [vmem:[%s208 + $0x18] sm:$0xf] %v582
      %603 = vst [vmem:[%s208 + $0x1c] sm:$0xf] %v583
      %604 = vst [vmem:[%s208 + $0x20] sm:$0xf] %v584
      %605 = vst [vmem:[%s208 + $0x24] sm:$0xf] %v585
      %v606 = vadd.f32 %v546, %v547
      %v607 = vadd.f32 %v606, %v548
      %v608 = vadd.f32 %v607, %v549
      %v609 = vadd.f32 %v608, %v550
      %v610 = vadd.f32 %v609, %v551
      %v611 = vadd.f32 %v610, %v552
      %v612 = vadd.f32 %v611, %v553
      %v613 = vadd.f32 %v612, %v554
      %v614 = vadd.f32 %v613, %v555
      %v615 = vrot.slane %v614, 4
      %v616 = vadd.f32 %v614, %v615
      %v617 = vrot.slane %v616, 2
      %v618 = vadd.f32 %v616, %v617
      %v619 = vrot.slane %v618, 1
      %v620 = vadd.f32 %v618, %v619
      %621 = vst [vmem:[%s211] sm:$0x1] %v620
      %v622 = vmul.f32 %v546, %v546
      %v623 = vmul.f32 %v547, %v547
      %v624 = vmul.f32 %v548, %v548
      %v625 = vmul.f32 %v549, %v549
      %v626 = vmul.f32 %v550, %v550
      %v627 = vmul.f32 %v551, %v551
      %v628 = vmul.f32 %v552, %v552
      %v629 = vmul.f32 %v553, %v553
      %v630 = vmul.f32 %v554, %v554
      %v631 = vmul.f32 %v555, %v555
      %v632 = vadd.f32 %v622, %v623
      %v633 = vadd.f32 %v632, %v624
      %v634 = vadd.f32 %v633, %v625
      %v635 = vadd.f32 %v634, %v626
      %v636 = vadd.f32 %v635, %v627
      %v637 = vadd.f32 %v636, %v628
      %v638 = vadd.f32 %v637, %v629
      %v639 = vadd.f32 %v638, %v630
      %v640 = vadd.f32 %v639, %v631
      %v641 = vrot.slane %v640, 4
      %v642 = vadd.f32 %v640, %v641
      %v643 = vrot.slane %v642, 2
      %v644 = vadd.f32 %v642, %v643
      %v645 = vrot.slane %v644, 1
      %v646 = vadd.f32 %v644, %v645
      %647 = vst [vmem:[%s214] sm:$0x1] %v646
      %p648 = scmp.lt.s32.totalorder %s16, 1
      %s649 = scalar_select %p648, %s16, 1
      %s650 = smul.addr %s649, 10
      %s651 = smul.addr %s650, 4
      %s652 = scalar_lea.vmem %s2, %s651
      %p653 = scmp.lt.s32.totalorder %s16, 1
      %s654 = scalar_select %p653, %s16, 1
      %s655 = scalar_lea.vmem %s3, %s654
      %p656 = scmp.lt.s32.totalorder %s16, 1
      %s657 = scalar_select %p656, %s16, 1
      %s658 = scalar_lea.vmem %s4, %s657
      // Predicated region
      $region29: #{basic_block_pallas.8} parent=27 // pred_check
        %p659 = pneg %p81
      $region30: #{basic_block_pallas.8} parent=27 // pred_check_branch
        %661 = sbr.rel (%p659) target = $region32
      $region31: #{basic_block_pallas.8} parent=27 // pred_region
        _
      $region32: #{basic_block_pallas.8} parent=27 // pred_fallthru
        _
      // Predicated region
      $region33: #{basic_block_pallas.8} parent=27 // pred_check
        %p662 = pneg %p107
      $region34: #{basic_block_pallas.8} parent=27 // pred_check_branch
        %664 = sbr.rel (%p662) target = $region36
      $region35: #{basic_block_pallas.8} parent=27 // pred_region
        _
      $region36: #{basic_block_pallas.8} parent=27 // pred_fallthru
        _
      // Predicated region
      $region37: #{basic_block_pallas.8} parent=27 // pred_check
        %p665 = pneg %p133
      $region38: #{basic_block_pallas.8} parent=27 // pred_check_branch
        %667 = sbr.rel (%p665) target = $region40
      $region39: #{basic_block_pallas.8} parent=27 // pred_region
        _
      $region40: #{basic_block_pallas.8} parent=27 // pred_fallthru
        _
    $region28: #{basic_block_pallas.8} parent=5 // pred_fallthru
      _
    %p668 = scmp.le.s32.totalorder 2, %s11
    // Predicated region
    $region41: #{basic_block_pallas.8} parent=5 // pred_check
      %p669 = pneg %p668
    $region42: #{basic_block_pallas.8} parent=5 // pred_check_branch
      %671 = sbr.rel (%p669) target = $region44
    $region43: #{basic_block_pallas.8} parent=5 // pred_region
      %s672 = ssub.s32 %s11, 2
      // Predicated region
      $region45: #{basic_block_pallas.8} parent=43 // pred_check
        %p673 = pneg %p87
      $region46: #{basic_block_pallas.8} parent=43 // pred_check_branch
        %675 = sbr.rel (%p673) target = $region48
      $region47: #{basic_block_pallas.8} parent=43 // pred_region
        %p676 = scmp.lt.s32.totalorder %s17, 1
        %s677 = scalar_select %p676, %s17, 1
        %s678 = smul.addr %s677, 10
        %s679 = smul.addr %s678, 4
        %s680 = scalar_lea.vmem %s2, %s679
      $region48: #{basic_block_pallas.8} parent=43 // pred_fallthru
        _
      // Predicated region
      $region49: #{basic_block_pallas.8} parent=43 // pred_check
        %p681 = pneg %p113
      $region50: #{basic_block_pallas.8} parent=43 // pred_check_branch
        %683 = sbr.rel (%p681) target = $region52
      $region51: #{basic_block_pallas.8} parent=43 // pred_region
        %p684 = scmp.lt.s32.totalorder %s17, 1
        %s685 = scalar_select %p684, %s17, 1
        %s686 = scalar_lea.vmem %s3, %s685
      $region52: #{basic_block_pallas.8} parent=43 // pred_fallthru
        _
      // Predicated region
      $region53: #{basic_block_pallas.8} parent=43 // pred_check
        %p687 = pneg %p139
      $region54: #{basic_block_pallas.8} parent=43 // pred_check_branch
        %689 = sbr.rel (%p687) target = $region56
      $region55: #{basic_block_pallas.8} parent=43 // pred_region
        %p690 = scmp.lt.s32.totalorder %s17, 1
        %s691 = scalar_select %p690, %s17, 1
        %s692 = scalar_lea.vmem %s4, %s691
      $region56: #{basic_block_pallas.8} parent=43 // pred_fallthru
        _
    $region44: #{basic_block_pallas.8} parent=5 // pred_fallthru
      _
  $region6: #{basic_block_pallas.8} parent=0 // loop_footer
    %s15 = sadd.s32 1, %s11
  $region7: #{basic_block_pallas.8} parent=0 // loop_footer_branch
    %10 = sbr.rel target = $region3
  $region8: #{basic_block_pallas.8} parent=0 // loop_exit
    _

// kernel: basic_block_pallas.11
$region0: #{basic_block_pallas.11}
  #allocation0 [shape = 'u32[]', space=smem, size = 0x4, offset = 0x4, fixed_abs, tag = 'smem constant byte address 0x4 - core index']
  #allocation1 [shape = 'u32[144,128]{1,0:T(1,128)}', space=vmem, size = 0x12000, scoped, tag = 'internal scratch']
  %s0 = inlined_call_operand.vmem [shape: bf16[2,80,128], index: 0, kind: input, shape index: {}]
  %s1 = inlined_call_operand.vmem [shape: f32[1,128], index: 1, kind: input, shape index: {}]
  %s2 = inlined_call_operand.vmem [shape: f32[1,128], index: 2, kind: input, shape index: {}]
  %s3 = inlined_call_operand.vmem [shape: bf16[2,80,128], index: 3, kind: input, shape index: {}]
  %s4 = inlined_call_operand.vmem [shape: f32[2,80,128], index: 4, kind: output, shape index: {}]
  %s5 = sld [smem:[#allocation0]]
  $region49: #{basic_block_pallas.11} parent=0
    _
  %s7 = ssub.s32 1, %s5
  %s8 = scalar_select 0, %s7, %s5
  loop: start=0, step=1, limit=4
  $region2: #{basic_block_pallas.11} parent=0 // loop_pre_header
    _
  $region3: #{basic_block_pallas.11} parent=0 // loop_header
    %s10 = sphi 0, %s14
    %p11 = scmp.ge.s32.totalorder %s10, 4
    %s20 = sphi 0, %s22
    %s23 = sphi 0, %s20
    %s24 = sphi 0, %s23
    %s40 = sphi 0, %s24
    %s44 = sphi 0, %s44
    %s46 = sphi 0, %s44
    %s47 = sphi 0, %s46
    %s61 = sphi 0, %s47
    %s65 = sphi 0, %s65
    %s67 = sphi 0, %s65
    %s68 = sphi 0, %s67
    %s82 = sphi 0, %s68
    %s88 = sphi 0, %s90
    %s91 = sphi 0, %s88
    %s92 = sphi 0, %s91
    %s108 = sphi 0, %s92
    %s114 = sphi 0, %s116
    %s117 = sphi 0, %s114
    %s118 = sphi 0, %s117
    %s134 = sphi 0, %s118
  $region4: #{basic_block_pallas.11} parent=0 // loop_header_branch
    %13 = sbr.rel (%p11) target = $region8
  $region5: #{basic_block_pallas.11} parent=0 // loop_body
    %s15 = ssub.s32 %s10, 1
    %s16 = ssub.s32 %s10, 2
    %s17 = sadd.s32 %s10, 1
    %s18 = ssub.s32 %s10, %s17
    %p19 = scmp.eq.s32.totalorder %s18, 0
    %s21 = sadd.s32 %s20, 1
    %s22 = scalar_select %p19, %s20, %s21
    %p25 = pneg %p19
    %p26 = scmp.eq.s32.totalorder %s10, 1
    %p27 = por %p25, %p26
    %p28 = scmp.ne.s32.totalorder %s20, %s23
    %p29 = scmp.eq.s32.totalorder %s10, 0
    %p30 = por %p28, %p29
    %p31 = scmp.ne.s32.totalorder %s20, %s23
    %p32 = scmp.eq.s32.totalorder %s15, 1
    %p33 = por %p31, %p32
    %p34 = scmp.ne.s32.totalorder %s23, %s24
    %p35 = scmp.eq.s32.totalorder %s15, 0
    %p36 = por %p34, %p35
    %p37 = scmp.ne.s32.totalorder %s23, %s24
    %p38 = scmp.eq.s32.totalorder %s16, 1
    %p39 = por %p37, %p38
    %p41 = scmp.ne.s32.totalorder %s24, %s40
    %p42 = scmp.eq.s32.totalorder %s16, 0
    %p43 = por %p41, %p42
    %s45 = sadd.s32 %s44, 1
    %p48 = scmp.eq.s32.totalorder %s10, 1
    %p49 = scmp.ne.s32.totalorder %s44, %s46
    %p50 = scmp.eq.s32.totalorder %s10, 0
    %p51 = por %p49, %p50
    %p52 = scmp.ne.s32.totalorder %s44, %s46
    %p53 = scmp.eq.s32.totalorder %s15, 1
    %p54 = por %p52, %p53
    %p55 = scmp.ne.s32.totalorder %s46, %s47
    %p56 = scmp.eq.s32.totalorder %s15, 0
    %p57 = por %p55, %p56
    %p58 = scmp.ne.s32.totalorder %s46, %s47
    %p59 = scmp.eq.s32.totalorder %s16, 1
    %p60 = por %p58, %p59
    %p62 = scmp.ne.s32.totalorder %s47, %s61
    %p63 = scmp.eq.s32.totalorder %s16, 0
    %p64 = por %p62, %p63
    %s66 = sadd.s32 %s65, 1
    %p69 = scmp.eq.s32.totalorder %s10, 1
    %p70 = scmp.ne.s32.totalorder %s65, %s67
    %p71 = scmp.eq.s32.totalorder %s10, 0
    %p72 = por %p70, %p71
    %p73 = scmp.ne.s32.totalorder %s65, %s67
    %p74 = scmp.eq.s32.totalorder %s15, 1
    %p75 = por %p73, %p74
    %p76 = scmp.ne.s32.totalorder %s67, %s68
    %p77 = scmp.eq.s32.totalorder %s15, 0
    %p78 = por %p76, %p77
    %p79 = scmp.ne.s32.totalorder %s67, %s68
    %p80 = scmp.eq.s32.totalorder %s16, 1
    %p81 = por %p79, %p80
    %p83 = scmp.ne.s32.totalorder %s68, %s82
    %p84 = scmp.eq.s32.totalorder %s16, 0
    %p85 = por %p83, %p84
    %s86 = ssub.s32 %s10, %s17
    %p87 = scmp.eq.s32.totalorder %s86, 0
    %s89 = sadd.s32 %s88, 1
    %s90 = scalar_select %p87, %s88, %s89
    %p93 = pneg %p87
    %p94 = scmp.eq.s32.totalorder %s10, 1
    %p95 = por %p93, %p94
    %p96 = scmp.ne.s32.totalorder %s88, %s91
    %p97 = scmp.eq.s32.totalorder %s10, 0
    %p98 = por %p96, %p97
    %p99 = scmp.ne.s32.totalorder %s88, %s91
    %p100 = scmp.eq.s32.totalorder %s15, 1
    %p101 = por %p99, %p100
    %p102 = scmp.ne.s32.totalorder %s91, %s92
    %p103 = scmp.eq.s32.totalorder %s15, 0
    %p104 = por %p102, %p103
    %p105 = scmp.ne.s32.totalorder %s91, %s92
    %p106 = scmp.eq.s32.totalorder %s16, 1
    %p107 = por %p105, %p106
    %p109 = scmp.ne.s32.totalorder %s92, %s108
    %p110 = scmp.eq.s32.totalorder %s16, 0
    %p111 = por %p109, %p110
    %s112 = ssub.s32 %s10, %s17
    %p113 = scmp.eq.s32.totalorder %s112, 0
    %s115 = sadd.s32 %s114, 1
    %s116 = scalar_select %p113, %s114, %s115
    %p119 = pneg %p113
    %p120 = scmp.eq.s32.totalorder %s10, 1
    %p121 = por %p119, %p120
    %p122 = scmp.ne.s32.totalorder %s114, %s117
    %p123 = scmp.eq.s32.totalorder %s10, 0
    %p124 = por %p122, %p123
    %p125 = scmp.ne.s32.totalorder %s114, %s117
    %p126 = scmp.eq.s32.totalorder %s15, 1
    %p127 = por %p125, %p126
    %p128 = scmp.ne.s32.totalorder %s117, %s118
    %p129 = scmp.eq.s32.totalorder %s15, 0
    %p130 = por %p128, %p129
    %p131 = scmp.ne.s32.totalorder %s117, %s118
    %p132 = scmp.eq.s32.totalorder %s16, 1
    %p133 = por %p131, %p132
    %p135 = scmp.ne.s32.totalorder %s118, %s134
    %p136 = scmp.eq.s32.totalorder %s16, 0
    %p137 = por %p135, %p136
    %p138 = scmp.le.s32.totalorder 1, %s10
    %p139 = scmp.lt.s32.totalorder %s10, 3
    %p140 = pnand %p138, %p139
    %p141 = pneg %p140
    // Predicated region
    $region9: #{basic_block_pallas.11} parent=5 // pred_check
      _
    $region10: #{basic_block_pallas.11} parent=5 // pred_check_branch
      %143 = sbr.rel (%p140) target = $region12
    $region11: #{basic_block_pallas.11} parent=5 // pred_region
      %s144 = ssub.s32 %s10, 1
      // Predicated region
      $region13: #{basic_block_pallas.11} parent=11 // pred_check
        %p145 = pneg %p57
      $region14: #{basic_block_pallas.11} parent=11 // pred_check_branch
        %147 = sbr.rel (%p145) target = $region16
      $region15: #{basic_block_pallas.11} parent=11 // pred_region
        _
      $region16: #{basic_block_pallas.11} parent=11 // pred_fallthru
        _
      // Predicated region
      $region17: #{basic_block_pallas.11} parent=11 // pred_check
        %p148 = pneg %p78
      $region18: #{basic_block_pallas.11} parent=11 // pred_check_branch
        %150 = sbr.rel (%p148) target = $region20
      $region19: #{basic_block_pallas.11} parent=11 // pred_region
        _
      $region20: #{basic_block_pallas.11} parent=11 // pred_fallthru
        _
    $region12: #{basic_block_pallas.11} parent=5 // pred_fallthru
      _
    %p151 = scmp.lt.s32.totalorder %s10, 2
    // Predicated region
    $region21: #{basic_block_pallas.11} parent=5 // pred_check
      %p152 = pneg %p151
    $region22: #{basic_block_pallas.11} parent=5 // pred_check_branch
      %154 = sbr.rel (%p152) target = $region24
    $region23: #{basic_block_pallas.11} parent=5 // pred_region
      // Predicated region
      $region25: #{basic_block_pallas.11} parent=23 // pred_check
        %p155 = pneg %p30
      $region26: #{basic_block_pallas.11} parent=23 // pred_check_branch
        %157 = sbr.rel (%p155) target = $region28
      $region27: #{basic_block_pallas.11} parent=23 // pred_region
        %p158 = scmp.lt.s32.totalorder %s10, 1
        %s159 = scalar_select %p158, %s10, 1
        %s160 = smul.addr %s159, 10
        %s161 = smul.addr %s160, 4
        %s162 = scalar_lea.vmem %s0, %s161
      $region28: #{basic_block_pallas.11} parent=23 // pred_fallthru
        _
      // Predicated region
      $region29: #{basic_block_pallas.11} parent=23 // pred_check
        %p163 = pneg %p98
      $region30: #{basic_block_pallas.11} parent=23 // pred_check_branch
        %165 = sbr.rel (%p163) target = $region32
      $region31: #{basic_block_pallas.11} parent=23 // pred_region
        %p166 = scmp.lt.s32.totalorder %s10, 1
        %s167 = scalar_select %p166, %s10, 1
        %s168 = smul.addr %s167, 10
        %s169 = smul.addr %s168, 4
        %s170 = scalar_lea.vmem %s3, %s169
      $region32: #{basic_block_pallas.11} parent=23 // pred_fallthru
        _
    $region24: #{basic_block_pallas.11} parent=5 // pred_fallthru
      _
    %p171 = scmp.le.s32.totalorder 1, %s10
    %p172 = scmp.lt.s32.totalorder %s10, 3
    %p173 = pnand %p171, %p172
    %p174 = pneg %p173
    // Predicated region
    $region33: #{basic_block_pallas.11} parent=5 // pred_check
      _
    $region34: #{basic_block_pallas.11} parent=5 // pred_check_branch
      %176 = sbr.rel (%p173) target = $region36
    $region35: #{basic_block_pallas.11} parent=5 // pred_region
      %s177 = ssub.s32 %s10, 1
      %p178 = scmp.lt.s32.totalorder %s15, 1
      %s179 = scalar_select %p178, %s15, 1
      %s180 = smul.addr %s179, 10
      %s181 = smul.addr %s180, 4
      %s182 = scalar_lea.vmem %s0, %s181
      %p183 = pneg %p36
      %p184 = pneg %p33
      %p185 = pneg %p57
      %p186 = pneg %p54
      %p187 = pneg %p78
      %p188 = pneg %p75
      %p189 = scmp.lt.s32.totalorder %s15, 1
      %s190 = scalar_select %p189, %s15, 1
      %s191 = smul.addr %s190, 10
      %s192 = smul.addr %s191, 4
      %s193 = scalar_lea.vmem %s3, %s192
      %p194 = pneg %p104
      %p195 = pneg %p101
      %p196 = pneg %p130
      %p197 = pneg %p127
      %p198 = scmp.lt.s32.totalorder %s15, 1
      %s199 = scalar_select %p198, %s15, 1
      %s200 = smul.addr %s199, 10
      %s201 = smul.addr %s200, 8
      %s202 = scalar_lea.vmem %s4, %s201
      %p203 = scmp.lt.s32.totalorder %s15, 1
      %s204 = scalar_select %p203, %s15, 1
      %s205 = smul.addr %s204, 10
      %s206 = smul.addr %s205, 4
      %s207 = scalar_lea.vmem %s0, %s206
      %p208 = scmp.lt.s32.totalorder %s15, 1
      %s209 = scalar_select %p208, %s15, 1
      %s210 = smul.addr %s209, 10
      %s211 = smul.addr %s210, 4
      %s212 = scalar_lea.vmem %s3, %s211
      %p213 = scmp.lt.s32.totalorder %s15, 1
      %s214 = scalar_select %p213, %s15, 1
      %s215 = smul.addr %s214, 10
      %s216 = smul.addr %s215, 8
      %s217 = scalar_lea.vmem %s4, %s216
      %v218 = vld [vmem:[%s207] sm:$0xf]
      %v219 = vld [vmem:[%s207 + $0x4] sm:$0xf]
      %v220 = vld [vmem:[%s207 + $0x8] sm:$0xf]
      %v221 = vld [vmem:[%s207 + $0xc] sm:$0xf]
      %v222 = vld [vmem:[%s207 + $0x10] sm:$0xf]
      %v223 = vld [vmem:[%s207 + $0x14] sm:$0xf]
      %v224 = vld [vmem:[%s207 + $0x18] sm:$0xf]
      %v225 = vld [vmem:[%s207 + $0x1c] sm:$0xf]
      %v226 = vld [vmem:[%s207 + $0x20] sm:$0xf]
      %v227 = vld [vmem:[%s207 + $0x24] sm:$0xf]
      %v228 = vunpack.c.l.bf16 %v218
      %v229 = vunpack.c.l.bf16 %v219
      %v230 = vunpack.c.l.bf16 %v220
      %v231 = vunpack.c.l.bf16 %v221
      %v232 = vunpack.c.l.bf16 %v222
      %v233 = vunpack.c.l.bf16 %v223
      %v234 = vunpack.c.l.bf16 %v224
      %v235 = vunpack.c.l.bf16 %v225
      %v236 = vunpack.c.l.bf16 %v226
      %v237 = vunpack.c.l.bf16 %v227
      %v238 = vld [vmem:[%s1] sm:$0x1]
      %v240 = vlaneseq
      %v241 = vshrl.u32 %v240, 7
      %v242 = vsub.s32 0, %v241
      %v243 = vrot.slane %v238, %v242
      %v245 = vmul.f32 %v228, %v243
      %v246 = vmul.f32 %v229, %v243
      %v247 = vmul.f32 %v230, %v243
      %v248 = vmul.f32 %v231, %v243
      %v249 = vmul.f32 %v232, %v243
      %v250 = vmul.f32 %v233, %v243
      %v251 = vmul.f32 %v234, %v243
      %v252 = vmul.f32 %v235, %v243
      %v253 = vmul.f32 %v236, %v243
      %v254 = vmul.f32 %v237, %v243
      %v255 = vld [vmem:[%s2] sm:$0x1]
      %v257 = vlaneseq
      %v258 = vshrl.u32 %v257, 7
      %v259 = vsub.s32 0, %v258
      %v260 = vrot.slane %v255, %v259
      %v262 = vadd.f32 %v245, %v260
      %v263 = vadd.f32 %v246, %v260
      %v264 = vadd.f32 %v247, %v260
      %v265 = vadd.f32 %v248, %v260
      %v266 = vadd.f32 %v249, %v260
      %v267 = vadd.f32 %v250, %v260
      %v268 = vadd.f32 %v251, %v260
      %v269 = vadd.f32 %v252, %v260
      %v270 = vadd.f32 %v253, %v260
      %v271 = vadd.f32 %v254, %v260
      %v272 = vld [vmem:[%s212] sm:$0xf]
      %v273 = vld [vmem:[%s212 + $0x4] sm:$0xf]
      %v274 = vld [vmem:[%s212 + $0x8] sm:$0xf]
      %v275 = vld [vmem:[%s212 + $0xc] sm:$0xf]
      %v276 = vld [vmem:[%s212 + $0x10] sm:$0xf]
      %v277 = vld [vmem:[%s212 + $0x14] sm:$0xf]
      %v278 = vld [vmem:[%s212 + $0x18] sm:$0xf]
      %v279 = vld [vmem:[%s212 + $0x1c] sm:$0xf]
      %v280 = vld [vmem:[%s212 + $0x20] sm:$0xf]
      %v281 = vld [vmem:[%s212 + $0x24] sm:$0xf]
      %v282 = vunpack.c.l.bf16 %v272
      %v283 = vunpack.c.l.bf16 %v273
      %v284 = vunpack.c.l.bf16 %v274
      %v285 = vunpack.c.l.bf16 %v275
      %v286 = vunpack.c.l.bf16 %v276
      %v287 = vunpack.c.l.bf16 %v277
      %v288 = vunpack.c.l.bf16 %v278
      %v289 = vunpack.c.l.bf16 %v279
      %v290 = vunpack.c.l.bf16 %v280
      %v291 = vunpack.c.l.bf16 %v281
      %v292 = vadd.f32 %v262, %v282
      %v293 = vadd.f32 %v263, %v283
      %v294 = vadd.f32 %v264, %v284
      %v295 = vadd.f32 %v265, %v285
      %v296 = vadd.f32 %v266, %v286
      %v297 = vadd.f32 %v267, %v287
      %v298 = vadd.f32 %v268, %v288
      %v299 = vadd.f32 %v269, %v289
      %v300 = vadd.f32 %v270, %v290
      %v301 = vadd.f32 %v271, %v291
      %v302 = vxor.u32 %v292, 2147483648
      %v303 = vxor.u32 %v293, 2147483648
      %v304 = vxor.u32 %v294, 2147483648
      %v305 = vxor.u32 %v295, 2147483648
      %v306 = vxor.u32 %v296, 2147483648
      %v307 = vxor.u32 %v297, 2147483648
      %v308 = vxor.u32 %v298, 2147483648
      %v309 = vxor.u32 %v299, 2147483648
      %v310 = vxor.u32 %v300, 2147483648
      %v311 = vxor.u32 %v301, 2147483648
      %v312 = vmul.f32 %v302, 1.442695
      %v313 = vpow.pop %v312
      %v314 = vmul.f32 %v303, 1.442695
      %v315 = vpow.pop %v314
      %v316 = vmul.f32 %v304, 1.442695
      %v317 = vpow.pop %v316
      %v318 = vmul.f32 %v305, 1.442695
      %v319 = vpow.pop %v318
      %v320 = vmul.f32 %v306, 1.442695
      %v321 = vpow.pop %v320
      %v322 = vmul.f32 %v307, 1.442695
      %v323 = vpow.pop %v322
      %v324 = vmul.f32 %v308, 1.442695
      %v325 = vpow.pop %v324
      %v326 = vmul.f32 %v309, 1.442695
      %v327 = vpow.pop %v326
      %v328 = vmul.f32 %v310, 1.442695
      %v329 = vpow.pop %v328
      %v330 = vmul.f32 %v311, 1.442695
      %v331 = vpow.pop %v330
      %v332 = vadd.f32 %v313, 1.0
      %v333 = vadd.f32 %v315, 1.0
      %v334 = vadd.f32 %v317, 1.0
      %v335 = vadd.f32 %v319, 1.0
      %v336 = vadd.f32 %v321, 1.0
      %v337 = vadd.f32 %v323, 1.0
      %v338 = vadd.f32 %v325, 1.0
      %v339 = vadd.f32 %v327, 1.0
      %v340 = vadd.f32 %v329, 1.0
      %v341 = vadd.f32 %v331, 1.0
      %v342 = vrcp.pop %v332
      %v343 = vmul.f32 1.0, %v342
      %v344 = vrcp.pop %v333
      %v345 = vmul.f32 1.0, %v344
      %v346 = vrcp.pop %v334
      %v347 = vmul.f32 1.0, %v346
      %v348 = vrcp.pop %v335
      %v349 = vmul.f32 1.0, %v348
      %v350 = vrcp.pop %v336
      %v351 = vmul.f32 1.0, %v350
      %v352 = vrcp.pop %v337
      %v353 = vmul.f32 1.0, %v352
      %v354 = vrcp.pop %v338
      %v355 = vmul.f32 1.0, %v354
      %v356 = vrcp.pop %v339
      %v357 = vmul.f32 1.0, %v356
      %v358 = vrcp.pop %v340
      %v359 = vmul.f32 1.0, %v358
      %v360 = vrcp.pop %v341
      %v361 = vmul.f32 1.0, %v360
      %v362 = vmul.f32 %v292, %v343
      %v363 = vmul.f32 %v293, %v345
      %v364 = vmul.f32 %v294, %v347
      %v365 = vmul.f32 %v295, %v349
      %v366 = vmul.f32 %v296, %v351
      %v367 = vmul.f32 %v297, %v353
      %v368 = vmul.f32 %v298, %v355
      %v369 = vmul.f32 %v299, %v357
      %v370 = vmul.f32 %v300, %v359
      %v371 = vmul.f32 %v301, %v361
      %372 = vst [vmem:[%s217] sm:$0xff] %v362
      %373 = vst [vmem:[%s217 + $0x8] sm:$0xff] %v363
      %374 = vst [vmem:[%s217 + $0x10] sm:$0xff] %v364
      %375 = vst [vmem:[%s217 + $0x18] sm:$0xff] %v365
      %376 = vst [vmem:[%s217 + $0x20] sm:$0xff] %v366
      %377 = vst [vmem:[%s217 + $0x28] sm:$0xff] %v367
      %378 = vst [vmem:[%s217 + $0x30] sm:$0xff] %v368
      %379 = vst [vmem:[%s217 + $0x38] sm:$0xff] %v369
      %380 = vst [vmem:[%s217 + $0x40] sm:$0xff] %v370
      %381 = vst [vmem:[%s217 + $0x48] sm:$0xff] %v371
      %p382 = scmp.lt.s32.totalorder %s15, 1
      %s383 = scalar_select %p382, %s15, 1
      %s384 = smul.addr %s383, 10
      %s385 = smul.addr %s384, 8
      %s386 = scalar_lea.vmem %s4, %s385
      // Predicated region
      $region37: #{basic_block_pallas.11} parent=35 // pred_check
        %p387 = pneg %p127
      $region38: #{basic_block_pallas.11} parent=35 // pred_check_branch
        %389 = sbr.rel (%p387) target = $region40
      $region39: #{basic_block_pallas.11} parent=35 // pred_region
        _
      $region40: #{basic_block_pallas.11} parent=35 // pred_fallthru
        _
    $region36: #{basic_block_pallas.11} parent=5 // pred_fallthru
      _
    %p390 = scmp.le.s32.totalorder 2, %s10
    // Predicated region
    $region41: #{basic_block_pallas.11} parent=5 // pred_check
      %p391 = pneg %p390
    $region42: #{basic_block_pallas.11} parent=5 // pred_check_branch
      %393 = sbr.rel (%p391) target = $region44
    $region43: #{basic_block_pallas.11} parent=5 // pred_region
      %s394 = ssub.s32 %s10, 2
      // Predicated region
      $region45: #{basic_block_pallas.11} parent=43 // pred_check
        %p395 = pneg %p133
      $region46: #{basic_block_pallas.11} parent=43 // pred_check_branch
        %397 = sbr.rel (%p395) target = $region48
      $region47: #{basic_block_pallas.11} parent=43 // pred_region
        %p398 = scmp.lt.s32.totalorder %s16, 1
        %s399 = scalar_select %p398, %s16, 1
        %s400 = smul.addr %s399, 10
        %s401 = smul.addr %s400, 8
        %s402 = scalar_lea.vmem %s4, %s401
      $region48: #{basic_block_pallas.11} parent=43 // pred_fallthru
        _
    $region44: #{basic_block_pallas.11} parent=5 // pred_fallthru
      _
  $region6: #{basic_block_pallas.11} parent=0 // loop_footer
    %s14 = sadd.s32 1, %s10
  $region7: #{basic_block_pallas.11} parent=0 // loop_footer_branch
    %9 = sbr.rel target = $region3
  $region8: #{basic_block_pallas.11} parent=0 // loop_exit
    _

// kernel: basic_block_pallas.10
$region0: #{basic_block_pallas.10}
  #allocation0 [shape = 'u32[]', space=smem, size = 0x4, offset = 0x4, fixed_abs, tag = 'smem constant byte address 0x4 - core index']
  #allocation1 [shape = 'u32[144,128]{1,0:T(1,128)}', space=vmem, size = 0x12000, scoped, tag = 'internal scratch']
  %s0 = inlined_call_operand.vmem [shape: bf16[1,2,110,128], index: 0, kind: input, shape index: {}]
  %s1 = inlined_call_operand.vmem [shape: bf16[1152,128], index: 1, kind: input, shape index: {}]
  %s2 = inlined_call_operand.vmem [shape: bf16[2,80,128], index: 2, kind: output, shape index: {0}]
  %s3 = inlined_call_operand.vmem [shape: f32[2,1,128], index: 3, kind: output, shape index: {1}]
  %s4 = inlined_call_operand.vmem [shape: f32[2,1,128], index: 4, kind: output, shape index: {2}]
  %5 = xla_tuple %s2, %s3, %s4
  %s6 = sld [smem:[#allocation0]]
  $region57: #{basic_block_pallas.10} parent=0
    _
  %s8 = ssub.s32 1, %s6
  %s9 = scalar_select 0, %s8, %s6
  loop: start=0, step=1, limit=4
  $region2: #{basic_block_pallas.10} parent=0 // loop_pre_header
    _
  $region3: #{basic_block_pallas.10} parent=0 // loop_header
    %s11 = sphi 0, %s15
    %p12 = scmp.ge.s32.totalorder %s11, 4
    %s21 = sphi 0, %s23
    %s24 = sphi 0, %s21
    %s25 = sphi 0, %s24
    %s41 = sphi 0, %s25
    %s45 = sphi 0, %s45
    %s47 = sphi 0, %s45
    %s48 = sphi 0, %s47
    %s62 = sphi 0, %s48
    %s68 = sphi 0, %s70
    %s71 = sphi 0, %s68
    %s72 = sphi 0, %s71
    %s88 = sphi 0, %s72
    %s94 = sphi 0, %s96
    %s97 = sphi 0, %s94
    %s98 = sphi 0, %s97
    %s114 = sphi 0, %s98
    %s120 = sphi 0, %s122
    %s123 = sphi 0, %s120
    %s124 = sphi 0, %s123
    %s140 = sphi 0, %s124
  $region4: #{basic_block_pallas.10} parent=0 // loop_header_branch
    %14 = sbr.rel (%p12) target = $region8
  $region5: #{basic_block_pallas.10} parent=0 // loop_body
    %s16 = ssub.s32 %s11, 1
    %s17 = ssub.s32 %s11, 2
    %s18 = sadd.s32 %s11, 1
    %s19 = ssub.s32 %s11, %s18
    %p20 = scmp.eq.s32.totalorder %s19, 0
    %s22 = sadd.s32 %s21, 1
    %s23 = scalar_select %p20, %s21, %s22
    %p26 = pneg %p20
    %p27 = scmp.eq.s32.totalorder %s11, 1
    %p28 = por %p26, %p27
    %p29 = scmp.ne.s32.totalorder %s21, %s24
    %p30 = scmp.eq.s32.totalorder %s11, 0
    %p31 = por %p29, %p30
    %p32 = scmp.ne.s32.totalorder %s21, %s24
    %p33 = scmp.eq.s32.totalorder %s16, 1
    %p34 = por %p32, %p33
    %p35 = scmp.ne.s32.totalorder %s24, %s25
    %p36 = scmp.eq.s32.totalorder %s16, 0
    %p37 = por %p35, %p36
    %p38 = scmp.ne.s32.totalorder %s24, %s25
    %p39 = scmp.eq.s32.totalorder %s17, 1
    %p40 = por %p38, %p39
    %p42 = scmp.ne.s32.totalorder %s25, %s41
    %p43 = scmp.eq.s32.totalorder %s17, 0
    %p44 = por %p42, %p43
    %s46 = sadd.s32 %s45, 1
    %p49 = scmp.eq.s32.totalorder %s11, 1
    %p50 = scmp.ne.s32.totalorder %s45, %s47
    %p51 = scmp.eq.s32.totalorder %s11, 0
    %p52 = por %p50, %p51
    %p53 = scmp.ne.s32.totalorder %s45, %s47
    %p54 = scmp.eq.s32.totalorder %s16, 1
    %p55 = por %p53, %p54
    %p56 = scmp.ne.s32.totalorder %s47, %s48
    %p57 = scmp.eq.s32.totalorder %s16, 0
    %p58 = por %p56, %p57
    %p59 = scmp.ne.s32.totalorder %s47, %s48
    %p60 = scmp.eq.s32.totalorder %s17, 1
    %p61 = por %p59, %p60
    %p63 = scmp.ne.s32.totalorder %s48, %s62
    %p64 = scmp.eq.s32.totalorder %s17, 0
    %p65 = por %p63, %p64
    %s66 = ssub.s32 %s11, %s18
    %p67 = scmp.eq.s32.totalorder %s66, 0
    %s69 = sadd.s32 %s68, 1
    %s70 = scalar_select %p67, %s68, %s69
    %p73 = pneg %p67
    %p74 = scmp.eq.s32.totalorder %s11, 1
    %p75 = por %p73, %p74
    %p76 = scmp.ne.s32.totalorder %s68, %s71
    %p77 = scmp.eq.s32.totalorder %s11, 0
    %p78 = por %p76, %p77
    %p79 = scmp.ne.s32.totalorder %s68, %s71
    %p80 = scmp.eq.s32.totalorder %s16, 1
    %p81 = por %p79, %p80
    %p82 = scmp.ne.s32.totalorder %s71, %s72
    %p83 = scmp.eq.s32.totalorder %s16, 0
    %p84 = por %p82, %p83
    %p85 = scmp.ne.s32.totalorder %s71, %s72
    %p86 = scmp.eq.s32.totalorder %s17, 1
    %p87 = por %p85, %p86
    %p89 = scmp.ne.s32.totalorder %s72, %s88
    %p90 = scmp.eq.s32.totalorder %s17, 0
    %p91 = por %p89, %p90
    %s92 = ssub.s32 %s11, %s18
    %p93 = scmp.eq.s32.totalorder %s92, 0
    %s95 = sadd.s32 %s94, 1
    %s96 = scalar_select %p93, %s94, %s95
    %p99 = pneg %p93
    %p100 = scmp.eq.s32.totalorder %s11, 1
    %p101 = por %p99, %p100
    %p102 = scmp.ne.s32.totalorder %s94, %s97
    %p103 = scmp.eq.s32.totalorder %s11, 0
    %p104 = por %p102, %p103
    %p105 = scmp.ne.s32.totalorder %s94, %s97
    %p106 = scmp.eq.s32.totalorder %s16, 1
    %p107 = por %p105, %p106
    %p108 = scmp.ne.s32.totalorder %s97, %s98
    %p109 = scmp.eq.s32.totalorder %s16, 0
    %p110 = por %p108, %p109
    %p111 = scmp.ne.s32.totalorder %s97, %s98
    %p112 = scmp.eq.s32.totalorder %s17, 1
    %p113 = por %p111, %p112
    %p115 = scmp.ne.s32.totalorder %s98, %s114
    %p116 = scmp.eq.s32.totalorder %s17, 0
    %p117 = por %p115, %p116
    %s118 = ssub.s32 %s11, %s18
    %p119 = scmp.eq.s32.totalorder %s118, 0
    %s121 = sadd.s32 %s120, 1
    %s122 = scalar_select %p119, %s120, %s121
    %p125 = pneg %p119
    %p126 = scmp.eq.s32.totalorder %s11, 1
    %p127 = por %p125, %p126
    %p128 = scmp.ne.s32.totalorder %s120, %s123
    %p129 = scmp.eq.s32.totalorder %s11, 0
    %p130 = por %p128, %p129
    %p131 = scmp.ne.s32.totalorder %s120, %s123
    %p132 = scmp.eq.s32.totalorder %s16, 1
    %p133 = por %p131, %p132
    %p134 = scmp.ne.s32.totalorder %s123, %s124
    %p135 = scmp.eq.s32.totalorder %s16, 0
    %p136 = por %p134, %p135
    %p137 = scmp.ne.s32.totalorder %s123, %s124
    %p138 = scmp.eq.s32.totalorder %s17, 1
    %p139 = por %p137, %p138
    %p141 = scmp.ne.s32.totalorder %s124, %s140
    %p142 = scmp.eq.s32.totalorder %s17, 0
    %p143 = por %p141, %p142
    %p144 = scmp.le.s32.totalorder 1, %s11
    %p145 = scmp.lt.s32.totalorder %s11, 3
    %p146 = pnand %p144, %p145
    %p147 = pneg %p146
    // Predicated region
    $region9: #{basic_block_pallas.10} parent=5 // pred_check
      _
    $region10: #{basic_block_pallas.10} parent=5 // pred_check_branch
      %149 = sbr.rel (%p146) target = $region12
    $region11: #{basic_block_pallas.10} parent=5 // pred_region
      %s150 = ssub.s32 %s11, 1
      // Predicated region
      $region13: #{basic_block_pallas.10} parent=11 // pred_check
        %p151 = pneg %p58
      $region14: #{basic_block_pallas.10} parent=11 // pred_check_branch
        %153 = sbr.rel (%p151) target = $region16
      $region15: #{basic_block_pallas.10} parent=11 // pred_region
        _
      $region16: #{basic_block_pallas.10} parent=11 // pred_fallthru
        _
    $region12: #{basic_block_pallas.10} parent=5 // pred_fallthru
      _
    %p154 = scmp.lt.s32.totalorder %s11, 2
    // Predicated region
    $region17: #{basic_block_pallas.10} parent=5 // pred_check
      %p155 = pneg %p154
    $region18: #{basic_block_pallas.10} parent=5 // pred_check_branch
      %157 = sbr.rel (%p155) target = $region20
    $region19: #{basic_block_pallas.10} parent=5 // pred_region
      // Predicated region
      $region21: #{basic_block_pallas.10} parent=19 // pred_check
        %p158 = pneg %p31
      $region22: #{basic_block_pallas.10} parent=19 // pred_check_branch
        %160 = sbr.rel (%p158) target = $region24
      $region23: #{basic_block_pallas.10} parent=19 // pred_region
        %p161 = scmp.lt.s32.totalorder %s11, 1
        %s162 = scalar_select %p161, %s11, 1
        %s163 = smul.addr %s162, 14
        %s164 = smul.addr %s163, 4
        %s165 = scalar_lea.vmem %s0, %s164
      $region24: #{basic_block_pallas.10} parent=19 // pred_fallthru
        _
    $region20: #{basic_block_pallas.10} parent=5 // pred_fallthru
      _
    %p166 = scmp.le.s32.totalorder 1, %s11
    %p167 = scmp.lt.s32.totalorder %s11, 3
    %p168 = pnand %p166, %p167
    %p169 = pneg %p168
    // Predicated region
    $region25: #{basic_block_pallas.10} parent=5 // pred_check
      _
    $region26: #{basic_block_pallas.10} parent=5 // pred_check_branch
      %171 = sbr.rel (%p168) target = $region28
    $region27: #{basic_block_pallas.10} parent=5 // pred_region
      %s172 = ssub.s32 %s11, 1
      %p173 = scmp.lt.s32.totalorder %s16, 1
      %s174 = scalar_select %p173, %s16, 1
      %s175 = smul.addr %s174, 14
      %s176 = smul.addr %s175, 4
      %s177 = scalar_lea.vmem %s0, %s176
      %p178 = pneg %p37
      %p179 = pneg %p34
      %p180 = pneg %p58
      %p181 = pneg %p55
      %p182 = pneg %p84
      %p183 = pneg %p81
      %p184 = scmp.lt.s32.totalorder %s16, 1
      %s185 = scalar_select %p184, %s16, 1
      %s186 = smul.addr %s185, 10
      %s187 = smul.addr %s186, 4
      %s188 = scalar_lea.vmem %s2, %s187
      %p189 = pneg %p110
      %p190 = pneg %p107
      %p191 = scmp.lt.s32.totalorder %s16, 1
      %s192 = scalar_select %p191, %s16, 1
      %s193 = scalar_lea.vmem %s3, %s192
      %p194 = pneg %p136
      %p195 = pneg %p133
      %p196 = scmp.lt.s32.totalorder %s16, 1
      %s197 = scalar_select %p196, %s16, 1
      %s198 = scalar_lea.vmem %s4, %s197
      %p199 = scmp.lt.s32.totalorder %s16, 1
      %s200 = scalar_select %p199, %s16, 1
      %s201 = smul.addr %s200, 14
      %s202 = smul.addr %s201, 4
      %s203 = scalar_lea.vmem %s0, %s202
      %p204 = scmp.lt.s32.totalorder %s16, 1
      %s205 = scalar_select %p204, %s16, 1
      %s206 = smul.addr %s205, 10
      %s207 = smul.addr %s206, 4
      %s208 = scalar_lea.vmem %s2, %s207
      %p209 = scmp.lt.s32.totalorder %s16, 1
      %s210 = scalar_select %p209, %s16, 1
      %s211 = scalar_lea.vmem %s3, %s210
      %p212 = scmp.lt.s32.totalorder %s16, 1
      %s213 = scalar_select %p212, %s16, 1
      %s214 = scalar_lea.vmem %s4, %s213
      %v216 = vld [vmem:[%s203] sm:$0xf]
      %v217 = vld [vmem:[%s203 + $0x4] sm:$0xf]
      %v218 = vld [vmem:[%s203 + $0x8] sm:$0xf]
      %v219 = vld [vmem:[%s203 + $0xc] sm:$0xf]
      %v220 = vld [vmem:[%s203 + $0x10] sm:$0xf]
      %v221 = vld [vmem:[%s203 + $0x14] sm:$0xf]
      %v222 = vld [vmem:[%s203 + $0x18] sm:$0xf]
      %v223 = vld [vmem:[%s203 + $0x1c] sm:$0xf]
      %v224 = vld [vmem:[%s203 + $0x20] sm:$0xf]
      %v225 = vld [vmem:[%s203 + $0x24] sm:$0xf]
      %v226 = vld [vmem:[%s1] sm:$0xf]
      %v227 = vld [vmem:[%s1 + $0x4] sm:$0xf]
      %v228 = vld [vmem:[%s1 + $0x8] sm:$0xf]
      %v229 = vld [vmem:[%s1 + $0xc] sm:$0xf]
      %v230 = vld [vmem:[%s1 + $0x10] sm:$0xf]
      %v231 = vld [vmem:[%s1 + $0x14] sm:$0xf]
      %v232 = vld [vmem:[%s1 + $0x18] sm:$0xf]
      %v233 = vld [vmem:[%s1 + $0x1c] sm:$0xf]
      %v234 = vld [vmem:[%s1 + $0x20] sm:$0xf]
      %v235 = vld [vmem:[%s1 + $0x24] sm:$0xf]
      %v236 = vld [vmem:[%s1 + $0x28] sm:$0xf]
      %v237 = vld [vmem:[%s1 + $0x2c] sm:$0xf]
      %v238 = vld [vmem:[%s1 + $0x30] sm:$0xf]
      %v239 = vld [vmem:[%s1 + $0x34] sm:$0xf]
      %v240 = vld [vmem:[%s1 + $0x38] sm:$0xf]
      %v241 = vld [vmem:[%s1 + $0x3c] sm:$0xf]
      %v242 = vld [vmem:[%s203 + $0x28] sm:$0x1]
      %v243 = vld [vmem:[%s1 + $0x40] sm:$0xf]
      %v244 = vld [vmem:[%s1 + $0x44] sm:$0xf]
      %v245 = vld [vmem:[%s1 + $0x48] sm:$0xf]
      %v246 = vld [vmem:[%s1 + $0x4c] sm:$0xf]
      %v247 = vld [vmem:[%s1 + $0x50] sm:$0xf]
      %v248 = vld [vmem:[%s1 + $0x54] sm:$0xf]
      %v249 = vld [vmem:[%s1 + $0x58] sm:$0xf]
      %v250 = vld [vmem:[%s1 + $0x5c] sm:$0xf]
      %v251 = vld [vmem:[%s1 + $0x60] sm:$0xf]
      %v252 = vld [vmem:[%s1 + $0x64] sm:$0xf]
      %v253 = vld [vmem:[%s1 + $0x68] sm:$0xf]
      %v254 = vld [vmem:[%s1 + $0x6c] sm:$0xf]
      %v255 = vld [vmem:[%s1 + $0x70] sm:$0xf]
      %v256 = vld [vmem:[%s1 + $0x74] sm:$0xf]
      %v257 = vld [vmem:[%s1 + $0x78] sm:$0xf]
      %v258 = vld [vmem:[%s1 + $0x7c] sm:$0xf]
      %v270 = vunpack.c.l.b16 %v216
      %v271 = vunpack.c.l.b16 %v217
      %v272 = vunpack.c.l.b16 %v218
      %v273 = vunpack.c.l.b16 %v219
      %v274 = vunpack.c.l.b16 %v220
      %v275 = vunpack.c.l.b16 %v221
      %v276 = vunpack.c.l.b16 %v222
      %v277 = vunpack.c.l.b16 %v223
      %v278 = vunpack.c.l.b16 %v224
      %v279 = vunpack.c.l.b16 %v225
      %v280 = vunpack.c.l.b16 %v242
      %v281 = vpack.c.b16 %v271, %v270
      %v282 = vpack.c.b16 %v273, %v272
      %v283 = vpack.c.b16 %v275, %v274
      %v284 = vpack.c.b16 %v277, %v276
      %v285 = vpack.c.b16 %v279, %v278
      %v286 = vpack.c.b16 %v280, %v280
      %vm287 = vsmask.f32 7424
      %v289 = vshrl.u32 %v281, 16
      %v291 = vshll.u32 %v281, 16
      %v293 = vrot.slane %v291, 1
      %v294 = vor.u32 %v289, %v293
      %v296 = vshll.u32 %v282, 16
      %v298 = vrot.slane %v296, 1
      %v299 = vsel %vm287, %v294, %v298
      %v300 = vshrl.u32 %v282, 16
      %v302 = vor.u32 %v300, %v298
      %v304 = vshll.u32 %v283, 16
      %v306 = vrot.slane %v304, 1
      %v307 = vsel %vm287, %v302, %v306
      %v308 = vshrl.u32 %v283, 16
      %v310 = vor.u32 %v308, %v306
      %v312 = vshll.u32 %v284, 16
      %v314 = vrot.slane %v312, 1
      %v315 = vsel %vm287, %v310, %v314
      %v316 = vshrl.u32 %v284, 16
      %v318 = vor.u32 %v316, %v314
      %v320 = vshll.u32 %v285, 16
      %v322 = vrot.slane %v320, 1
      %v323 = vsel %vm287, %v318, %v322
      %v324 = vshrl.u32 %v285, 16
      %v326 = vor.u32 %v324, %v322
      %v328 = vshll.u32 %v286, 16
      %v330 = vrot.slane %v328, 1
      %v331 = vsel %vm287, %v326, %v330
      %v353 = vunpack.c.l.b16 %v243
      %v354 = vunpack.c.l.b16 %v244
      %v355 = vunpack.c.l.b16 %v245
      %v356 = vunpack.c.l.b16 %v246
      %v357 = vunpack.c.l.b16 %v247
      %v358 = vunpack.c.l.b16 %v248
      %v359 = vunpack.c.l.b16 %v249
      %v360 = vunpack.c.l.b16 %v250
      %v361 = vunpack.c.l.b16 %v251
      %v362 = vunpack.c.l.b16 %v252
      %v363 = vunpack.c.l.b16 %v253
      %v364 = vunpack.c.l.b16 %v254
      %v365 = vunpack.c.l.b16 %v255
      %v366 = vunpack.c.l.b16 %v256
      %v367 = vunpack.c.l.b16 %v257
      %v368 = vunpack.c.l.b16 %v258
      %v369 = vpack.c.b16 %v354, %v353
      %v370 = vpack.c.b16 %v356, %v355
      %v371 = vpack.c.b16 %v358, %v357
      %v372 = vpack.c.b16 %v360, %v359
      %v373 = vpack.c.b16 %v362, %v361
      %v374 = vpack.c.b16 %v364, %v363
      %v375 = vpack.c.b16 %v366, %v365
      %v376 = vpack.c.b16 %v368, %v367
      %385 = vmatprep.subr.bf16.mxu0 0
      %386 = vmatpush1.bf16.msra.mxu0 %v369
      %387 = vmatprep.subr.bf16.mxu0 0
      %388 = vmatpush1.bf16.msra.mxu0 %v370
      %389 = vmatprep.subr.bf16.mxu0 0
      %390 = vmatpush1.bf16.msra.mxu0 %v371
      %391 = vmatprep.subr.bf16.mxu0 0
      %392 = vmatpush1.bf16.msra.mxu0 %v372
      %393 = vmatprep.subr.bf16.mxu0 0
      %394 = vmatpush1.bf16.msra.mxu0 %v373
      %395 = vmatprep.subr.bf16.mxu0 0
      %396 = vmatpush1.bf16.msra.mxu0 %v374
      %397 = vmatprep.subr.bf16.mxu0 0
      %398 = vmatpush1.bf16.msra.mxu0 %v375
      %399 = vmatprep.subr.bf16.mxu0 0
      %400 = vmatpush1.bf16.msra.mxu0 %v376
      %401 = vmatprep.subr.bf16.mxu0 0
      %402 = vmatpush1.bf16.msra.mxu0 0
      %403 = vmatprep.subr.bf16.mxu0 0
      %404 = vmatpush1.bf16.msra.mxu0 0
      %405 = vmatprep.subr.bf16.mxu0 0
      %406 = vmatpush1.bf16.msra.mxu0 0
      %407 = vmatprep.subr.bf16.mxu0 0
      %408 = vmatpush1.bf16.msra.mxu0 0
      %409 = vmatprep.subr.bf16.mxu0 0
      %410 = vmatpush1.bf16.msra.mxu0 0
      %411 = vmatprep.subr.bf16.mxu0 0
      %412 = vmatpush1.bf16.msra.mxu0 0
      %413 = vmatprep.subr.bf16.mxu0 0
      %414 = vmatpush1.bf16.msra.mxu0 0
      %415 = vmatprep.subr.bf16.mxu0 0
      %416 = vmatpush1.bf16.msra.mxu0 0
      %417 = vmatprep.mubr.bf16.mxu0 0
      %418 = vmatmul.mubr.bf16.gmra.mrb[0].mxu0 %v299
      %v419 = vpop.f32.mrb[0].mxu0
      %v420 = vadd.f32 0.0, %v419
      %v421 = vpop.f32.mrb[0].mxu0
      %v422 = vpop.f32.mrb[0].mxu0
      %v423 = vadd.f32 0.0, %v422
      %v424 = vpop.f32.mrb[0].mxu0
      %425 = vmatprep.mubr.bf16.mxu0 0
      %426 = vmatmul.mubr.bf16.gmra.mrb[0].mxu0 %v307
      %v427 = vpop.f32.mrb[0].mxu0
      %v428 = vadd.f32 0.0, %v427
      %v429 = vpop.f32.mrb[0].mxu0
      %v430 = vpop.f32.mrb[0].mxu0
      %v431 = vadd.f32 0.0, %v430
      %v432 = vpop.f32.mrb[0].mxu0
      %433 = vmatprep.mubr.bf16.mxu0 0
      %434 = vmatmul.mubr.bf16.gmra.mrb[0].mxu0 %v315
      %v435 = vpop.f32.mrb[0].mxu0
      %v436 = vadd.f32 0.0, %v435
      %v437 = vpop.f32.mrb[0].mxu0
      %v438 = vpop.f32.mrb[0].mxu0
      %v439 = vadd.f32 0.0, %v438
      %v440 = vpop.f32.mrb[0].mxu0
      %441 = vmatprep.mubr.bf16.mxu0 0
      %442 = vmatmul.mubr.bf16.gmra.mrb[0].mxu0 %v323
      %v443 = vpop.f32.mrb[0].mxu0
      %v444 = vadd.f32 0.0, %v443
      %v445 = vpop.f32.mrb[0].mxu0
      %v446 = vpop.f32.mrb[0].mxu0
      %v447 = vadd.f32 0.0, %v446
      %v448 = vpop.f32.mrb[0].mxu0
      %449 = vmatprep.mubr.bf16.mxu0 0
      %450 = vmatmul.mubr.bf16.gmra.mrb[0].mxu0 %v331
      %v451 = vpop.f32.mrb[0].mxu0
      %v452 = vadd.f32 0.0, %v451
      %v453 = vpop.f32.mrb[0].mxu0
      %v454 = vpop.f32.mrb[0].mxu0
      %v455 = vadd.f32 0.0, %v454
      %v456 = vpop.f32.mrb[0].mxu0
      %457 = vdwg.mxu0
      %v479 = vunpack.c.l.b16 %v226
      %v480 = vunpack.c.l.b16 %v227
      %v481 = vunpack.c.l.b16 %v228
      %v482 = vunpack.c.l.b16 %v229
      %v483 = vunpack.c.l.b16 %v230
      %v484 = vunpack.c.l.b16 %v231
      %v485 = vunpack.c.l.b16 %v232
      %v486 = vunpack.c.l.b16 %v233
      %v487 = vunpack.c.l.b16 %v234
      %v488 = vunpack.c.l.b16 %v235
      %v489 = vunpack.c.l.b16 %v236
      %v490 = vunpack.c.l.b16 %v237
      %v491 = vunpack.c.l.b16 %v238
      %v492 = vunpack.c.l.b16 %v239
      %v493 = vunpack.c.l.b16 %v240
      %v494 = vunpack.c.l.b16 %v241
      %v495 = vpack.c.b16 %v480, %v479
      %v496 = vpack.c.b16 %v482, %v481
      %v497 = vpack.c.b16 %v484, %v483
      %v498 = vpack.c.b16 %v486, %v485
      %v499 = vpack.c.b16 %v488, %v487
      %v500 = vpack.c.b16 %v490, %v489
      %v501 = vpack.c.b16 %v492, %v491
      %v502 = vpack.c.b16 %v494, %v493
      %511 = vmatprep.subr.bf16.mxu0 0
      %512 = vmatpush1.bf16.msra.mxu0 %v495
      %513 = vmatprep.subr.bf16.mxu0 0
      %514 = vmatpush1.bf16.msra.mxu0 %v496
      %515 = vmatprep.subr.bf16.mxu0 0
      %516 = vmatpush1.bf16.msra.mxu0 %v497
      %517 = vmatprep.subr.bf16.mxu0 0
      %518 = vmatpush1.bf16.msra.mxu0 %v498
      %519 = vmatprep.subr.bf16.mxu0 0
      %520 = vmatpush1.bf16.msra.mxu0 %v499
      %521 = vmatprep.subr.bf16.mxu0 0
      %522 = vmatpush1.bf16.msra.mxu0 %v500
      %523 = vmatprep.subr.bf16.mxu0 0
      %524 = vmatpush1.bf16.msra.mxu0 %v501
      %525 = vmatprep.subr.bf16.mxu0 0
      %526 = vmatpush1.bf16.msra.mxu0 %v502
      %527 = vmatprep.subr.bf16.mxu0 0
      %528 = vmatpush1.bf16.msra.mxu0 0
      %529 = vmatprep.subr.bf16.mxu0 0
      %530 = vmatpush1.bf16.msra.mxu0 0
      %531 = vmatprep.subr.bf16.mxu0 0
      %532 = vmatpush1.bf16.msra.mxu0 0
      %533 = vmatprep.subr.bf16.mxu0 0
      %534 = vmatpush1.bf16.msra.mxu0 0
      %535 = vmatprep.subr.bf16.mxu0 0
      %536 = vmatpush1.bf16.msra.mxu0 0
      %537 = vmatprep.subr.bf16.mxu0 0
      %538 = vmatpush1.bf16.msra.mxu0 0
      %539 = vmatprep.subr.bf16.mxu0 0
      %540 = vmatpush1.bf16.msra.mxu0 0
      %541 = vmatprep.subr.bf16.mxu0 0
      %542 = vmatpush1.bf16.msra.mxu0 0
      %543 = vmatprep.mubr.bf16.mxu0 0
      %544 = vmatmul.mubr.bf16.gmra.mrb[0].mxu0 %v281
      %v545 = vpop.f32.mrb[0].mxu0
      %v546 = vadd.f32 %v420, %v545
      %v547 = vpop.f32.mrb[0].mxu0
      %v548 = vpop.f32.mrb[0].mxu0
      %v549 = vadd.f32 %v423, %v548
      %v550 = vpop.f32.mrb[0].mxu0
      %551 = vmatprep.mubr.bf16.mxu0 0
      %552 = vmatmul.mubr.bf16.gmra.mrb[0].mxu0 %v282
      %v553 = vpop.f32.mrb[0].mxu0
      %v554 = vadd.f32 %v428, %v553
      %v555 = vpop.f32.mrb[0].mxu0
      %v556 = vpop.f32.mrb[0].mxu0
      %v557 = vadd.f32 %v431, %v556
      %v558 = vpop.f32.mrb[0].mxu0
      %559 = vmatprep.mubr.bf16.mxu0 0
      %560 = vmatmul.mubr.bf16.gmra.mrb[0].mxu0 %v283
      %v561 = vpop.f32.mrb[0].mxu0
      %v562 = vadd.f32 %v436, %v561
      %v563 = vpop.f32.mrb[0].mxu0
      %v564 = vpop.f32.mrb[0].mxu0
      %v565 = vadd.f32 %v439, %v564
      %v566 = vpop.f32.mrb[0].mxu0
      %567 = vmatprep.mubr.bf16.mxu0 0
      %568 = vmatmul.mubr.bf16.gmra.mrb[0].mxu0 %v284
      %v569 = vpop.f32.mrb[0].mxu0
      %v570 = vadd.f32 %v444, %v569
      %v571 = vpop.f32.mrb[0].mxu0
      %v572 = vpop.f32.mrb[0].mxu0
      %v573 = vadd.f32 %v447, %v572
      %v574 = vpop.f32.mrb[0].mxu0
      %575 = vmatprep.mubr.bf16.mxu0 0
      %576 = vmatmul.mubr.bf16.gmra.mrb[0].mxu0 %v285
      %v577 = vpop.f32.mrb[0].mxu0
      %v578 = vadd.f32 %v452, %v577
      %v579 = vpop.f32.mrb[0].mxu0
      %v580 = vpop.f32.mrb[0].mxu0
      %v581 = vadd.f32 %v455, %v580
      %v582 = vpop.f32.mrb[0].mxu0
      %583 = vdwg.mxu0
      %v584 = vld [vmem:[%s203] sm:$0xe]
      %v585 = vld [vmem:[%s1 + $0x80] sm:$0xf]
      %v586 = vld [vmem:[%s1 + $0x84] sm:$0xf]
      %v587 = vld [vmem:[%s1 + $0x88] sm:$0xf]
      %v588 = vld [vmem:[%s1 + $0x8c] sm:$0xf]
      %v589 = vld [vmem:[%s1 + $0x90] sm:$0xf]
      %v590 = vld [vmem:[%s1 + $0x94] sm:$0xf]
      %v591 = vld [vmem:[%s1 + $0x98] sm:$0xf]
      %v592 = vld [vmem:[%s1 + $0x9c] sm:$0xf]
      %v593 = vld [vmem:[%s1 + $0xa0] sm:$0xf]
      %v594 = vld [vmem:[%s1 + $0xa4] sm:$0xf]
      %v595 = vld [vmem:[%s1 + $0xa8] sm:$0xf]
      %v596 = vld [vmem:[%s1 + $0xac] sm:$0xf]
      %v597 = vld [vmem:[%s1 + $0xb0] sm:$0xf]
      %v598 = vld [vmem:[%s1 + $0xb4] sm:$0xf]
      %v599 = vld [vmem:[%s1 + $0xb8] sm:$0xf]
      %v600 = vld [vmem:[%s1 + $0xbc] sm:$0xf]
      %v602 = vunpack.c.l.b16 %v584
      %v603 = vpack.c.b16 %v271, %v602
      %vm604 = vcmask 1046528
      %v605 = vrot.slane %v603, 1
      %v606 = vrot.slane %v282, 1
      %v607 = vsel %vm604, %v605, %v606
      %v608 = vrot.slane %v283, 1
      %v609 = vsel %vm604, %v606, %v608
      %v610 = vrot.slane %v284, 1
      %v611 = vsel %vm604, %v608, %v610
      %v612 = vrot.slane %v285, 1
      %v613 = vsel %vm604, %v610, %v612
      %v614 = vrot.slane %v286, 1
      %v615 = vsel %vm604, %v612, %v614
      %v637 = vunpack.c.l.b16 %v585
      %v638 = vunpack.c.l.b16 %v586
      %v639 = vunpack.c.l.b16 %v587
      %v640 = vunpack.c.l.b16 %v588
      %v641 = vunpack.c.l.b16 %v589
      %v642 = vunpack.c.l.b16 %v590
      %v643 = vunpack.c.l.b16 %v591
      %v644 = vunpack.c.l.b16 %v592
      %v645 = vunpack.c.l.b16 %v593
      %v646 = vunpack.c.l.b16 %v594
      %v647 = vunpack.c.l.b16 %v595
      %v648 = vunpack.c.l.b16 %v596
      %v649 = vunpack.c.l.b16 %v597
      %v650 = vunpack.c.l.b16 %v598
      %v651 = vunpack.c.l.b16 %v599
      %v652 = vunpack.c.l.b16 %v600
      %v653 = vpack.c.b16 %v638, %v637
      %v654 = vpack.c.b16 %v640, %v639
      %v655 = vpack.c.b16 %v642, %v641
      %v656 = vpack.c.b16 %v644, %v643
      %v657 = vpack.c.b16 %v646, %v645
      %v658 = vpack.c.b16 %v648, %v647
      %v659 = vpack.c.b16 %v650, %v649
      %v660 = vpack.c.b16 %v652, %v651
      %669 = vmatprep.subr.bf16.mxu0 0
      %670 = vmatpush1.bf16.msra.mxu0 %v653
      %671 = vmatprep.subr.bf16.mxu0 0
      %672 = vmatpush1.bf16.msra.mxu0 %v654
      %673 = vmatprep.subr.bf16.mxu0 0
      %674 = vmatpush1.bf16.msra.mxu0 %v655
      %675 = vmatprep.subr.bf16.mxu0 0
      %676 = vmatpush1.bf16.msra.mxu0 %v656
      %677 = vmatprep.subr.bf16.mxu0 0
      %678 = vmatpush1.bf16.msra.mxu0 %v657
      %679 = vmatprep.subr.bf16.mxu0 0
      %680 = vmatpush1.bf16.msra.mxu0 %v658
      %681 = vmatprep.subr.bf16.mxu0 0
      %682 = vmatpush1.bf16.msra.mxu0 %v659
      %683 = vmatprep.subr.bf16.mxu0 0
      %684 = vmatpush1.bf16.msra.mxu0 %v660
      %685 = vmatprep.subr.bf16.mxu0 0
      %686 = vmatpush1.bf16.msra.mxu0 0
      %687 = vmatprep.subr.bf16.mxu0 0
      %688 = vmatpush1.bf16.msra.mxu0 0
      %689 = vmatprep.subr.bf16.mxu0 0
      %690 = vmatpush1.bf16.msra.mxu0 0
      %691 = vmatprep.subr.bf16.mxu0 0
      %692 = vmatpush1.bf16.msra.mxu0 0
      %693 = vmatprep.subr.bf16.mxu0 0
      %694 = vmatpush1.bf16.msra.mxu0 0
      %695 = vmatprep.subr.bf16.mxu0 0
      %696 = vmatpush1.bf16.msra.mxu0 0
      %697 = vmatprep.subr.bf16.mxu0 0
      %698 = vmatpush1.bf16.msra.mxu0 0
      %699 = vmatprep.subr.bf16.mxu0 0
      %700 = vmatpush1.bf16.msra.mxu0 0
      %701 = vmatprep.mubr.bf16.mxu0 0
      %702 = vmatmul.mubr.bf16.gmra.mrb[0].mxu0 %v607
      %v703 = vpop.f32.mrb[0].mxu0
      %v704 = vadd.f32 0.0, %v703
      %v705 = vpop.f32.mrb[0].mxu0
      %v706 = vpop.f32.mrb[0].mxu0
      %v707 = vadd.f32 0.0, %v706
      %v708 = vpop.f32.mrb[0].mxu0
      %709 = vmatprep.mubr.bf16.mxu0 0
      %710 = vmatmul.mubr.bf16.gmra.mrb[0].mxu0 %v609
      %v711 = vpop.f32.mrb[0].mxu0
      %v712 = vadd.f32 0.0, %v711
      %v713 = vpop.f32.mrb[0].mxu0
      %v714 = vpop.f32.mrb[0].mxu0
      %v715 = vadd.f32 0.0, %v714
      %v716 = vpop.f32.mrb[0].mxu0
      %717 = vmatprep.mubr.bf16.mxu0 0
      %718 = vmatmul.mubr.bf16.gmra.mrb[0].mxu0 %v611
      %v719 = vpop.f32.mrb[0].mxu0
      %v720 = vadd.f32 0.0, %v719
      %v721 = vpop.f32.mrb[0].mxu0
      %v722 = vpop.f32.mrb[0].mxu0
      %v723 = vadd.f32 0.0, %v722
      %v724 = vpop.f32.mrb[0].mxu0
      %725 = vmatprep.mubr.bf16.mxu0 0
      %726 = vmatmul.mubr.bf16.gmra.mrb[0].mxu0 %v613
      %v727 = vpop.f32.mrb[0].mxu0
      %v728 = vadd.f32 0.0, %v727
      %v729 = vpop.f32.mrb[0].mxu0
      %v730 = vpop.f32.mrb[0].mxu0
      %v731 = vadd.f32 0.0, %v730
      %v732 = vpop.f32.mrb[0].mxu0
      %733 = vmatprep.mubr.bf16.mxu0 0
      %734 = vmatmul.mubr.bf16.gmra.mrb[0].mxu0 %v615
      %v735 = vpop.f32.mrb[0].mxu0
      %v736 = vadd.f32 0.0, %v735
      %v737 = vpop.f32.mrb[0].mxu0
      %v738 = vpop.f32.mrb[0].mxu0
      %v739 = vadd.f32 0.0, %v738
      %v740 = vpop.f32.mrb[0].mxu0
      %741 = vdwg.mxu0
      %v742 = vadd.f32 %v546, %v704
      %v743 = vadd.f32 %v549, %v707
      %v744 = vadd.f32 %v554, %v712
      %v745 = vadd.f32 %v557, %v715
      %v746 = vadd.f32 %v562, %v720
      %v747 = vadd.f32 %v565, %v723
      %v748 = vadd.f32 %v570, %v728
      %v749 = vadd.f32 %v573, %v731
      %v750 = vadd.f32 %v578, %v736
      %v751 = vadd.f32 %v581, %v739
      %v752 = vld [vmem:[%s203 + $0x4] sm:$0xe]
      %v753 = vld [vmem:[%s203 + $0x8] sm:$0xf]
      %v754 = vld [vmem:[%s203 + $0xc] sm:$0xf]
      %v755 = vld [vmem:[%s203 + $0x10] sm:$0xf]
      %v756 = vld [vmem:[%s203 + $0x14] sm:$0xf]
      %v757 = vld [vmem:[%s203 + $0x18] sm:$0xf]
      %v758 = vld [vmem:[%s203 + $0x1c] sm:$0xf]
      %v759 = vld [vmem:[%s203 + $0x20] sm:$0xf]
      %v760 = vld [vmem:[%s203 + $0x24] sm:$0xf]
      %v761 = vld [vmem:[%s203 + $0x28] sm:$0xf]
      %v762 = vld [vmem:[%s203 + $0x2c] sm:$0x1]
      %v763 = vld [vmem:[%s1 + $0xc0] sm:$0xf]
      %v764 = vld [vmem:[%s1 + $0xc4] sm:$0xf]
      %v765 = vld [vmem:[%s1 + $0xc8] sm:$0xf]
      %v766 = vld [vmem:[%s1 + $0xcc] sm:$0xf]
      %v767 = vld [vmem:[%s1 + $0xd0] sm:$0xf]
      %v768 = vld [vmem:[%s1 + $0xd4] sm:$0xf]
      %v769 = vld [vmem:[%s1 + $0xd8] sm:$0xf]
      %v770 = vld [vmem:[%s1 + $0xdc] sm:$0xf]
      %v771 = vld [vmem:[%s1 + $0xe0] sm:$0xf]
      %v772 = vld [vmem:[%s1 + $0xe4] sm:$0xf]
      %v773 = vld [vmem:[%s1 + $0xe8] sm:$0xf]
      %v774 = vld [vmem:[%s1 + $0xec] sm:$0xf]
      %v775 = vld [vmem:[%s1 + $0xf0] sm:$0xf]
      %v776 = vld [vmem:[%s1 + $0xf4] sm:$0xf]
      %v777 = vld [vmem:[%s1 + $0xf8] sm:$0xf]
      %v778 = vld [vmem:[%s1 + $0xfc] sm:$0xf]
      %v790 = vunpack.c.l.b16 %v752
      %v791 = vunpack.c.l.b16 %v753
      %v792 = vunpack.c.l.b16 %v754
      %v793 = vunpack.c.l.b16 %v755
      %v794 = vunpack.c.l.b16 %v756
      %v795 = vunpack.c.l.b16 %v757
      %v796 = vunpack.c.l.b16 %v758
      %v797 = vunpack.c.l.b16 %v759
      %v798 = vunpack.c.l.b16 %v760
      %v799 = vunpack.c.l.b16 %v761
      %v800 = vunpack.c.l.b16 %v762
      %v801 = vpack.c.b16 %v791, %v790
      %v802 = vpack.c.b16 %v793, %v792
      %v803 = vpack.c.b16 %v795, %v794
      %v804 = vpack.c.b16 %v797, %v796
      %v805 = vpack.c.b16 %v799, %v798
      %v806 = vpack.c.b16 %v800, %v800
      %v807 = vrot.slane %v801, 1
      %v808 = vrot.slane %v802, 1
      %v809 = vsel %vm604, %v807, %v808
      %v810 = vrot.slane %v803, 1
      %v811 = vsel %vm604, %v808, %v810
      %v812 = vrot.slane %v804, 1
      %v813 = vsel %vm604, %v810, %v812
      %v814 = vrot.slane %v805, 1
      %v815 = vsel %vm604, %v812, %v814
      %v816 = vrot.slane %v806, 1
      %v817 = vsel %vm604, %v814, %v816
      %v839 = vunpack.c.l.b16 %v763
      %v840 = vunpack.c.l.b16 %v764
      %v841 = vunpack.c.l.b16 %v765
      %v842 = vunpack.c.l.b16 %v766
      %v843 = vunpack.c.l.b16 %v767
      %v844 = vunpack.c.l.b16 %v768
      %v845 = vunpack.c.l.b16 %v769
      %v846 = vunpack.c.l.b16 %v770
      %v847 = vunpack.c.l.b16 %v771
      %v848 = vunpack.c.l.b16 %v772
      %v849 = vunpack.c.l.b16 %v773
      %v850 = vunpack.c.l.b16 %v774
      %v851 = vunpack.c.l.b16 %v775
      %v852 = vunpack.c.l.b16 %v776
      %v853 = vunpack.c.l.b16 %v777
      %v854 = vunpack.c.l.b16 %v778
      %v855 = vpack.c.b16 %v840, %v839
      %v856 = vpack.c.b16 %v842, %v841
      %v857 = vpack.c.b16 %v844, %v843
      %v858 = vpack.c.b16 %v846, %v845
      %v859 = vpack.c.b16 %v848, %v847
      %v860 = vpack.c.b16 %v850, %v849
      %v861 = vpack.c.b16 %v852, %v851
      %v862 = vpack.c.b16 %v854, %v853
      %871 = vmatprep.subr.bf16.mxu0 0
      %872 = vmatpush1.bf16.msra.mxu0 %v855
      %873 = vmatprep.subr.bf16.mxu0 0
      %874 = vmatpush1.bf16.msra.mxu0 %v856
      %875 = vmatprep.subr.bf16.mxu0 0
      %876 = vmatpush1.bf16.msra.mxu0 %v857
      %877 = vmatprep.subr.bf16.mxu0 0
      %878 = vmatpush1.bf16.msra.mxu0 %v858
      %879 = vmatprep.subr.bf16.mxu0 0
      %880 = vmatpush1.bf16.msra.mxu0 %v859
      %881 = vmatprep.subr.bf16.mxu0 0
      %882 = vmatpush1.bf16.msra.mxu0 %v860
      %883 = vmatprep.subr.bf16.mxu0 0
      %884 = vmatpush1.bf16.msra.mxu0 %v861
      %885 = vmatprep.subr.bf16.mxu0 0
      %886 = vmatpush1.bf16.msra.mxu0 %v862
      %887 = vmatprep.subr.bf16.mxu0 0
      %888 = vmatpush1.bf16.msra.mxu0 0
      %889 = vmatprep.subr.bf16.mxu0 0
      %890 = vmatpush1.bf16.msra.mxu0 0
      %891 = vmatprep.subr.bf16.mxu0 0
      %892 = vmatpush1.bf16.msra.mxu0 0
      %893 = vmatprep.subr.bf16.mxu0 0
      %894 = vmatpush1.bf16.msra.mxu0 0
      %895 = vmatprep.subr.bf16.mxu0 0
      %896 = vmatpush1.bf16.msra.mxu0 0
      %897 = vmatprep.subr.bf16.mxu0 0
      %898 = vmatpush1.bf16.msra.mxu0 0
      %899 = vmatprep.subr.bf16.mxu0 0
      %900 = vmatpush1.bf16.msra.mxu0 0
      %901 = vmatprep.subr.bf16.mxu0 0
      %902 = vmatpush1.bf16.msra.mxu0 0
      %903 = vmatprep.mubr.bf16.mxu0 0
      %904 = vmatmul.mubr.bf16.gmra.mrb[0].mxu0 %v809
      %v905 = vpop.f32.mrb[0].mxu0
      %v906 = vadd.f32 0.0, %v905
      %v907 = vpop.f32.mrb[0].mxu0
      %v908 = vpop.f32.mrb[0].mxu0
      %v909 = vadd.f32 0.0, %v908
      %v910 = vpop.f32.mrb[0].mxu0
      %911 = vmatprep.mubr.bf16.mxu0 0
      %912 = vmatmul.mubr.bf16.gmra.mrb[0].mxu0 %v811
      %v913 = vpop.f32.mrb[0].mxu0
      %v914 = vadd.f32 0.0, %v913
      %v915 = vpop.f32.mrb[0].mxu0
      %v916 = vpop.f32.mrb[0].mxu0
      %v917 = vadd.f32 0.0, %v916
      %v918 = vpop.f32.mrb[0].mxu0
      %919 = vmatprep.mubr.bf16.mxu0 0
      %920 = vmatmul.mubr.bf16.gmra.mrb[0].mxu0 %v813
      %v921 = vpop.f32.mrb[0].mxu0
      %v922 = vadd.f32 0.0, %v921
      %v923 = vpop.f32.mrb[0].mxu0
      %v924 = vpop.f32.mrb[0].mxu0
      %v925 = vadd.f32 0.0, %v924
      %v926 = vpop.f32.mrb[0].mxu0
      %927 = vmatprep.mubr.bf16.mxu0 0
      %928 = vmatmul.mubr.bf16.gmra.mrb[0].mxu0 %v815
      %v929 = vpop.f32.mrb[0].mxu0
      %v930 = vadd.f32 0.0, %v929
      %v931 = vpop.f32.mrb[0].mxu0
      %v932 = vpop.f32.mrb[0].mxu0
      %v933 = vadd.f32 0.0, %v932
      %v934 = vpop.f32.mrb[0].mxu0
      %935 = vmatprep.mubr.bf16.mxu0 0
      %936 = vmatmul.mubr.bf16.gmra.mrb[0].mxu0 %v817
      %v937 = vpop.f32.mrb[0].mxu0
      %v938 = vadd.f32 0.0, %v937
      %v939 = vpop.f32.mrb[0].mxu0
      %v940 = vpop.f32.mrb[0].mxu0
      %v941 = vadd.f32 0.0, %v940
      %v942 = vpop.f32.mrb[0].mxu0
      %943 = vdwg.mxu0
      %v944 = vadd.f32 %v742, %v906
      %v945 = vadd.f32 %v743, %v909
      %v946 = vadd.f32 %v744, %v914
      %v947 = vadd.f32 %v745, %v917
      %v948 = vadd.f32 %v746, %v922
      %v949 = vadd.f32 %v747, %v925
      %v950 = vadd.f32 %v748, %v930
      %v951 = vadd.f32 %v749, %v933
      %v952 = vadd.f32 %v750, %v938
      %v953 = vadd.f32 %v751, %v941
      %v954 = vld [vmem:[%s203 + $0x2c] sm:$0x3]
      %v955 = vld [vmem:[%s1 + $0x100] sm:$0xf]
      %v956 = vld [vmem:[%s1 + $0x104] sm:$0xf]
      %v957 = vld [vmem:[%s1 + $0x108] sm:$0xf]
      %v958 = vld [vmem:[%s1 + $0x10c] sm:$0xf]
      %v959 = vld [vmem:[%s1 + $0x110] sm:$0xf]
      %v960 = vld [vmem:[%s1 + $0x114] sm:$0xf]
      %v961 = vld [vmem:[%s1 + $0x118] sm:$0xf]
      %v962 = vld [vmem:[%s1 + $0x11c] sm:$0xf]
      %v963 = vld [vmem:[%s1 + $0x120] sm:$0xf]
      %v964 = vld [vmem:[%s1 + $0x124] sm:$0xf]
      %v965 = vld [vmem:[%s1 + $0x128] sm:$0xf]
      %v966 = vld [vmem:[%s1 + $0x12c] sm:$0xf]
      %v967 = vld [vmem:[%s1 + $0x130] sm:$0xf]
      %v968 = vld [vmem:[%s1 + $0x134] sm:$0xf]
      %v969 = vld [vmem:[%s1 + $0x138] sm:$0xf]
      %v970 = vld [vmem:[%s1 + $0x13c] sm:$0xf]
      %v972 = vunpack.c.l.b16 %v954
      %v973 = vpack.c.b16 %v972, %v972
      %vm974 = vsmask.f32 6400
      %v976 = vshrl.u32 %v801, 16
      %v978 = vrot.slane %v976, 1
      %v979 = vshll.u32 %v801, 16
      %v981 = vrot.slane %v979, 2
      %v982 = vor.u32 %v978, %v981
      %v984 = vshrl.u32 %v802, 16
      %v986 = vrot.slane %v984, 1
      %v987 = vshll.u32 %v802, 16
      %v989 = vrot.slane %v987, 2
      %v990 = vor.u32 %v986, %v989
      %v991 = vsel %vm974, %v982, %v990
      %v993 = vshrl.u32 %v803, 16
      %v995 = vrot.slane %v993, 1
      %v996 = vshll.u32 %v803, 16
      %v998 = vrot.slane %v996, 2
      %v999 = vor.u32 %v995, %v998
      %v1000 = vsel %vm974, %v990, %v999
      %v1002 = vshrl.u32 %v804, 16
      %v1004 = vrot.slane %v1002, 1
      %v1005 = vshll.u32 %v804, 16
      %v1007 = vrot.slane %v1005, 2
      %v1008 = vor.u32 %v1004, %v1007
      %v1009 = vsel %vm974, %v999, %v1008
      %v1011 = vshrl.u32 %v805, 16
      %v1013 = vrot.slane %v1011, 1
      %v1014 = vshll.u32 %v805, 16
      %v1016 = vrot.slane %v1014, 2
      %v1017 = vor.u32 %v1013, %v1016
      %v1018 = vsel %vm974, %v1008, %v1017
      %v1020 = vshrl.u32 %v973, 16
      %v1022 = vrot.slane %v1020, 1
      %v1023 = vshll.u32 %v973, 16
      %v1025 = vrot.slane %v1023, 2
      %v1026 = vor.u32 %v1022, %v1025
      %v1027 = vsel %vm974, %v1017, %v1026
      %v1049 = vunpack.c.l.b16 %v955
      %v1050 = vunpack.c.l.b16 %v956
      %v1051 = vunpack.c.l.b16 %v957
      %v1052 = vunpack.c.l.b16 %v958
      %v1053 = vunpack.c.l.b16 %v959
      %v1054 = vunpack.c.l.b16 %v960
      %v1055 = vunpack.c.l.b16 %v961
      %v1056 = vunpack.c.l.b16 %v962
      %v1057 = vunpack.c.l.b16 %v963
      %v1058 = vunpack.c.l.b16 %v964
      %v1059 = vunpack.c.l.b16 %v965
      %v1060 = vunpack.c.l.b16 %v966
      %v1061 = vunpack.c.l.b16 %v967
      %v1062 = vunpack.c.l.b16 %v968
      %v1063 = vunpack.c.l.b16 %v969
      %v1064 = vunpack.c.l.b16 %v970
      %v1065 = vpack.c.b16 %v1050, %v1049
      %v1066 = vpack.c.b16 %v1052, %v1051
      %v1067 = vpack.c.b16 %v1054, %v1053
      %v1068 = vpack.c.b16 %v1056, %v1055
      %v1069 = vpack.c.b16 %v1058, %v1057
      %v1070 = vpack.c.b16 %v1060, %v1059
      %v1071 = vpack.c.b16 %v1062, %v1061
      %v1072 = vpack.c.b16 %v1064, %v1063
      %1081 = vmatprep.subr.bf16.mxu0 0
      %1082 = vmatpush1.bf16.msra.mxu0 %v1065
      %1083 = vmatprep.subr.bf16.mxu0 0
      %1084 = vmatpush1.bf16.msra.mxu0 %v1066
      %1085 = vmatprep.subr.bf16.mxu0 0
      %1086 = vmatpush1.bf16.msra.mxu0 %v1067
      %1087 = vmatprep.subr.bf16.mxu0 0
      %1088 = vmatpush1.bf16.msra.mxu0 %v1068
      %1089 = vmatprep.subr.bf16.mxu0 0
      %1090 = vmatpush1.bf16.msra.mxu0 %v1069
      %1091 = vmatprep.subr.bf16.mxu0 0
      %1092 = vmatpush1.bf16.msra.mxu0 %v1070
      %1093 = vmatprep.subr.bf16.mxu0 0
      %1094 = vmatpush1.bf16.msra.mxu0 %v1071
      %1095 = vmatprep.subr.bf16.mxu0 0
      %1096 = vmatpush1.bf16.msra.mxu0 %v1072
      %1097 = vmatprep.subr.bf16.mxu0 0
      %1098 = vmatpush1.bf16.msra.mxu0 0
      %1099 = vmatprep.subr.bf16.mxu0 0
      %1100 = vmatpush1.bf16.msra.mxu0 0
      %1101 = vmatprep.subr.bf16.mxu0 0
      %1102 = vmatpush1.bf16.msra.mxu0 0
      %1103 = vmatprep.subr.bf16.mxu0 0
      %1104 = vmatpush1.bf16.msra.mxu0 0
      %1105 = vmatprep.subr.bf16.mxu0 0
      %1106 = vmatpush1.bf16.msra.mxu0 0
      %1107 = vmatprep.subr.bf16.mxu0 0
      %1108 = vmatpush1.bf16.msra.mxu0 0
      %1109 = vmatprep.subr.bf16.mxu0 0
      %1110 = vmatpush1.bf16.msra.mxu0 0
      %1111 = vmatprep.subr.bf16.mxu0 0
      %1112 = vmatpush1.bf16.msra.mxu0 0
      %1113 = vmatprep.mubr.bf16.mxu0 0
      %1114 = vmatmul.mubr.bf16.gmra.mrb[0].mxu0 %v991
      %v1115 = vpop.f32.mrb[0].mxu0
      %v1116 = vadd.f32 0.0, %v1115
      %v1117 = vpop.f32.mrb[0].mxu0
      %v1118 = vpop.f32.mrb[0].mxu0
      %v1119 = vadd.f32 0.0, %v1118
      %v1120 = vpop.f32.mrb[0].mxu0
      %1121 = vmatprep.mubr.bf16.mxu0 0
      %1122 = vmatmul.mubr.bf16.gmra.mrb[0].mxu0 %v1000
      %v1123 = vpop.f32.mrb[0].mxu0
      %v1124 = vadd.f32 0.0, %v1123
      %v1125 = vpop.f32.mrb[0].mxu0
      %v1126 = vpop.f32.mrb[0].mxu0
      %v1127 = vadd.f32 0.0, %v1126
      %v1128 = vpop.f32.mrb[0].mxu0
      %1129 = vmatprep.mubr.bf16.mxu0 0
      %1130 = vmatmul.mubr.bf16.gmra.mrb[0].mxu0 %v1009
      %v1131 = vpop.f32.mrb[0].mxu0
      %v1132 = vadd.f32 0.0, %v1131
      %v1133 = vpop.f32.mrb[0].mxu0
      %v1134 = vpop.f32.mrb[0].mxu0
      %v1135 = vadd.f32 0.0, %v1134
      %v1136 = vpop.f32.mrb[0].mxu0
      %1137 = vmatprep.mubr.bf16.mxu0 0
      %1138 = vmatmul.mubr.bf16.gmra.mrb[0].mxu0 %v1018
      %v1139 = vpop.f32.mrb[0].mxu0
      %v1140 = vadd.f32 0.0, %v1139
      %v1141 = vpop.f32.mrb[0].mxu0
      %v1142 = vpop.f32.mrb[0].mxu0
      %v1143 = vadd.f32 0.0, %v1142
      %v1144 = vpop.f32.mrb[0].mxu0
      %1145 = vmatprep.mubr.bf16.mxu0 0
      %1146 = vmatmul.mubr.bf16.gmra.mrb[0].mxu0 %v1027
      %v1147 = vpop.f32.mrb[0].mxu0
      %v1148 = vadd.f32 0.0, %v1147
      %v1149 = vpop.f32.mrb[0].mxu0
      %v1150 = vpop.f32.mrb[0].mxu0
      %v1151 = vadd.f32 0.0, %v1150
      %v1152 = vpop.f32.mrb[0].mxu0
      %1153 = vdwg.mxu0
      %v1154 = vadd.f32 %v944, %v1116
      %v1155 = vadd.f32 %v945, %v1119
      %v1156 = vadd.f32 %v946, %v1124
      %v1157 = vadd.f32 %v947, %v1127
      %v1158 = vadd.f32 %v948, %v1132
      %v1159 = vadd.f32 %v949, %v1135
      %v1160 = vadd.f32 %v950, %v1140
      %v1161 = vadd.f32 %v951, %v1143
      %v1162 = vadd.f32 %v952, %v1148
      %v1163 = vadd.f32 %v953, %v1151
      %v1164 = vld [vmem:[%s203 + $0x4] sm:$0xc]
      %v1165 = vld [vmem:[%s1 + $0x140] sm:$0xf]
      %v1166 = vld [vmem:[%s1 + $0x144] sm:$0xf]
      %v1167 = vld [vmem:[%s1 + $0x148] sm:$0xf]
      %v1168 = vld [vmem:[%s1 + $0x14c] sm:$0xf]
      %v1169 = vld [vmem:[%s1 + $0x150] sm:$0xf]
      %v1170 = vld [vmem:[%s1 + $0x154] sm:$0xf]
      %v1171 = vld [vmem:[%s1 + $0x158] sm:$0xf]
      %v1172 = vld [vmem:[%s1 + $0x15c] sm:$0xf]
      %v1173 = vld [vmem:[%s1 + $0x160] sm:$0xf]
      %v1174 = vld [vmem:[%s1 + $0x164] sm:$0xf]
      %v1175 = vld [vmem:[%s1 + $0x168] sm:$0xf]
      %v1176 = vld [vmem:[%s1 + $0x16c] sm:$0xf]
      %v1177 = vld [vmem:[%s1 + $0x170] sm:$0xf]
      %v1178 = vld [vmem:[%s1 + $0x174] sm:$0xf]
      %v1179 = vld [vmem:[%s1 + $0x178] sm:$0xf]
      %v1180 = vld [vmem:[%s1 + $0x17c] sm:$0xf]
      %v1182 = vunpack.c.l.b16 %v1164
      %v1183 = vpack.c.b16 %v791, %v1182
      %vm1184 = vcmask 1045504
      %v1185 = vrot.slane %v1183, 2
      %v1186 = vrot.slane %v802, 2
      %v1187 = vsel %vm1184, %v1185, %v1186
      %v1188 = vrot.slane %v803, 2
      %v1189 = vsel %vm1184, %v1186, %v1188
      %v1190 = vrot.slane %v804, 2
      %v1191 = vsel %vm1184, %v1188, %v1190
      %v1192 = vrot.slane %v805, 2
      %v1193 = vsel %vm1184, %v1190, %v1192
      %v1194 = vrot.slane %v973, 2
      %v1195 = vsel %vm1184, %v1192, %v1194
      %v1217 = vunpack.c.l.b16 %v1165
      %v1218 = vunpack.c.l.b16 %v1166
      %v1219 = vunpack.c.l.b16 %v1167
      %v1220 = vunpack.c.l.b16 %v1168
      %v1221 = vunpack.c.l.b16 %v1169
      %v1222 = vunpack.c.l.b16 %v1170
      %v1223 = vunpack.c.l.b16 %v1171
      %v1224 = vunpack.c.l.b16 %v1172
      %v1225 = vunpack.c.l.b16 %v1173
      %v1226 = vunpack.c.l.b16 %v1174
      %v1227 = vunpack.c.l.b16 %v1175
      %v1228 = vunpack.c.l.b16 %v1176
      %v1229 = vunpack.c.l.b16 %v1177
      %v1230 = vunpack.c.l.b16 %v1178
      %v1231 = vunpack.c.l.b16 %v1179
      %v1232 = vunpack.c.l.b16 %v1180
      %v1233 = vpack.c.b16 %v1218, %v1217
      %v1234 = vpack.c.b16 %v1220, %v1219
      %v1235 = vpack.c.b16 %v1222, %v1221
      %v1236 = vpack.c.b16 %v1224, %v1223
      %v1237 = vpack.c.b16 %v1226, %v1225
      %v1238 = vpack.c.b16 %v1228, %v1227
      %v1239 = vpack.c.b16 %v1230, %v1229
      %v1240 = vpack.c.b16 %v1232, %v1231
      %1249 = vmatprep.subr.bf16.mxu0 0
      %1250 = vmatpush1.bf16.msra.mxu0 %v1233
      %1251 = vmatprep.subr.bf16.mxu0 0
      %1252 = vmatpush1.bf16.msra.mxu0 %v1234
      %1253 = vmatprep.subr.bf16.mxu0 0
      %1254 = vmatpush1.bf16.msra.mxu0 %v1235
      %1255 = vmatprep.subr.bf16.mxu0 0
      %1256 = vmatpush1.bf16.msra.mxu0 %v1236
      %1257 = vmatprep.subr.bf16.mxu0 0
      %1258 = vmatpush1.bf16.msra.mxu0 %v1237
      %1259 = vmatprep.subr.bf16.mxu0 0
      %1260 = vmatpush1.bf16.msra.mxu0 %v1238
      %1261 = vmatprep.subr.bf16.mxu0 0
      %1262 = vmatpush1.bf16.msra.mxu0 %v1239
      %1263 = vmatprep.subr.bf16.mxu0 0
      %1264 = vmatpush1.bf16.msra.mxu0 %v1240
      %1265 = vmatprep.subr.bf16.mxu0 0
      %1266 = vmatpush1.bf16.msra.mxu0 0
      %1267 = vmatprep.subr.bf16.mxu0 0
      %1268 = vmatpush1.bf16.msra.mxu0 0
      %1269 = vmatprep.subr.bf16.mxu0 0
      %1270 = vmatpush1.bf16.msra.mxu0 0
      %1271 = vmatprep.subr.bf16.mxu0 0
      %1272 = vmatpush1.bf16.msra.mxu0 0
      %1273 = vmatprep.subr.bf16.mxu0 0
      %1274 = vmatpush1.bf16.msra.mxu0 0
      %1275 = vmatprep.subr.bf16.mxu0 0
      %1276 = vmatpush1.bf16.msra.mxu0 0
      %1277 = vmatprep.subr.bf16.mxu0 0
      %1278 = vmatpush1.bf16.msra.mxu0 0
      %1279 = vmatprep.subr.bf16.mxu0 0
      %1280 = vmatpush1.bf16.msra.mxu0 0
      %1281 = vmatprep.mubr.bf16.mxu0 0
      %1282 = vmatmul.mubr.bf16.gmra.mrb[0].mxu0 %v1187
      %v1283 = vpop.f32.mrb[0].mxu0
      %v1284 = vadd.f32 0.0, %v1283
      %v1285 = vpop.f32.mrb[0].mxu0
      %v1286 = vpop.f32.mrb[0].mxu0
      %v1287 = vadd.f32 0.0, %v1286
      %v1288 = vpop.f32.mrb[0].mxu0
      %1289 = vmatprep.mubr.bf16.mxu0 0
      %1290 = vmatmul.mubr.bf16.gmra.mrb[0].mxu0 %v1189
      %v1291 = vpop.f32.mrb[0].mxu0
      %v1292 = vadd.f32 0.0, %v1291
      %v1293 = vpop.f32.mrb[0].mxu0
      %v1294 = vpop.f32.mrb[0].mxu0
      %v1295 = vadd.f32 0.0, %v1294
      %v1296 = vpop.f32.mrb[0].mxu0
      %1297 = vmatprep.mubr.bf16.mxu0 0
      %1298 = vmatmul.mubr.bf16.gmra.mrb[0].mxu0 %v1191
      %v1299 = vpop.f32.mrb[0].mxu0
      %v1300 = vadd.f32 0.0, %v1299
      %v1301 = vpop.f32.mrb[0].mxu0
      %v1302 = vpop.f32.mrb[0].mxu0
      %v1303 = vadd.f32 0.0, %v1302
      %v1304 = vpop.f32.mrb[0].mxu0
      %1305 = vmatprep.mubr.bf16.mxu0 0
      %1306 = vmatmul.mubr.bf16.gmra.mrb[0].mxu0 %v1193
      %v1307 = vpop.f32.mrb[0].mxu0
      %v1308 = vadd.f32 0.0, %v1307
      %v1309 = vpop.f32.mrb[0].mxu0
      %v1310 = vpop.f32.mrb[0].mxu0
      %v1311 = vadd.f32 0.0, %v1310
      %v1312 = vpop.f32.mrb[0].mxu0
      %1313 = vmatprep.mubr.bf16.mxu0 0
      %1314 = vmatmul.mubr.bf16.gmra.mrb[0].mxu0 %v1195
      %v1315 = vpop.f32.mrb[0].mxu0
      %v1316 = vadd.f32 0.0, %v1315
      %v1317 = vpop.f32.mrb[0].mxu0
      %v1318 = vpop.f32.mrb[0].mxu0
      %v1319 = vadd.f32 0.0, %v1318
      %v1320 = vpop.f32.mrb[0].mxu0
      %1321 = vdwg.mxu0
      %v1322 = vadd.f32 %v1154, %v1284
      %v1323 = vadd.f32 %v1155, %v1287
      %v1324 = vadd.f32 %v1156, %v1292
      %v1325 = vadd.f32 %v1157, %v1295
      %v1326 = vadd.f32 %v1158, %v1300
      %v1327 = vadd.f32 %v1159, %v1303
      %v1328 = vadd.f32 %v1160, %v1308
      %v1329 = vadd.f32 %v1161, %v1311
      %v1330 = vadd.f32 %v1162, %v1316
      %v1331 = vadd.f32 %v1163, %v1319
      %v1332 = vld [vmem:[%s203 + $0x8] sm:$0xc]
      %v1333 = vld [vmem:[%s203 + $0xc] sm:$0xf]
      %v1334 = vld [vmem:[%s203 + $0x10] sm:$0xf]
      %v1335 = vld [vmem:[%s203 + $0x14] sm:$0xf]
      %v1336 = vld [vmem:[%s203 + $0x18] sm:$0xf]
      %v1337 = vld [vmem:[%s203 + $0x1c] sm:$0xf]
      %v1338 = vld [vmem:[%s203 + $0x20] sm:$0xf]
      %v1339 = vld [vmem:[%s203 + $0x24] sm:$0xf]
      %v1340 = vld [vmem:[%s203 + $0x28] sm:$0xf]
      %v1341 = vld [vmem:[%s203 + $0x2c] sm:$0xf]
      %v1342 = vld [vmem:[%s203 + $0x30] sm:$0x3]
      %v1343 = vld [vmem:[%s1 + $0x180] sm:$0xf]
      %v1344 = vld [vmem:[%s1 + $0x184] sm:$0xf]
      %v1345 = vld [vmem:[%s1 + $0x188] sm:$0xf]
      %v1346 = vld [vmem:[%s1 + $0x18c] sm:$0xf]
      %v1347 = vld [vmem:[%s1 + $0x190] sm:$0xf]
      %v1348 = vld [vmem:[%s1 + $0x194] sm:$0xf]
      %v1349 = vld [vmem:[%s1 + $0x198] sm:$0xf]
      %v1350 = vld [vmem:[%s1 + $0x19c] sm:$0xf]
      %v1351 = vld [vmem:[%s1 + $0x1a0] sm:$0xf]
      %v1352 = vld [vmem:[%s1 + $0x1a4] sm:$0xf]
      %v1353 = vld [vmem:[%s1 + $0x1a8] sm:$0xf]
      %v1354 = vld [vmem:[%s1 + $0x1ac] sm:$0xf]
      %v1355 = vld [vmem:[%s1 + $0x1b0] sm:$0xf]
      %v1356 = vld [vmem:[%s1 + $0x1b4] sm:$0xf]
      %v1357 = vld [vmem:[%s1 + $0x1b8] sm:$0xf]
      %v1358 = vld [vmem:[%s1 + $0x1bc] sm:$0xf]
      %v1370 = vunpack.c.l.b16 %v1332
      %v1371 = vunpack.c.l.b16 %v1333
      %v1372 = vunpack.c.l.b16 %v1334
      %v1373 = vunpack.c.l.b16 %v1335
      %v1374 = vunpack.c.l.b16 %v1336
      %v1375 = vunpack.c.l.b16 %v1337
      %v1376 = vunpack.c.l.b16 %v1338
      %v1377 = vunpack.c.l.b16 %v1339
      %v1378 = vunpack.c.l.b16 %v1340
      %v1379 = vunpack.c.l.b16 %v1341
      %v1380 = vunpack.c.l.b16 %v1342
      %v1381 = vpack.c.b16 %v1371, %v1370
      %v1382 = vpack.c.b16 %v1373, %v1372
      %v1383 = vpack.c.b16 %v1375, %v1374
      %v1384 = vpack.c.b16 %v1377, %v1376
      %v1385 = vpack.c.b16 %v1379, %v1378
      %v1386 = vpack.c.b16 %v1380, %v1380
      %v1387 = vrot.slane %v1381, 2
      %v1388 = vrot.slane %v1382, 2
      %v1389 = vsel %vm1184, %v1387, %v1388
      %v1390 = vrot.slane %v1383, 2
      %v1391 = vsel %vm1184, %v1388, %v1390
      %v1392 = vrot.slane %v1384, 2
      %v1393 = vsel %vm1184, %v1390, %v1392
      %v1394 = vrot.slane %v1385, 2
      %v1395 = vsel %vm1184, %v1392, %v1394
      %v1396 = vrot.slane %v1386, 2
      %v1397 = vsel %vm1184, %v1394, %v1396
      %v1419 = vunpack.c.l.b16 %v1343
      %v1420 = vunpack.c.l.b16 %v1344
      %v1421 = vunpack.c.l.b16 %v1345
      %v1422 = vunpack.c.l.b16 %v1346
      %v1423 = vunpack.c.l.b16 %v1347
      %v1424 = vunpack.c.l.b16 %v1348
      %v1425 = vunpack.c.l.b16 %v1349
      %v1426 = vunpack.c.l.b16 %v1350
      %v1427 = vunpack.c.l.b16 %v1351
      %v1428 = vunpack.c.l.b16 %v1352
      %v1429 = vunpack.c.l.b16 %v1353
      %v1430 = vunpack.c.l.b16 %v1354
      %v1431 = vunpack.c.l.b16 %v1355
      %v1432 = vunpack.c.l.b16 %v1356
      %v1433 = vunpack.c.l.b16 %v1357
      %v1434 = vunpack.c.l.b16 %v1358
      %v1435 = vpack.c.b16 %v1420, %v1419
      %v1436 = vpack.c.b16 %v1422, %v1421
      %v1437 = vpack.c.b16 %v1424, %v1423
      %v1438 = vpack.c.b16 %v1426, %v1425
      %v1439 = vpack.c.b16 %v1428, %v1427
      %v1440 = vpack.c.b16 %v1430, %v1429
      %v1441 = vpack.c.b16 %v1432, %v1431
      %v1442 = vpack.c.b16 %v1434, %v1433
      %1451 = vmatprep.subr.bf16.mxu0 0
      %1452 = vmatpush1.bf16.msra.mxu0 %v1435
      %1453 = vmatprep.subr.bf16.mxu0 0
      %1454 = vmatpush1.bf16.msra.mxu0 %v1436
      %1455 = vmatprep.subr.bf16.mxu0 0
      %1456 = vmatpush1.bf16.msra.mxu0 %v1437
      %1457 = vmatprep.subr.bf16.mxu0 0
      %1458 = vmatpush1.bf16.msra.mxu0 %v1438
      %1459 = vmatprep.subr.bf16.mxu0 0
      %1460 = vmatpush1.bf16.msra.mxu0 %v1439
      %1461 = vmatprep.subr.bf16.mxu0 0
      %1462 = vmatpush1.bf16.msra.mxu0 %v1440
      %1463 = vmatprep.subr.bf16.mxu0 0
      %1464 = vmatpush1.bf16.msra.mxu0 %v1441
      %1465 = vmatprep.subr.bf16.mxu0 0
      %1466 = vmatpush1.bf16.msra.mxu0 %v1442
      %1467 = vmatprep.subr.bf16.mxu0 0
      %1468 = vmatpush1.bf16.msra.mxu0 0
      %1469 = vmatprep.subr.bf16.mxu0 0
      %1470 = vmatpush1.bf16.msra.mxu0 0
      %1471 = vmatprep.subr.bf16.mxu0 0
      %1472 = vmatpush1.bf16.msra.mxu0 0
      %1473 = vmatprep.subr.bf16.mxu0 0
      %1474 = vmatpush1.bf16.msra.mxu0 0
      %1475 = vmatprep.subr.bf16.mxu0 0
      %1476 = vmatpush1.bf16.msra.mxu0 0
      %1477 = vmatprep.subr.bf16.mxu0 0
      %1478 = vmatpush1.bf16.msra.mxu0 0
      %1479 = vmatprep.subr.bf16.mxu0 0
      %1480 = vmatpush1.bf16.msra.mxu0 0
      %1481 = vmatprep.subr.bf16.mxu0 0
      %1482 = vmatpush1.bf16.msra.mxu0 0
      %1483 = vmatprep.mubr.bf16.mxu0 0
      %1484 = vmatmul.mubr.bf16.gmra.mrb[0].mxu0 %v1389
      %v1485 = vpop.f32.mrb[0].mxu0
      %v1486 = vadd.f32 0.0, %v1485
      %v1487 = vpop.f32.mrb[0].mxu0
      %v1488 = vpop.f32.mrb[0].mxu0
      %v1489 = vadd.f32 0.0, %v1488
      %v1490 = vpop.f32.mrb[0].mxu0
      %1491 = vmatprep.mubr.bf16.mxu0 0
      %1492 = vmatmul.mubr.bf16.gmra.mrb[0].mxu0 %v1391
      %v1493 = vpop.f32.mrb[0].mxu0
      %v1494 = vadd.f32 0.0, %v1493
      %v1495 = vpop.f32.mrb[0].mxu0
      %v1496 = vpop.f32.mrb[0].mxu0
      %v1497 = vadd.f32 0.0, %v1496
      %v1498 = vpop.f32.mrb[0].mxu0
      %1499 = vmatprep.mubr.bf16.mxu0 0
      %1500 = vmatmul.mubr.bf16.gmra.mrb[0].mxu0 %v1393
      %v1501 = vpop.f32.mrb[0].mxu0
      %v1502 = vadd.f32 0.0, %v1501
      %v1503 = vpop.f32.mrb[0].mxu0
      %v1504 = vpop.f32.mrb[0].mxu0
      %v1505 = vadd.f32 0.0, %v1504
      %v1506 = vpop.f32.mrb[0].mxu0
      %1507 = vmatprep.mubr.bf16.mxu0 0
      %1508 = vmatmul.mubr.bf16.gmra.mrb[0].mxu0 %v1395
      %v1509 = vpop.f32.mrb[0].mxu0
      %v1510 = vadd.f32 0.0, %v1509
      %v1511 = vpop.f32.mrb[0].mxu0
      %v1512 = vpop.f32.mrb[0].mxu0
      %v1513 = vadd.f32 0.0, %v1512
      %v1514 = vpop.f32.mrb[0].mxu0
      %1515 = vmatprep.mubr.bf16.mxu0 0
      %1516 = vmatmul.mubr.bf16.gmra.mrb[0].mxu0 %v1397
      %v1517 = vpop.f32.mrb[0].mxu0
      %v1518 = vadd.f32 0.0, %v1517
      %v1519 = vpop.f32.mrb[0].mxu0
      %v1520 = vpop.f32.mrb[0].mxu0
      %v1521 = vadd.f32 0.0, %v1520
      %v1522 = vpop.f32.mrb[0].mxu0
      %1523 = vdwg.mxu0
      %v1524 = vadd.f32 %v1322, %v1486
      %v1525 = vadd.f32 %v1323, %v1489
      %v1526 = vadd.f32 %v1324, %v1494
      %v1527 = vadd.f32 %v1325, %v1497
      %v1528 = vadd.f32 %v1326, %v1502
      %v1529 = vadd.f32 %v1327, %v1505
      %v1530 = vadd.f32 %v1328, %v1510
      %v1531 = vadd.f32 %v1329, %v1513
      %v1532 = vadd.f32 %v1330, %v1518
      %v1533 = vadd.f32 %v1331, %v1521
      %v1534 = vld [vmem:[%s203 + $0x30] sm:$0x7]
      %v1535 = vld [vmem:[%s1 + $0x1c0] sm:$0xf]
      %v1536 = vld [vmem:[%s1 + $0x1c4] sm:$0xf]
      %v1537 = vld [vmem:[%s1 + $0x1c8] sm:$0xf]
      %v1538 = vld [vmem:[%s1 + $0x1cc] sm:$0xf]
      %v1539 = vld [vmem:[%s1 + $0x1d0] sm:$0xf]
      %v1540 = vld [vmem:[%s1 + $0x1d4] sm:$0xf]
      %v1541 = vld [vmem:[%s1 + $0x1d8] sm:$0xf]
      %v1542 = vld [vmem:[%s1 + $0x1dc] sm:$0xf]
      %v1543 = vld [vmem:[%s1 + $0x1e0] sm:$0xf]
      %v1544 = vld [vmem:[%s1 + $0x1e4] sm:$0xf]
      %v1545 = vld [vmem:[%s1 + $0x1e8] sm:$0xf]
      %v1546 = vld [vmem:[%s1 + $0x1ec] sm:$0xf]
      %v1547 = vld [vmem:[%s1 + $0x1f0] sm:$0xf]
      %v1548 = vld [vmem:[%s1 + $0x1f4] sm:$0xf]
      %v1549 = vld [vmem:[%s1 + $0x1f8] sm:$0xf]
      %v1550 = vld [vmem:[%s1 + $0x1fc] sm:$0xf]
      %v1552 = vunpack.c.l.b16 %v1534
      %v1553 = vpack.c.b16 %v1552, %v1552
      %vm1554 = vsmask.f32 5376
      %v1556 = vshrl.u32 %v1381, 16
      %v1558 = vrot.slane %v1556, 2
      %v1559 = vshll.u32 %v1381, 16
      %v1561 = vrot.slane %v1559, 3
      %v1562 = vor.u32 %v1558, %v1561
      %v1564 = vshrl.u32 %v1382, 16
      %v1566 = vrot.slane %v1564, 2
      %v1567 = vshll.u32 %v1382, 16
      %v1569 = vrot.slane %v1567, 3
      %v1570 = vor.u32 %v1566, %v1569
      %v1571 = vsel %vm1554, %v1562, %v1570
      %v1573 = vshrl.u32 %v1383, 16
      %v1575 = vrot.slane %v1573, 2
      %v1576 = vshll.u32 %v1383, 16
      %v1578 = vrot.slane %v1576, 3
      %v1579 = vor.u32 %v1575, %v1578
      %v1580 = vsel %vm1554, %v1570, %v1579
      %v1582 = vshrl.u32 %v1384, 16
      %v1584 = vrot.slane %v1582, 2
      %v1585 = vshll.u32 %v1384, 16
      %v1587 = vrot.slane %v1585, 3
      %v1588 = vor.u32 %v1584, %v1587
      %v1589 = vsel %vm1554, %v1579, %v1588
      %v1591 = vshrl.u32 %v1385, 16
      %v1593 = vrot.slane %v1591, 2
      %v1594 = vshll.u32 %v1385, 16
      %v1596 = vrot.slane %v1594, 3
      %v1597 = vor.u32 %v1593, %v1596
      %v1598 = vsel %vm1554, %v1588, %v1597
      %v1600 = vshrl.u32 %v1553, 16
      %v1602 = vrot.slane %v1600, 2
      %v1603 = vshll.u32 %v1553, 16
      %v1605 = vrot.slane %v1603, 3
      %v1606 = vor.u32 %v1602, %v1605
      %v1607 = vsel %vm1554, %v1597, %v1606
      %v1629 = vunpack.c.l.b16 %v1535
      %v1630 = vunpack.c.l.b16 %v1536
      %v1631 = vunpack.c.l.b16 %v1537
      %v1632 = vunpack.c.l.b16 %v1538
      %v1633 = vunpack.c.l.b16 %v1539
      %v1634 = vunpack.c.l.b16 %v1540
      %v1635 = vunpack.c.l.b16 %v1541
      %v1636 = vunpack.c.l.b16 %v1542
      %v1637 = vunpack.c.l.b16 %v1543
      %v1638 = vunpack.c.l.b16 %v1544
      %v1639 = vunpack.c.l.b16 %v1545
      %v1640 = vunpack.c.l.b16 %v1546
      %v1641 = vunpack.c.l.b16 %v1547
      %v1642 = vunpack.c.l.b16 %v1548
      %v1643 = vunpack.c.l.b16 %v1549
      %v1644 = vunpack.c.l.b16 %v1550
      %v1645 = vpack.c.b16 %v1630, %v1629
      %v1646 = vpack.c.b16 %v1632, %v1631
      %v1647 = vpack.c.b16 %v1634, %v1633
      %v1648 = vpack.c.b16 %v1636, %v1635
      %v1649 = vpack.c.b16 %v1638, %v1637
      %v1650 = vpack.c.b16 %v1640, %v1639
      %v1651 = vpack.c.b16 %v1642, %v1641
      %v1652 = vpack.c.b16 %v1644, %v1643
      %1661 = vmatprep.subr.bf16.mxu0 0
      %1662 = vmatpush1.bf16.msra.mxu0 %v1645
      %1663 = vmatprep.subr.bf16.mxu0 0
      %1664 = vmatpush1.bf16.msra.mxu0 %v1646
      %1665 = vmatprep.subr.bf16.mxu0 0
      %1666 = vmatpush1.bf16.msra.mxu0 %v1647
      %1667 = vmatprep.subr.bf16.mxu0 0
      %1668 = vmatpush1.bf16.msra.mxu0 %v1648
      %1669 = vmatprep.subr.bf16.mxu0 0
      %1670 = vmatpush1.bf16.msra.mxu0 %v1649
      %1671 = vmatprep.subr.bf16.mxu0 0
      %1672 = vmatpush1.bf16.msra.mxu0 %v1650
      %1673 = vmatprep.subr.bf16.mxu0 0
      %1674 = vmatpush1.bf16.msra.mxu0 %v1651
      %1675 = vmatprep.subr.bf16.mxu0 0
      %1676 = vmatpush1.bf16.msra.mxu0 %v1652
      %1677 = vmatprep.subr.bf16.mxu0 0
      %1678 = vmatpush1.bf16.msra.mxu0 0
      %1679 = vmatprep.subr.bf16.mxu0 0
      %1680 = vmatpush1.bf16.msra.mxu0 0
      %1681 = vmatprep.subr.bf16.mxu0 0
      %1682 = vmatpush1.bf16.msra.mxu0 0
      %1683 = vmatprep.subr.bf16.mxu0 0
      %1684 = vmatpush1.bf16.msra.mxu0 0
      %1685 = vmatprep.subr.bf16.mxu0 0
      %1686 = vmatpush1.bf16.msra.mxu0 0
      %1687 = vmatprep.subr.bf16.mxu0 0
      %1688 = vmatpush1.bf16.msra.mxu0 0
      %1689 = vmatprep.subr.bf16.mxu0 0
      %1690 = vmatpush1.bf16.msra.mxu0 0
      %1691 = vmatprep.subr.bf16.mxu0 0
      %1692 = vmatpush1.bf16.msra.mxu0 0
      %1693 = vmatprep.mubr.bf16.mxu0 0
      %1694 = vmatmul.mubr.bf16.gmra.mrb[0].mxu0 %v1571
      %v1695 = vpop.f32.mrb[0].mxu0
      %v1696 = vadd.f32 0.0, %v1695
      %v1697 = vpop.f32.mrb[0].mxu0
      %v1698 = vpop.f32.mrb[0].mxu0
      %v1699 = vadd.f32 0.0, %v1698
      %v1700 = vpop.f32.mrb[0].mxu0
      %1701 = vmatprep.mubr.bf16.mxu0 0
      %1702 = vmatmul.mubr.bf16.gmra.mrb[0].mxu0 %v1580
      %v1703 = vpop.f32.mrb[0].mxu0
      %v1704 = vadd.f32 0.0, %v1703
      %v1705 = vpop.f32.mrb[0].mxu0
      %v1706 = vpop.f32.mrb[0].mxu0
      %v1707 = vadd.f32 0.0, %v1706
      %v1708 = vpop.f32.mrb[0].mxu0
      %1709 = vmatprep.mubr.bf16.mxu0 0
      %1710 = vmatmul.mubr.bf16.gmra.mrb[0].mxu0 %v1589
      %v1711 = vpop.f32.mrb[0].mxu0
      %v1712 = vadd.f32 0.0, %v1711
      %v1713 = vpop.f32.mrb[0].mxu0
      %v1714 = vpop.f32.mrb[0].mxu0
      %v1715 = vadd.f32 0.0, %v1714
      %v1716 = vpop.f32.mrb[0].mxu0
      %1717 = vmatprep.mubr.bf16.mxu0 0
      %1718 = vmatmul.mubr.bf16.gmra.mrb[0].mxu0 %v1598
      %v1719 = vpop.f32.mrb[0].mxu0
      %v1720 = vadd.f32 0.0, %v1719
      %v1721 = vpop.f32.mrb[0].mxu0
      %v1722 = vpop.f32.mrb[0].mxu0
      %v1723 = vadd.f32 0.0, %v1722
      %v1724 = vpop.f32.mrb[0].mxu0
      %1725 = vmatprep.mubr.bf16.mxu0 0
      %1726 = vmatmul.mubr.bf16.gmra.mrb[0].mxu0 %v1607
      %v1727 = vpop.f32.mrb[0].mxu0
      %v1728 = vadd.f32 0.0, %v1727
      %v1729 = vpop.f32.mrb[0].mxu0
      %v1730 = vpop.f32.mrb[0].mxu0
      %v1731 = vadd.f32 0.0, %v1730
      %v1732 = vpop.f32.mrb[0].mxu0
      %1733 = vdwg.mxu0
      %v1734 = vadd.f32 %v1524, %v1696
      %v1735 = vadd.f32 %v1525, %v1699
      %v1736 = vadd.f32 %v1526, %v1704
      %v1737 = vadd.f32 %v1527, %v1707
      %v1738 = vadd.f32 %v1528, %v1712
      %v1739 = vadd.f32 %v1529, %v1715
      %v1740 = vadd.f32 %v1530, %v1720
      %v1741 = vadd.f32 %v1531, %v1723
      %v1742 = vadd.f32 %v1532, %v1728
      %v1743 = vadd.f32 %v1533, %v1731
      %v1744 = vld [vmem:[%s203 + $0x8] sm:$0x8]
      %v1745 = vld [vmem:[%s1 + $0x200] sm:$0xf]
      %v1746 = vld [vmem:[%s1 + $0x204] sm:$0xf]
      %v1747 = vld [vmem:[%s1 + $0x208] sm:$0xf]
      %v1748 = vld [vmem:[%s1 + $0x20c] sm:$0xf]
      %v1749 = vld [vmem:[%s1 + $0x210] sm:$0xf]
      %v1750 = vld [vmem:[%s1 + $0x214] sm:$0xf]
      %v1751 = vld [vmem:[%s1 + $0x218] sm:$0xf]
      %v1752 = vld [vmem:[%s1 + $0x21c] sm:$0xf]
      %v1753 = vld [vmem:[%s1 + $0x220] sm:$0xf]
      %v1754 = vld [vmem:[%s1 + $0x224] sm:$0xf]
      %v1755 = vld [vmem:[%s1 + $0x228] sm:$0xf]
      %v1756 = vld [vmem:[%s1 + $0x22c] sm:$0xf]
      %v1757 = vld [vmem:[%s1 + $0x230] sm:$0xf]
      %v1758 = vld [vmem:[%s1 + $0x234] sm:$0xf]
      %v1759 = vld [vmem:[%s1 + $0x238] sm:$0xf]
      %v1760 = vld [vmem:[%s1 + $0x23c] sm:$0xf]
      %v1762 = vunpack.c.l.b16 %v1744
      %v1763 = vpack.c.b16 %v1371, %v1762
      %vm1764 = vcmask 1044480
      %v1765 = vrot.slane %v1763, 3
      %v1766 = vrot.slane %v1382, 3
      %v1767 = vsel %vm1764, %v1765, %v1766
      %v1768 = vrot.slane %v1383, 3
      %v1769 = vsel %vm1764, %v1766, %v1768
      %v1770 = vrot.slane %v1384, 3
      %v1771 = vsel %vm1764, %v1768, %v1770
      %v1772 = vrot.slane %v1385, 3
      %v1773 = vsel %vm1764, %v1770, %v1772
      %v1774 = vrot.slane %v1553, 3
      %v1775 = vsel %vm1764, %v1772, %v1774
      %v1797 = vunpack.c.l.b16 %v1745
      %v1798 = vunpack.c.l.b16 %v1746
      %v1799 = vunpack.c.l.b16 %v1747
      %v1800 = vunpack.c.l.b16 %v1748
      %v1801 = vunpack.c.l.b16 %v1749
      %v1802 = vunpack.c.l.b16 %v1750
      %v1803 = vunpack.c.l.b16 %v1751
      %v1804 = vunpack.c.l.b16 %v1752
      %v1805 = vunpack.c.l.b16 %v1753
      %v1806 = vunpack.c.l.b16 %v1754
      %v1807 = vunpack.c.l.b16 %v1755
      %v1808 = vunpack.c.l.b16 %v1756
      %v1809 = vunpack.c.l.b16 %v1757
      %v1810 = vunpack.c.l.b16 %v1758
      %v1811 = vunpack.c.l.b16 %v1759
      %v1812 = vunpack.c.l.b16 %v1760
      %v1813 = vpack.c.b16 %v1798, %v1797
      %v1814 = vpack.c.b16 %v1800, %v1799
      %v1815 = vpack.c.b16 %v1802, %v1801
      %v1816 = vpack.c.b16 %v1804, %v1803
      %v1817 = vpack.c.b16 %v1806, %v1805
      %v1818 = vpack.c.b16 %v1808, %v1807
      %v1819 = vpack.c.b16 %v1810, %v1809
      %v1820 = vpack.c.b16 %v1812, %v1811
      %1829 = vmatprep.subr.bf16.mxu0 0
      %1830 = vmatpush1.bf16.msra.mxu0 %v1813
      %1831 = vmatprep.subr.bf16.mxu0 0
      %1832 = vmatpush1.bf16.msra.mxu0 %v1814
      %1833 = vmatprep.subr.bf16.mxu0 0
      %1834 = vmatpush1.bf16.msra.mxu0 %v1815
      %1835 = vmatprep.subr.bf16.mxu0 0
      %1836 = vmatpush1.bf16.msra.mxu0 %v1816
      %1837 = vmatprep.subr.bf16.mxu0 0
      %1838 = vmatpush1.bf16.msra.mxu0 %v1817
      %1839 = vmatprep.subr.bf16.mxu0 0
      %1840 = vmatpush1.bf16.msra.mxu0 %v1818
      %1841 = vmatprep.subr.bf16.mxu0 0
      %1842 = vmatpush1.bf16.msra.mxu0 %v1819
      %1843 = vmatprep.subr.bf16.mxu0 0
      %1844 = vmatpush1.bf16.msra.mxu0 %v1820
      %1845 = vmatprep.subr.bf16.mxu0 0
      %1846 = vmatpush1.bf16.msra.mxu0 0
      %1847 = vmatprep.subr.bf16.mxu0 0
      %1848 = vmatpush1.bf16.msra.mxu0 0
      %1849 = vmatprep.subr.bf16.mxu0 0
      %1850 = vmatpush1.bf16.msra.mxu0 0
      %1851 = vmatprep.subr.bf16.mxu0 0
      %1852 = vmatpush1.bf16.msra.mxu0 0
      %1853 = vmatprep.subr.bf16.mxu0 0
      %1854 = vmatpush1.bf16.msra.mxu0 0
      %1855 = vmatprep.subr.bf16.mxu0 0
      %1856 = vmatpush1.bf16.msra.mxu0 0
      %1857 = vmatprep.subr.bf16.mxu0 0
      %1858 = vmatpush1.bf16.msra.mxu0 0
      %1859 = vmatprep.subr.bf16.mxu0 0
      %1860 = vmatpush1.bf16.msra.mxu0 0
      %1861 = vmatprep.mubr.bf16.mxu0 0
      %1862 = vmatmul.mubr.bf16.gmra.mrb[0].mxu0 %v1767
      %v1863 = vpop.f32.mrb[0].mxu0
      %v1864 = vadd.f32 0.0, %v1863
      %v1865 = vpop.f32.mrb[0].mxu0
      %v1866 = vpop.f32.mrb[0].mxu0
      %v1867 = vadd.f32 0.0, %v1866
      %v1868 = vpop.f32.mrb[0].mxu0
      %1869 = vmatprep.mubr.bf16.mxu0 0
      %1870 = vmatmul.mubr.bf16.gmra.mrb[0].mxu0 %v1769
      %v1871 = vpop.f32.mrb[0].mxu0
      %v1872 = vadd.f32 0.0, %v1871
      %v1873 = vpop.f32.mrb[0].mxu0
      %v1874 = vpop.f32.mrb[0].mxu0
      %v1875 = vadd.f32 0.0, %v1874
      %v1876 = vpop.f32.mrb[0].mxu0
      %1877 = vmatprep.mubr.bf16.mxu0 0
      %1878 = vmatmul.mubr.bf16.gmra.mrb[0].mxu0 %v1771
      %v1879 = vpop.f32.mrb[0].mxu0
      %v1880 = vadd.f32 0.0, %v1879
      %v1881 = vpop.f32.mrb[0].mxu0
      %v1882 = vpop.f32.mrb[0].mxu0
      %v1883 = vadd.f32 0.0, %v1882
      %v1884 = vpop.f32.mrb[0].mxu0
      %1885 = vmatprep.mubr.bf16.mxu0 0
      %1886 = vmatmul.mubr.bf16.gmra.mrb[0].mxu0 %v1773
      %v1887 = vpop.f32.mrb[0].mxu0
      %v1888 = vadd.f32 0.0, %v1887
      %v1889 = vpop.f32.mrb[0].mxu0
      %v1890 = vpop.f32.mrb[0].mxu0
      %v1891 = vadd.f32 0.0, %v1890
      %v1892 = vpop.f32.mrb[0].mxu0
      %1893 = vmatprep.mubr.bf16.mxu0 0
      %1894 = vmatmul.mubr.bf16.gmra.mrb[0].mxu0 %v1775
      %v1895 = vpop.f32.mrb[0].mxu0
      %v1896 = vadd.f32 0.0, %v1895
      %v1897 = vpop.f32.mrb[0].mxu0
      %v1898 = vpop.f32.mrb[0].mxu0
      %v1899 = vadd.f32 0.0, %v1898
      %v1900 = vpop.f32.mrb[0].mxu0
      %1901 = vdwg.mxu0
      %v1902 = vadd.f32 %v1734, %v1864
      %v1903 = vadd.f32 %v1735, %v1867
      %v1904 = vadd.f32 %v1736, %v1872
      %v1905 = vadd.f32 %v1737, %v1875
      %v1906 = vadd.f32 %v1738, %v1880
      %v1907 = vadd.f32 %v1739, %v1883
      %v1908 = vadd.f32 %v1740, %v1888
      %v1909 = vadd.f32 %v1741, %v1891
      %v1910 = vadd.f32 %v1742, %v1896
      %v1911 = vadd.f32 %v1743, %v1899
      %v1912 = vlaneseq
      %v1913 = vshrl.u32 %v1912, 7
      %v1914 = vadd.s32 %v1913, 8
      %v1915 = vadd.s32 %v1913, 16
      %v1916 = vadd.s32 %v1913, 24
      %v1917 = vadd.s32 %v1913, 32
      %v1918 = vadd.s32 %v1913, 40
      %v1919 = vadd.s32 %v1913, 48
      %v1920 = vadd.s32 %v1913, 56
      %v1921 = vadd.s32 %v1913, 64
      %v1922 = vadd.s32 %v1913, 72
      %vm1923 = vcmp.lt.s32.totalorder %v1913, 0
      %v1924 = vsub.s32 0, %v1913
      %v1925 = vsel %vm1923, %v1924, %v1913
      %v1926 = vmul.u32.u64.compose %v1925, 3435973837
      %v1927 = vextract.low.u32 %v1926
      %v1928 = vextract.high.u32 %v1926
      %v1929 = vshrl.u32 %v1928, 3
      %v1930 = vmul.u32 %v1929, 10
      %v1931 = vsub.s32 %v1925, %v1930
      %v1932 = vsub.s32 0, %v1931
      %v1933 = vsel %vm1923, %v1932, %v1931
      %vm1934 = vcmp.lt.s32.totalorder %v1914, 0
      %v1935 = vsub.s32 0, %v1914
      %v1936 = vsel %vm1934, %v1935, %v1914
      %v1937 = vmul.u32.u64.compose %v1936, 3435973837
      %v1938 = vextract.low.u32 %v1937
      %v1939 = vextract.high.u32 %v1937
      %v1940 = vshrl.u32 %v1939, 3
      %v1941 = vmul.u32 %v1940, 10
      %v1942 = vsub.s32 %v1936, %v1941
      %v1943 = vsub.s32 0, %v1942
      %v1944 = vsel %vm1934, %v1943, %v1942
      %vm1945 = vcmp.lt.s32.totalorder %v1915, 0
      %v1946 = vsub.s32 0, %v1915
      %v1947 = vsel %vm1945, %v1946, %v1915
      %v1948 = vmul.u32.u64.compose %v1947, 3435973837
      %v1949 = vextract.low.u32 %v1948
      %v1950 = vextract.high.u32 %v1948
      %v1951 = vshrl.u32 %v1950, 3
      %v1952 = vmul.u32 %v1951, 10
      %v1953 = vsub.s32 %v1947, %v1952
      %v1954 = vsub.s32 0, %v1953
      %v1955 = vsel %vm1945, %v1954, %v1953
      %vm1956 = vcmp.lt.s32.totalorder %v1916, 0
      %v1957 = vsub.s32 0, %v1916
      %v1958 = vsel %vm1956, %v1957, %v1916
      %v1959 = vmul.u32.u64.compose %v1958, 3435973837
      %v1960 = vextract.low.u32 %v1959
      %v1961 = vextract.high.u32 %v1959
      %v1962 = vshrl.u32 %v1961, 3
      %v1963 = vmul.u32 %v1962, 10
      %v1964 = vsub.s32 %v1958, %v1963
      %v1965 = vsub.s32 0, %v1964
      %v1966 = vsel %vm1956, %v1965, %v1964
      %vm1967 = vcmp.lt.s32.totalorder %v1917, 0
      %v1968 = vsub.s32 0, %v1917
      %v1969 = vsel %vm1967, %v1968, %v1917
      %v1970 = vmul.u32.u64.compose %v1969, 3435973837
      %v1971 = vextract.low.u32 %v1970
      %v1972 = vextract.high.u32 %v1970
      %v1973 = vshrl.u32 %v1972, 3
      %v1974 = vmul.u32 %v1973, 10
      %v1975 = vsub.s32 %v1969, %v1974
      %v1976 = vsub.s32 0, %v1975
      %v1977 = vsel %vm1967, %v1976, %v1975
      %vm1978 = vcmp.lt.s32.totalorder %v1918, 0
      %v1979 = vsub.s32 0, %v1918
      %v1980 = vsel %vm1978, %v1979, %v1918
      %v1981 = vmul.u32.u64.compose %v1980, 3435973837
      %v1982 = vextract.low.u32 %v1981
      %v1983 = vextract.high.u32 %v1981
      %v1984 = vshrl.u32 %v1983, 3
      %v1985 = vmul.u32 %v1984, 10
      %v1986 = vsub.s32 %v1980, %v1985
      %v1987 = vsub.s32 0, %v1986
      %v1988 = vsel %vm1978, %v1987, %v1986
      %vm1989 = vcmp.lt.s32.totalorder %v1919, 0
      %v1990 = vsub.s32 0, %v1919
      %v1991 = vsel %vm1989, %v1990, %v1919
      %v1992 = vmul.u32.u64.compose %v1991, 3435973837
      %v1993 = vextract.low.u32 %v1992
      %v1994 = vextract.high.u32 %v1992
      %v1995 = vshrl.u32 %v1994, 3
      %v1996 = vmul.u32 %v1995, 10
      %v1997 = vsub.s32 %v1991, %v1996
      %v1998 = vsub.s32 0, %v1997
      %v1999 = vsel %vm1989, %v1998, %v1997
      %vm2000 = vcmp.lt.s32.totalorder %v1920, 0
      %v2001 = vsub.s32 0, %v1920
      %v2002 = vsel %vm2000, %v2001, %v1920
      %v2003 = vmul.u32.u64.compose %v2002, 3435973837
      %v2004 = vextract.low.u32 %v2003
      %v2005 = vextract.high.u32 %v2003
      %v2006 = vshrl.u32 %v2005, 3
      %v2007 = vmul.u32 %v2006, 10
      %v2008 = vsub.s32 %v2002, %v2007
      %v2009 = vsub.s32 0, %v2008
      %v2010 = vsel %vm2000, %v2009, %v2008
      %vm2011 = vcmp.lt.s32.totalorder %v1921, 0
      %v2012 = vsub.s32 0, %v1921
      %v2013 = vsel %vm2011, %v2012, %v1921
      %v2014 = vmul.u32.u64.compose %v2013, 3435973837
      %v2015 = vextract.low.u32 %v2014
      %v2016 = vextract.high.u32 %v2014
      %v2017 = vshrl.u32 %v2016, 3
      %v2018 = vmul.u32 %v2017, 10
      %v2019 = vsub.s32 %v2013, %v2018
      %v2020 = vsub.s32 0, %v2019
      %v2021 = vsel %vm2011, %v2020, %v2019
      %vm2022 = vcmp.lt.s32.totalorder %v1922, 0
      %v2023 = vsub.s32 0, %v1922
      %v2024 = vsel %vm2022, %v2023, %v1922
      %v2025 = vmul.u32.u64.compose %v2024, 3435973837
      %v2026 = vextract.low.u32 %v2025
      %v2027 = vextract.high.u32 %v2025
      %v2028 = vshrl.u32 %v2027, 3
      %v2029 = vmul.u32 %v2028, 10
      %v2030 = vsub.s32 %v2024, %v2029
      %v2031 = vsub.s32 0, %v2030
      %v2032 = vsel %vm2022, %v2031, %v2030
      %vm2033 = vcmp.ne.s32.totalorder %v1933, 0
      %vm2034 = vcmp.ne.s32.totalorder %v1944, 0
      %vm2035 = vcmp.ne.s32.totalorder %v1955, 0
      %vm2036 = vcmp.ne.s32.totalorder %v1966, 0
      %vm2037 = vcmp.ne.s32.totalorder %v1977, 0
      %vm2038 = vcmp.ne.s32.totalorder %v1988, 0
      %vm2039 = vcmp.ne.s32.totalorder %v1999, 0
      %vm2040 = vcmp.ne.s32.totalorder %v2010, 0
      %vm2041 = vcmp.ne.s32.totalorder %v2021, 0
      %vm2042 = vcmp.ne.s32.totalorder %v2032, 0
      %vm2043 = vcmp.lt.s32.totalorder %v1933, 0
      %vm2044 = vcmp.lt.s32.totalorder %v1944, 0
      %vm2045 = vcmp.lt.s32.totalorder %v1955, 0
      %vm2046 = vcmp.lt.s32.totalorder %v1966, 0
      %vm2047 = vcmp.lt.s32.totalorder %v1977, 0
      %vm2048 = vcmp.lt.s32.totalorder %v1988, 0
      %vm2049 = vcmp.lt.s32.totalorder %v1999, 0
      %vm2050 = vcmp.lt.s32.totalorder %v2010, 0
      %vm2051 = vcmp.lt.s32.totalorder %v2021, 0
      %vm2052 = vcmp.lt.s32.totalorder %v2032, 0
      %vm2053 = vmand %vm2043, %vm2033
      %vm2054 = vmand %vm2044, %vm2034
      %vm2055 = vmand %vm2045, %vm2035
      %vm2056 = vmand %vm2046, %vm2036
      %vm2057 = vmand %vm2047, %vm2037
      %vm2058 = vmand %vm2048, %vm2038
      %vm2059 = vmand %vm2049, %vm2039
      %vm2060 = vmand %vm2050, %vm2040
      %vm2061 = vmand %vm2051, %vm2041
      %vm2062 = vmand %vm2052, %vm2042
      %v2063 = vadd.s32 %v1933, 10
      %v2064 = vadd.s32 %v1944, 10
      %v2065 = vadd.s32 %v1955, 10
      %v2066 = vadd.s32 %v1966, 10
      %v2067 = vadd.s32 %v1977, 10
      %v2068 = vadd.s32 %v1988, 10
      %v2069 = vadd.s32 %v1999, 10
      %v2070 = vadd.s32 %v2010, 10
      %v2071 = vadd.s32 %v2021, 10
      %v2072 = vadd.s32 %v2032, 10
      %v2073 = vsel %vm2053, %v2063, %v1933
      %v2074 = vsel %vm2054, %v2064, %v1944
      %v2075 = vsel %vm2055, %v2065, %v1955
      %v2076 = vsel %vm2056, %v2066, %v1966
      %v2077 = vsel %vm2057, %v2067, %v1977
      %v2078 = vsel %vm2058, %v2068, %v1988
      %v2079 = vsel %vm2059, %v2069, %v1999
      %v2080 = vsel %vm2060, %v2070, %v2010
      %v2081 = vsel %vm2061, %v2071, %v2021
      %v2082 = vsel %vm2062, %v2072, %v2032
      %vm2083 = vcmp.lt.s32.totalorder %v2073, 8
      %vm2084 = vcmp.lt.s32.totalorder %v2074, 8
      %vm2085 = vcmp.lt.s32.totalorder %v2075, 8
      %vm2086 = vcmp.lt.s32.totalorder %v2076, 8
      %vm2087 = vcmp.lt.s32.totalorder %v2077, 8
      %vm2088 = vcmp.lt.s32.totalorder %v2078, 8
      %vm2089 = vcmp.lt.s32.totalorder %v2079, 8
      %vm2090 = vcmp.lt.s32.totalorder %v2080, 8
      %vm2091 = vcmp.lt.s32.totalorder %v2081, 8
      %vm2092 = vcmp.lt.s32.totalorder %v2082, 8
      %v2093 = vsel %vm2083, 1, 0
      %v2094 = vsel %vm2084, 1, 0
      %v2095 = vsel %vm2085, 1, 0
      %v2096 = vsel %vm2086, 1, 0
      %v2097 = vsel %vm2087, 1, 0
      %v2098 = vsel %vm2088, 1, 0
      %v2099 = vsel %vm2089, 1, 0
      %v2100 = vsel %vm2090, 1, 0
      %v2101 = vsel %vm2091, 1, 0
      %v2102 = vsel %vm2092, 1, 0
      %vm2103 = vcmp.eq.s32.totalorder %v2093, 1
      %vm2104 = vcmp.eq.s32.totalorder %v2094, 1
      %vm2105 = vcmp.eq.s32.totalorder %v2095, 1
      %vm2106 = vcmp.eq.s32.totalorder %v2096, 1
      %vm2107 = vcmp.eq.s32.totalorder %v2097, 1
      %vm2108 = vcmp.eq.s32.totalorder %v2098, 1
      %vm2109 = vcmp.eq.s32.totalorder %v2099, 1
      %vm2110 = vcmp.eq.s32.totalorder %v2100, 1
      %vm2111 = vcmp.eq.s32.totalorder %v2101, 1
      %vm2112 = vcmp.eq.s32.totalorder %v2102, 1
      %v2113 = vsel %vm2103, %v1902, 0.0
      %v2114 = vsel %vm2104, %v1903, 0.0
      %v2115 = vsel %vm2105, %v1904, 0.0
      %v2116 = vsel %vm2106, %v1905, 0.0
      %v2117 = vsel %vm2107, %v1906, 0.0
      %v2118 = vsel %vm2108, %v1907, 0.0
      %v2119 = vsel %vm2109, %v1908, 0.0
      %v2120 = vsel %vm2110, %v1909, 0.0
      %v2121 = vsel %vm2111, %v1910, 0.0
      %v2122 = vsel %vm2112, %v1911, 0.0
      %v2123 = vpack.c.bf16 %v2114, %v2113
      %v2124 = vpack.c.bf16 %v2116, %v2115
      %v2125 = vpack.c.bf16 %v2118, %v2117
      %v2126 = vpack.c.bf16 %v2120, %v2119
      %v2127 = vpack.c.bf16 %v2122, %v2121
      %v2133 = vunpack.c.l.b16 %v2123
      %v2134 = vunpack.c.h.b16 %v2123
      %v2135 = vunpack.c.l.b16 %v2124
      %v2136 = vunpack.c.h.b16 %v2124
      %v2137 = vunpack.c.l.b16 %v2125
      %v2138 = vunpack.c.h.b16 %v2125
      %v2139 = vunpack.c.l.b16 %v2126
      %v2140 = vunpack.c.h.b16 %v2126
      %v2141 = vunpack.c.l.b16 %v2127
      %v2142 = vunpack.c.h.b16 %v2127
      %v2143 = vpack.c.b16 %v2133, %v2133
      %v2144 = vpack.c.b16 %v2134, %v2134
      %v2145 = vpack.c.b16 %v2135, %v2135
      %v2146 = vpack.c.b16 %v2136, %v2136
      %v2147 = vpack.c.b16 %v2137, %v2137
      %v2148 = vpack.c.b16 %v2138, %v2138
      %v2149 = vpack.c.b16 %v2139, %v2139
      %v2150 = vpack.c.b16 %v2140, %v2140
      %v2151 = vpack.c.b16 %v2141, %v2141
      %v2152 = vpack.c.b16 %v2142, %v2142
      %2163 = vst [vmem:[%s208] sm:$0xf] %v2143
      %2164 = vst [vmem:[%s208 + $0x4] sm:$0xf] %v2144
      %2165 = vst [vmem:[%s208 + $0x8] sm:$0xf] %v2145
      %2166 = vst [vmem:[%s208 + $0xc] sm:$0xf] %v2146
      %2167 = vst [vmem:[%s208 + $0x10] sm:$0xf] %v2147
      %2168 = vst [vmem:[%s208 + $0x14] sm:$0xf] %v2148
      %2169 = vst [vmem:[%s208 + $0x18] sm:$0xf] %v2149
      %2170 = vst [vmem:[%s208 + $0x1c] sm:$0xf] %v2150
      %2171 = vst [vmem:[%s208 + $0x20] sm:$0xf] %v2151
      %2172 = vst [vmem:[%s208 + $0x24] sm:$0xf] %v2152
      %v2173 = vadd.f32 %v2113, %v2114
      %v2174 = vadd.f32 %v2173, %v2115
      %v2175 = vadd.f32 %v2174, %v2116
      %v2176 = vadd.f32 %v2175, %v2117
      %v2177 = vadd.f32 %v2176, %v2118
      %v2178 = vadd.f32 %v2177, %v2119
      %v2179 = vadd.f32 %v2178, %v2120
      %v2180 = vadd.f32 %v2179, %v2121
      %v2181 = vadd.f32 %v2180, %v2122
      %v2182 = vrot.slane %v2181, 4
      %v2183 = vadd.f32 %v2181, %v2182
      %v2184 = vrot.slane %v2183, 2
      %v2185 = vadd.f32 %v2183, %v2184
      %v2186 = vrot.slane %v2185, 1
      %v2187 = vadd.f32 %v2185, %v2186
      %2188 = vst [vmem:[%s211] sm:$0x1] %v2187
      %v2189 = vmul.f32 %v2113, %v2113
      %v2190 = vmul.f32 %v2114, %v2114
      %v2191 = vmul.f32 %v2115, %v2115
      %v2192 = vmul.f32 %v2116, %v2116
      %v2193 = vmul.f32 %v2117, %v2117
      %v2194 = vmul.f32 %v2118, %v2118
      %v2195 = vmul.f32 %v2119, %v2119
      %v2196 = vmul.f32 %v2120, %v2120
      %v2197 = vmul.f32 %v2121, %v2121
      %v2198 = vmul.f32 %v2122, %v2122
      %v2199 = vadd.f32 %v2189, %v2190
      %v2200 = vadd.f32 %v2199, %v2191
      %v2201 = vadd.f32 %v2200, %v2192
      %v2202 = vadd.f32 %v2201, %v2193
      %v2203 = vadd.f32 %v2202, %v2194
      %v2204 = vadd.f32 %v2203, %v2195
      %v2205 = vadd.f32 %v2204, %v2196
      %v2206 = vadd.f32 %v2205, %v2197
      %v2207 = vadd.f32 %v2206, %v2198
      %v2208 = vrot.slane %v2207, 4
      %v2209 = vadd.f32 %v2207, %v2208
      %v2210 = vrot.slane %v2209, 2
      %v2211 = vadd.f32 %v2209, %v2210
      %v2212 = vrot.slane %v2211, 1
      %v2213 = vadd.f32 %v2211, %v2212
      %2214 = vst [vmem:[%s214] sm:$0x1] %v2213
      %p2215 = scmp.lt.s32.totalorder %s16, 1
      %s2216 = scalar_select %p2215, %s16, 1
      %s2217 = smul.addr %s2216, 10
      %s2218 = smul.addr %s2217, 4
      %s2219 = scalar_lea.vmem %s2, %s2218
      %p2220 = scmp.lt.s32.totalorder %s16, 1
      %s2221 = scalar_select %p2220, %s16, 1
      %s2222 = scalar_lea.vmem %s3, %s2221
      %p2223 = scmp.lt.s32.totalorder %s16, 1
      %s2224 = scalar_select %p2223, %s16, 1
      %s2225 = scalar_lea.vmem %s4, %s2224
      // Predicated region
      $region29: #{basic_block_pallas.10} parent=27 // pred_check
        %p2226 = pneg %p81
      $region30: #{basic_block_pallas.10} parent=27 // pred_check_branch
        %2228 = sbr.rel (%p2226) target = $region32
      $region31: #{basic_block_pallas.10} parent=27 // pred_region
        _
      $region32: #{basic_block_pallas.10} parent=27 // pred_fallthru
        _
      // Predicated region
      $region33: #{basic_block_pallas.10} parent=27 // pred_check
        %p2229 = pneg %p107
      $region34: #{basic_block_pallas.10} parent=27 // pred_check_branch
        %2231 = sbr.rel (%p2229) target = $region36
      $region35: #{basic_block_pallas.10} parent=27 // pred_region
        _
      $region36: #{basic_block_pallas.10} parent=27 // pred_fallthru
        _
      // Predicated region
      $region37: #{basic_block_pallas.10} parent=27 // pred_check
        %p2232 = pneg %p133
      $region38: #{basic_block_pallas.10} parent=27 // pred_check_branch
        %2234 = sbr.rel (%p2232) target = $region40
      $region39: #{basic_block_pallas.10} parent=27 // pred_region
        _
      $region40: #{basic_block_pallas.10} parent=27 // pred_fallthru
        _
    $region28: #{basic_block_pallas.10} parent=5 // pred_fallthru
      _
    %p2235 = scmp.le.s32.totalorder 2, %s11
    // Predicated region
    $region41: #{basic_block_pallas.10} parent=5 // pred_check
      %p2236 = pneg %p2235
    $region42: #{basic_block_pallas.10} parent=5 // pred_check_branch
      %2238 = sbr.rel (%p2236) target = $region44
    $region43: #{basic_block_pallas.10} parent=5 // pred_region
      %s2239 = ssub.s32 %s11, 2
      // Predicated region
      $region45: #{basic_block_pallas.10} parent=43 // pred_check
        %p2240 = pneg %p87
      $region46: #{basic_block_pallas.10} parent=43 // pred_check_branch
        %2242 = sbr.rel (%p2240) target = $region48
      $region47: #{basic_block_pallas.10} parent=43 // pred_region
        %p2243 = scmp.lt.s32.totalorder %s17, 1
        %s2244 = scalar_select %p2243, %s17, 1
        %s2245 = smul.addr %s2244, 10
        %s2246 = smul.addr %s2245, 4
        %s2247 = scalar_lea.vmem %s2, %s2246
      $region48: #{basic_block_pallas.10} parent=43 // pred_fallthru
        _
      // Predicated region
      $region49: #{basic_block_pallas.10} parent=43 // pred_check
        %p2248 = pneg %p113
      $region50: #{basic_block_pallas.10} parent=43 // pred_check_branch
        %2250 = sbr.rel (%p2248) target = $region52
      $region51: #{basic_block_pallas.10} parent=43 // pred_region
        %p2251 = scmp.lt.s32.totalorder %s17, 1
        %s2252 = scalar_select %p2251, %s17, 1
        %s2253 = scalar_lea.vmem %s3, %s2252
      $region52: #{basic_block_pallas.10} parent=43 // pred_fallthru
        _
      // Predicated region
      $region53: #{basic_block_pallas.10} parent=43 // pred_check
        %p2254 = pneg %p139
      $region54: #{basic_block_pallas.10} parent=43 // pred_check_branch
        %2256 = sbr.rel (%p2254) target = $region56
      $region55: #{basic_block_pallas.10} parent=43 // pred_region
        %p2257 = scmp.lt.s32.totalorder %s17, 1
        %s2258 = scalar_select %p2257, %s17, 1
        %s2259 = scalar_lea.vmem %s4, %s2258
      $region56: #{basic_block_pallas.10} parent=43 // pred_fallthru
        _
    $region44: #{basic_block_pallas.10} parent=5 // pred_fallthru
      _
  $region6: #{basic_block_pallas.10} parent=0 // loop_footer
    %s15 = sadd.s32 1, %s11
  $region7: #{basic_block_pallas.10} parent=0 // loop_footer_branch
    %10 = sbr.rel target = $region3
  $region8: #{basic_block_pallas.10} parent=0 // loop_exit
    _

</llo_original>
